<compile_context>
chip_gen: v7x
topology: tpu7x:2x2x1
jax: 0.10.0
libtpu: 0.0.40
codegen_flags: <defaults>
</compile_context>

<pallas_src>
import numpy as np
import jax
import jax.numpy as jnp
from jax.experimental import pallas as pl
from jax.experimental.pallas import tpu as pltpu


# ---------------- sizes (scaled-down versions of the PyTorch module dims) ----------------
B = 2            # batch
C_IN = 3         # image channels (RGB)
H = W = 16       # image spatial size
PATCH = 4        # encoder patch / stride (stand-in for ResNet's /32 downsample)
GRID_HW = H // PATCH            # 4
N_FEAT = GRID_HW * GRID_HW      # 16 spatial feature locations
ENC_DIM = 32     # encoder_dim   (2048 in the original)
DEC_DIM = 32     # decoder_dim   (512)
ATT_DIM = 16     # attention_dim (256)
EMB_DIM = 16     # embed_size    (300)
VOCAB = 32       # vocab size (len(dataset.vocab))
T_CAP = 9        # caption length  -> seq_length = T_CAP - 1
SEQ_LEN = T_CAP - 1

K_PATCH = C_IN * PATCH * PATCH            # 48  (im2col K)


# ---------------- static parameter-slab layout (row offsets are compile-time constants) ----
def _layout(spec):
    offs, cur = {}, 0
    for name, r, c in spec:
        offs[name] = (cur, r, c)
        cur += ((r + 7) // 8) * 8          # keep every entry sublane(8)-aligned
    return offs, cur


_P1_SPEC = [                                # packed into a (rows, 128) slab
    ("conv_w", K_PATCH, ENC_DIM),
    ("conv_b", 1, ENC_DIM),
    ("a_bd", N_FEAT * ATT_DIM, N_FEAT),     # block-diag A weight: scores = combined @ a_bd
    ("a_b", 1, 1),
    ("ih_w", ENC_DIM, DEC_DIM),
    ("ih_b", 1, DEC_DIM),
    ("ic_w", ENC_DIM, DEC_DIM),
    ("ic_b", 1, DEC_DIM),
    ("pool", B, B * N_FEAT),                # block-diag 1/N spatial-mean matrix
    ("w_e", EMB_DIM, 4 * DEC_DIM),          # LSTM input weights, full 128-lane gate output
    ("w_c", ENC_DIM, 4 * DEC_DIM),
    ("w_h", DEC_DIM, 4 * DEC_DIM),
    ("lstm_b", 1, 4 * DEC_DIM),
    ("fcn_w", DEC_DIM, VOCAB),
    ("fcn_b", 1, VOCAB),
]
P1_OFF, P1_ROWS = _layout(_P1_SPEC)
P1_WIDTH = 4 * DEC_DIM                      # 128

_P2_SPEC = [                                # packed into a (rows, 256) slab
    ("cu_bd", N_FEAT * K_PATCH, N_FEAT * ATT_DIM),   # folded conv->U, block-diag
    ("cu_b_t", 1, N_FEAT * ATT_DIM),
    ("w_w_t", DEC_DIM, N_FEAT * ATT_DIM),            # W tiled across the N locations
    ("w_b_t", 1, N_FEAT * ATT_DIM),
]
P2_OFF, P2_ROWS = _layout(_P2_SPEC)
P2_WIDTH = N_FEAT * ATT_DIM                 # 256


# ============================ fused encoder + decoder kernel ============================
def _encoder_decoder_kernel(patches_ref, patches_dense_ref, emb_ref, p1_ref, p2_ref,
                            preds_ref, alphas_ref):
    f32 = jnp.float32

    def p1(name):
        o, r, c = P1_OFF[name]
        return p1_ref[o:o + r, :c]

    def p2(name):
        o, r, c = P2_OFF[name]
        return p2_ref[o:o + r, :c]

    def mm(a, b):
        return jnp.dot(a, b, preferred_element_type=f32)

    # ---- Encoder: strided patch-conv as one matmul (stand-in for frozen ResNet-50) ----
    # TODO(synk): pretrained ResNet-50 backbone not reproduced; single patch-conv instead.
    feats_flat = mm(patches_ref[...], p1("conv_w")) + p1("conv_b")          # (B*N, ENC)

    # ---- loop-invariant U(conv(x)) computed directly in the lane-dense (B, N*ATT) layout
    #      (conv and U folded into one block-diag weight in the wrapper: no in-kernel
    #       relayout, one matmul, hoisted out of the time loop) ----
    u_hs = mm(patches_dense_ref[...], p2("cu_bd")) + p2("cu_b_t")           # (B, N*ATT)

    # ---- init_hidden_state: spatial mean as a block-diag pooling matmul (MXU, not XLU) ----
    mean_f = mm(p1("pool"), feats_flat)                                     # (B, ENC)
    h = mm(mean_f, p1("ih_w")) + p1("ih_b")                                 # (B, DEC)
    c = mm(mean_f, p1("ic_w")) + p1("ic_b")                                 # (B, DEC)

    # Fully unrolled decode loop: one launch, no per-step grid / DMA bookkeeping.
    # Weight slices are re-read from the VMEM slabs each step (vld is cheap, off the
    # critical path) to keep vreg pressure low across the unrolled body.
    for s in range(SEQ_LEN):
        # ---- Attention: lane-dense math, reductions as MXU matmuls ----
        w_ah = mm(h, p2("w_w_t")) + p2("w_b_t")                             # (B, N*ATT)
        combined = jnp.tanh(u_hs + w_ah)                                    # 2 packed vregs
        scores = mm(combined, p1("a_bd")) + p1("a_b")                       # (B, N)
        scores = scores - jnp.max(scores, axis=1, keepdims=True)
        e = jnp.exp(scores)
        alpha = e / jnp.sum(e, axis=1, keepdims=True)       # exact softmax (alpha is output)
        # context[b] = alpha[b] @ feats[b]  (tiny per-batch MXU matmuls; B is static)
        context = jnp.concatenate(
            [mm(alpha[b:b + 1, :], feats_flat[b * N_FEAT:(b + 1) * N_FEAT, :])
             for b in range(B)], axis=0)                                    # (B, ENC)

        # ---- LSTMCell: gates fused to the full 4*DEC = 128-lane output (3 MXU pushes) ----
        emb_s = emb_ref[s]                                                  # (B, EMB)
        gates = (mm(emb_s, p1("w_e")) + mm(context, p1("w_c"))
                 + mm(h, p1("w_h")) + p1("lstm_b"))                         # (B, 128)
        sig = jax.nn.sigmoid(gates)                 # one full-width EUP pass covers i, f, o
        i_g = sig[:, 0 * DEC_DIM:1 * DEC_DIM]
        f_g = sig[:, 1 * DEC_DIM:2 * DEC_DIM]
        o_g = sig[:, 3 * DEC_DIM:4 * DEC_DIM]
        g_g = jnp.tanh(gates[:, 2 * DEC_DIM:3 * DEC_DIM])
        c = f_g * c + i_g * g_g
        h = o_g * jnp.tanh(c)

        # ---- output projection ----
        # TODO(synk): nn.Dropout(p=0.3) treated as identity (eval semantics).
        out = mm(h, p1("fcn_w")) + p1("fcn_b")                              # (B, VOCAB)

        # lane-dense output slabs; per-step values die immediately (no live-range growth)
        preds_ref[:, s * VOCAB:(s + 1) * VOCAB] = out
        alphas_ref[:, s * N_FEAT:(s + 1) * N_FEAT] = alpha


# ============================ one-time parameter packing ============================
def pack_params(params):
    """Derive the kernel-layout weights and pack them into two contiguous f32 slabs
    (2 parameter DMAs instead of ~21)."""
    f32 = jnp.float32
    eye_n = jnp.eye(N_FEAT, dtype=f32)

    # fold conv -> attention-U projection:  U(conv(x)) = x @ (conv_w @ u_w) + (conv_b@u_w + u_b)
    cu_w = params["conv_w"] @ params["u_w"]                       # (48, ATT)
    cu_b = params["conv_b"] @ params["u_w"] + params["u_b"]       # (1, ATT)

    wih = params["wih"]                                           # (EMB+ENC, 4*DEC), i,f,g,o
    slab1_entries = {
        "conv_w": params["conv_w"], "conv_b": params["conv_b"],
        "a_bd": jnp.kron(eye_n, params["a_w"].T),                 # (N*ATT, N) block-diag
        "a_b": params["a_b"],
        "ih_w": params["ih_w"], "ih_b": params["ih_b"],
        "ic_w": params["ic_w"], "ic_b": params["ic_b"],
        "pool": jnp.kron(jnp.eye(B, dtype=f32),
                         jnp.full((1, N_FEAT), 1.0 / N_FEAT, dtype=f32)),
        "w_e": wih[:EMB_DIM, :], "w_c": wih[EMB_DIM:, :], "w_h": params["whh"],
        "lstm_b": params["bih"] + params["bhh"],
        "fcn_w": params["fcn_w"], "fcn_b": params["fcn_b"],
    }
    slab2_entries = {
        "cu_bd": jnp.kron(eye_n, cu_w),                           # (N*48, N*ATT) block-diag
        "cu_b_t": jnp.tile(cu_b, (1, N_FEAT)),
        "w_w_t": jnp.tile(params["w_w"], (1, N_FEAT)),            # (DEC, N*ATT)
        "w_b_t": jnp.tile(params["w_b"], (1, N_FEAT)),
    }

    def fill(spec, offs, rows, width, entries):
        slab = jnp.zeros((rows, width), f32)
        for name, r, c in spec:
            o = offs[name][0]
            slab = slab.at[o:o + r, :c].set(entries[name].astype(f32))
        return slab

    p1 = fill(_P1_SPEC, P1_OFF, P1_ROWS, P1_WIDTH, slab1_entries)
    p2 = fill(_P2_SPEC, P2_OFF, P2_ROWS, P2_WIDTH, slab2_entries)
    return p1, p2


# ============================ forward wrapper (layout glue only) ============================
def encoder_decoder_forward(images, captions, emb_table, p1, p2):
    # im2col for the strided patch-conv encoder stand-in
    x = images.reshape(B, C_IN, GRID_HW, PATCH, GRID_HW, PATCH)
    x = x.transpose(0, 2, 4, 1, 3, 5)                             # (B, gh, gw, C, ph, pw)
    patches = x.reshape(B * N_FEAT, K_PATCH)                      # (B*N, 48)
    patches_dense = x.reshape(B, N_FEAT * K_PATCH)                # (B, 768) lane-dense copy

    # embedding gather; (SEQ, B, EMB) so the kernel indexes a leading axis per step
    emb = jnp.take(emb_table, captions[:, :SEQ_LEN], axis=0)      # (B, SEQ, EMB)
    emb = emb.transpose(1, 0, 2)                                  # (SEQ, B, EMB)

    vmem = pl.BlockSpec(memory_space=pltpu.MemorySpace.VMEM)
    preds_slab, alphas_slab = pl.pallas_call(
        _encoder_decoder_kernel,
        out_shape=(jax.ShapeDtypeStruct((B, SEQ_LEN * VOCAB), jnp.float32),
                   jax.ShapeDtypeStruct((B, SEQ_LEN * N_FEAT), jnp.float32)),
        in_specs=[vmem] * 5,
        out_specs=(vmem, vmem),
    )(patches, patches_dense, emb, p1, p2)

    preds = preds_slab.reshape(B, SEQ_LEN, VOCAB)
    alphas = alphas_slab.reshape(B, SEQ_LEN, N_FEAT)
    return preds, alphas


# ============================ deterministic parameter init ============================
def init_params(key):
    ks = jax.random.split(key, 19)

    def w(k, shape, scale=0.1):
        return scale * jax.random.normal(k, shape, dtype=jnp.float32)

    p = {}
    # encoder patch-conv (stand-in for ResNet-50 feature extractor)
    p["conv_w"] = w(ks[0], (K_PATCH, ENC_DIM), 0.05)
    p["conv_b"] = w(ks[1], (1, ENC_DIM), 0.05)
    # decoder params (linears stored in (in, out) math layout; LSTM gate order i,f,g,o)
    p["emb_table"] = w(ks[2], (VOCAB, EMB_DIM))
    p["u_w"] = w(ks[3], (ENC_DIM, ATT_DIM));       p["u_b"] = w(ks[4], (1, ATT_DIM))
    p["w_w"] = w(ks[5], (DEC_DIM, ATT_DIM));       p["w_b"] = w(ks[6], (1, ATT_DIM))
    p["a_w"] = w(ks[7], (1, ATT_DIM));             p["a_b"] = w(ks[8], (1, 1))
    p["ih_w"] = w(ks[9], (ENC_DIM, DEC_DIM));      p["ih_b"] = w(ks[10], (1, DEC_DIM))
    p["ic_w"] = w(ks[11], (ENC_DIM, DEC_DIM));     p["ic_b"] = w(ks[12], (1, DEC_DIM))
    p["wih"] = w(ks[13], (EMB_DIM + ENC_DIM, 4 * DEC_DIM)); p["bih"] = w(ks[14], (1, 4 * DEC_DIM))
    p["whh"] = w(ks[15], (DEC_DIM, 4 * DEC_DIM));  p["bhh"] = w(ks[16], (1, 4 * DEC_DIM))
    p["fcn_w"] = w(ks[17], (DEC_DIM, VOCAB));      p["fcn_b"] = w(ks[18], (1, VOCAB))
    return p


# ============================ pure-JAX reference for validation ============================
def reference_forward(images, captions, p):
    x = images.reshape(B, C_IN, GRID_HW, PATCH, GRID_HW, PATCH)
    x = x.transpose(0, 2, 4, 1, 3, 5).reshape(B * N_FEAT, -1)
    feats = (x @ p["conv_w"] + p["conv_b"]).reshape(B, N_FEAT, ENC_DIM)

    emb = jnp.take(p["emb_table"], captions, axis=0)
    mean_f = feats.mean(axis=1)
    h = mean_f @ p["ih_w"] + p["ih_b"]
    c = mean_f @ p["ic_w"] + p["ic_b"]
    preds, alphas = [], []
    for s in range(SEQ_LEN):
        u_hs = feats @ p["u_w"] + p["u_b"]
        w_ah = h @ p["w_w"] + p["w_b"]
        combined = jnp.tanh(u_hs + w_ah[:, None, :])
        scores = jnp.sum(combined * p["a_w"][None, :, :], axis=-1) + p["a_b"]
        alpha = jax.nn.softmax(scores, axis=1)
        context = jnp.sum(feats * alpha[:, :, None], axis=1)
        xcat = jnp.concatenate([emb[:, s], context], axis=1)
        gates = xcat @ p["wih"] + p["bih"] + h @ p["whh"] + p["bhh"]
        i_g = jax.nn.sigmoid(gates[:, :DEC_DIM])
        f_g = jax.nn.sigmoid(gates[:, DEC_DIM:2 * DEC_DIM])
        g_g = jnp.tanh(gates[:, 2 * DEC_DIM:3 * DEC_DIM])
        o_g = jax.nn.sigmoid(gates[:, 3 * DEC_DIM:])
        c = f_g * c + i_g * g_g
        h = o_g * jnp.tanh(c)
        preds.append(h @ p["fcn_w"] + p["fcn_b"])
        alphas.append(alpha)
    return jnp.stack(preds, axis=1), jnp.stack(alphas, axis=1)


if __name__ == "__main__":
    key = jax.random.PRNGKey(0)
    k_img, k_cap, k_param = jax.random.split(key, 3)
    images = jax.random.normal(k_img, (B, C_IN, H, W), dtype=jnp.float32)     # NCHW
    captions = jax.random.randint(k_cap, (B, T_CAP), 0, VOCAB, dtype=jnp.int32)
    params = init_params(k_param)

    # one-time weight re-layout + slab packing (amortized over calls)
    p1_slab, p2_slab = pack_params(params)

    fwd = jax.jit(encoder_decoder_forward)
    preds, alphas = fwd(images, captions, params["emb_table"], p1_slab, p2_slab)
    preds, alphas = jax.block_until_ready((preds, alphas))

    assert preds.shape == (B, SEQ_LEN, VOCAB)
    assert alphas.shape == (B, SEQ_LEN, N_FEAT)

    ref_p, ref_a = reference_forward(images, captions, params)
    np.testing.assert_allclose(np.asarray(preds), np.asarray(ref_p), rtol=2e-3, atol=2e-3)
    np.testing.assert_allclose(np.asarray(alphas), np.asarray(ref_a), rtol=2e-3, atol=2e-3)

    print("KERNEL_OK")
</pallas_src>

<mosaic_0001>
module attributes {stable_mosaic.version = 11 : i64} {
  func.func @_encoder_decoder_kernel(%arg0: memref<32x48xf32, #tpu.memory_space<vmem>>, %arg1: memref<2x768xf32, #tpu.memory_space<vmem>>, %arg2: memref<8x2x16xf32, #tpu.memory_space<vmem>>, %arg3: memref<536x128xf32, #tpu.memory_space<vmem>>, %arg4: memref<816x256xf32, #tpu.memory_space<vmem>>, %arg5: memref<2x256xf32, #tpu.memory_space<vmem>>, %arg6: memref<2x128xf32, #tpu.memory_space<vmem>>) attributes {dimension_semantics = [], scalar_prefetch = 0 : i64, scratch_operands = 0 : i64, tpu.core_type = #tpu.core_type<tc>} {
    %c0 = arith.constant 0 : index
    %c0_0 = arith.constant 0 : index
    %0 = vector.load %arg0[%c0, %c0_0] : memref<32x48xf32, #tpu.memory_space<vmem>>, vector<32x48xf32>
    %c0_1 = arith.constant 0 : index
    %c0_2 = arith.constant 0 : index
    %1 = vector.load %arg3[%c0_1, %c0_2] : memref<536x128xf32, #tpu.memory_space<vmem>>, vector<48x32xf32>
    %cst = arith.constant dense<0.000000e+00> : vector<32x32xf32>
    %2 = tpu.matmul %0, %1, %cst {dimension_numbers = #tpu.dot_dimension_numbers<[1], [0], [0], [1], [0, 0, 1, 1], [], []>} : vector<32x48xf32>, vector<48x32xf32>, vector<32x32xf32> -> vector<32x32xf32>
    %c48 = arith.constant 48 : index
    %c0_3 = arith.constant 0 : index
    %3 = vector.load %arg3[%c48, %c0_3] : memref<536x128xf32, #tpu.memory_space<vmem>>, vector<1x32xf32>
    %4 = vector.broadcast %3 : vector<1x32xf32> to vector<32x32xf32>
    %5 = arith.addf %2, %4 : vector<32x32xf32>
    %c0_4 = arith.constant 0 : index
    %c0_5 = arith.constant 0 : index
    %6 = vector.load %arg1[%c0_4, %c0_5] : memref<2x768xf32, #tpu.memory_space<vmem>>, vector<2x768xf32>
    %c0_6 = arith.constant 0 : index
    %c0_7 = arith.constant 0 : index
    %7 = vector.load %arg4[%c0_6, %c0_7] : memref<816x256xf32, #tpu.memory_space<vmem>>, vector<768x256xf32>
    %cst_8 = arith.constant dense<0.000000e+00> : vector<2x256xf32>
    %8 = tpu.matmul %6, %7, %cst_8 {dimension_numbers = #tpu.dot_dimension_numbers<[1], [0], [0], [1], [0, 0, 1, 1], [], []>} : vector<2x768xf32>, vector<768x256xf32>, vector<2x256xf32> -> vector<2x256xf32>
    %c768 = arith.constant 768 : index
    %c0_9 = arith.constant 0 : index
    %9 = vector.load %arg4[%c768, %c0_9] : memref<816x256xf32, #tpu.memory_space<vmem>>, vector<1x256xf32>
    %10 = vector.broadcast %9 : vector<1x256xf32> to vector<2x256xf32>
    %11 = arith.addf %8, %10 : vector<2x256xf32>
    %c400 = arith.constant 400 : index
    %c0_10 = arith.constant 0 : index
    %12 = vector.load %arg3[%c400, %c0_10] : memref<536x128xf32, #tpu.memory_space<vmem>>, vector<2x32xf32>
    %cst_11 = arith.constant dense<0.000000e+00> : vector<2x32xf32>
    %13 = tpu.matmul %12, %5, %cst_11 {dimension_numbers = #tpu.dot_dimension_numbers<[1], [0], [0], [1], [0, 0, 1, 1], [], []>} : vector<2x32xf32>, vector<32x32xf32>, vector<2x32xf32> -> vector<2x32xf32>
    %c320 = arith.constant 320 : index
    %c0_12 = arith.constant 0 : index
    %14 = vector.load %arg3[%c320, %c0_12] : memref<536x128xf32, #tpu.memory_space<vmem>>, vector<32x32xf32>
    %cst_13 = arith.constant dense<0.000000e+00> : vector<2x32xf32>
    %15 = tpu.matmul %13, %14, %cst_13 {dimension_numbers = #tpu.dot_dimension_numbers<[1], [0], [0], [1], [0, 0, 1, 1], [], []>} : vector<2x32xf32>, vector<32x32xf32>, vector<2x32xf32> -> vector<2x32xf32>
    %c352 = arith.constant 352 : index
    %c0_14 = arith.constant 0 : index
    %16 = vector.load %arg3[%c352, %c0_14] : memref<536x128xf32, #tpu.memory_space<vmem>>, vector<1x32xf32>
    %17 = vector.broadcast %16 : vector<1x32xf32> to vector<2x32xf32>
    %18 = arith.addf %15, %17 : vector<2x32xf32>
    %c360 = arith.constant 360 : index
    %c0_15 = arith.constant 0 : index
    %19 = vector.load %arg3[%c360, %c0_15] : memref<536x128xf32, #tpu.memory_space<vmem>>, vector<32x32xf32>
    %cst_16 = arith.constant dense<0.000000e+00> : vector<2x32xf32>
    %20 = tpu.matmul %13, %19, %cst_16 {dimension_numbers = #tpu.dot_dimension_numbers<[1], [0], [0], [1], [0, 0, 1, 1], [], []>} : vector<2x32xf32>, vector<32x32xf32>, vector<2x32xf32> -> vector<2x32xf32>
    %c392 = arith.constant 392 : index
    %c0_17 = arith.constant 0 : index
    %21 = vector.load %arg3[%c392, %c0_17] : memref<536x128xf32, #tpu.memory_space<vmem>>, vector<1x32xf32>
    %22 = vector.broadcast %21 : vector<1x32xf32> to vector<2x32xf32>
    %23 = arith.addf %20, %22 : vector<2x32xf32>
    %c776 = arith.constant 776 : index
    %c0_18 = arith.constant 0 : index
    %24 = vector.load %arg4[%c776, %c0_18] : memref<816x256xf32, #tpu.memory_space<vmem>>, vector<32x256xf32>
    %cst_19 = arith.constant dense<0.000000e+00> : vector<2x256xf32>
    %25 = tpu.matmul %18, %24, %cst_19 {dimension_numbers = #tpu.dot_dimension_numbers<[1], [0], [0], [1], [0, 0, 1, 1], [], []>} : vector<2x32xf32>, vector<32x256xf32>, vector<2x256xf32> -> vector<2x256xf32>
    %c808 = arith.constant 808 : index
    %c0_20 = arith.constant 0 : index
    %26 = vector.load %arg4[%c808, %c0_20] : memref<816x256xf32, #tpu.memory_space<vmem>>, vector<1x256xf32>
    %27 = vector.broadcast %26 : vector<1x256xf32> to vector<2x256xf32>
    %28 = arith.addf %25, %27 : vector<2x256xf32>
    %29 = arith.addf %11, %28 : vector<2x256xf32>
    %30 = math.tanh %29 : vector<2x256xf32>
    %c56 = arith.constant 56 : index
    %c0_21 = arith.constant 0 : index
    %31 = vector.load %arg3[%c56, %c0_21] : memref<536x128xf32, #tpu.memory_space<vmem>>, vector<256x16xf32>
    %cst_22 = arith.constant dense<0.000000e+00> : vector<2x16xf32>
    %32 = tpu.matmul %30, %31, %cst_22 {dimension_numbers = #tpu.dot_dimension_numbers<[1], [0], [0], [1], [0, 0, 1, 1], [], []>} : vector<2x256xf32>, vector<256x16xf32>, vector<2x16xf32> -> vector<2x16xf32>
    %c312 = arith.constant 312 : index
    %c0_23 = arith.constant 0 : index
    %33 = vector.load %arg3[%c312, %c0_23] : memref<536x128xf32, #tpu.memory_space<vmem>>, vector<1x1xf32>
    %34 = vector.broadcast %33 : vector<1x1xf32> to vector<2x16xf32>
    %35 = arith.addf %32, %34 : vector<2x16xf32>
    %cst_24 = arith.constant dense<0xFF800000> : vector<2xf32>
    %36 = vector.multi_reduction <maximumf>, %35, %cst_24 [1] : vector<2x16xf32> to vector<2xf32>
    %37 = vector.shape_cast %36 : vector<2xf32> to vector<2x1xf32>
    %38 = vector.broadcast %37 : vector<2x1xf32> to vector<2x16xf32>
    %39 = arith.subf %35, %38 : vector<2x16xf32>
    %40 = math.exp %39 : vector<2x16xf32>
    %cst_25 = arith.constant dense<0.000000e+00> : vector<2xf32>
    %41 = vector.multi_reduction <add>, %40, %cst_25 [1] : vector<2x16xf32> to vector<2xf32>
    %42 = vector.shape_cast %41 : vector<2xf32> to vector<2x1xf32>
    %43 = vector.broadcast %42 : vector<2x1xf32> to vector<2x16xf32>
    %44 = arith.divf %40, %43 : vector<2x16xf32>
    %45 = vector.extract_strided_slice %44 {offsets = [0, 0], sizes = [1, 16], strides = [1, 1]} : vector<2x16xf32> to vector<1x16xf32>
    %46 = vector.extract_strided_slice %5 {offsets = [0, 0], sizes = [16, 32], strides = [1, 1]} : vector<32x32xf32> to vector<16x32xf32>
    %cst_26 = arith.constant dense<0.000000e+00> : vector<1x32xf32>
    %47 = tpu.matmul %45, %46, %cst_26 {dimension_numbers = #tpu.dot_dimension_numbers<[1], [0], [0], [1], [0, 0, 1, 1], [], []>} : vector<1x16xf32>, vector<16x32xf32>, vector<1x32xf32> -> vector<1x32xf32>
    %48 = vector.extract_strided_slice %44 {offsets = [1, 0], sizes = [1, 16], strides = [1, 1]} : vector<2x16xf32> to vector<1x16xf32>
    %49 = vector.extract_strided_slice %5 {offsets = [16, 0], sizes = [16, 32], strides = [1, 1]} : vector<32x32xf32> to vector<16x32xf32>
    %cst_27 = arith.constant dense<0.000000e+00> : vector<1x32xf32>
    %50 = tpu.matmul %48, %49, %cst_27 {dimension_numbers = #tpu.dot_dimension_numbers<[1], [0], [0], [1], [0, 0, 1, 1], [], []>} : vector<1x16xf32>, vector<16x32xf32>, vector<1x32xf32> -> vector<1x32xf32>
    %51 = tpu.concatenate %47, %50 in 0 : vector<1x32xf32>, vector<1x32xf32> -> vector<2x32xf32>
    %c0_28 = arith.constant 0 : index
    %c0_29 = arith.constant 0 : index
    %c0_30 = arith.constant 0 : index
    %52 = vector.load %arg2[%c0_28, %c0_29, %c0_30] : memref<8x2x16xf32, #tpu.memory_space<vmem>>, vector<1x2x16xf32>
    %53 = vector.shape_cast %52 : vector<1x2x16xf32> to vector<2x16xf32>
    %c408 = arith.constant 408 : index
    %c0_31 = arith.constant 0 : index
    %54 = vector.load %arg3[%c408, %c0_31] : memref<536x128xf32, #tpu.memory_space<vmem>>, vector<16x128xf32>
    %cst_32 = arith.constant dense<0.000000e+00> : vector<2x128xf32>
    %55 = tpu.matmul %53, %54, %cst_32 {dimension_numbers = #tpu.dot_dimension_numbers<[1], [0], [0], [1], [0, 0, 1, 1], [], []>} : vector<2x16xf32>, vector<16x128xf32>, vector<2x128xf32> -> vector<2x128xf32>
    %c424 = arith.constant 424 : index
    %c0_33 = arith.constant 0 : index
    %56 = vector.load %arg3[%c424, %c0_33] : memref<536x128xf32, #tpu.memory_space<vmem>>, vector<32x128xf32>
    %cst_34 = arith.constant dense<0.000000e+00> : vector<2x128xf32>
    %57 = tpu.matmul %51, %56, %cst_34 {dimension_numbers = #tpu.dot_dimension_numbers<[1], [0], [0], [1], [0, 0, 1, 1], [], []>} : vector<2x32xf32>, vector<32x128xf32>, vector<2x128xf32> -> vector<2x128xf32>
    %58 = arith.addf %55, %57 : vector<2x128xf32>
    %c456 = arith.constant 456 : index
    %c0_35 = arith.constant 0 : index
    %59 = vector.load %arg3[%c456, %c0_35] : memref<536x128xf32, #tpu.memory_space<vmem>>, vector<32x128xf32>
    %cst_36 = arith.constant dense<0.000000e+00> : vector<2x128xf32>
    %60 = tpu.matmul %18, %59, %cst_36 {dimension_numbers = #tpu.dot_dimension_numbers<[1], [0], [0], [1], [0, 0, 1, 1], [], []>} : vector<2x32xf32>, vector<32x128xf32>, vector<2x128xf32> -> vector<2x128xf32>
    %61 = arith.addf %58, %60 : vector<2x128xf32>
    %c488 = arith.constant 488 : index
    %c0_37 = arith.constant 0 : index
    %62 = vector.load %arg3[%c488, %c0_37] : memref<536x128xf32, #tpu.memory_space<vmem>>, vector<1x128xf32>
    %63 = vector.broadcast %62 : vector<1x128xf32> to vector<2x128xf32>
    %64 = arith.addf %61, %63 : vector<2x128xf32>
    %65 = arith.negf %64 : vector<2x128xf32>
    %66 = math.exp %65 : vector<2x128xf32>
    %cst_38 = arith.constant 1.000000e+00 : f32
    %67 = vector.broadcast %cst_38 : f32 to vector<2x128xf32>
    %68 = arith.addf %67, %66 : vector<2x128xf32>
    %69 = arith.divf %67, %68 : vector<2x128xf32>
    %70 = vector.extract_strided_slice %69 {offsets = [0, 0], sizes = [2, 32], strides = [1, 1]} : vector<2x128xf32> to vector<2x32xf32>
    %71 = vector.extract_strided_slice %69 {offsets = [0, 32], sizes = [2, 32], strides = [1, 1]} : vector<2x128xf32> to vector<2x32xf32>
    %72 = vector.extract_strided_slice %69 {offsets = [0, 96], sizes = [2, 32], strides = [1, 1]} : vector<2x128xf32> to vector<2x32xf32>
    %73 = vector.extract_strided_slice %64 {offsets = [0, 64], sizes = [2, 32], strides = [1, 1]} : vector<2x128xf32> to vector<2x32xf32>
    %74 = math.tanh %73 : vector<2x32xf32>
    %75 = arith.mulf %71, %23 : vector<2x32xf32>
    %76 = arith.mulf %70, %74 : vector<2x32xf32>
    %77 = arith.addf %75, %76 : vector<2x32xf32>
    %78 = math.tanh %77 : vector<2x32xf32>
    %79 = arith.mulf %72, %78 : vector<2x32xf32>
    %c496 = arith.constant 496 : index
    %c0_39 = arith.constant 0 : index
    %80 = vector.load %arg3[%c496, %c0_39] : memref<536x128xf32, #tpu.memory_space<vmem>>, vector<32x32xf32>
    %cst_40 = arith.constant dense<0.000000e+00> : vector<2x32xf32>
    %81 = tpu.matmul %79, %80, %cst_40 {dimension_numbers = #tpu.dot_dimension_numbers<[1], [0], [0], [1], [0, 0, 1, 1], [], []>} : vector<2x32xf32>, vector<32x32xf32>, vector<2x32xf32> -> vector<2x32xf32>
    %c528 = arith.constant 528 : index
    %c0_41 = arith.constant 0 : index
    %82 = vector.load %arg3[%c528, %c0_41] : memref<536x128xf32, #tpu.memory_space<vmem>>, vector<1x32xf32>
    %83 = vector.broadcast %82 : vector<1x32xf32> to vector<2x32xf32>
    %84 = arith.addf %81, %83 : vector<2x32xf32>
    %c0_42 = arith.constant 0 : index
    %c0_43 = arith.constant 0 : index
    %85 = vector.load %arg5[%c0_42, %c0_43] : memref<2x256xf32, #tpu.memory_space<vmem>>, vector<2x32xf32>
    tpu.vector_store %arg5[%c0_42, %c0_43], %84 {strides = array<i32>} : memref<2x256xf32, #tpu.memory_space<vmem>>, vector<2x32xf32>,
    %c0_44 = arith.constant 0 : index
    %c0_45 = arith.constant 0 : index
    %86 = vector.load %arg6[%c0_44, %c0_45] : memref<2x128xf32, #tpu.memory_space<vmem>>, vector<2x16xf32>
    tpu.vector_store %arg6[%c0_44, %c0_45], %44 {strides = array<i32>} : memref<2x128xf32, #tpu.memory_space<vmem>>, vector<2x16xf32>,
    %c776_46 = arith.constant 776 : index
    %c0_47 = arith.constant 0 : index
    %87 = vector.load %arg4[%c776_46, %c0_47] : memref<816x256xf32, #tpu.memory_space<vmem>>, vector<32x256xf32>
    %cst_48 = arith.constant dense<0.000000e+00> : vector<2x256xf32>
    %88 = tpu.matmul %79, %87, %cst_48 {dimension_numbers = #tpu.dot_dimension_numbers<[1], [0], [0], [1], [0, 0, 1, 1], [], []>} : vector<2x32xf32>, vector<32x256xf32>, vector<2x256xf32> -> vector<2x256xf32>
    %c808_49 = arith.constant 808 : index
    %c0_50 = arith.constant 0 : index
    %89 = vector.load %arg4[%c808_49, %c0_50] : memref<816x256xf32, #tpu.memory_space<vmem>>, vector<1x256xf32>
    %90 = vector.broadcast %89 : vector<1x256xf32> to vector<2x256xf32>
    %91 = arith.addf %88, %90 : vector<2x256xf32>
    %92 = arith.addf %11, %91 : vector<2x256xf32>
    %93 = math.tanh %92 : vector<2x256xf32>
    %c56_51 = arith.constant 56 : index
    %c0_52 = arith.constant 0 : index
    %94 = vector.load %arg3[%c56_51, %c0_52] : memref<536x128xf32, #tpu.memory_space<vmem>>, vector<256x16xf32>
    %cst_53 = arith.constant dense<0.000000e+00> : vector<2x16xf32>
    %95 = tpu.matmul %93, %94, %cst_53 {dimension_numbers = #tpu.dot_dimension_numbers<[1], [0], [0], [1], [0, 0, 1, 1], [], []>} : vector<2x256xf32>, vector<256x16xf32>, vector<2x16xf32> -> vector<2x16xf32>
    %c312_54 = arith.constant 312 : index
    %c0_55 = arith.constant 0 : index
    %96 = vector.load %arg3[%c312_54, %c0_55] : memref<536x128xf32, #tpu.memory_space<vmem>>, vector<1x1xf32>
    %97 = vector.broadcast %96 : vector<1x1xf32> to vector<2x16xf32>
    %98 = arith.addf %95, %97 : vector<2x16xf32>
    %cst_56 = arith.constant dense<0xFF800000> : vector<2xf32>
    %99 = vector.multi_reduction <maximumf>, %98, %cst_56 [1] : vector<2x16xf32> to vector<2xf32>
    %100 = vector.shape_cast %99 : vector<2xf32> to vector<2x1xf32>
    %101 = vector.broadcast %100 : vector<2x1xf32> to vector<2x16xf32>
    %102 = arith.subf %98, %101 : vector<2x16xf32>
    %103 = math.exp %102 : vector<2x16xf32>
    %cst_57 = arith.constant dense<0.000000e+00> : vector<2xf32>
    %104 = vector.multi_reduction <add>, %103, %cst_57 [1] : vector<2x16xf32> to vector<2xf32>
    %105 = vector.shape_cast %104 : vector<2xf32> to vector<2x1xf32>
    %106 = vector.broadcast %105 : vector<2x1xf32> to vector<2x16xf32>
    %107 = arith.divf %103, %106 : vector<2x16xf32>
    %108 = vector.extract_strided_slice %107 {offsets = [0, 0], sizes = [1, 16], strides = [1, 1]} : vector<2x16xf32> to vector<1x16xf32>
    %109 = vector.extract_strided_slice %5 {offsets = [0, 0], sizes = [16, 32], strides = [1, 1]} : vector<32x32xf32> to vector<16x32xf32>
    %cst_58 = arith.constant dense<0.000000e+00> : vector<1x32xf32>
    %110 = tpu.matmul %108, %109, %cst_58 {dimension_numbers = #tpu.dot_dimension_numbers<[1], [0], [0], [1], [0, 0, 1, 1], [], []>} : vector<1x16xf32>, vector<16x32xf32>, vector<1x32xf32> -> vector<1x32xf32>
    %111 = vector.extract_strided_slice %107 {offsets = [1, 0], sizes = [1, 16], strides = [1, 1]} : vector<2x16xf32> to vector<1x16xf32>
    %112 = vector.extract_strided_slice %5 {offsets = [16, 0], sizes = [16, 32], strides = [1, 1]} : vector<32x32xf32> to vector<16x32xf32>
    %cst_59 = arith.constant dense<0.000000e+00> : vector<1x32xf32>
    %113 = tpu.matmul %111, %112, %cst_59 {dimension_numbers = #tpu.dot_dimension_numbers<[1], [0], [0], [1], [0, 0, 1, 1], [], []>} : vector<1x16xf32>, vector<16x32xf32>, vector<1x32xf32> -> vector<1x32xf32>
    %114 = tpu.concatenate %110, %113 in 0 : vector<1x32xf32>, vector<1x32xf32> -> vector<2x32xf32>
    %c1 = arith.constant 1 : index
    %c0_60 = arith.constant 0 : index
    %c0_61 = arith.constant 0 : index
    %115 = vector.load %arg2[%c1, %c0_60, %c0_61] : memref<8x2x16xf32, #tpu.memory_space<vmem>>, vector<1x2x16xf32>
    %116 = vector.shape_cast %115 : vector<1x2x16xf32> to vector<2x16xf32>
    %c408_62 = arith.constant 408 : index
    %c0_63 = arith.constant 0 : index
    %117 = vector.load %arg3[%c408_62, %c0_63] : memref<536x128xf32, #tpu.memory_space<vmem>>, vector<16x128xf32>
    %cst_64 = arith.constant dense<0.000000e+00> : vector<2x128xf32>
    %118 = tpu.matmul %116, %117, %cst_64 {dimension_numbers = #tpu.dot_dimension_numbers<[1], [0], [0], [1], [0, 0, 1, 1], [], []>} : vector<2x16xf32>, vector<16x128xf32>, vector<2x128xf32> -> vector<2x128xf32>
    %c424_65 = arith.constant 424 : index
    %c0_66 = arith.constant 0 : index
    %119 = vector.load %arg3[%c424_65, %c0_66] : memref<536x128xf32, #tpu.memory_space<vmem>>, vector<32x128xf32>
    %cst_67 = arith.constant dense<0.000000e+00> : vector<2x128xf32>
    %120 = tpu.matmul %114, %119, %cst_67 {dimension_numbers = #tpu.dot_dimension_numbers<[1], [0], [0], [1], [0, 0, 1, 1], [], []>} : vector<2x32xf32>, vector<32x128xf32>, vector<2x128xf32> -> vector<2x128xf32>
    %121 = arith.addf %118, %120 : vector<2x128xf32>
    %c456_68 = arith.constant 456 : index
    %c0_69 = arith.constant 0 : index
    %122 = vector.load %arg3[%c456_68, %c0_69] : memref<536x128xf32, #tpu.memory_space<vmem>>, vector<32x128xf32>
    %cst_70 = arith.constant dense<0.000000e+00> : vector<2x128xf32>
    %123 = tpu.matmul %79, %122, %cst_70 {dimension_numbers = #tpu.dot_dimension_numbers<[1], [0], [0], [1], [0, 0, 1, 1], [], []>} : vector<2x32xf32>, vector<32x128xf32>, vector<2x128xf32> -> vector<2x128xf32>
    %124 = arith.addf %121, %123 : vector<2x128xf32>
    %c488_71 = arith.constant 488 : index
    %c0_72 = arith.constant 0 : index
    %125 = vector.load %arg3[%c488_71, %c0_72] : memref<536x128xf32, #tpu.memory_space<vmem>>, vector<1x128xf32>
    %126 = vector.broadcast %125 : vector<1x128xf32> to vector<2x128xf32>
    %127 = arith.addf %124, %126 : vector<2x128xf32>
    %128 = arith.negf %127 : vector<2x128xf32>
    %129 = math.exp %128 : vector<2x128xf32>
    %cst_73 = arith.constant 1.000000e+00 : f32
    %130 = vector.broadcast %cst_73 : f32 to vector<2x128xf32>
    %131 = arith.addf %130, %129 : vector<2x128xf32>
    %132 = arith.divf %130, %131 : vector<2x128xf32>
    %133 = vector.extract_strided_slice %132 {offsets = [0, 0], sizes = [2, 32], strides = [1, 1]} : vector<2x128xf32> to vector<2x32xf32>
    %134 = vector.extract_strided_slice %132 {offsets = [0, 32], sizes = [2, 32], strides = [1, 1]} : vector<2x128xf32> to vector<2x32xf32>
    %135 = vector.extract_strided_slice %132 {offsets = [0, 96], sizes = [2, 32], strides = [1, 1]} : vector<2x128xf32> to vector<2x32xf32>
    %136 = vector.extract_strided_slice %127 {offsets = [0, 64], sizes = [2, 32], strides = [1, 1]} : vector<2x128xf32> to vector<2x32xf32>
    %137 = math.tanh %136 : vector<2x32xf32>
    %138 = arith.mulf %134, %77 : vector<2x32xf32>
    %139 = arith.mulf %133, %137 : vector<2x32xf32>
    %140 = arith.addf %138, %139 : vector<2x32xf32>
    %141 = math.tanh %140 : vector<2x32xf32>
    %142 = arith.mulf %135, %141 : vector<2x32xf32>
    %c496_74 = arith.constant 496 : index
    %c0_75 = arith.constant 0 : index
    %143 = vector.load %arg3[%c496_74, %c0_75] : memref<536x128xf32, #tpu.memory_space<vmem>>, vector<32x32xf32>
    %cst_76 = arith.constant dense<0.000000e+00> : vector<2x32xf32>
    %144 = tpu.matmul %142, %143, %cst_76 {dimension_numbers = #tpu.dot_dimension_numbers<[1], [0], [0], [1], [0, 0, 1, 1], [], []>} : vector<2x32xf32>, vector<32x32xf32>, vector<2x32xf32> -> vector<2x32xf32>
    %c528_77 = arith.constant 528 : index
    %c0_78 = arith.constant 0 : index
    %145 = vector.load %arg3[%c528_77, %c0_78] : memref<536x128xf32, #tpu.memory_space<vmem>>, vector<1x32xf32>
    %146 = vector.broadcast %145 : vector<1x32xf32> to vector<2x32xf32>
    %147 = arith.addf %144, %146 : vector<2x32xf32>
    %c0_79 = arith.constant 0 : index
    %c32 = arith.constant 32 : index
    %148 = vector.load %arg5[%c0_79, %c32] : memref<2x256xf32, #tpu.memory_space<vmem>>, vector<2x32xf32>
    tpu.vector_store %arg5[%c0_79, %c32], %147 {strides = array<i32>} : memref<2x256xf32, #tpu.memory_space<vmem>>, vector<2x32xf32>,
    %c0_80 = arith.constant 0 : index
    %c16 = arith.constant 16 : index
    %149 = vector.load %arg6[%c0_80, %c16] : memref<2x128xf32, #tpu.memory_space<vmem>>, vector<2x16xf32>
    tpu.vector_store %arg6[%c0_80, %c16], %107 {strides = array<i32>} : memref<2x128xf32, #tpu.memory_space<vmem>>, vector<2x16xf32>,
    %c776_81 = arith.constant 776 : index
    %c0_82 = arith.constant 0 : index
    %150 = vector.load %arg4[%c776_81, %c0_82] : memref<816x256xf32, #tpu.memory_space<vmem>>, vector<32x256xf32>
    %cst_83 = arith.constant dense<0.000000e+00> : vector<2x256xf32>
    %151 = tpu.matmul %142, %150, %cst_83 {dimension_numbers = #tpu.dot_dimension_numbers<[1], [0], [0], [1], [0, 0, 1, 1], [], []>} : vector<2x32xf32>, vector<32x256xf32>, vector<2x256xf32> -> vector<2x256xf32>
    %c808_84 = arith.constant 808 : index
    %c0_85 = arith.constant 0 : index
    %152 = vector.load %arg4[%c808_84, %c0_85] : memref<816x256xf32, #tpu.memory_space<vmem>>, vector<1x256xf32>
    %153 = vector.broadcast %152 : vector<1x256xf32> to vector<2x256xf32>
    %154 = arith.addf %151, %153 : vector<2x256xf32>
    %155 = arith.addf %11, %154 : vector<2x256xf32>
    %156 = math.tanh %155 : vector<2x256xf32>
    %c56_86 = arith.constant 56 : index
    %c0_87 = arith.constant 0 : index
    %157 = vector.load %arg3[%c56_86, %c0_87] : memref<536x128xf32, #tpu.memory_space<vmem>>, vector<256x16xf32>
    %cst_88 = arith.constant dense<0.000000e+00> : vector<2x16xf32>
    %158 = tpu.matmul %156, %157, %cst_88 {dimension_numbers = #tpu.dot_dimension_numbers<[1], [0], [0], [1], [0, 0, 1, 1], [], []>} : vector<2x256xf32>, vector<256x16xf32>, vector<2x16xf32> -> vector<2x16xf32>
    %c312_89 = arith.constant 312 : index
    %c0_90 = arith.constant 0 : index
    %159 = vector.load %arg3[%c312_89, %c0_90] : memref<536x128xf32, #tpu.memory_space<vmem>>, vector<1x1xf32>
    %160 = vector.broadcast %159 : vector<1x1xf32> to vector<2x16xf32>
    %161 = arith.addf %158, %160 : vector<2x16xf32>
    %cst_91 = arith.constant dense<0xFF800000> : vector<2xf32>
    %162 = vector.multi_reduction <maximumf>, %161, %cst_91 [1] : vector<2x16xf32> to vector<2xf32>
    %163 = vector.shape_cast %162 : vector<2xf32> to vector<2x1xf32>
    %164 = vector.broadcast %163 : vector<2x1xf32> to vector<2x16xf32>
    %165 = arith.subf %161, %164 : vector<2x16xf32>
    %166 = math.exp %165 : vector<2x16xf32>
    %cst_92 = arith.constant dense<0.000000e+00> : vector<2xf32>
    %167 = vector.multi_reduction <add>, %166, %cst_92 [1] : vector<2x16xf32> to vector<2xf32>
    %168 = vector.shape_cast %167 : vector<2xf32> to vector<2x1xf32>
    %169 = vector.broadcast %168 : vector<2x1xf32> to vector<2x16xf32>
    %170 = arith.divf %166, %169 : vector<2x16xf32>
    %171 = vector.extract_strided_slice %170 {offsets = [0, 0], sizes = [1, 16], strides = [1, 1]} : vector<2x16xf32> to vector<1x16xf32>
    %172 = vector.extract_strided_slice %5 {offsets = [0, 0], sizes = [16, 32], strides = [1, 1]} : vector<32x32xf32> to vector<16x32xf32>
    %cst_93 = arith.constant dense<0.000000e+00> : vector<1x32xf32>
    %173 = tpu.matmul %171, %172, %cst_93 {dimension_numbers = #tpu.dot_dimension_numbers<[1], [0], [0], [1], [0, 0, 1, 1], [], []>} : vector<1x16xf32>, vector<16x32xf32>, vector<1x32xf32> -> vector<1x32xf32>
    %174 = vector.extract_strided_slice %170 {offsets = [1, 0], sizes = [1, 16], strides = [1, 1]} : vector<2x16xf32> to vector<1x16xf32>
    %175 = vector.extract_strided_slice %5 {offsets = [16, 0], sizes = [16, 32], strides = [1, 1]} : vector<32x32xf32> to vector<16x32xf32>
    %cst_94 = arith.constant dense<0.000000e+00> : vector<1x32xf32>
    %176 = tpu.matmul %174, %175, %cst_94 {dimension_numbers = #tpu.dot_dimension_numbers<[1], [0], [0], [1], [0, 0, 1, 1], [], []>} : vector<1x16xf32>, vector<16x32xf32>, vector<1x32xf32> -> vector<1x32xf32>
    %177 = tpu.concatenate %173, %176 in 0 : vector<1x32xf32>, vector<1x32xf32> -> vector<2x32xf32>
    %c2 = arith.constant 2 : index
    %c0_95 = arith.constant 0 : index
    %c0_96 = arith.constant 0 : index
    %178 = vector.load %arg2[%c2, %c0_95, %c0_96] : memref<8x2x16xf32, #tpu.memory_space<vmem>>, vector<1x2x16xf32>
    %179 = vector.shape_cast %178 : vector<1x2x16xf32> to vector<2x16xf32>
    %c408_97 = arith.constant 408 : index
    %c0_98 = arith.constant 0 : index
    %180 = vector.load %arg3[%c408_97, %c0_98] : memref<536x128xf32, #tpu.memory_space<vmem>>, vector<16x128xf32>
    %cst_99 = arith.constant dense<0.000000e+00> : vector<2x128xf32>
    %181 = tpu.matmul %179, %180, %cst_99 {dimension_numbers = #tpu.dot_dimension_numbers<[1], [0], [0], [1], [0, 0, 1, 1], [], []>} : vector<2x16xf32>, vector<16x128xf32>, vector<2x128xf32> -> vector<2x128xf32>
    %c424_100 = arith.constant 424 : index
    %c0_101 = arith.constant 0 : index
    %182 = vector.load %arg3[%c424_100, %c0_101] : memref<536x128xf32, #tpu.memory_space<vmem>>, vector<32x128xf32>
    %cst_102 = arith.constant dense<0.000000e+00> : vector<2x128xf32>
    %183 = tpu.matmul %177, %182, %cst_102 {dimension_numbers = #tpu.dot_dimension_numbers<[1], [0], [0], [1], [0, 0, 1, 1], [], []>} : vector<2x32xf32>, vector<32x128xf32>, vector<2x128xf32> -> vector<2x128xf32>
    %184 = arith.addf %181, %183 : vector<2x128xf32>
    %c456_103 = arith.constant 456 : index
    %c0_104 = arith.constant 0 : index
    %185 = vector.load %arg3[%c456_103, %c0_104] : memref<536x128xf32, #tpu.memory_space<vmem>>, vector<32x128xf32>
    %cst_105 = arith.constant dense<0.000000e+00> : vector<2x128xf32>
    %186 = tpu.matmul %142, %185, %cst_105 {dimension_numbers = #tpu.dot_dimension_numbers<[1], [0], [0], [1], [0, 0, 1, 1], [], []>} : vector<2x32xf32>, vector<32x128xf32>, vector<2x128xf32> -> vector<2x128xf32>
    %187 = arith.addf %184, %186 : vector<2x128xf32>
    %c488_106 = arith.constant 488 : index
    %c0_107 = arith.constant 0 : index
    %188 = vector.load %arg3[%c488_106, %c0_107] : memref<536x128xf32, #tpu.memory_space<vmem>>, vector<1x128xf32>
    %189 = vector.broadcast %188 : vector<1x128xf32> to vector<2x128xf32>
    %190 = arith.addf %187, %189 : vector<2x128xf32>
    %191 = arith.negf %190 : vector<2x128xf32>
    %192 = math.exp %191 : vector<2x128xf32>
    %cst_108 = arith.constant 1.000000e+00 : f32
    %193 = vector.broadcast %cst_108 : f32 to vector<2x128xf32>
    %194 = arith.addf %193, %192 : vector<2x128xf32>
    %195 = arith.divf %193, %194 : vector<2x128xf32>
    %196 = vector.extract_strided_slice %195 {offsets = [0, 0], sizes = [2, 32], strides = [1, 1]} : vector<2x128xf32> to vector<2x32xf32>
    %197 = vector.extract_strided_slice %195 {offsets = [0, 32], sizes = [2, 32], strides = [1, 1]} : vector<2x128xf32> to vector<2x32xf32>
    %198 = vector.extract_strided_slice %195 {offsets = [0, 96], sizes = [2, 32], strides = [1, 1]} : vector<2x128xf32> to vector<2x32xf32>
    %199 = vector.extract_strided_slice %190 {offsets = [0, 64], sizes = [2, 32], strides = [1, 1]} : vector<2x128xf32> to vector<2x32xf32>
    %200 = math.tanh %199 : vector<2x32xf32>
    %201 = arith.mulf %197, %140 : vector<2x32xf32>
    %202 = arith.mulf %196, %200 : vector<2x32xf32>
    %203 = arith.addf %201, %202 : vector<2x32xf32>
    %204 = math.tanh %203 : vector<2x32xf32>
    %205 = arith.mulf %198, %204 : vector<2x32xf32>
    %c496_109 = arith.constant 496 : index
    %c0_110 = arith.constant 0 : index
    %206 = vector.load %arg3[%c496_109, %c0_110] : memref<536x128xf32, #tpu.memory_space<vmem>>, vector<32x32xf32>
    %cst_111 = arith.constant dense<0.000000e+00> : vector<2x32xf32>
    %207 = tpu.matmul %205, %206, %cst_111 {dimension_numbers = #tpu.dot_dimension_numbers<[1], [0], [0], [1], [0, 0, 1, 1], [], []>} : vector<2x32xf32>, vector<32x32xf32>, vector<2x32xf32> -> vector<2x32xf32>
    %c528_112 = arith.constant 528 : index
    %c0_113 = arith.constant 0 : index
    %208 = vector.load %arg3[%c528_112, %c0_113] : memref<536x128xf32, #tpu.memory_space<vmem>>, vector<1x32xf32>
    %209 = vector.broadcast %208 : vector<1x32xf32> to vector<2x32xf32>
    %210 = arith.addf %207, %209 : vector<2x32xf32>
    %c0_114 = arith.constant 0 : index
    %c64 = arith.constant 64 : index
    %211 = vector.load %arg5[%c0_114, %c64] : memref<2x256xf32, #tpu.memory_space<vmem>>, vector<2x32xf32>
    tpu.vector_store %arg5[%c0_114, %c64], %210 {strides = array<i32>} : memref<2x256xf32, #tpu.memory_space<vmem>>, vector<2x32xf32>,
    %c0_115 = arith.constant 0 : index
    %c32_116 = arith.constant 32 : index
    %212 = vector.load %arg6[%c0_115, %c32_116] : memref<2x128xf32, #tpu.memory_space<vmem>>, vector<2x16xf32>
    tpu.vector_store %arg6[%c0_115, %c32_116], %170 {strides = array<i32>} : memref<2x128xf32, #tpu.memory_space<vmem>>, vector<2x16xf32>,
    %c776_117 = arith.constant 776 : index
    %c0_118 = arith.constant 0 : index
    %213 = vector.load %arg4[%c776_117, %c0_118] : memref<816x256xf32, #tpu.memory_space<vmem>>, vector<32x256xf32>
    %cst_119 = arith.constant dense<0.000000e+00> : vector<2x256xf32>
    %214 = tpu.matmul %205, %213, %cst_119 {dimension_numbers = #tpu.dot_dimension_numbers<[1], [0], [0], [1], [0, 0, 1, 1], [], []>} : vector<2x32xf32>, vector<32x256xf32>, vector<2x256xf32> -> vector<2x256xf32>
    %c808_120 = arith.constant 808 : index
    %c0_121 = arith.constant 0 : index
    %215 = vector.load %arg4[%c808_120, %c0_121] : memref<816x256xf32, #tpu.memory_space<vmem>>, vector<1x256xf32>
    %216 = vector.broadcast %215 : vector<1x256xf32> to vector<2x256xf32>
    %217 = arith.addf %214, %216 : vector<2x256xf32>
    %218 = arith.addf %11, %217 : vector<2x256xf32>
    %219 = math.tanh %218 : vector<2x256xf32>
    %c56_122 = arith.constant 56 : index
    %c0_123 = arith.constant 0 : index
    %220 = vector.load %arg3[%c56_122, %c0_123] : memref<536x128xf32, #tpu.memory_space<vmem>>, vector<256x16xf32>
    %cst_124 = arith.constant dense<0.000000e+00> : vector<2x16xf32>
    %221 = tpu.matmul %219, %220, %cst_124 {dimension_numbers = #tpu.dot_dimension_numbers<[1], [0], [0], [1], [0, 0, 1, 1], [], []>} : vector<2x256xf32>, vector<256x16xf32>, vector<2x16xf32> -> vector<2x16xf32>
    %c312_125 = arith.constant 312 : index
    %c0_126 = arith.constant 0 : index
    %222 = vector.load %arg3[%c312_125, %c0_126] : memref<536x128xf32, #tpu.memory_space<vmem>>, vector<1x1xf32>
    %223 = vector.broadcast %222 : vector<1x1xf32> to vector<2x16xf32>
    %224 = arith.addf %221, %223 : vector<2x16xf32>
    %cst_127 = arith.constant dense<0xFF800000> : vector<2xf32>
    %225 = vector.multi_reduction <maximumf>, %224, %cst_127 [1] : vector<2x16xf32> to vector<2xf32>
    %226 = vector.shape_cast %225 : vector<2xf32> to vector<2x1xf32>
    %227 = vector.broadcast %226 : vector<2x1xf32> to vector<2x16xf32>
    %228 = arith.subf %224, %227 : vector<2x16xf32>
    %229 = math.exp %228 : vector<2x16xf32>
    %cst_128 = arith.constant dense<0.000000e+00> : vector<2xf32>
    %230 = vector.multi_reduction <add>, %229, %cst_128 [1] : vector<2x16xf32> to vector<2xf32>
    %231 = vector.shape_cast %230 : vector<2xf32> to vector<2x1xf32>
    %232 = vector.broadcast %231 : vector<2x1xf32> to vector<2x16xf32>
    %233 = arith.divf %229, %232 : vector<2x16xf32>
    %234 = vector.extract_strided_slice %233 {offsets = [0, 0], sizes = [1, 16], strides = [1, 1]} : vector<2x16xf32> to vector<1x16xf32>
    %235 = vector.extract_strided_slice %5 {offsets = [0, 0], sizes = [16, 32], strides = [1, 1]} : vector<32x32xf32> to vector<16x32xf32>
    %cst_129 = arith.constant dense<0.000000e+00> : vector<1x32xf32>
    %236 = tpu.matmul %234, %235, %cst_129 {dimension_numbers = #tpu.dot_dimension_numbers<[1], [0], [0], [1], [0, 0, 1, 1], [], []>} : vector<1x16xf32>, vector<16x32xf32>, vector<1x32xf32> -> vector<1x32xf32>
    %237 = vector.extract_strided_slice %233 {offsets = [1, 0], sizes = [1, 16], strides = [1, 1]} : vector<2x16xf32> to vector<1x16xf32>
    %238 = vector.extract_strided_slice %5 {offsets = [16, 0], sizes = [16, 32], strides = [1, 1]} : vector<32x32xf32> to vector<16x32xf32>
    %cst_130 = arith.constant dense<0.000000e+00> : vector<1x32xf32>
    %239 = tpu.matmul %237, %238, %cst_130 {dimension_numbers = #tpu.dot_dimension_numbers<[1], [0], [0], [1], [0, 0, 1, 1], [], []>} : vector<1x16xf32>, vector<16x32xf32>, vector<1x32xf32> -> vector<1x32xf32>
    %240 = tpu.concatenate %236, %239 in 0 : vector<1x32xf32>, vector<1x32xf32> -> vector<2x32xf32>
    %c3 = arith.constant 3 : index
    %c0_131 = arith.constant 0 : index
    %c0_132 = arith.constant 0 : index
    %241 = vector.load %arg2[%c3, %c0_131, %c0_132] : memref<8x2x16xf32, #tpu.memory_space<vmem>>, vector<1x2x16xf32>
    %242 = vector.shape_cast %241 : vector<1x2x16xf32> to vector<2x16xf32>
    %c408_133 = arith.constant 408 : index
    %c0_134 = arith.constant 0 : index
    %243 = vector.load %arg3[%c408_133, %c0_134] : memref<536x128xf32, #tpu.memory_space<vmem>>, vector<16x128xf32>
    %cst_135 = arith.constant dense<0.000000e+00> : vector<2x128xf32>
    %244 = tpu.matmul %242, %243, %cst_135 {dimension_numbers = #tpu.dot_dimension_numbers<[1], [0], [0], [1], [0, 0, 1, 1], [], []>} : vector<2x16xf32>, vector<16x128xf32>, vector<2x128xf32> -> vector<2x128xf32>
    %c424_136 = arith.constant 424 : index
    %c0_137 = arith.constant 0 : index
    %245 = vector.load %arg3[%c424_136, %c0_137] : memref<536x128xf32, #tpu.memory_space<vmem>>, vector<32x128xf32>
    %cst_138 = arith.constant dense<0.000000e+00> : vector<2x128xf32>
    %246 = tpu.matmul %240, %245, %cst_138 {dimension_numbers = #tpu.dot_dimension_numbers<[1], [0], [0], [1], [0, 0, 1, 1], [], []>} : vector<2x32xf32>, vector<32x128xf32>, vector<2x128xf32> -> vector<2x128xf32>
    %247 = arith.addf %244, %246 : vector<2x128xf32>
    %c456_139 = arith.constant 456 : index
    %c0_140 = arith.constant 0 : index
    %248 = vector.load %arg3[%c456_139, %c0_140] : memref<536x128xf32, #tpu.memory_space<vmem>>, vector<32x128xf32>
    %cst_141 = arith.constant dense<0.000000e+00> : vector<2x128xf32>
    %249 = tpu.matmul %205, %248, %cst_141 {dimension_numbers = #tpu.dot_dimension_numbers<[1], [0], [0], [1], [0, 0, 1, 1], [], []>} : vector<2x32xf32>, vector<32x128xf32>, vector<2x128xf32> -> vector<2x128xf32>
    %250 = arith.addf %247, %249 : vector<2x128xf32>
    %c488_142 = arith.constant 488 : index
    %c0_143 = arith.constant 0 : index
    %251 = vector.load %arg3[%c488_142, %c0_143] : memref<536x128xf32, #tpu.memory_space<vmem>>, vector<1x128xf32>
    %252 = vector.broadcast %251 : vector<1x128xf32> to vector<2x128xf32>
    %253 = arith.addf %250, %252 : vector<2x128xf32>
    %254 = arith.negf %253 : vector<2x128xf32>
    %255 = math.exp %254 : vector<2x128xf32>
    %cst_144 = arith.constant 1.000000e+00 : f32
    %256 = vector.broadcast %cst_144 : f32 to vector<2x128xf32>
    %257 = arith.addf %256, %255 : vector<2x128xf32>
    %258 = arith.divf %256, %257 : vector<2x128xf32>
    %259 = vector.extract_strided_slice %258 {offsets = [0, 0], sizes = [2, 32], strides = [1, 1]} : vector<2x128xf32> to vector<2x32xf32>
    %260 = vector.extract_strided_slice %258 {offsets = [0, 32], sizes = [2, 32], strides = [1, 1]} : vector<2x128xf32> to vector<2x32xf32>
    %261 = vector.extract_strided_slice %258 {offsets = [0, 96], sizes = [2, 32], strides = [1, 1]} : vector<2x128xf32> to vector<2x32xf32>
    %262 = vector.extract_strided_slice %253 {offsets = [0, 64], sizes = [2, 32], strides = [1, 1]} : vector<2x128xf32> to vector<2x32xf32>
    %263 = math.tanh %262 : vector<2x32xf32>
    %264 = arith.mulf %260, %203 : vector<2x32xf32>
    %265 = arith.mulf %259, %263 : vector<2x32xf32>
    %266 = arith.addf %264, %265 : vector<2x32xf32>
    %267 = math.tanh %266 : vector<2x32xf32>
    %268 = arith.mulf %261, %267 : vector<2x32xf32>
    %c496_145 = arith.constant 496 : index
    %c0_146 = arith.constant 0 : index
    %269 = vector.load %arg3[%c496_145, %c0_146] : memref<536x128xf32, #tpu.memory_space<vmem>>, vector<32x32xf32>
    %cst_147 = arith.constant dense<0.000000e+00> : vector<2x32xf32>
    %270 = tpu.matmul %268, %269, %cst_147 {dimension_numbers = #tpu.dot_dimension_numbers<[1], [0], [0], [1], [0, 0, 1, 1], [], []>} : vector<2x32xf32>, vector<32x32xf32>, vector<2x32xf32> -> vector<2x32xf32>
    %c528_148 = arith.constant 528 : index
    %c0_149 = arith.constant 0 : index
    %271 = vector.load %arg3[%c528_148, %c0_149] : memref<536x128xf32, #tpu.memory_space<vmem>>, vector<1x32xf32>
    %272 = vector.broadcast %271 : vector<1x32xf32> to vector<2x32xf32>
    %273 = arith.addf %270, %272 : vector<2x32xf32>
    %c0_150 = arith.constant 0 : index
    %c96 = arith.constant 96 : index
    %274 = vector.load %arg5[%c0_150, %c96] : memref<2x256xf32, #tpu.memory_space<vmem>>, vector<2x32xf32>
    tpu.vector_store %arg5[%c0_150, %c96], %273 {strides = array<i32>} : memref<2x256xf32, #tpu.memory_space<vmem>>, vector<2x32xf32>,
    %c0_151 = arith.constant 0 : index
    %c48_152 = arith.constant 48 : index
    %275 = vector.load %arg6[%c0_151, %c48_152] : memref<2x128xf32, #tpu.memory_space<vmem>>, vector<2x16xf32>
    tpu.vector_store %arg6[%c0_151, %c48_152], %233 {strides = array<i32>} : memref<2x128xf32, #tpu.memory_space<vmem>>, vector<2x16xf32>,
    %c776_153 = arith.constant 776 : index
    %c0_154 = arith.constant 0 : index
    %276 = vector.load %arg4[%c776_153, %c0_154] : memref<816x256xf32, #tpu.memory_space<vmem>>, vector<32x256xf32>
    %cst_155 = arith.constant dense<0.000000e+00> : vector<2x256xf32>
    %277 = tpu.matmul %268, %276, %cst_155 {dimension_numbers = #tpu.dot_dimension_numbers<[1], [0], [0], [1], [0, 0, 1, 1], [], []>} : vector<2x32xf32>, vector<32x256xf32>, vector<2x256xf32> -> vector<2x256xf32>
    %c808_156 = arith.constant 808 : index
    %c0_157 = arith.constant 0 : index
    %278 = vector.load %arg4[%c808_156, %c0_157] : memref<816x256xf32, #tpu.memory_space<vmem>>, vector<1x256xf32>
    %279 = vector.broadcast %278 : vector<1x256xf32> to vector<2x256xf32>
    %280 = arith.addf %277, %279 : vector<2x256xf32>
    %281 = arith.addf %11, %280 : vector<2x256xf32>
    %282 = math.tanh %281 : vector<2x256xf32>
    %c56_158 = arith.constant 56 : index
    %c0_159 = arith.constant 0 : index
    %283 = vector.load %arg3[%c56_158, %c0_159] : memref<536x128xf32, #tpu.memory_space<vmem>>, vector<256x16xf32>
    %cst_160 = arith.constant dense<0.000000e+00> : vector<2x16xf32>
    %284 = tpu.matmul %282, %283, %cst_160 {dimension_numbers = #tpu.dot_dimension_numbers<[1], [0], [0], [1], [0, 0, 1, 1], [], []>} : vector<2x256xf32>, vector<256x16xf32>, vector<2x16xf32> -> vector<2x16xf32>
    %c312_161 = arith.constant 312 : index
    %c0_162 = arith.constant 0 : index
    %285 = vector.load %arg3[%c312_161, %c0_162] : memref<536x128xf32, #tpu.memory_space<vmem>>, vector<1x1xf32>
    %286 = vector.broadcast %285 : vector<1x1xf32> to vector<2x16xf32>
    %287 = arith.addf %284, %286 : vector<2x16xf32>
    %cst_163 = arith.constant dense<0xFF800000> : vector<2xf32>
    %288 = vector.multi_reduction <maximumf>, %287, %cst_163 [1] : vector<2x16xf32> to vector<2xf32>
    %289 = vector.shape_cast %288 : vector<2xf32> to vector<2x1xf32>
    %290 = vector.broadcast %289 : vector<2x1xf32> to vector<2x16xf32>
    %291 = arith.subf %287, %290 : vector<2x16xf32>
    %292 = math.exp %291 : vector<2x16xf32>
    %cst_164 = arith.constant dense<0.000000e+00> : vector<2xf32>
    %293 = vector.multi_reduction <add>, %292, %cst_164 [1] : vector<2x16xf32> to vector<2xf32>
    %294 = vector.shape_cast %293 : vector<2xf32> to vector<2x1xf32>
    %295 = vector.broadcast %294 : vector<2x1xf32> to vector<2x16xf32>
    %296 = arith.divf %292, %295 : vector<2x16xf32>
    %297 = vector.extract_strided_slice %296 {offsets = [0, 0], sizes = [1, 16], strides = [1, 1]} : vector<2x16xf32> to vector<1x16xf32>
    %298 = vector.extract_strided_slice %5 {offsets = [0, 0], sizes = [16, 32], strides = [1, 1]} : vector<32x32xf32> to vector<16x32xf32>
    %cst_165 = arith.constant dense<0.000000e+00> : vector<1x32xf32>
    %299 = tpu.matmul %297, %298, %cst_165 {dimension_numbers = #tpu.dot_dimension_numbers<[1], [0], [0], [1], [0, 0, 1, 1], [], []>} : vector<1x16xf32>, vector<16x32xf32>, vector<1x32xf32> -> vector<1x32xf32>
    %300 = vector.extract_strided_slice %296 {offsets = [1, 0], sizes = [1, 16], strides = [1, 1]} : vector<2x16xf32> to vector<1x16xf32>
    %301 = vector.extract_strided_slice %5 {offsets = [16, 0], sizes = [16, 32], strides = [1, 1]} : vector<32x32xf32> to vector<16x32xf32>
    %cst_166 = arith.constant dense<0.000000e+00> : vector<1x32xf32>
    %302 = tpu.matmul %300, %301, %cst_166 {dimension_numbers = #tpu.dot_dimension_numbers<[1], [0], [0], [1], [0, 0, 1, 1], [], []>} : vector<1x16xf32>, vector<16x32xf32>, vector<1x32xf32> -> vector<1x32xf32>
    %303 = tpu.concatenate %299, %302 in 0 : vector<1x32xf32>, vector<1x32xf32> -> vector<2x32xf32>
    %c4 = arith.constant 4 : index
    %c0_167 = arith.constant 0 : index
    %c0_168 = arith.constant 0 : index
    %304 = vector.load %arg2[%c4, %c0_167, %c0_168] : memref<8x2x16xf32, #tpu.memory_space<vmem>>, vector<1x2x16xf32>
    %305 = vector.shape_cast %304 : vector<1x2x16xf32> to vector<2x16xf32>
    %c408_169 = arith.constant 408 : index
    %c0_170 = arith.constant 0 : index
    %306 = vector.load %arg3[%c408_169, %c0_170] : memref<536x128xf32, #tpu.memory_space<vmem>>, vector<16x128xf32>
    %cst_171 = arith.constant dense<0.000000e+00> : vector<2x128xf32>
    %307 = tpu.matmul %305, %306, %cst_171 {dimension_numbers = #tpu.dot_dimension_numbers<[1], [0], [0], [1], [0, 0, 1, 1], [], []>} : vector<2x16xf32>, vector<16x128xf32>, vector<2x128xf32> -> vector<2x128xf32>
    %c424_172 = arith.constant 424 : index
    %c0_173 = arith.constant 0 : index
    %308 = vector.load %arg3[%c424_172, %c0_173] : memref<536x128xf32, #tpu.memory_space<vmem>>, vector<32x128xf32>
    %cst_174 = arith.constant dense<0.000000e+00> : vector<2x128xf32>
    %309 = tpu.matmul %303, %308, %cst_174 {dimension_numbers = #tpu.dot_dimension_numbers<[1], [0], [0], [1], [0, 0, 1, 1], [], []>} : vector<2x32xf32>, vector<32x128xf32>, vector<2x128xf32> -> vector<2x128xf32>
    %310 = arith.addf %307, %309 : vector<2x128xf32>
    %c456_175 = arith.constant 456 : index
    %c0_176 = arith.constant 0 : index
    %311 = vector.load %arg3[%c456_175, %c0_176] : memref<536x128xf32, #tpu.memory_space<vmem>>, vector<32x128xf32>
    %cst_177 = arith.constant dense<0.000000e+00> : vector<2x128xf32>
    %312 = tpu.matmul %268, %311, %cst_177 {dimension_numbers = #tpu.dot_dimension_numbers<[1], [0], [0], [1], [0, 0, 1, 1], [], []>} : vector<2x32xf32>, vector<32x128xf32>, vector<2x128xf32> -> vector<2x128xf32>
    %313 = arith.addf %310, %312 : vector<2x128xf32>
    %c488_178 = arith.constant 488 : index
    %c0_179 = arith.constant 0 : index
    %314 = vector.load %arg3[%c488_178, %c0_179] : memref<536x128xf32, #tpu.memory_space<vmem>>, vector<1x128xf32>
    %315 = vector.broadcast %314 : vector<1x128xf32> to vector<2x128xf32>
    %316 = arith.addf %313, %315 : vector<2x128xf32>
    %317 = arith.negf %316 : vector<2x128xf32>
    %318 = math.exp %317 : vector<2x128xf32>
    %cst_180 = arith.constant 1.000000e+00 : f32
    %319 = vector.broadcast %cst_180 : f32 to vector<2x128xf32>
    %320 = arith.addf %319, %318 : vector<2x128xf32>
    %321 = arith.divf %319, %320 : vector<2x128xf32>
    %322 = vector.extract_strided_slice %321 {offsets = [0, 0], sizes = [2, 32], strides = [1, 1]} : vector<2x128xf32> to vector<2x32xf32>
    %323 = vector.extract_strided_slice %321 {offsets = [0, 32], sizes = [2, 32], strides = [1, 1]} : vector<2x128xf32> to vector<2x32xf32>
    %324 = vector.extract_strided_slice %321 {offsets = [0, 96], sizes = [2, 32], strides = [1, 1]} : vector<2x128xf32> to vector<2x32xf32>
    %325 = vector.extract_strided_slice %316 {offsets = [0, 64], sizes = [2, 32], strides = [1, 1]} : vector<2x128xf32> to vector<2x32xf32>
    %326 = math.tanh %325 : vector<2x32xf32>
    %327 = arith.mulf %323, %266 : vector<2x32xf32>
    %328 = arith.mulf %322, %326 : vector<2x32xf32>
    %329 = arith.addf %327, %328 : vector<2x32xf32>
    %330 = math.tanh %329 : vector<2x32xf32>
    %331 = arith.mulf %324, %330 : vector<2x32xf32>
    %c496_181 = arith.constant 496 : index
    %c0_182 = arith.constant 0 : index
    %332 = vector.load %arg3[%c496_181, %c0_182] : memref<536x128xf32, #tpu.memory_space<vmem>>, vector<32x32xf32>
    %cst_183 = arith.constant dense<0.000000e+00> : vector<2x32xf32>
    %333 = tpu.matmul %331, %332, %cst_183 {dimension_numbers = #tpu.dot_dimension_numbers<[1], [0], [0], [1], [0, 0, 1, 1], [], []>} : vector<2x32xf32>, vector<32x32xf32>, vector<2x32xf32> -> vector<2x32xf32>
    %c528_184 = arith.constant 528 : index
    %c0_185 = arith.constant 0 : index
    %334 = vector.load %arg3[%c528_184, %c0_185] : memref<536x128xf32, #tpu.memory_space<vmem>>, vector<1x32xf32>
    %335 = vector.broadcast %334 : vector<1x32xf32> to vector<2x32xf32>
    %336 = arith.addf %333, %335 : vector<2x32xf32>
    %c0_186 = arith.constant 0 : index
    %c128 = arith.constant 128 : index
    %337 = vector.load %arg5[%c0_186, %c128] : memref<2x256xf32, #tpu.memory_space<vmem>>, vector<2x32xf32>
    tpu.vector_store %arg5[%c0_186, %c128], %336 {strides = array<i32>} : memref<2x256xf32, #tpu.memory_space<vmem>>, vector<2x32xf32>,
    %c0_187 = arith.constant 0 : index
    %c64_188 = arith.constant 64 : index
    %338 = vector.load %arg6[%c0_187, %c64_188] : memref<2x128xf32, #tpu.memory_space<vmem>>, vector<2x16xf32>
    tpu.vector_store %arg6[%c0_187, %c64_188], %296 {strides = array<i32>} : memref<2x128xf32, #tpu.memory_space<vmem>>, vector<2x16xf32>,
    %c776_189 = arith.constant 776 : index
    %c0_190 = arith.constant 0 : index
    %339 = vector.load %arg4[%c776_189, %c0_190] : memref<816x256xf32, #tpu.memory_space<vmem>>, vector<32x256xf32>
    %cst_191 = arith.constant dense<0.000000e+00> : vector<2x256xf32>
    %340 = tpu.matmul %331, %339, %cst_191 {dimension_numbers = #tpu.dot_dimension_numbers<[1], [0], [0], [1], [0, 0, 1, 1], [], []>} : vector<2x32xf32>, vector<32x256xf32>, vector<2x256xf32> -> vector<2x256xf32>
    %c808_192 = arith.constant 808 : index
    %c0_193 = arith.constant 0 : index
    %341 = vector.load %arg4[%c808_192, %c0_193] : memref<816x256xf32, #tpu.memory_space<vmem>>, vector<1x256xf32>
    %342 = vector.broadcast %341 : vector<1x256xf32> to vector<2x256xf32>
    %343 = arith.addf %340, %342 : vector<2x256xf32>
    %344 = arith.addf %11, %343 : vector<2x256xf32>
    %345 = math.tanh %344 : vector<2x256xf32>
    %c56_194 = arith.constant 56 : index
    %c0_195 = arith.constant 0 : index
    %346 = vector.load %arg3[%c56_194, %c0_195] : memref<536x128xf32, #tpu.memory_space<vmem>>, vector<256x16xf32>
    %cst_196 = arith.constant dense<0.000000e+00> : vector<2x16xf32>
    %347 = tpu.matmul %345, %346, %cst_196 {dimension_numbers = #tpu.dot_dimension_numbers<[1], [0], [0], [1], [0, 0, 1, 1], [], []>} : vector<2x256xf32>, vector<256x16xf32>, vector<2x16xf32> -> vector<2x16xf32>
    %c312_197 = arith.constant 312 : index
    %c0_198 = arith.constant 0 : index
    %348 = vector.load %arg3[%c312_197, %c0_198] : memref<536x128xf32, #tpu.memory_space<vmem>>, vector<1x1xf32>
    %349 = vector.broadcast %348 : vector<1x1xf32> to vector<2x16xf32>
    %350 = arith.addf %347, %349 : vector<2x16xf32>
    %cst_199 = arith.constant dense<0xFF800000> : vector<2xf32>
    %351 = vector.multi_reduction <maximumf>, %350, %cst_199 [1] : vector<2x16xf32> to vector<2xf32>
    %352 = vector.shape_cast %351 : vector<2xf32> to vector<2x1xf32>
    %353 = vector.broadcast %352 : vector<2x1xf32> to vector<2x16xf32>
    %354 = arith.subf %350, %353 : vector<2x16xf32>
    %355 = math.exp %354 : vector<2x16xf32>
    %cst_200 = arith.constant dense<0.000000e+00> : vector<2xf32>
    %356 = vector.multi_reduction <add>, %355, %cst_200 [1] : vector<2x16xf32> to vector<2xf32>
    %357 = vector.shape_cast %356 : vector<2xf32> to vector<2x1xf32>
    %358 = vector.broadcast %357 : vector<2x1xf32> to vector<2x16xf32>
    %359 = arith.divf %355, %358 : vector<2x16xf32>
    %360 = vector.extract_strided_slice %359 {offsets = [0, 0], sizes = [1, 16], strides = [1, 1]} : vector<2x16xf32> to vector<1x16xf32>
    %361 = vector.extract_strided_slice %5 {offsets = [0, 0], sizes = [16, 32], strides = [1, 1]} : vector<32x32xf32> to vector<16x32xf32>
    %cst_201 = arith.constant dense<0.000000e+00> : vector<1x32xf32>
    %362 = tpu.matmul %360, %361, %cst_201 {dimension_numbers = #tpu.dot_dimension_numbers<[1], [0], [0], [1], [0, 0, 1, 1], [], []>} : vector<1x16xf32>, vector<16x32xf32>, vector<1x32xf32> -> vector<1x32xf32>
    %363 = vector.extract_strided_slice %359 {offsets = [1, 0], sizes = [1, 16], strides = [1, 1]} : vector<2x16xf32> to vector<1x16xf32>
    %364 = vector.extract_strided_slice %5 {offsets = [16, 0], sizes = [16, 32], strides = [1, 1]} : vector<32x32xf32> to vector<16x32xf32>
    %cst_202 = arith.constant dense<0.000000e+00> : vector<1x32xf32>
    %365 = tpu.matmul %363, %364, %cst_202 {dimension_numbers = #tpu.dot_dimension_numbers<[1], [0], [0], [1], [0, 0, 1, 1], [], []>} : vector<1x16xf32>, vector<16x32xf32>, vector<1x32xf32> -> vector<1x32xf32>
    %366 = tpu.concatenate %362, %365 in 0 : vector<1x32xf32>, vector<1x32xf32> -> vector<2x32xf32>
    %c5 = arith.constant 5 : index
    %c0_203 = arith.constant 0 : index
    %c0_204 = arith.constant 0 : index
    %367 = vector.load %arg2[%c5, %c0_203, %c0_204] : memref<8x2x16xf32, #tpu.memory_space<vmem>>, vector<1x2x16xf32>
    %368 = vector.shape_cast %367 : vector<1x2x16xf32> to vector<2x16xf32>
    %c408_205 = arith.constant 408 : index
    %c0_206 = arith.constant 0 : index
    %369 = vector.load %arg3[%c408_205, %c0_206] : memref<536x128xf32, #tpu.memory_space<vmem>>, vector<16x128xf32>
    %cst_207 = arith.constant dense<0.000000e+00> : vector<2x128xf32>
    %370 = tpu.matmul %368, %369, %cst_207 {dimension_numbers = #tpu.dot_dimension_numbers<[1], [0], [0], [1], [0, 0, 1, 1], [], []>} : vector<2x16xf32>, vector<16x128xf32>, vector<2x128xf32> -> vector<2x128xf32>
    %c424_208 = arith.constant 424 : index
    %c0_209 = arith.constant 0 : index
    %371 = vector.load %arg3[%c424_208, %c0_209] : memref<536x128xf32, #tpu.memory_space<vmem>>, vector<32x128xf32>
    %cst_210 = arith.constant dense<0.000000e+00> : vector<2x128xf32>
    %372 = tpu.matmul %366, %371, %cst_210 {dimension_numbers = #tpu.dot_dimension_numbers<[1], [0], [0], [1], [0, 0, 1, 1], [], []>} : vector<2x32xf32>, vector<32x128xf32>, vector<2x128xf32> -> vector<2x128xf32>
    %373 = arith.addf %370, %372 : vector<2x128xf32>
    %c456_211 = arith.constant 456 : index
    %c0_212 = arith.constant 0 : index
    %374 = vector.load %arg3[%c456_211, %c0_212] : memref<536x128xf32, #tpu.memory_space<vmem>>, vector<32x128xf32>
    %cst_213 = arith.constant dense<0.000000e+00> : vector<2x128xf32>
    %375 = tpu.matmul %331, %374, %cst_213 {dimension_numbers = #tpu.dot_dimension_numbers<[1], [0], [0], [1], [0, 0, 1, 1], [], []>} : vector<2x32xf32>, vector<32x128xf32>, vector<2x128xf32> -> vector<2x128xf32>
    %376 = arith.addf %373, %375 : vector<2x128xf32>
    %c488_214 = arith.constant 488 : index
    %c0_215 = arith.constant 0 : index
    %377 = vector.load %arg3[%c488_214, %c0_215] : memref<536x128xf32, #tpu.memory_space<vmem>>, vector<1x128xf32>
    %378 = vector.broadcast %377 : vector<1x128xf32> to vector<2x128xf32>
    %379 = arith.addf %376, %378 : vector<2x128xf32>
    %380 = arith.negf %379 : vector<2x128xf32>
    %381 = math.exp %380 : vector<2x128xf32>
    %cst_216 = arith.constant 1.000000e+00 : f32
    %382 = vector.broadcast %cst_216 : f32 to vector<2x128xf32>
    %383 = arith.addf %382, %381 : vector<2x128xf32>
    %384 = arith.divf %382, %383 : vector<2x128xf32>
    %385 = vector.extract_strided_slice %384 {offsets = [0, 0], sizes = [2, 32], strides = [1, 1]} : vector<2x128xf32> to vector<2x32xf32>
    %386 = vector.extract_strided_slice %384 {offsets = [0, 32], sizes = [2, 32], strides = [1, 1]} : vector<2x128xf32> to vector<2x32xf32>
    %387 = vector.extract_strided_slice %384 {offsets = [0, 96], sizes = [2, 32], strides = [1, 1]} : vector<2x128xf32> to vector<2x32xf32>
    %388 = vector.extract_strided_slice %379 {offsets = [0, 64], sizes = [2, 32], strides = [1, 1]} : vector<2x128xf32> to vector<2x32xf32>
    %389 = math.tanh %388 : vector<2x32xf32>
    %390 = arith.mulf %386, %329 : vector<2x32xf32>
    %391 = arith.mulf %385, %389 : vector<2x32xf32>
    %392 = arith.addf %390, %391 : vector<2x32xf32>
    %393 = math.tanh %392 : vector<2x32xf32>
    %394 = arith.mulf %387, %393 : vector<2x32xf32>
    %c496_217 = arith.constant 496 : index
    %c0_218 = arith.constant 0 : index
    %395 = vector.load %arg3[%c496_217, %c0_218] : memref<536x128xf32, #tpu.memory_space<vmem>>, vector<32x32xf32>
    %cst_219 = arith.constant dense<0.000000e+00> : vector<2x32xf32>
    %396 = tpu.matmul %394, %395, %cst_219 {dimension_numbers = #tpu.dot_dimension_numbers<[1], [0], [0], [1], [0, 0, 1, 1], [], []>} : vector<2x32xf32>, vector<32x32xf32>, vector<2x32xf32> -> vector<2x32xf32>
    %c528_220 = arith.constant 528 : index
    %c0_221 = arith.constant 0 : index
    %397 = vector.load %arg3[%c528_220, %c0_221] : memref<536x128xf32, #tpu.memory_space<vmem>>, vector<1x32xf32>
    %398 = vector.broadcast %397 : vector<1x32xf32> to vector<2x32xf32>
    %399 = arith.addf %396, %398 : vector<2x32xf32>
    %c0_222 = arith.constant 0 : index
    %c160 = arith.constant 160 : index
    %400 = vector.load %arg5[%c0_222, %c160] : memref<2x256xf32, #tpu.memory_space<vmem>>, vector<2x32xf32>
    tpu.vector_store %arg5[%c0_222, %c160], %399 {strides = array<i32>} : memref<2x256xf32, #tpu.memory_space<vmem>>, vector<2x32xf32>,
    %c0_223 = arith.constant 0 : index
    %c80 = arith.constant 80 : index
    %401 = vector.load %arg6[%c0_223, %c80] : memref<2x128xf32, #tpu.memory_space<vmem>>, vector<2x16xf32>
    tpu.vector_store %arg6[%c0_223, %c80], %359 {strides = array<i32>} : memref<2x128xf32, #tpu.memory_space<vmem>>, vector<2x16xf32>,
    %c776_224 = arith.constant 776 : index
    %c0_225 = arith.constant 0 : index
    %402 = vector.load %arg4[%c776_224, %c0_225] : memref<816x256xf32, #tpu.memory_space<vmem>>, vector<32x256xf32>
    %cst_226 = arith.constant dense<0.000000e+00> : vector<2x256xf32>
    %403 = tpu.matmul %394, %402, %cst_226 {dimension_numbers = #tpu.dot_dimension_numbers<[1], [0], [0], [1], [0, 0, 1, 1], [], []>} : vector<2x32xf32>, vector<32x256xf32>, vector<2x256xf32> -> vector<2x256xf32>
    %c808_227 = arith.constant 808 : index
    %c0_228 = arith.constant 0 : index
    %404 = vector.load %arg4[%c808_227, %c0_228] : memref<816x256xf32, #tpu.memory_space<vmem>>, vector<1x256xf32>
    %405 = vector.broadcast %404 : vector<1x256xf32> to vector<2x256xf32>
    %406 = arith.addf %403, %405 : vector<2x256xf32>
    %407 = arith.addf %11, %406 : vector<2x256xf32>
    %408 = math.tanh %407 : vector<2x256xf32>
    %c56_229 = arith.constant 56 : index
    %c0_230 = arith.constant 0 : index
    %409 = vector.load %arg3[%c56_229, %c0_230] : memref<536x128xf32, #tpu.memory_space<vmem>>, vector<256x16xf32>
    %cst_231 = arith.constant dense<0.000000e+00> : vector<2x16xf32>
    %410 = tpu.matmul %408, %409, %cst_231 {dimension_numbers = #tpu.dot_dimension_numbers<[1], [0], [0], [1], [0, 0, 1, 1], [], []>} : vector<2x256xf32>, vector<256x16xf32>, vector<2x16xf32> -> vector<2x16xf32>
    %c312_232 = arith.constant 312 : index
    %c0_233 = arith.constant 0 : index
    %411 = vector.load %arg3[%c312_232, %c0_233] : memref<536x128xf32, #tpu.memory_space<vmem>>, vector<1x1xf32>
    %412 = vector.broadcast %411 : vector<1x1xf32> to vector<2x16xf32>
    %413 = arith.addf %410, %412 : vector<2x16xf32>
    %cst_234 = arith.constant dense<0xFF800000> : vector<2xf32>
    %414 = vector.multi_reduction <maximumf>, %413, %cst_234 [1] : vector<2x16xf32> to vector<2xf32>
    %415 = vector.shape_cast %414 : vector<2xf32> to vector<2x1xf32>
    %416 = vector.broadcast %415 : vector<2x1xf32> to vector<2x16xf32>
    %417 = arith.subf %413, %416 : vector<2x16xf32>
    %418 = math.exp %417 : vector<2x16xf32>
    %cst_235 = arith.constant dense<0.000000e+00> : vector<2xf32>
    %419 = vector.multi_reduction <add>, %418, %cst_235 [1] : vector<2x16xf32> to vector<2xf32>
    %420 = vector.shape_cast %419 : vector<2xf32> to vector<2x1xf32>
    %421 = vector.broadcast %420 : vector<2x1xf32> to vector<2x16xf32>
    %422 = arith.divf %418, %421 : vector<2x16xf32>
    %423 = vector.extract_strided_slice %422 {offsets = [0, 0], sizes = [1, 16], strides = [1, 1]} : vector<2x16xf32> to vector<1x16xf32>
    %424 = vector.extract_strided_slice %5 {offsets = [0, 0], sizes = [16, 32], strides = [1, 1]} : vector<32x32xf32> to vector<16x32xf32>
    %cst_236 = arith.constant dense<0.000000e+00> : vector<1x32xf32>
    %425 = tpu.matmul %423, %424, %cst_236 {dimension_numbers = #tpu.dot_dimension_numbers<[1], [0], [0], [1], [0, 0, 1, 1], [], []>} : vector<1x16xf32>, vector<16x32xf32>, vector<1x32xf32> -> vector<1x32xf32>
    %426 = vector.extract_strided_slice %422 {offsets = [1, 0], sizes = [1, 16], strides = [1, 1]} : vector<2x16xf32> to vector<1x16xf32>
    %427 = vector.extract_strided_slice %5 {offsets = [16, 0], sizes = [16, 32], strides = [1, 1]} : vector<32x32xf32> to vector<16x32xf32>
    %cst_237 = arith.constant dense<0.000000e+00> : vector<1x32xf32>
    %428 = tpu.matmul %426, %427, %cst_237 {dimension_numbers = #tpu.dot_dimension_numbers<[1], [0], [0], [1], [0, 0, 1, 1], [], []>} : vector<1x16xf32>, vector<16x32xf32>, vector<1x32xf32> -> vector<1x32xf32>
    %429 = tpu.concatenate %425, %428 in 0 : vector<1x32xf32>, vector<1x32xf32> -> vector<2x32xf32>
    %c6 = arith.constant 6 : index
    %c0_238 = arith.constant 0 : index
    %c0_239 = arith.constant 0 : index
    %430 = vector.load %arg2[%c6, %c0_238, %c0_239] : memref<8x2x16xf32, #tpu.memory_space<vmem>>, vector<1x2x16xf32>
    %431 = vector.shape_cast %430 : vector<1x2x16xf32> to vector<2x16xf32>
    %c408_240 = arith.constant 408 : index
    %c0_241 = arith.constant 0 : index
    %432 = vector.load %arg3[%c408_240, %c0_241] : memref<536x128xf32, #tpu.memory_space<vmem>>, vector<16x128xf32>
    %cst_242 = arith.constant dense<0.000000e+00> : vector<2x128xf32>
    %433 = tpu.matmul %431, %432, %cst_242 {dimension_numbers = #tpu.dot_dimension_numbers<[1], [0], [0], [1], [0, 0, 1, 1], [], []>} : vector<2x16xf32>, vector<16x128xf32>, vector<2x128xf32> -> vector<2x128xf32>
    %c424_243 = arith.constant 424 : index
    %c0_244 = arith.constant 0 : index
    %434 = vector.load %arg3[%c424_243, %c0_244] : memref<536x128xf32, #tpu.memory_space<vmem>>, vector<32x128xf32>
    %cst_245 = arith.constant dense<0.000000e+00> : vector<2x128xf32>
    %435 = tpu.matmul %429, %434, %cst_245 {dimension_numbers = #tpu.dot_dimension_numbers<[1], [0], [0], [1], [0, 0, 1, 1], [], []>} : vector<2x32xf32>, vector<32x128xf32>, vector<2x128xf32> -> vector<2x128xf32>
    %436 = arith.addf %433, %435 : vector<2x128xf32>
    %c456_246 = arith.constant 456 : index
    %c0_247 = arith.constant 0 : index
    %437 = vector.load %arg3[%c456_246, %c0_247] : memref<536x128xf32, #tpu.memory_space<vmem>>, vector<32x128xf32>
    %cst_248 = arith.constant dense<0.000000e+00> : vector<2x128xf32>
    %438 = tpu.matmul %394, %437, %cst_248 {dimension_numbers = #tpu.dot_dimension_numbers<[1], [0], [0], [1], [0, 0, 1, 1], [], []>} : vector<2x32xf32>, vector<32x128xf32>, vector<2x128xf32> -> vector<2x128xf32>
    %439 = arith.addf %436, %438 : vector<2x128xf32>
    %c488_249 = arith.constant 488 : index
    %c0_250 = arith.constant 0 : index
    %440 = vector.load %arg3[%c488_249, %c0_250] : memref<536x128xf32, #tpu.memory_space<vmem>>, vector<1x128xf32>
    %441 = vector.broadcast %440 : vector<1x128xf32> to vector<2x128xf32>
    %442 = arith.addf %439, %441 : vector<2x128xf32>
    %443 = arith.negf %442 : vector<2x128xf32>
    %444 = math.exp %443 : vector<2x128xf32>
    %cst_251 = arith.constant 1.000000e+00 : f32
    %445 = vector.broadcast %cst_251 : f32 to vector<2x128xf32>
    %446 = arith.addf %445, %444 : vector<2x128xf32>
    %447 = arith.divf %445, %446 : vector<2x128xf32>
    %448 = vector.extract_strided_slice %447 {offsets = [0, 0], sizes = [2, 32], strides = [1, 1]} : vector<2x128xf32> to vector<2x32xf32>
    %449 = vector.extract_strided_slice %447 {offsets = [0, 32], sizes = [2, 32], strides = [1, 1]} : vector<2x128xf32> to vector<2x32xf32>
    %450 = vector.extract_strided_slice %447 {offsets = [0, 96], sizes = [2, 32], strides = [1, 1]} : vector<2x128xf32> to vector<2x32xf32>
    %451 = vector.extract_strided_slice %442 {offsets = [0, 64], sizes = [2, 32], strides = [1, 1]} : vector<2x128xf32> to vector<2x32xf32>
    %452 = math.tanh %451 : vector<2x32xf32>
    %453 = arith.mulf %449, %392 : vector<2x32xf32>
    %454 = arith.mulf %448, %452 : vector<2x32xf32>
    %455 = arith.addf %453, %454 : vector<2x32xf32>
    %456 = math.tanh %455 : vector<2x32xf32>
    %457 = arith.mulf %450, %456 : vector<2x32xf32>
    %c496_252 = arith.constant 496 : index
    %c0_253 = arith.constant 0 : index
    %458 = vector.load %arg3[%c496_252, %c0_253] : memref<536x128xf32, #tpu.memory_space<vmem>>, vector<32x32xf32>
    %cst_254 = arith.constant dense<0.000000e+00> : vector<2x32xf32>
    %459 = tpu.matmul %457, %458, %cst_254 {dimension_numbers = #tpu.dot_dimension_numbers<[1], [0], [0], [1], [0, 0, 1, 1], [], []>} : vector<2x32xf32>, vector<32x32xf32>, vector<2x32xf32> -> vector<2x32xf32>
    %c528_255 = arith.constant 528 : index
    %c0_256 = arith.constant 0 : index
    %460 = vector.load %arg3[%c528_255, %c0_256] : memref<536x128xf32, #tpu.memory_space<vmem>>, vector<1x32xf32>
    %461 = vector.broadcast %460 : vector<1x32xf32> to vector<2x32xf32>
    %462 = arith.addf %459, %461 : vector<2x32xf32>
    %c0_257 = arith.constant 0 : index
    %c192 = arith.constant 192 : index
    %463 = vector.load %arg5[%c0_257, %c192] : memref<2x256xf32, #tpu.memory_space<vmem>>, vector<2x32xf32>
    tpu.vector_store %arg5[%c0_257, %c192], %462 {strides = array<i32>} : memref<2x256xf32, #tpu.memory_space<vmem>>, vector<2x32xf32>,
    %c0_258 = arith.constant 0 : index
    %c96_259 = arith.constant 96 : index
    %464 = vector.load %arg6[%c0_258, %c96_259] : memref<2x128xf32, #tpu.memory_space<vmem>>, vector<2x16xf32>
    tpu.vector_store %arg6[%c0_258, %c96_259], %422 {strides = array<i32>} : memref<2x128xf32, #tpu.memory_space<vmem>>, vector<2x16xf32>,
    %c776_260 = arith.constant 776 : index
    %c0_261 = arith.constant 0 : index
    %465 = vector.load %arg4[%c776_260, %c0_261] : memref<816x256xf32, #tpu.memory_space<vmem>>, vector<32x256xf32>
    %cst_262 = arith.constant dense<0.000000e+00> : vector<2x256xf32>
    %466 = tpu.matmul %457, %465, %cst_262 {dimension_numbers = #tpu.dot_dimension_numbers<[1], [0], [0], [1], [0, 0, 1, 1], [], []>} : vector<2x32xf32>, vector<32x256xf32>, vector<2x256xf32> -> vector<2x256xf32>
    %c808_263 = arith.constant 808 : index
    %c0_264 = arith.constant 0 : index
    %467 = vector.load %arg4[%c808_263, %c0_264] : memref<816x256xf32, #tpu.memory_space<vmem>>, vector<1x256xf32>
    %468 = vector.broadcast %467 : vector<1x256xf32> to vector<2x256xf32>
    %469 = arith.addf %466, %468 : vector<2x256xf32>
    %470 = arith.addf %11, %469 : vector<2x256xf32>
    %471 = math.tanh %470 : vector<2x256xf32>
    %c56_265 = arith.constant 56 : index
    %c0_266 = arith.constant 0 : index
    %472 = vector.load %arg3[%c56_265, %c0_266] : memref<536x128xf32, #tpu.memory_space<vmem>>, vector<256x16xf32>
    %cst_267 = arith.constant dense<0.000000e+00> : vector<2x16xf32>
    %473 = tpu.matmul %471, %472, %cst_267 {dimension_numbers = #tpu.dot_dimension_numbers<[1], [0], [0], [1], [0, 0, 1, 1], [], []>} : vector<2x256xf32>, vector<256x16xf32>, vector<2x16xf32> -> vector<2x16xf32>
    %c312_268 = arith.constant 312 : index
    %c0_269 = arith.constant 0 : index
    %474 = vector.load %arg3[%c312_268, %c0_269] : memref<536x128xf32, #tpu.memory_space<vmem>>, vector<1x1xf32>
    %475 = vector.broadcast %474 : vector<1x1xf32> to vector<2x16xf32>
    %476 = arith.addf %473, %475 : vector<2x16xf32>
    %cst_270 = arith.constant dense<0xFF800000> : vector<2xf32>
    %477 = vector.multi_reduction <maximumf>, %476, %cst_270 [1] : vector<2x16xf32> to vector<2xf32>
    %478 = vector.shape_cast %477 : vector<2xf32> to vector<2x1xf32>
    %479 = vector.broadcast %478 : vector<2x1xf32> to vector<2x16xf32>
    %480 = arith.subf %476, %479 : vector<2x16xf32>
    %481 = math.exp %480 : vector<2x16xf32>
    %cst_271 = arith.constant dense<0.000000e+00> : vector<2xf32>
    %482 = vector.multi_reduction <add>, %481, %cst_271 [1] : vector<2x16xf32> to vector<2xf32>
    %483 = vector.shape_cast %482 : vector<2xf32> to vector<2x1xf32>
    %484 = vector.broadcast %483 : vector<2x1xf32> to vector<2x16xf32>
    %485 = arith.divf %481, %484 : vector<2x16xf32>
    %486 = vector.extract_strided_slice %485 {offsets = [0, 0], sizes = [1, 16], strides = [1, 1]} : vector<2x16xf32> to vector<1x16xf32>
    %487 = vector.extract_strided_slice %5 {offsets = [0, 0], sizes = [16, 32], strides = [1, 1]} : vector<32x32xf32> to vector<16x32xf32>
    %cst_272 = arith.constant dense<0.000000e+00> : vector<1x32xf32>
    %488 = tpu.matmul %486, %487, %cst_272 {dimension_numbers = #tpu.dot_dimension_numbers<[1], [0], [0], [1], [0, 0, 1, 1], [], []>} : vector<1x16xf32>, vector<16x32xf32>, vector<1x32xf32> -> vector<1x32xf32>
    %489 = vector.extract_strided_slice %485 {offsets = [1, 0], sizes = [1, 16], strides = [1, 1]} : vector<2x16xf32> to vector<1x16xf32>
    %490 = vector.extract_strided_slice %5 {offsets = [16, 0], sizes = [16, 32], strides = [1, 1]} : vector<32x32xf32> to vector<16x32xf32>
    %cst_273 = arith.constant dense<0.000000e+00> : vector<1x32xf32>
    %491 = tpu.matmul %489, %490, %cst_273 {dimension_numbers = #tpu.dot_dimension_numbers<[1], [0], [0], [1], [0, 0, 1, 1], [], []>} : vector<1x16xf32>, vector<16x32xf32>, vector<1x32xf32> -> vector<1x32xf32>
    %492 = tpu.concatenate %488, %491 in 0 : vector<1x32xf32>, vector<1x32xf32> -> vector<2x32xf32>
    %c7 = arith.constant 7 : index
    %c0_274 = arith.constant 0 : index
    %c0_275 = arith.constant 0 : index
    %493 = vector.load %arg2[%c7, %c0_274, %c0_275] : memref<8x2x16xf32, #tpu.memory_space<vmem>>, vector<1x2x16xf32>
    %494 = vector.shape_cast %493 : vector<1x2x16xf32> to vector<2x16xf32>
    %c408_276 = arith.constant 408 : index
    %c0_277 = arith.constant 0 : index
    %495 = vector.load %arg3[%c408_276, %c0_277] : memref<536x128xf32, #tpu.memory_space<vmem>>, vector<16x128xf32>
    %cst_278 = arith.constant dense<0.000000e+00> : vector<2x128xf32>
    %496 = tpu.matmul %494, %495, %cst_278 {dimension_numbers = #tpu.dot_dimension_numbers<[1], [0], [0], [1], [0, 0, 1, 1], [], []>} : vector<2x16xf32>, vector<16x128xf32>, vector<2x128xf32> -> vector<2x128xf32>
    %c424_279 = arith.constant 424 : index
    %c0_280 = arith.constant 0 : index
    %497 = vector.load %arg3[%c424_279, %c0_280] : memref<536x128xf32, #tpu.memory_space<vmem>>, vector<32x128xf32>
    %cst_281 = arith.constant dense<0.000000e+00> : vector<2x128xf32>
    %498 = tpu.matmul %492, %497, %cst_281 {dimension_numbers = #tpu.dot_dimension_numbers<[1], [0], [0], [1], [0, 0, 1, 1], [], []>} : vector<2x32xf32>, vector<32x128xf32>, vector<2x128xf32> -> vector<2x128xf32>
    %499 = arith.addf %496, %498 : vector<2x128xf32>
    %c456_282 = arith.constant 456 : index
    %c0_283 = arith.constant 0 : index
    %500 = vector.load %arg3[%c456_282, %c0_283] : memref<536x128xf32, #tpu.memory_space<vmem>>, vector<32x128xf32>
    %cst_284 = arith.constant dense<0.000000e+00> : vector<2x128xf32>
    %501 = tpu.matmul %457, %500, %cst_284 {dimension_numbers = #tpu.dot_dimension_numbers<[1], [0], [0], [1], [0, 0, 1, 1], [], []>} : vector<2x32xf32>, vector<32x128xf32>, vector<2x128xf32> -> vector<2x128xf32>
    %502 = arith.addf %499, %501 : vector<2x128xf32>
    %c488_285 = arith.constant 488 : index
    %c0_286 = arith.constant 0 : index
    %503 = vector.load %arg3[%c488_285, %c0_286] : memref<536x128xf32, #tpu.memory_space<vmem>>, vector<1x128xf32>
    %504 = vector.broadcast %503 : vector<1x128xf32> to vector<2x128xf32>
    %505 = arith.addf %502, %504 : vector<2x128xf32>
    %506 = arith.negf %505 : vector<2x128xf32>
    %507 = math.exp %506 : vector<2x128xf32>
    %cst_287 = arith.constant 1.000000e+00 : f32
    %508 = vector.broadcast %cst_287 : f32 to vector<2x128xf32>
    %509 = arith.addf %508, %507 : vector<2x128xf32>
    %510 = arith.divf %508, %509 : vector<2x128xf32>
    %511 = vector.extract_strided_slice %510 {offsets = [0, 0], sizes = [2, 32], strides = [1, 1]} : vector<2x128xf32> to vector<2x32xf32>
    %512 = vector.extract_strided_slice %510 {offsets = [0, 32], sizes = [2, 32], strides = [1, 1]} : vector<2x128xf32> to vector<2x32xf32>
    %513 = vector.extract_strided_slice %510 {offsets = [0, 96], sizes = [2, 32], strides = [1, 1]} : vector<2x128xf32> to vector<2x32xf32>
    %514 = vector.extract_strided_slice %505 {offsets = [0, 64], sizes = [2, 32], strides = [1, 1]} : vector<2x128xf32> to vector<2x32xf32>
    %515 = math.tanh %514 : vector<2x32xf32>
    %516 = arith.mulf %512, %455 : vector<2x32xf32>
    %517 = arith.mulf %511, %515 : vector<2x32xf32>
    %518 = arith.addf %516, %517 : vector<2x32xf32>
    %519 = math.tanh %518 : vector<2x32xf32>
    %520 = arith.mulf %513, %519 : vector<2x32xf32>
    %c496_288 = arith.constant 496 : index
    %c0_289 = arith.constant 0 : index
    %521 = vector.load %arg3[%c496_288, %c0_289] : memref<536x128xf32, #tpu.memory_space<vmem>>, vector<32x32xf32>
    %cst_290 = arith.constant dense<0.000000e+00> : vector<2x32xf32>
    %522 = tpu.matmul %520, %521, %cst_290 {dimension_numbers = #tpu.dot_dimension_numbers<[1], [0], [0], [1], [0, 0, 1, 1], [], []>} : vector<2x32xf32>, vector<32x32xf32>, vector<2x32xf32> -> vector<2x32xf32>
    %c528_291 = arith.constant 528 : index
    %c0_292 = arith.constant 0 : index
    %523 = vector.load %arg3[%c528_291, %c0_292] : memref<536x128xf32, #tpu.memory_space<vmem>>, vector<1x32xf32>
    %524 = vector.broadcast %523 : vector<1x32xf32> to vector<2x32xf32>
    %525 = arith.addf %522, %524 : vector<2x32xf32>
    %c0_293 = arith.constant 0 : index
    %c224 = arith.constant 224 : index
    %526 = vector.load %arg5[%c0_293, %c224] : memref<2x256xf32, #tpu.memory_space<vmem>>, vector<2x32xf32>
    tpu.vector_store %arg5[%c0_293, %c224], %525 {strides = array<i32>} : memref<2x256xf32, #tpu.memory_space<vmem>>, vector<2x32xf32>,
    %c0_294 = arith.constant 0 : index
    %c112 = arith.constant 112 : index
    %527 = vector.load %arg6[%c0_294, %c112] : memref<2x128xf32, #tpu.memory_space<vmem>>, vector<2x16xf32>
    tpu.vector_store %arg6[%c0_294, %c112], %485 {strides = array<i32>} : memref<2x128xf32, #tpu.memory_space<vmem>>, vector<2x16xf32>,
    return
  }
}

</mosaic_0001>

<llo_original>
// kernel: encoder_decoder_forward.1
$region0: #{encoder_decoder_forward.1}
  #allocation0 [shape = 'u32[]', space=smem, size = 0x4, offset = 0x4, fixed_abs, tag = 'smem constant byte address 0x4 - core index']
  #allocation1 [shape = 'u32[144,128]{1,0:T(1,128)}', space=vmem, size = 0x12000, scoped, tag = 'internal scratch']
  %s0 = inlined_call_operand.vmem [shape: f32[32,48], index: 0, kind: input, shape index: {}]
  %s1 = inlined_call_operand.vmem [shape: f32[2,768], index: 1, kind: input, shape index: {}]
  %s2 = inlined_call_operand.vmem [shape: f32[8,2,16], index: 2, kind: input, shape index: {}]
  %s3 = inlined_call_operand.vmem [shape: f32[536,128], index: 3, kind: input, shape index: {}]
  %s4 = inlined_call_operand.vmem [shape: f32[816,256], index: 4, kind: input, shape index: {}]
  %s5 = inlined_call_operand.vmem [shape: f32[2,256], index: 5, kind: output, shape index: {0}]
  %s6 = inlined_call_operand.vmem [shape: f32[2,128], index: 6, kind: output, shape index: {1}]
  %7 = xla_tuple %s5, %s6
  %s8 = sld [smem:[#allocation0]]
  $region38: #{encoder_decoder_forward.1} parent=0
    _
  %s10 = ssub.s32 1, %s8
  %s11 = scalar_select 0, %s10, %s8
  // Predicated region
  $region2: #{encoder_decoder_forward.1} parent=0 // pred_check
    _
  $region3: #{encoder_decoder_forward.1} parent=0 // pred_check_branch
    %13 = sbr.rel (0) target = $region5
  $region4: #{encoder_decoder_forward.1} parent=0 // pred_region
    _
  $region5: #{encoder_decoder_forward.1} parent=0 // pred_fallthru
    _
  // Predicated region
  $region6: #{encoder_decoder_forward.1} parent=0 // pred_check
    _
  $region7: #{encoder_decoder_forward.1} parent=0 // pred_check_branch
    %15 = sbr.rel (0) target = $region9
  $region8: #{encoder_decoder_forward.1} parent=0 // pred_region
    _
  $region9: #{encoder_decoder_forward.1} parent=0 // pred_fallthru
    _
  // Predicated region
  $region10: #{encoder_decoder_forward.1} parent=0 // pred_check
    _
  $region11: #{encoder_decoder_forward.1} parent=0 // pred_check_branch
    %17 = sbr.rel (0) target = $region13
  $region12: #{encoder_decoder_forward.1} parent=0 // pred_region
    _
  $region13: #{encoder_decoder_forward.1} parent=0 // pred_fallthru
    _
  // Predicated region
  $region14: #{encoder_decoder_forward.1} parent=0 // pred_check
    _
  $region15: #{encoder_decoder_forward.1} parent=0 // pred_check_branch
    %19 = sbr.rel (0) target = $region17
  $region16: #{encoder_decoder_forward.1} parent=0 // pred_region
    _
  $region17: #{encoder_decoder_forward.1} parent=0 // pred_fallthru
    _
  // Predicated region
  $region18: #{encoder_decoder_forward.1} parent=0 // pred_check
    _
  $region19: #{encoder_decoder_forward.1} parent=0 // pred_check_branch
    %21 = sbr.rel (0) target = $region21
  $region20: #{encoder_decoder_forward.1} parent=0 // pred_region
    _
  $region21: #{encoder_decoder_forward.1} parent=0 // pred_fallthru
    _
  %v22 = vld [vmem:[%s0] sm:$0xff]
  %v23 = vld [vmem:[%s0 + $0x8] sm:$0xff]
  %v24 = vld [vmem:[%s0 + $0x10] sm:$0xff]
  %v25 = vld [vmem:[%s0 + $0x18] sm:$0xff]
  %v26 = vld [vmem:[%s3] sm:$0xff]
  %v27 = vld [vmem:[%s3 + $0x8] sm:$0xff]
  %v28 = vld [vmem:[%s3 + $0x10] sm:$0xff]
  %v29 = vld [vmem:[%s3 + $0x18] sm:$0xff]
  %v30 = vld [vmem:[%s3 + $0x20] sm:$0xff]
  %v31 = vld [vmem:[%s3 + $0x28] sm:$0xff]
  %v32 = vld [vmem:[%s3 + $0x30] sm:$0x1]
  %v33 = vlaneseq
  %v34 = vshrl.u32 %v33, 7
  %v35 = vsub.s32 0, %v34
  %v36 = vrot.slane %v32, %v35
  %vm37 = vcmask 392192
  %v39 = vsel %vm37, %v22, 0
  %v42 = vsel %vm37, %v23, 0
  %v45 = vsel %vm37, %v24, 0
  %v48 = vsel %vm37, %v25, 0
  %50 = vmatprep.subr.mxu0 0.0
  %51 = vmatpush1.msra.mxu0 %v26
  %52 = vmatprep.subr.mxu0 0.0
  %53 = vmatpush1.msra.mxu0 %v27
  %54 = vmatprep.subr.mxu0 0.0
  %55 = vmatpush1.msra.mxu0 %v28
  %56 = vmatprep.subr.mxu0 0.0
  %57 = vmatpush1.msra.mxu0 %v29
  %58 = vmatprep.subr.mxu0 0.0
  %59 = vmatpush1.msra.mxu0 %v30
  %60 = vmatprep.subr.mxu0 0.0
  %61 = vmatpush1.msra.mxu0 %v31
  %62 = vmatprep.subr.mxu0 0.0
  %63 = vmatpush1.msra.mxu0 0.0
  %64 = vmatprep.subr.mxu0 0.0
  %65 = vmatpush1.msra.mxu0 0.0
  %66 = vmatprep.subr.mxu0 0.0
  %67 = vmatpush1.msra.mxu0 0.0
  %68 = vmatprep.subr.mxu0 0.0
  %69 = vmatpush1.msra.mxu0 0.0
  %70 = vmatprep.subr.mxu0 0.0
  %71 = vmatpush1.msra.mxu0 0.0
  %72 = vmatprep.subr.mxu0 0.0
  %73 = vmatpush1.msra.mxu0 0.0
  %74 = vmatprep.subr.mxu0 0.0
  %75 = vmatpush1.msra.mxu0 0.0
  %76 = vmatprep.subr.mxu0 0.0
  %77 = vmatpush1.msra.mxu0 0.0
  %78 = vmatprep.subr.mxu0 0.0
  %79 = vmatpush1.msra.mxu0 0.0
  %80 = vmatprep.subr.mxu0 0.0
  %81 = vmatpush1.msra.mxu0 0.0
  %82 = vmatprep.subr.mxu0 0.0
  %83 = vmatpush1.msra.mxu0 0.0
  %84 = vmatprep.subr.mxu0 0.0
  %85 = vmatpush1.msra.mxu0 0.0
  %86 = vmatprep.subr.mxu0 0.0
  %87 = vmatpush1.msra.mxu0 0.0
  %88 = vmatprep.subr.mxu0 0.0
  %89 = vmatpush1.msra.mxu0 0.0
  %90 = vmatprep.subr.mxu0 0.0
  %91 = vmatpush1.msra.mxu0 0.0
  %92 = vmatprep.subr.mxu0 0.0
  %93 = vmatpush1.msra.mxu0 0.0
  %94 = vmatprep.subr.mxu0 0.0
  %95 = vmatpush1.msra.mxu0 0.0
  %96 = vmatprep.subr.mxu0 0.0
  %97 = vmatpush1.msra.mxu0 0.0
  %98 = vmatprep.subr.mxu0 0.0
  %99 = vmatpush1.msra.mxu0 0.0
  %100 = vmatprep.subr.mxu0 0.0
  %101 = vmatpush1.msra.mxu0 0.0
  %102 = vmatprep.subr.mxu0 0.0
  %103 = vmatpush1.msra.mxu0 0.0
  %104 = vmatprep.subr.mxu0 0.0
  %105 = vmatpush1.msra.mxu0 0.0
  %106 = vmatprep.subr.mxu0 0.0
  %107 = vmatpush1.msra.mxu0 0.0
  %108 = vmatprep.subr.mxu0 0.0
  %109 = vmatpush1.msra.mxu0 0.0
  %110 = vmatprep.subr.mxu0 0.0
  %111 = vmatpush1.msra.mxu0 0.0
  %112 = vmatprep.subr.mxu0 0.0
  %113 = vmatpush1.msra.mxu0 0.0
  %114 = vmatprep.mubr.f32.mxu0 0.0
  %115 = vmatmul.mubr.f32.gmra.mrb[0].mxu0 %v39
  %v116 = vpop.f32.mrb[0].mxu0
  %v117 = vadd.f32 %v36, %v116
  %v118 = vpop.f32.mrb[0].mxu0
  %119 = vmatprep.mubr.f32.mxu0 0.0
  %120 = vmatmul.mubr.f32.gmra.mrb[0].mxu0 %v42
  %v121 = vpop.f32.mrb[0].mxu0
  %v122 = vadd.f32 %v36, %v121
  %v123 = vpop.f32.mrb[0].mxu0
  %124 = vmatprep.mubr.f32.mxu0 0.0
  %125 = vmatmul.mubr.f32.gmra.mrb[0].mxu0 %v45
  %v126 = vpop.f32.mrb[0].mxu0
  %v127 = vadd.f32 %v36, %v126
  %v128 = vpop.f32.mrb[0].mxu0
  %129 = vmatprep.mubr.f32.mxu0 0.0
  %130 = vmatmul.mubr.f32.gmra.mrb[0].mxu0 %v48
  %v131 = vpop.f32.mrb[0].mxu0
  %v132 = vadd.f32 %v36, %v131
  %v133 = vpop.f32.mrb[0].mxu0
  %134 = vdwg.mxu0
  %v135 = vld [vmem:[%s1] sm:$0xff]
  %v136 = vld [vmem:[%s1 + $0x8] sm:$0xf]
  %v137 = vld [vmem:[%s4] sm:$0xff]
  %v138 = vld [vmem:[%s4 + $0x8] sm:$0xff]
  %v139 = vld [vmem:[%s4 + $0x10] sm:$0xff]
  %v140 = vld [vmem:[%s4 + $0x18] sm:$0xff]
  %v141 = vld [vmem:[%s4 + $0x20] sm:$0xff]
  %v142 = vld [vmem:[%s4 + $0x28] sm:$0xff]
  %v143 = vld [vmem:[%s4 + $0x30] sm:$0xff]
  %v144 = vld [vmem:[%s4 + $0x38] sm:$0xff]
  %v145 = vld [vmem:[%s4 + $0x40] sm:$0xff]
  %v146 = vld [vmem:[%s4 + $0x48] sm:$0xff]
  %v147 = vld [vmem:[%s4 + $0x50] sm:$0xff]
  %v148 = vld [vmem:[%s4 + $0x58] sm:$0xff]
  %v149 = vld [vmem:[%s4 + $0x60] sm:$0xff]
  %v150 = vld [vmem:[%s4 + $0x68] sm:$0xff]
  %v151 = vld [vmem:[%s4 + $0x70] sm:$0xff]
  %v152 = vld [vmem:[%s4 + $0x78] sm:$0xff]
  %v153 = vld [vmem:[%s4 + $0x80] sm:$0xff]
  %v154 = vld [vmem:[%s4 + $0x88] sm:$0xff]
  %v155 = vld [vmem:[%s4 + $0x90] sm:$0xff]
  %v156 = vld [vmem:[%s4 + $0x98] sm:$0xff]
  %v157 = vld [vmem:[%s4 + $0xa0] sm:$0xff]
  %v158 = vld [vmem:[%s4 + $0xa8] sm:$0xff]
  %v159 = vld [vmem:[%s4 + $0xb0] sm:$0xff]
  %v160 = vld [vmem:[%s4 + $0xb8] sm:$0xff]
  %v161 = vld [vmem:[%s4 + $0xc0] sm:$0xff]
  %v162 = vld [vmem:[%s4 + $0xc8] sm:$0xff]
  %v163 = vld [vmem:[%s4 + $0xd0] sm:$0xff]
  %v164 = vld [vmem:[%s4 + $0xd8] sm:$0xff]
  %v165 = vld [vmem:[%s4 + $0xe0] sm:$0xff]
  %v166 = vld [vmem:[%s4 + $0xe8] sm:$0xff]
  %v167 = vld [vmem:[%s4 + $0xf0] sm:$0xff]
  %v168 = vld [vmem:[%s4 + $0xf8] sm:$0xff]
  %v169 = vld [vmem:[%s4 + $0x100] sm:$0xff]
  %v170 = vld [vmem:[%s4 + $0x108] sm:$0xff]
  %v171 = vld [vmem:[%s4 + $0x110] sm:$0xff]
  %v172 = vld [vmem:[%s4 + $0x118] sm:$0xff]
  %v173 = vld [vmem:[%s4 + $0x120] sm:$0xff]
  %v174 = vld [vmem:[%s4 + $0x128] sm:$0xff]
  %v175 = vld [vmem:[%s4 + $0x130] sm:$0xff]
  %v176 = vld [vmem:[%s4 + $0x138] sm:$0xff]
  %v177 = vld [vmem:[%s4 + $0x140] sm:$0xff]
  %v178 = vld [vmem:[%s4 + $0x148] sm:$0xff]
  %v179 = vld [vmem:[%s4 + $0x150] sm:$0xff]
  %v180 = vld [vmem:[%s4 + $0x158] sm:$0xff]
  %v181 = vld [vmem:[%s4 + $0x160] sm:$0xff]
  %v182 = vld [vmem:[%s4 + $0x168] sm:$0xff]
  %v183 = vld [vmem:[%s4 + $0x170] sm:$0xff]
  %v184 = vld [vmem:[%s4 + $0x178] sm:$0xff]
  %v185 = vld [vmem:[%s4 + $0x180] sm:$0xff]
  %v186 = vld [vmem:[%s4 + $0x188] sm:$0xff]
  %v187 = vld [vmem:[%s4 + $0x190] sm:$0xff]
  %v188 = vld [vmem:[%s4 + $0x198] sm:$0xff]
  %v189 = vld [vmem:[%s4 + $0x1a0] sm:$0xff]
  %v190 = vld [vmem:[%s4 + $0x1a8] sm:$0xff]
  %v191 = vld [vmem:[%s4 + $0x1b0] sm:$0xff]
  %v192 = vld [vmem:[%s4 + $0x1b8] sm:$0xff]
  %v193 = vld [vmem:[%s4 + $0x1c0] sm:$0xff]
  %v194 = vld [vmem:[%s4 + $0x1c8] sm:$0xff]
  %v195 = vld [vmem:[%s4 + $0x1d0] sm:$0xff]
  %v196 = vld [vmem:[%s4 + $0x1d8] sm:$0xff]
  %v197 = vld [vmem:[%s4 + $0x1e0] sm:$0xff]
  %v198 = vld [vmem:[%s4 + $0x1e8] sm:$0xff]
  %v199 = vld [vmem:[%s4 + $0x1f0] sm:$0xff]
  %v200 = vld [vmem:[%s4 + $0x1f8] sm:$0xff]
  %v201 = vld [vmem:[%s4 + $0x200] sm:$0xff]
  %v202 = vld [vmem:[%s4 + $0x208] sm:$0xff]
  %v203 = vld [vmem:[%s4 + $0x210] sm:$0xff]
  %v204 = vld [vmem:[%s4 + $0x218] sm:$0xff]
  %v205 = vld [vmem:[%s4 + $0x220] sm:$0xff]
  %v206 = vld [vmem:[%s4 + $0x228] sm:$0xff]
  %v207 = vld [vmem:[%s4 + $0x230] sm:$0xff]
  %v208 = vld [vmem:[%s4 + $0x238] sm:$0xff]
  %v209 = vld [vmem:[%s4 + $0x240] sm:$0xff]
  %v210 = vld [vmem:[%s4 + $0x248] sm:$0xff]
  %v211 = vld [vmem:[%s4 + $0x250] sm:$0xff]
  %v212 = vld [vmem:[%s4 + $0x258] sm:$0xff]
  %v213 = vld [vmem:[%s4 + $0x260] sm:$0xff]
  %v214 = vld [vmem:[%s4 + $0x268] sm:$0xff]
  %v215 = vld [vmem:[%s4 + $0x270] sm:$0xff]
  %v216 = vld [vmem:[%s4 + $0x278] sm:$0xff]
  %v217 = vld [vmem:[%s4 + $0x280] sm:$0xff]
  %v218 = vld [vmem:[%s4 + $0x288] sm:$0xff]
  %v219 = vld [vmem:[%s4 + $0x290] sm:$0xff]
  %v220 = vld [vmem:[%s4 + $0x298] sm:$0xff]
  %v221 = vld [vmem:[%s4 + $0x2a0] sm:$0xff]
  %v222 = vld [vmem:[%s4 + $0x2a8] sm:$0xff]
  %v223 = vld [vmem:[%s4 + $0x2b0] sm:$0xff]
  %v224 = vld [vmem:[%s4 + $0x2b8] sm:$0xff]
  %v225 = vld [vmem:[%s4 + $0x2c0] sm:$0xff]
  %v226 = vld [vmem:[%s4 + $0x2c8] sm:$0xff]
  %v227 = vld [vmem:[%s4 + $0x2d0] sm:$0xff]
  %v228 = vld [vmem:[%s4 + $0x2d8] sm:$0xff]
  %v229 = vld [vmem:[%s4 + $0x2e0] sm:$0xff]
  %v230 = vld [vmem:[%s4 + $0x2e8] sm:$0xff]
  %v231 = vld [vmem:[%s4 + $0x2f0] sm:$0xff]
  %v232 = vld [vmem:[%s4 + $0x2f8] sm:$0xff]
  %v233 = vld [vmem:[%s4 + $0x300] sm:$0xff]
  %v234 = vld [vmem:[%s4 + $0x308] sm:$0xff]
  %v235 = vld [vmem:[%s4 + $0x310] sm:$0xff]
  %v236 = vld [vmem:[%s4 + $0x318] sm:$0xff]
  %v237 = vld [vmem:[%s4 + $0x320] sm:$0xff]
  %v238 = vld [vmem:[%s4 + $0x328] sm:$0xff]
  %v239 = vld [vmem:[%s4 + $0x330] sm:$0xff]
  %v240 = vld [vmem:[%s4 + $0x338] sm:$0xff]
  %v241 = vld [vmem:[%s4 + $0x340] sm:$0xff]
  %v242 = vld [vmem:[%s4 + $0x348] sm:$0xff]
  %v243 = vld [vmem:[%s4 + $0x350] sm:$0xff]
  %v244 = vld [vmem:[%s4 + $0x358] sm:$0xff]
  %v245 = vld [vmem:[%s4 + $0x360] sm:$0xff]
  %v246 = vld [vmem:[%s4 + $0x368] sm:$0xff]
  %v247 = vld [vmem:[%s4 + $0x370] sm:$0xff]
  %v248 = vld [vmem:[%s4 + $0x378] sm:$0xff]
  %v249 = vld [vmem:[%s4 + $0x380] sm:$0xff]
  %v250 = vld [vmem:[%s4 + $0x388] sm:$0xff]
  %v251 = vld [vmem:[%s4 + $0x390] sm:$0xff]
  %v252 = vld [vmem:[%s4 + $0x398] sm:$0xff]
  %v253 = vld [vmem:[%s4 + $0x3a0] sm:$0xff]
  %v254 = vld [vmem:[%s4 + $0x3a8] sm:$0xff]
  %v255 = vld [vmem:[%s4 + $0x3b0] sm:$0xff]
  %v256 = vld [vmem:[%s4 + $0x3b8] sm:$0xff]
  %v257 = vld [vmem:[%s4 + $0x3c0] sm:$0xff]
  %v258 = vld [vmem:[%s4 + $0x3c8] sm:$0xff]
  %v259 = vld [vmem:[%s4 + $0x3d0] sm:$0xff]
  %v260 = vld [vmem:[%s4 + $0x3d8] sm:$0xff]
  %v261 = vld [vmem:[%s4 + $0x3e0] sm:$0xff]
  %v262 = vld [vmem:[%s4 + $0x3e8] sm:$0xff]
  %v263 = vld [vmem:[%s4 + $0x3f0] sm:$0xff]
  %v264 = vld [vmem:[%s4 + $0x3f8] sm:$0xff]
  %v265 = vld [vmem:[%s4 + $0x400] sm:$0xff]
  %v266 = vld [vmem:[%s4 + $0x408] sm:$0xff]
  %v267 = vld [vmem:[%s4 + $0x410] sm:$0xff]
  %v268 = vld [vmem:[%s4 + $0x418] sm:$0xff]
  %v269 = vld [vmem:[%s4 + $0x420] sm:$0xff]
  %v270 = vld [vmem:[%s4 + $0x428] sm:$0xff]
  %v271 = vld [vmem:[%s4 + $0x430] sm:$0xff]
  %v272 = vld [vmem:[%s4 + $0x438] sm:$0xff]
  %v273 = vld [vmem:[%s4 + $0x440] sm:$0xff]
  %v274 = vld [vmem:[%s4 + $0x448] sm:$0xff]
  %v275 = vld [vmem:[%s4 + $0x450] sm:$0xff]
  %v276 = vld [vmem:[%s4 + $0x458] sm:$0xff]
  %v277 = vld [vmem:[%s4 + $0x460] sm:$0xff]
  %v278 = vld [vmem:[%s4 + $0x468] sm:$0xff]
  %v279 = vld [vmem:[%s4 + $0x470] sm:$0xff]
  %v280 = vld [vmem:[%s4 + $0x478] sm:$0xff]
  %v281 = vld [vmem:[%s4 + $0x480] sm:$0xff]
  %v282 = vld [vmem:[%s4 + $0x488] sm:$0xff]
  %v283 = vld [vmem:[%s4 + $0x490] sm:$0xff]
  %v284 = vld [vmem:[%s4 + $0x498] sm:$0xff]
  %v285 = vld [vmem:[%s4 + $0x4a0] sm:$0xff]
  %v286 = vld [vmem:[%s4 + $0x4a8] sm:$0xff]
  %v287 = vld [vmem:[%s4 + $0x4b0] sm:$0xff]
  %v288 = vld [vmem:[%s4 + $0x4b8] sm:$0xff]
  %v289 = vld [vmem:[%s4 + $0x4c0] sm:$0xff]
  %v290 = vld [vmem:[%s4 + $0x4c8] sm:$0xff]
  %v291 = vld [vmem:[%s4 + $0x4d0] sm:$0xff]
  %v292 = vld [vmem:[%s4 + $0x4d8] sm:$0xff]
  %v293 = vld [vmem:[%s4 + $0x4e0] sm:$0xff]
  %v294 = vld [vmem:[%s4 + $0x4e8] sm:$0xff]
  %v295 = vld [vmem:[%s4 + $0x4f0] sm:$0xff]
  %v296 = vld [vmem:[%s4 + $0x4f8] sm:$0xff]
  %v297 = vld [vmem:[%s4 + $0x500] sm:$0xff]
  %v298 = vld [vmem:[%s4 + $0x508] sm:$0xff]
  %v299 = vld [vmem:[%s4 + $0x510] sm:$0xff]
  %v300 = vld [vmem:[%s4 + $0x518] sm:$0xff]
  %v301 = vld [vmem:[%s4 + $0x520] sm:$0xff]
  %v302 = vld [vmem:[%s4 + $0x528] sm:$0xff]
  %v303 = vld [vmem:[%s4 + $0x530] sm:$0xff]
  %v304 = vld [vmem:[%s4 + $0x538] sm:$0xff]
  %v305 = vld [vmem:[%s4 + $0x540] sm:$0xff]
  %v306 = vld [vmem:[%s4 + $0x548] sm:$0xff]
  %v307 = vld [vmem:[%s4 + $0x550] sm:$0xff]
  %v308 = vld [vmem:[%s4 + $0x558] sm:$0xff]
  %v309 = vld [vmem:[%s4 + $0x560] sm:$0xff]
  %v310 = vld [vmem:[%s4 + $0x568] sm:$0xff]
  %v311 = vld [vmem:[%s4 + $0x570] sm:$0xff]
  %v312 = vld [vmem:[%s4 + $0x578] sm:$0xff]
  %v313 = vld [vmem:[%s4 + $0x580] sm:$0xff]
  %v314 = vld [vmem:[%s4 + $0x588] sm:$0xff]
  %v315 = vld [vmem:[%s4 + $0x590] sm:$0xff]
  %v316 = vld [vmem:[%s4 + $0x598] sm:$0xff]
  %v317 = vld [vmem:[%s4 + $0x5a0] sm:$0xff]
  %v318 = vld [vmem:[%s4 + $0x5a8] sm:$0xff]
  %v319 = vld [vmem:[%s4 + $0x5b0] sm:$0xff]
  %v320 = vld [vmem:[%s4 + $0x5b8] sm:$0xff]
  %v321 = vld [vmem:[%s4 + $0x5c0] sm:$0xff]
  %v322 = vld [vmem:[%s4 + $0x5c8] sm:$0xff]
  %v323 = vld [vmem:[%s4 + $0x5d0] sm:$0xff]
  %v324 = vld [vmem:[%s4 + $0x5d8] sm:$0xff]
  %v325 = vld [vmem:[%s4 + $0x5e0] sm:$0xff]
  %v326 = vld [vmem:[%s4 + $0x5e8] sm:$0xff]
  %v327 = vld [vmem:[%s4 + $0x5f0] sm:$0xff]
  %v328 = vld [vmem:[%s4 + $0x5f8] sm:$0xff]
  %s329 = scalar_lea.vmem %s4, 1536
  %v330 = vld [vmem:[%s329] ss:$8 sm:$0x3]
  %v332 = vlaneseq
  %v333 = vshrl.u32 %v332, 7
  %v334 = vsub.s32 0, %v333
  %v335 = vrot.slane %v330, %v334
  %v336 = vlaneseq
  %v337 = vshrl.u32 %v336, 7
  %v338 = vsub.s32 1, %v337
  %v339 = vrot.slane %v330, %v338
  %v344 = vcombine.high %v135, %v135
  %v346 = vunpack.c.l.s4 1983009808
  %v347 = vunpack.c.0.s8 %v346
  %v348 = vlaneseq
  %v349 = vshrl.u32 %v348, 7
  %v350 = vsub.s32 %v347, %v349
  %v351 = vrot.slane %v135, %v350
  %v353 = vunpack.c.l.s4 1983009808
  %v354 = vunpack.c.0.s8 %v353
  %v355 = vlaneseq
  %v356 = vshrl.u32 %v355, 7
  %v357 = vsub.s32 %v354, %v356
  %v358 = vrot.slane %v344, %v357
  %v359 = vcombine.high %v351, %v351
  %v360 = vcombine.high %v358, %v358
  %v362 = vunpack.c.l.s4 1983009808
  %v363 = vunpack.c.0.s8 %v362
  %v364 = vlaneseq
  %v365 = vshrl.u32 %v364, 7
  %v366 = vsub.s32 %v363, %v365
  %v367 = vrot.slane %v136, %v366
  %v368 = vcombine.high %v367, %v367
  %375 = vmatprep.subr.mxu0 %v138
  %376 = vmatpush1.msra.mxu0 %v137
  %377 = vmatprep.subr.mxu0 %v140
  %378 = vmatpush1.msra.mxu0 %v139
  %379 = vmatprep.subr.mxu0 %v142
  %380 = vmatpush1.msra.mxu0 %v141
  %381 = vmatprep.subr.mxu0 %v144
  %382 = vmatpush1.msra.mxu0 %v143
  %383 = vmatprep.subr.mxu0 %v146
  %384 = vmatpush1.msra.mxu0 %v145
  %385 = vmatprep.subr.mxu0 %v148
  %386 = vmatpush1.msra.mxu0 %v147
  %387 = vmatprep.subr.mxu0 %v150
  %388 = vmatpush1.msra.mxu0 %v149
  %389 = vmatprep.subr.mxu0 %v152
  %390 = vmatpush1.msra.mxu0 %v151
  %391 = vmatprep.subr.mxu0 %v154
  %392 = vmatpush1.msra.mxu0 %v153
  %393 = vmatprep.subr.mxu0 %v156
  %394 = vmatpush1.msra.mxu0 %v155
  %395 = vmatprep.subr.mxu0 %v158
  %396 = vmatpush1.msra.mxu0 %v157
  %397 = vmatprep.subr.mxu0 %v160
  %398 = vmatpush1.msra.mxu0 %v159
  %399 = vmatprep.subr.mxu0 %v162
  %400 = vmatpush1.msra.mxu0 %v161
  %401 = vmatprep.subr.mxu0 %v164
  %402 = vmatpush1.msra.mxu0 %v163
  %403 = vmatprep.subr.mxu0 %v166
  %404 = vmatpush1.msra.mxu0 %v165
  %405 = vmatprep.subr.mxu0 %v168
  %406 = vmatpush1.msra.mxu0 %v167
  %407 = vmatprep.subr.mxu0 %v170
  %408 = vmatpush1.msra.mxu0 %v169
  %409 = vmatprep.subr.mxu0 %v172
  %410 = vmatpush1.msra.mxu0 %v171
  %411 = vmatprep.subr.mxu0 %v174
  %412 = vmatpush1.msra.mxu0 %v173
  %413 = vmatprep.subr.mxu0 %v176
  %414 = vmatpush1.msra.mxu0 %v175
  %415 = vmatprep.subr.mxu0 %v178
  %416 = vmatpush1.msra.mxu0 %v177
  %417 = vmatprep.subr.mxu0 %v180
  %418 = vmatpush1.msra.mxu0 %v179
  %419 = vmatprep.subr.mxu0 %v182
  %420 = vmatpush1.msra.mxu0 %v181
  %421 = vmatprep.subr.mxu0 %v184
  %422 = vmatpush1.msra.mxu0 %v183
  %423 = vmatprep.subr.mxu0 %v186
  %424 = vmatpush1.msra.mxu0 %v185
  %425 = vmatprep.subr.mxu0 %v188
  %426 = vmatpush1.msra.mxu0 %v187
  %427 = vmatprep.subr.mxu0 %v190
  %428 = vmatpush1.msra.mxu0 %v189
  %429 = vmatprep.subr.mxu0 %v192
  %430 = vmatpush1.msra.mxu0 %v191
  %431 = vmatprep.subr.mxu0 %v194
  %432 = vmatpush1.msra.mxu0 %v193
  %433 = vmatprep.subr.mxu0 %v196
  %434 = vmatpush1.msra.mxu0 %v195
  %435 = vmatprep.subr.mxu0 %v198
  %436 = vmatpush1.msra.mxu0 %v197
  %437 = vmatprep.subr.mxu0 %v200
  %438 = vmatpush1.msra.mxu0 %v199
  %439 = vmatprep.mubr.f32.mxu0 %v359
  %440 = vmatmul.mubr.f32.gmra.mrb[0].mxu0 %v351
  %v441 = vpop.f32.mrb[0].mxu0
  %v442 = vadd.f32 %v335, %v441
  %v443 = vpop.f32.mrb[0].mxu0
  %v444 = vadd.f32 %v339, %v443
  %445 = vdwg.mxu0
  %446 = vmatprep.subr.mxu0 %v202
  %447 = vmatpush1.msra.mxu0 %v201
  %448 = vmatprep.subr.mxu0 %v204
  %449 = vmatpush1.msra.mxu0 %v203
  %450 = vmatprep.subr.mxu0 %v206
  %451 = vmatpush1.msra.mxu0 %v205
  %452 = vmatprep.subr.mxu0 %v208
  %453 = vmatpush1.msra.mxu0 %v207
  %454 = vmatprep.subr.mxu0 %v210
  %455 = vmatpush1.msra.mxu0 %v209
  %456 = vmatprep.subr.mxu0 %v212
  %457 = vmatpush1.msra.mxu0 %v211
  %458 = vmatprep.subr.mxu0 %v214
  %459 = vmatpush1.msra.mxu0 %v213
  %460 = vmatprep.subr.mxu0 %v216
  %461 = vmatpush1.msra.mxu0 %v215
  %462 = vmatprep.subr.mxu0 %v218
  %463 = vmatpush1.msra.mxu0 %v217
  %464 = vmatprep.subr.mxu0 %v220
  %465 = vmatpush1.msra.mxu0 %v219
  %466 = vmatprep.subr.mxu0 %v222
  %467 = vmatpush1.msra.mxu0 %v221
  %468 = vmatprep.subr.mxu0 %v224
  %469 = vmatpush1.msra.mxu0 %v223
  %470 = vmatprep.subr.mxu0 %v226
  %471 = vmatpush1.msra.mxu0 %v225
  %472 = vmatprep.subr.mxu0 %v228
  %473 = vmatpush1.msra.mxu0 %v227
  %474 = vmatprep.subr.mxu0 %v230
  %475 = vmatpush1.msra.mxu0 %v229
  %476 = vmatprep.subr.mxu0 %v232
  %477 = vmatpush1.msra.mxu0 %v231
  %478 = vmatprep.subr.mxu0 %v234
  %479 = vmatpush1.msra.mxu0 %v233
  %480 = vmatprep.subr.mxu0 %v236
  %481 = vmatpush1.msra.mxu0 %v235
  %482 = vmatprep.subr.mxu0 %v238
  %483 = vmatpush1.msra.mxu0 %v237
  %484 = vmatprep.subr.mxu0 %v240
  %485 = vmatpush1.msra.mxu0 %v239
  %486 = vmatprep.subr.mxu0 %v242
  %487 = vmatpush1.msra.mxu0 %v241
  %488 = vmatprep.subr.mxu0 %v244
  %489 = vmatpush1.msra.mxu0 %v243
  %490 = vmatprep.subr.mxu0 %v246
  %491 = vmatpush1.msra.mxu0 %v245
  %492 = vmatprep.subr.mxu0 %v248
  %493 = vmatpush1.msra.mxu0 %v247
  %494 = vmatprep.subr.mxu0 %v250
  %495 = vmatpush1.msra.mxu0 %v249
  %496 = vmatprep.subr.mxu0 %v252
  %497 = vmatpush1.msra.mxu0 %v251
  %498 = vmatprep.subr.mxu0 %v254
  %499 = vmatpush1.msra.mxu0 %v253
  %500 = vmatprep.subr.mxu0 %v256
  %501 = vmatpush1.msra.mxu0 %v255
  %502 = vmatprep.subr.mxu0 %v258
  %503 = vmatpush1.msra.mxu0 %v257
  %504 = vmatprep.subr.mxu0 %v260
  %505 = vmatpush1.msra.mxu0 %v259
  %506 = vmatprep.subr.mxu0 %v262
  %507 = vmatpush1.msra.mxu0 %v261
  %508 = vmatprep.subr.mxu0 %v264
  %509 = vmatpush1.msra.mxu0 %v263
  %510 = vmatprep.mubr.f32.mxu0 %v360
  %511 = vmatmul.mubr.f32.gmra.mrb[0].mxu0 %v358
  %v512 = vpop.f32.mrb[0].mxu0
  %v513 = vadd.f32 %v442, %v512
  %v514 = vpop.f32.mrb[0].mxu0
  %v515 = vadd.f32 %v444, %v514
  %516 = vdwg.mxu0
  %517 = vmatprep.subr.mxu0 %v266
  %518 = vmatpush1.msra.mxu0 %v265
  %519 = vmatprep.subr.mxu0 %v268
  %520 = vmatpush1.msra.mxu0 %v267
  %521 = vmatprep.subr.mxu0 %v270
  %522 = vmatpush1.msra.mxu0 %v269
  %523 = vmatprep.subr.mxu0 %v272
  %524 = vmatpush1.msra.mxu0 %v271
  %525 = vmatprep.subr.mxu0 %v274
  %526 = vmatpush1.msra.mxu0 %v273
  %527 = vmatprep.subr.mxu0 %v276
  %528 = vmatpush1.msra.mxu0 %v275
  %529 = vmatprep.subr.mxu0 %v278
  %530 = vmatpush1.msra.mxu0 %v277
  %531 = vmatprep.subr.mxu0 %v280
  %532 = vmatpush1.msra.mxu0 %v279
  %533 = vmatprep.subr.mxu0 %v282
  %534 = vmatpush1.msra.mxu0 %v281
  %535 = vmatprep.subr.mxu0 %v284
  %536 = vmatpush1.msra.mxu0 %v283
  %537 = vmatprep.subr.mxu0 %v286
  %538 = vmatpush1.msra.mxu0 %v285
  %539 = vmatprep.subr.mxu0 %v288
  %540 = vmatpush1.msra.mxu0 %v287
  %541 = vmatprep.subr.mxu0 %v290
  %542 = vmatpush1.msra.mxu0 %v289
  %543 = vmatprep.subr.mxu0 %v292
  %544 = vmatpush1.msra.mxu0 %v291
  %545 = vmatprep.subr.mxu0 %v294
  %546 = vmatpush1.msra.mxu0 %v293
  %547 = vmatprep.subr.mxu0 %v296
  %548 = vmatpush1.msra.mxu0 %v295
  %549 = vmatprep.subr.mxu0 %v298
  %550 = vmatpush1.msra.mxu0 %v297
  %551 = vmatprep.subr.mxu0 %v300
  %552 = vmatpush1.msra.mxu0 %v299
  %553 = vmatprep.subr.mxu0 %v302
  %554 = vmatpush1.msra.mxu0 %v301
  %555 = vmatprep.subr.mxu0 %v304
  %556 = vmatpush1.msra.mxu0 %v303
  %557 = vmatprep.subr.mxu0 %v306
  %558 = vmatpush1.msra.mxu0 %v305
  %559 = vmatprep.subr.mxu0 %v308
  %560 = vmatpush1.msra.mxu0 %v307
  %561 = vmatprep.subr.mxu0 %v310
  %562 = vmatpush1.msra.mxu0 %v309
  %563 = vmatprep.subr.mxu0 %v312
  %564 = vmatpush1.msra.mxu0 %v311
  %565 = vmatprep.subr.mxu0 %v314
  %566 = vmatpush1.msra.mxu0 %v313
  %567 = vmatprep.subr.mxu0 %v316
  %568 = vmatpush1.msra.mxu0 %v315
  %569 = vmatprep.subr.mxu0 %v318
  %570 = vmatpush1.msra.mxu0 %v317
  %571 = vmatprep.subr.mxu0 %v320
  %572 = vmatpush1.msra.mxu0 %v319
  %573 = vmatprep.subr.mxu0 %v322
  %574 = vmatpush1.msra.mxu0 %v321
  %575 = vmatprep.subr.mxu0 %v324
  %576 = vmatpush1.msra.mxu0 %v323
  %577 = vmatprep.subr.mxu0 %v326
  %578 = vmatpush1.msra.mxu0 %v325
  %579 = vmatprep.subr.mxu0 %v328
  %580 = vmatpush1.msra.mxu0 %v327
  %581 = vmatprep.mubr.f32.mxu0 %v368
  %582 = vmatmul.mubr.f32.gmra.mrb[0].mxu0 %v367
  %v583 = vpop.f32.mrb[0].mxu0
  %v584 = vadd.f32 %v513, %v583
  %v585 = vpop.f32.mrb[0].mxu0
  %v586 = vadd.f32 %v515, %v585
  %587 = vdwg.mxu0
  %v588 = vld [vmem:[%s3 + $0x190] sm:$0x3]
  %vm589 = vcmask 261120
  %v591 = vsel %vm589, %v588, 0
  %593 = vmatprep.subr.mxu0 0.0
  %594 = vmatpush1.msra.mxu0 %v117
  %595 = vmatprep.subr.mxu0 0.0
  %596 = vmatpush1.msra.mxu0 %v122
  %597 = vmatprep.subr.mxu0 0.0
  %598 = vmatpush1.msra.mxu0 %v127
  %599 = vmatprep.subr.mxu0 0.0
  %600 = vmatpush1.msra.mxu0 %v132
  %601 = vmatprep.subr.mxu0 0.0
  %602 = vmatpush1.msra.mxu0 0.0
  %603 = vmatprep.subr.mxu0 0.0
  %604 = vmatpush1.msra.mxu0 0.0
  %605 = vmatprep.subr.mxu0 0.0
  %606 = vmatpush1.msra.mxu0 0.0
  %607 = vmatprep.subr.mxu0 0.0
  %608 = vmatpush1.msra.mxu0 0.0
  %609 = vmatprep.subr.mxu0 0.0
  %610 = vmatpush1.msra.mxu0 0.0
  %611 = vmatprep.subr.mxu0 0.0
  %612 = vmatpush1.msra.mxu0 0.0
  %613 = vmatprep.subr.mxu0 0.0
  %614 = vmatpush1.msra.mxu0 0.0
  %615 = vmatprep.subr.mxu0 0.0
  %616 = vmatpush1.msra.mxu0 0.0
  %617 = vmatprep.subr.mxu0 0.0
  %618 = vmatpush1.msra.mxu0 0.0
  %619 = vmatprep.subr.mxu0 0.0
  %620 = vmatpush1.msra.mxu0 0.0
  %621 = vmatprep.subr.mxu0 0.0
  %622 = vmatpush1.msra.mxu0 0.0
  %623 = vmatprep.subr.mxu0 0.0
  %624 = vmatpush1.msra.mxu0 0.0
  %625 = vmatprep.subr.mxu0 0.0
  %626 = vmatpush1.msra.mxu0 0.0
  %627 = vmatprep.subr.mxu0 0.0
  %628 = vmatpush1.msra.mxu0 0.0
  %629 = vmatprep.subr.mxu0 0.0
  %630 = vmatpush1.msra.mxu0 0.0
  %631 = vmatprep.subr.mxu0 0.0
  %632 = vmatpush1.msra.mxu0 0.0
  %633 = vmatprep.subr.mxu0 0.0
  %634 = vmatpush1.msra.mxu0 0.0
  %635 = vmatprep.subr.mxu0 0.0
  %636 = vmatpush1.msra.mxu0 0.0
  %637 = vmatprep.subr.mxu0 0.0
  %638 = vmatpush1.msra.mxu0 0.0
  %639 = vmatprep.subr.mxu0 0.0
  %640 = vmatpush1.msra.mxu0 0.0
  %641 = vmatprep.subr.mxu0 0.0
  %642 = vmatpush1.msra.mxu0 0.0
  %643 = vmatprep.subr.mxu0 0.0
  %644 = vmatpush1.msra.mxu0 0.0
  %645 = vmatprep.subr.mxu0 0.0
  %646 = vmatpush1.msra.mxu0 0.0
  %647 = vmatprep.subr.mxu0 0.0
  %648 = vmatpush1.msra.mxu0 0.0
  %649 = vmatprep.subr.mxu0 0.0
  %650 = vmatpush1.msra.mxu0 0.0
  %651 = vmatprep.subr.mxu0 0.0
  %652 = vmatpush1.msra.mxu0 0.0
  %653 = vmatprep.subr.mxu0 0.0
  %654 = vmatpush1.msra.mxu0 0.0
  %655 = vmatprep.subr.mxu0 0.0
  %656 = vmatpush1.msra.mxu0 0.0
  %657 = vmatprep.mubr.f32.mxu0 0.0
  %658 = vmatmul.mubr.f32.gmra.mrb[0].mxu0 %v591
  %v659 = vpop.f32.mrb[0].mxu0
  %v660 = vadd.f32 0.0, %v659
  %v661 = vpop.f32.mrb[0].mxu0
  %662 = vdwg.mxu0
  %v663 = vld [vmem:[%s3 + $0x140] sm:$0xff]
  %v664 = vld [vmem:[%s3 + $0x148] sm:$0xff]
  %v665 = vld [vmem:[%s3 + $0x150] sm:$0xff]
  %v666 = vld [vmem:[%s3 + $0x158] sm:$0xff]
  %v667 = vld [vmem:[%s3 + $0x160] sm:$0x1]
  %v668 = vlaneseq
  %v669 = vshrl.u32 %v668, 7
  %v670 = vsub.s32 0, %v669
  %v671 = vrot.slane %v667, %v670
  %v673 = vsel %vm589, %v660, 0
  %675 = vmatprep.subr.mxu0 0.0
  %676 = vmatpush1.msra.mxu0 %v663
  %677 = vmatprep.subr.mxu0 0.0
  %678 = vmatpush1.msra.mxu0 %v664
  %679 = vmatprep.subr.mxu0 0.0
  %680 = vmatpush1.msra.mxu0 %v665
  %681 = vmatprep.subr.mxu0 0.0
  %682 = vmatpush1.msra.mxu0 %v666
  %683 = vmatprep.subr.mxu0 0.0
  %684 = vmatpush1.msra.mxu0 0.0
  %685 = vmatprep.subr.mxu0 0.0
  %686 = vmatpush1.msra.mxu0 0.0
  %687 = vmatprep.subr.mxu0 0.0
  %688 = vmatpush1.msra.mxu0 0.0
  %689 = vmatprep.subr.mxu0 0.0
  %690 = vmatpush1.msra.mxu0 0.0
  %691 = vmatprep.subr.mxu0 0.0
  %692 = vmatpush1.msra.mxu0 0.0
  %693 = vmatprep.subr.mxu0 0.0
  %694 = vmatpush1.msra.mxu0 0.0
  %695 = vmatprep.subr.mxu0 0.0
  %696 = vmatpush1.msra.mxu0 0.0
  %697 = vmatprep.subr.mxu0 0.0
  %698 = vmatpush1.msra.mxu0 0.0
  %699 = vmatprep.subr.mxu0 0.0
  %700 = vmatpush1.msra.mxu0 0.0
  %701 = vmatprep.subr.mxu0 0.0
  %702 = vmatpush1.msra.mxu0 0.0
  %703 = vmatprep.subr.mxu0 0.0
  %704 = vmatpush1.msra.mxu0 0.0
  %705 = vmatprep.subr.mxu0 0.0
  %706 = vmatpush1.msra.mxu0 0.0
  %707 = vmatprep.subr.mxu0 0.0
  %708 = vmatpush1.msra.mxu0 0.0
  %709 = vmatprep.subr.mxu0 0.0
  %710 = vmatpush1.msra.mxu0 0.0
  %711 = vmatprep.subr.mxu0 0.0
  %712 = vmatpush1.msra.mxu0 0.0
  %713 = vmatprep.subr.mxu0 0.0
  %714 = vmatpush1.msra.mxu0 0.0
  %715 = vmatprep.subr.mxu0 0.0
  %716 = vmatpush1.msra.mxu0 0.0
  %717 = vmatprep.subr.mxu0 0.0
  %718 = vmatpush1.msra.mxu0 0.0
  %719 = vmatprep.subr.mxu0 0.0
  %720 = vmatpush1.msra.mxu0 0.0
  %721 = vmatprep.subr.mxu0 0.0
  %722 = vmatpush1.msra.mxu0 0.0
  %723 = vmatprep.subr.mxu0 0.0
  %724 = vmatpush1.msra.mxu0 0.0
  %725 = vmatprep.subr.mxu0 0.0
  %726 = vmatpush1.msra.mxu0 0.0
  %727 = vmatprep.subr.mxu0 0.0
  %728 = vmatpush1.msra.mxu0 0.0
  %729 = vmatprep.subr.mxu0 0.0
  %730 = vmatpush1.msra.mxu0 0.0
  %731 = vmatprep.subr.mxu0 0.0
  %732 = vmatpush1.msra.mxu0 0.0
  %733 = vmatprep.subr.mxu0 0.0
  %734 = vmatpush1.msra.mxu0 0.0
  %735 = vmatprep.subr.mxu0 0.0
  %736 = vmatpush1.msra.mxu0 0.0
  %737 = vmatprep.subr.mxu0 0.0
  %738 = vmatpush1.msra.mxu0 0.0
  %739 = vmatprep.mubr.f32.mxu0 0.0
  %740 = vmatmul.mubr.f32.gmra.mrb[0].mxu0 %v673
  %v741 = vpop.f32.mrb[0].mxu0
  %v742 = vadd.f32 %v671, %v741
  %v743 = vpop.f32.mrb[0].mxu0
  %744 = vdwg.mxu0
  %v745 = vld [vmem:[%s3 + $0x168] sm:$0xff]
  %v746 = vld [vmem:[%s3 + $0x170] sm:$0xff]
  %v747 = vld [vmem:[%s3 + $0x178] sm:$0xff]
  %v748 = vld [vmem:[%s3 + $0x180] sm:$0xff]
  %v749 = vld [vmem:[%s3 + $0x188] sm:$0x1]
  %v750 = vlaneseq
  %v751 = vshrl.u32 %v750, 7
  %v752 = vsub.s32 0, %v751
  %v753 = vrot.slane %v749, %v752
  %754 = vmatprep.subr.mxu0 0.0
  %755 = vmatpush1.msra.mxu0 %v745
  %756 = vmatprep.subr.mxu0 0.0
  %757 = vmatpush1.msra.mxu0 %v746
  %758 = vmatprep.subr.mxu0 0.0
  %759 = vmatpush1.msra.mxu0 %v747
  %760 = vmatprep.subr.mxu0 0.0
  %761 = vmatpush1.msra.mxu0 %v748
  %762 = vmatprep.subr.mxu0 0.0
  %763 = vmatpush1.msra.mxu0 0.0
  %764 = vmatprep.subr.mxu0 0.0
  %765 = vmatpush1.msra.mxu0 0.0
  %766 = vmatprep.subr.mxu0 0.0
  %767 = vmatpush1.msra.mxu0 0.0
  %768 = vmatprep.subr.mxu0 0.0
  %769 = vmatpush1.msra.mxu0 0.0
  %770 = vmatprep.subr.mxu0 0.0
  %771 = vmatpush1.msra.mxu0 0.0
  %772 = vmatprep.subr.mxu0 0.0
  %773 = vmatpush1.msra.mxu0 0.0
  %774 = vmatprep.subr.mxu0 0.0
  %775 = vmatpush1.msra.mxu0 0.0
  %776 = vmatprep.subr.mxu0 0.0
  %777 = vmatpush1.msra.mxu0 0.0
  %778 = vmatprep.subr.mxu0 0.0
  %779 = vmatpush1.msra.mxu0 0.0
  %780 = vmatprep.subr.mxu0 0.0
  %781 = vmatpush1.msra.mxu0 0.0
  %782 = vmatprep.subr.mxu0 0.0
  %783 = vmatpush1.msra.mxu0 0.0
  %784 = vmatprep.subr.mxu0 0.0
  %785 = vmatpush1.msra.mxu0 0.0
  %786 = vmatprep.subr.mxu0 0.0
  %787 = vmatpush1.msra.mxu0 0.0
  %788 = vmatprep.subr.mxu0 0.0
  %789 = vmatpush1.msra.mxu0 0.0
  %790 = vmatprep.subr.mxu0 0.0
  %791 = vmatpush1.msra.mxu0 0.0
  %792 = vmatprep.subr.mxu0 0.0
  %793 = vmatpush1.msra.mxu0 0.0
  %794 = vmatprep.subr.mxu0 0.0
  %795 = vmatpush1.msra.mxu0 0.0
  %796 = vmatprep.subr.mxu0 0.0
  %797 = vmatpush1.msra.mxu0 0.0
  %798 = vmatprep.subr.mxu0 0.0
  %799 = vmatpush1.msra.mxu0 0.0
  %800 = vmatprep.subr.mxu0 0.0
  %801 = vmatpush1.msra.mxu0 0.0
  %802 = vmatprep.subr.mxu0 0.0
  %803 = vmatpush1.msra.mxu0 0.0
  %804 = vmatprep.subr.mxu0 0.0
  %805 = vmatpush1.msra.mxu0 0.0
  %806 = vmatprep.subr.mxu0 0.0
  %807 = vmatpush1.msra.mxu0 0.0
  %808 = vmatprep.subr.mxu0 0.0
  %809 = vmatpush1.msra.mxu0 0.0
  %810 = vmatprep.subr.mxu0 0.0
  %811 = vmatpush1.msra.mxu0 0.0
  %812 = vmatprep.subr.mxu0 0.0
  %813 = vmatpush1.msra.mxu0 0.0
  %814 = vmatprep.subr.mxu0 0.0
  %815 = vmatpush1.msra.mxu0 0.0
  %816 = vmatprep.subr.mxu0 0.0
  %817 = vmatpush1.msra.mxu0 0.0
  %818 = vmatprep.mubr.f32.mxu0 0.0
  %819 = vmatmul.mubr.f32.gmra.mrb[0].mxu0 %v673
  %v820 = vpop.f32.mrb[0].mxu0
  %v821 = vadd.f32 %v753, %v820
  %v822 = vpop.f32.mrb[0].mxu0
  %823 = vdwg.mxu0
  %v824 = vld [vmem:[%s4 + $0x610] sm:$0xff]
  %v825 = vld [vmem:[%s4 + $0x618] sm:$0xff]
  %v826 = vld [vmem:[%s4 + $0x620] sm:$0xff]
  %v827 = vld [vmem:[%s4 + $0x628] sm:$0xff]
  %v828 = vld [vmem:[%s4 + $0x630] sm:$0xff]
  %v829 = vld [vmem:[%s4 + $0x638] sm:$0xff]
  %v830 = vld [vmem:[%s4 + $0x640] sm:$0xff]
  %v831 = vld [vmem:[%s4 + $0x648] sm:$0xff]
  %s832 = scalar_lea.vmem %s4, 1616
  %v833 = vld [vmem:[%s832] ss:$8 sm:$0x3]
  %v835 = vlaneseq
  %v836 = vshrl.u32 %v835, 7
  %v837 = vsub.s32 0, %v836
  %v838 = vrot.slane %v833, %v837
  %v839 = vlaneseq
  %v840 = vshrl.u32 %v839, 7
  %v841 = vsub.s32 1, %v840
  %v842 = vrot.slane %v833, %v841
  %v846 = vsel %vm589, %v742, 0
  %848 = vmatprep.subr.mxu0 %v825
  %849 = vmatpush1.msra.mxu0 %v824
  %850 = vmatprep.subr.mxu0 %v827
  %851 = vmatpush1.msra.mxu0 %v826
  %852 = vmatprep.subr.mxu0 %v829
  %853 = vmatpush1.msra.mxu0 %v828
  %854 = vmatprep.subr.mxu0 %v831
  %855 = vmatpush1.msra.mxu0 %v830
  %856 = vmatprep.subr.mxu0 0.0
  %857 = vmatpush1.msra.mxu0 0.0
  %858 = vmatprep.subr.mxu0 0.0
  %859 = vmatpush1.msra.mxu0 0.0
  %860 = vmatprep.subr.mxu0 0.0
  %861 = vmatpush1.msra.mxu0 0.0
  %862 = vmatprep.subr.mxu0 0.0
  %863 = vmatpush1.msra.mxu0 0.0
  %864 = vmatprep.subr.mxu0 0.0
  %865 = vmatpush1.msra.mxu0 0.0
  %866 = vmatprep.subr.mxu0 0.0
  %867 = vmatpush1.msra.mxu0 0.0
  %868 = vmatprep.subr.mxu0 0.0
  %869 = vmatpush1.msra.mxu0 0.0
  %870 = vmatprep.subr.mxu0 0.0
  %871 = vmatpush1.msra.mxu0 0.0
  %872 = vmatprep.subr.mxu0 0.0
  %873 = vmatpush1.msra.mxu0 0.0
  %874 = vmatprep.subr.mxu0 0.0
  %875 = vmatpush1.msra.mxu0 0.0
  %876 = vmatprep.subr.mxu0 0.0
  %877 = vmatpush1.msra.mxu0 0.0
  %878 = vmatprep.subr.mxu0 0.0
  %879 = vmatpush1.msra.mxu0 0.0
  %880 = vmatprep.subr.mxu0 0.0
  %881 = vmatpush1.msra.mxu0 0.0
  %882 = vmatprep.subr.mxu0 0.0
  %883 = vmatpush1.msra.mxu0 0.0
  %884 = vmatprep.subr.mxu0 0.0
  %885 = vmatpush1.msra.mxu0 0.0
  %886 = vmatprep.subr.mxu0 0.0
  %887 = vmatpush1.msra.mxu0 0.0
  %888 = vmatprep.subr.mxu0 0.0
  %889 = vmatpush1.msra.mxu0 0.0
  %890 = vmatprep.subr.mxu0 0.0
  %891 = vmatpush1.msra.mxu0 0.0
  %892 = vmatprep.subr.mxu0 0.0
  %893 = vmatpush1.msra.mxu0 0.0
  %894 = vmatprep.subr.mxu0 0.0
  %895 = vmatpush1.msra.mxu0 0.0
  %896 = vmatprep.subr.mxu0 0.0
  %897 = vmatpush1.msra.mxu0 0.0
  %898 = vmatprep.subr.mxu0 0.0
  %899 = vmatpush1.msra.mxu0 0.0
  %900 = vmatprep.subr.mxu0 0.0
  %901 = vmatpush1.msra.mxu0 0.0
  %902 = vmatprep.subr.mxu0 0.0
  %903 = vmatpush1.msra.mxu0 0.0
  %904 = vmatprep.subr.mxu0 0.0
  %905 = vmatpush1.msra.mxu0 0.0
  %906 = vmatprep.subr.mxu0 0.0
  %907 = vmatpush1.msra.mxu0 0.0
  %908 = vmatprep.subr.mxu0 0.0
  %909 = vmatpush1.msra.mxu0 0.0
  %910 = vmatprep.subr.mxu0 0.0
  %911 = vmatpush1.msra.mxu0 0.0
  %912 = vmatprep.mubr.f32.mxu0 0.0
  %913 = vmatmul.mubr.f32.gmra.mrb[0].mxu0 %v846
  %v914 = vpop.f32.mrb[0].mxu0
  %v915 = vadd.f32 %v838, %v914
  %v916 = vpop.f32.mrb[0].mxu0
  %v917 = vadd.f32 %v842, %v916
  %918 = vdwg.mxu0
  %v919 = vadd.f32 %v584, %v915
  %v920 = vadd.f32 %v586, %v917
  %v921 = vtanh.pop %v919
  %v922 = vtanh.pop %v920
  %v923 = vld [vmem:[%s3 + $0x38] sm:$0xff]
  %v924 = vld [vmem:[%s3 + $0x40] sm:$0xff]
  %v925 = vld [vmem:[%s3 + $0x48] sm:$0xff]
  %v926 = vld [vmem:[%s3 + $0x50] sm:$0xff]
  %v927 = vld [vmem:[%s3 + $0x58] sm:$0xff]
  %v928 = vld [vmem:[%s3 + $0x60] sm:$0xff]
  %v929 = vld [vmem:[%s3 + $0x68] sm:$0xff]
  %v930 = vld [vmem:[%s3 + $0x70] sm:$0xff]
  %v931 = vld [vmem:[%s3 + $0x78] sm:$0xff]
  %v932 = vld [vmem:[%s3 + $0x80] sm:$0xff]
  %v933 = vld [vmem:[%s3 + $0x88] sm:$0xff]
  %v934 = vld [vmem:[%s3 + $0x90] sm:$0xff]
  %v935 = vld [vmem:[%s3 + $0x98] sm:$0xff]
  %v936 = vld [vmem:[%s3 + $0xa0] sm:$0xff]
  %v937 = vld [vmem:[%s3 + $0xa8] sm:$0xff]
  %v938 = vld [vmem:[%s3 + $0xb0] sm:$0xff]
  %v939 = vld [vmem:[%s3 + $0xb8] sm:$0xff]
  %v940 = vld [vmem:[%s3 + $0xc0] sm:$0xff]
  %v941 = vld [vmem:[%s3 + $0xc8] sm:$0xff]
  %v942 = vld [vmem:[%s3 + $0xd0] sm:$0xff]
  %v943 = vld [vmem:[%s3 + $0xd8] sm:$0xff]
  %v944 = vld [vmem:[%s3 + $0xe0] sm:$0xff]
  %v945 = vld [vmem:[%s3 + $0xe8] sm:$0xff]
  %v946 = vld [vmem:[%s3 + $0xf0] sm:$0xff]
  %v947 = vld [vmem:[%s3 + $0xf8] sm:$0xff]
  %v948 = vld [vmem:[%s3 + $0x100] sm:$0xff]
  %v949 = vld [vmem:[%s3 + $0x108] sm:$0xff]
  %v950 = vld [vmem:[%s3 + $0x110] sm:$0xff]
  %v951 = vld [vmem:[%s3 + $0x118] sm:$0xff]
  %v952 = vld [vmem:[%s3 + $0x120] sm:$0xff]
  %v953 = vld [vmem:[%s3 + $0x128] sm:$0xff]
  %v954 = vld [vmem:[%s3 + $0x130] sm:$0xff]
  %v955 = vld [vmem:[%s3 + $0x138] sm:$0x1]
  %s957 = vtos %v955
  %v958 = vstv %s957
  %960 = vmatprep.subr.mxu0 0.0
  %961 = vmatpush1.msra.mxu0 %v923
  %962 = vmatprep.subr.mxu0 0.0
  %963 = vmatpush1.msra.mxu0 %v924
  %964 = vmatprep.subr.mxu0 0.0
  %965 = vmatpush1.msra.mxu0 %v925
  %966 = vmatprep.subr.mxu0 0.0
  %967 = vmatpush1.msra.mxu0 %v926
  %968 = vmatprep.subr.mxu0 0.0
  %969 = vmatpush1.msra.mxu0 %v927
  %970 = vmatprep.subr.mxu0 0.0
  %971 = vmatpush1.msra.mxu0 %v928
  %972 = vmatprep.subr.mxu0 0.0
  %973 = vmatpush1.msra.mxu0 %v929
  %974 = vmatprep.subr.mxu0 0.0
  %975 = vmatpush1.msra.mxu0 %v930
  %976 = vmatprep.subr.mxu0 0.0
  %977 = vmatpush1.msra.mxu0 %v931
  %978 = vmatprep.subr.mxu0 0.0
  %979 = vmatpush1.msra.mxu0 %v932
  %980 = vmatprep.subr.mxu0 0.0
  %981 = vmatpush1.msra.mxu0 %v933
  %982 = vmatprep.subr.mxu0 0.0
  %983 = vmatpush1.msra.mxu0 %v934
  %984 = vmatprep.subr.mxu0 0.0
  %985 = vmatpush1.msra.mxu0 %v935
  %986 = vmatprep.subr.mxu0 0.0
  %987 = vmatpush1.msra.mxu0 %v936
  %988 = vmatprep.subr.mxu0 0.0
  %989 = vmatpush1.msra.mxu0 %v937
  %990 = vmatprep.subr.mxu0 0.0
  %991 = vmatpush1.msra.mxu0 %v938
  %992 = vmatprep.subr.mxu0 0.0
  %993 = vmatpush1.msra.mxu0 %v939
  %994 = vmatprep.subr.mxu0 0.0
  %995 = vmatpush1.msra.mxu0 %v940
  %996 = vmatprep.subr.mxu0 0.0
  %997 = vmatpush1.msra.mxu0 %v941
  %998 = vmatprep.subr.mxu0 0.0
  %999 = vmatpush1.msra.mxu0 %v942
  %1000 = vmatprep.subr.mxu0 0.0
  %1001 = vmatpush1.msra.mxu0 %v943
  %1002 = vmatprep.subr.mxu0 0.0
  %1003 = vmatpush1.msra.mxu0 %v944
  %1004 = vmatprep.subr.mxu0 0.0
  %1005 = vmatpush1.msra.mxu0 %v945
  %1006 = vmatprep.subr.mxu0 0.0
  %1007 = vmatpush1.msra.mxu0 %v946
  %1008 = vmatprep.subr.mxu0 0.0
  %1009 = vmatpush1.msra.mxu0 %v947
  %1010 = vmatprep.subr.mxu0 0.0
  %1011 = vmatpush1.msra.mxu0 %v948
  %1012 = vmatprep.subr.mxu0 0.0
  %1013 = vmatpush1.msra.mxu0 %v949
  %1014 = vmatprep.subr.mxu0 0.0
  %1015 = vmatpush1.msra.mxu0 %v950
  %1016 = vmatprep.subr.mxu0 0.0
  %1017 = vmatpush1.msra.mxu0 %v951
  %1018 = vmatprep.subr.mxu0 0.0
  %1019 = vmatpush1.msra.mxu0 %v952
  %1020 = vmatprep.subr.mxu0 0.0
  %1021 = vmatpush1.msra.mxu0 %v953
  %1022 = vmatprep.subr.mxu0 0.0
  %1023 = vmatpush1.msra.mxu0 %v954
  %1024 = vmatprep.mubr.f32.mxu0 %v922
  %1025 = vmatmul.mubr.f32.gmra.mrb[0].mxu0 %v921
  %v1026 = vpop.f32.mrb[0].mxu0
  %v1027 = vadd.f32 %v958, %v1026
  %v1028 = vpop.f32.mrb[0].mxu0
  %1029 = vdwg.mxu0
  %vm1030 = vcmask 123904
  %v1031 = vsel %vm1030, %v1027, -inf
  %1032 = vmax.xlane.f32.xlu0 %v1031
  %v1033 = vpop.xlane.xlu0 %1032
  %v1034 = vsub.f32 %v1027, %v1033
  %v1035 = vmul.f32 %v1034, 1.442695
  %v1036 = vpow.pop %v1035
  %v1037 = vsel %vm1030, %v1036, 0.0
  %1038 = vadd.xlane.f32.xlu0 %v1037
  %v1039 = vpop.xlane.xlu0 %1038
  %v1040 = vrcp.pop %v1039
  %v1041 = vmul.f32 %v1036, %v1040
  %vm1042 = vcmask 130048
  %v1044 = vsel %vm1042, %v1041, 0
  %1046 = vmatprep.subr.mxu0 0.0
  %1047 = vmatpush1.msra.mxu0 %v117
  %1048 = vmatprep.subr.mxu0 0.0
  %1049 = vmatpush1.msra.mxu0 %v122
  %1050 = vmatprep.subr.mxu0 0.0
  %1051 = vmatpush1.msra.mxu0 0.0
  %1052 = vmatprep.subr.mxu0 0.0
  %1053 = vmatpush1.msra.mxu0 0.0
  %1054 = vmatprep.subr.mxu0 0.0
  %1055 = vmatpush1.msra.mxu0 0.0
  %1056 = vmatprep.subr.mxu0 0.0
  %1057 = vmatpush1.msra.mxu0 0.0
  %1058 = vmatprep.subr.mxu0 0.0
  %1059 = vmatpush1.msra.mxu0 0.0
  %1060 = vmatprep.subr.mxu0 0.0
  %1061 = vmatpush1.msra.mxu0 0.0
  %1062 = vmatprep.subr.mxu0 0.0
  %1063 = vmatpush1.msra.mxu0 0.0
  %1064 = vmatprep.subr.mxu0 0.0
  %1065 = vmatpush1.msra.mxu0 0.0
  %1066 = vmatprep.subr.mxu0 0.0
  %1067 = vmatpush1.msra.mxu0 0.0
  %1068 = vmatprep.subr.mxu0 0.0
  %1069 = vmatpush1.msra.mxu0 0.0
  %1070 = vmatprep.subr.mxu0 0.0
  %1071 = vmatpush1.msra.mxu0 0.0
  %1072 = vmatprep.subr.mxu0 0.0
  %1073 = vmatpush1.msra.mxu0 0.0
  %1074 = vmatprep.subr.mxu0 0.0
  %1075 = vmatpush1.msra.mxu0 0.0
  %1076 = vmatprep.subr.mxu0 0.0
  %1077 = vmatpush1.msra.mxu0 0.0
  %1078 = vmatprep.subr.mxu0 0.0
  %1079 = vmatpush1.msra.mxu0 0.0
  %1080 = vmatprep.subr.mxu0 0.0
  %1081 = vmatpush1.msra.mxu0 0.0
  %1082 = vmatprep.subr.mxu0 0.0
  %1083 = vmatpush1.msra.mxu0 0.0
  %1084 = vmatprep.subr.mxu0 0.0
  %1085 = vmatpush1.msra.mxu0 0.0
  %1086 = vmatprep.subr.mxu0 0.0
  %1087 = vmatpush1.msra.mxu0 0.0
  %1088 = vmatprep.subr.mxu0 0.0
  %1089 = vmatpush1.msra.mxu0 0.0
  %1090 = vmatprep.subr.mxu0 0.0
  %1091 = vmatpush1.msra.mxu0 0.0
  %1092 = vmatprep.subr.mxu0 0.0
  %1093 = vmatpush1.msra.mxu0 0.0
  %1094 = vmatprep.subr.mxu0 0.0
  %1095 = vmatpush1.msra.mxu0 0.0
  %1096 = vmatprep.subr.mxu0 0.0
  %1097 = vmatpush1.msra.mxu0 0.0
  %1098 = vmatprep.subr.mxu0 0.0
  %1099 = vmatpush1.msra.mxu0 0.0
  %1100 = vmatprep.subr.mxu0 0.0
  %1101 = vmatpush1.msra.mxu0 0.0
  %1102 = vmatprep.subr.mxu0 0.0
  %1103 = vmatpush1.msra.mxu0 0.0
  %1104 = vmatprep.subr.mxu0 0.0
  %1105 = vmatpush1.msra.mxu0 0.0
  %1106 = vmatprep.subr.mxu0 0.0
  %1107 = vmatpush1.msra.mxu0 0.0
  %1108 = vmatprep.subr.mxu0 0.0
  %1109 = vmatpush1.msra.mxu0 0.0
  %1110 = vmatprep.mubr.f32.mxu0 0.0
  %1111 = vmatmul.mubr.f32.gmra.mrb[0].mxu0 %v1044
  %v1112 = vpop.f32.mrb[0].mxu0
  %v1113 = vadd.f32 0.0, %v1112
  %v1114 = vpop.f32.mrb[0].mxu0
  %1115 = vdwg.mxu0
  %v1116 = vrot.slane %v1041, 1
  %v1117 = vsel %vm1042, %v1116, 0
  %1119 = vmatprep.subr.mxu0 0.0
  %1120 = vmatpush1.msra.mxu0 %v127
  %1121 = vmatprep.subr.mxu0 0.0
  %1122 = vmatpush1.msra.mxu0 %v132
  %1123 = vmatprep.subr.mxu0 0.0
  %1124 = vmatpush1.msra.mxu0 0.0
  %1125 = vmatprep.subr.mxu0 0.0
  %1126 = vmatpush1.msra.mxu0 0.0
  %1127 = vmatprep.subr.mxu0 0.0
  %1128 = vmatpush1.msra.mxu0 0.0
  %1129 = vmatprep.subr.mxu0 0.0
  %1130 = vmatpush1.msra.mxu0 0.0
  %1131 = vmatprep.subr.mxu0 0.0
  %1132 = vmatpush1.msra.mxu0 0.0
  %1133 = vmatprep.subr.mxu0 0.0
  %1134 = vmatpush1.msra.mxu0 0.0
  %1135 = vmatprep.subr.mxu0 0.0
  %1136 = vmatpush1.msra.mxu0 0.0
  %1137 = vmatprep.subr.mxu0 0.0
  %1138 = vmatpush1.msra.mxu0 0.0
  %1139 = vmatprep.subr.mxu0 0.0
  %1140 = vmatpush1.msra.mxu0 0.0
  %1141 = vmatprep.subr.mxu0 0.0
  %1142 = vmatpush1.msra.mxu0 0.0
  %1143 = vmatprep.subr.mxu0 0.0
  %1144 = vmatpush1.msra.mxu0 0.0
  %1145 = vmatprep.subr.mxu0 0.0
  %1146 = vmatpush1.msra.mxu0 0.0
  %1147 = vmatprep.subr.mxu0 0.0
  %1148 = vmatpush1.msra.mxu0 0.0
  %1149 = vmatprep.subr.mxu0 0.0
  %1150 = vmatpush1.msra.mxu0 0.0
  %1151 = vmatprep.subr.mxu0 0.0
  %1152 = vmatpush1.msra.mxu0 0.0
  %1153 = vmatprep.subr.mxu0 0.0
  %1154 = vmatpush1.msra.mxu0 0.0
  %1155 = vmatprep.subr.mxu0 0.0
  %1156 = vmatpush1.msra.mxu0 0.0
  %1157 = vmatprep.subr.mxu0 0.0
  %1158 = vmatpush1.msra.mxu0 0.0
  %1159 = vmatprep.subr.mxu0 0.0
  %1160 = vmatpush1.msra.mxu0 0.0
  %1161 = vmatprep.subr.mxu0 0.0
  %1162 = vmatpush1.msra.mxu0 0.0
  %1163 = vmatprep.subr.mxu0 0.0
  %1164 = vmatpush1.msra.mxu0 0.0
  %1165 = vmatprep.subr.mxu0 0.0
  %1166 = vmatpush1.msra.mxu0 0.0
  %1167 = vmatprep.subr.mxu0 0.0
  %1168 = vmatpush1.msra.mxu0 0.0
  %1169 = vmatprep.subr.mxu0 0.0
  %1170 = vmatpush1.msra.mxu0 0.0
  %1171 = vmatprep.subr.mxu0 0.0
  %1172 = vmatpush1.msra.mxu0 0.0
  %1173 = vmatprep.subr.mxu0 0.0
  %1174 = vmatpush1.msra.mxu0 0.0
  %1175 = vmatprep.subr.mxu0 0.0
  %1176 = vmatpush1.msra.mxu0 0.0
  %1177 = vmatprep.subr.mxu0 0.0
  %1178 = vmatpush1.msra.mxu0 0.0
  %1179 = vmatprep.subr.mxu0 0.0
  %1180 = vmatpush1.msra.mxu0 0.0
  %1181 = vmatprep.subr.mxu0 0.0
  %1182 = vmatpush1.msra.mxu0 0.0
  %1183 = vmatprep.mubr.f32.mxu0 0.0
  %1184 = vmatmul.mubr.f32.gmra.mrb[0].mxu0 %v1117
  %v1185 = vpop.f32.mrb[0].mxu0
  %v1186 = vadd.f32 0.0, %v1185
  %v1187 = vpop.f32.mrb[0].mxu0
  %1188 = vdwg.mxu0
  %v1190 = vrot.slane %v1186, 7
  %vm1192 = vcmask 1040384
  %v1193 = vsel %vm1192, %v1113, %v1190
  %v1194 = vld [vmem:[%s2] sm:$0x3]
  %v1195 = vld [vmem:[%s3 + $0x198] sm:$0xff]
  %v1196 = vld [vmem:[%s3 + $0x1a0] sm:$0xff]
  %v1197 = vld [vmem:[%s3 + $0x1a8] sm:$0xff]
  %v1198 = vld [vmem:[%s3 + $0x1b0] sm:$0xff]
  %v1199 = vld [vmem:[%s3 + $0x1b8] sm:$0xff]
  %v1200 = vld [vmem:[%s3 + $0x1c0] sm:$0xff]
  %v1202 = vsel %vm589, %v1193, 0
  %1204 = vmatprep.subr.mxu0 0.0
  %1205 = vmatpush1.msra.mxu0 %v1197
  %1206 = vmatprep.subr.mxu0 0.0
  %1207 = vmatpush1.msra.mxu0 %v1198
  %1208 = vmatprep.subr.mxu0 0.0
  %1209 = vmatpush1.msra.mxu0 %v1199
  %1210 = vmatprep.subr.mxu0 0.0
  %1211 = vmatpush1.msra.mxu0 %v1200
  %1212 = vmatprep.subr.mxu0 0.0
  %1213 = vmatpush1.msra.mxu0 0.0
  %1214 = vmatprep.subr.mxu0 0.0
  %1215 = vmatpush1.msra.mxu0 0.0
  %1216 = vmatprep.subr.mxu0 0.0
  %1217 = vmatpush1.msra.mxu0 0.0
  %1218 = vmatprep.subr.mxu0 0.0
  %1219 = vmatpush1.msra.mxu0 0.0
  %1220 = vmatprep.subr.mxu0 0.0
  %1221 = vmatpush1.msra.mxu0 0.0
  %1222 = vmatprep.subr.mxu0 0.0
  %1223 = vmatpush1.msra.mxu0 0.0
  %1224 = vmatprep.subr.mxu0 0.0
  %1225 = vmatpush1.msra.mxu0 0.0
  %1226 = vmatprep.subr.mxu0 0.0
  %1227 = vmatpush1.msra.mxu0 0.0
  %1228 = vmatprep.subr.mxu0 0.0
  %1229 = vmatpush1.msra.mxu0 0.0
  %1230 = vmatprep.subr.mxu0 0.0
  %1231 = vmatpush1.msra.mxu0 0.0
  %1232 = vmatprep.subr.mxu0 0.0
  %1233 = vmatpush1.msra.mxu0 0.0
  %1234 = vmatprep.subr.mxu0 0.0
  %1235 = vmatpush1.msra.mxu0 0.0
  %1236 = vmatprep.subr.mxu0 0.0
  %1237 = vmatpush1.msra.mxu0 0.0
  %1238 = vmatprep.subr.mxu0 0.0
  %1239 = vmatpush1.msra.mxu0 0.0
  %1240 = vmatprep.subr.mxu0 0.0
  %1241 = vmatpush1.msra.mxu0 0.0
  %1242 = vmatprep.subr.mxu0 0.0
  %1243 = vmatpush1.msra.mxu0 0.0
  %1244 = vmatprep.subr.mxu0 0.0
  %1245 = vmatpush1.msra.mxu0 0.0
  %1246 = vmatprep.subr.mxu0 0.0
  %1247 = vmatpush1.msra.mxu0 0.0
  %1248 = vmatprep.subr.mxu0 0.0
  %1249 = vmatpush1.msra.mxu0 0.0
  %1250 = vmatprep.subr.mxu0 0.0
  %1251 = vmatpush1.msra.mxu0 0.0
  %1252 = vmatprep.subr.mxu0 0.0
  %1253 = vmatpush1.msra.mxu0 0.0
  %1254 = vmatprep.subr.mxu0 0.0
  %1255 = vmatpush1.msra.mxu0 0.0
  %1256 = vmatprep.subr.mxu0 0.0
  %1257 = vmatpush1.msra.mxu0 0.0
  %1258 = vmatprep.subr.mxu0 0.0
  %1259 = vmatpush1.msra.mxu0 0.0
  %1260 = vmatprep.subr.mxu0 0.0
  %1261 = vmatpush1.msra.mxu0 0.0
  %1262 = vmatprep.subr.mxu0 0.0
  %1263 = vmatpush1.msra.mxu0 0.0
  %1264 = vmatprep.subr.mxu0 0.0
  %1265 = vmatpush1.msra.mxu0 0.0
  %1266 = vmatprep.subr.mxu0 0.0
  %1267 = vmatpush1.msra.mxu0 0.0
  %1268 = vmatprep.mubr.f32.mxu0 0.0
  %1269 = vmatmul.mubr.f32.gmra.mrb[0].mxu0 %v1202
  %v1270 = vpop.f32.mrb[0].mxu0
  %v1271 = vadd.f32 0.0, %v1270
  %v1272 = vpop.f32.mrb[0].mxu0
  %1273 = vdwg.mxu0
  %v1275 = vsel %vm1042, %v1194, 0
  %1277 = vmatprep.subr.mxu0 0.0
  %1278 = vmatpush1.msra.mxu0 %v1195
  %1279 = vmatprep.subr.mxu0 0.0
  %1280 = vmatpush1.msra.mxu0 %v1196
  %1281 = vmatprep.subr.mxu0 0.0
  %1282 = vmatpush1.msra.mxu0 0.0
  %1283 = vmatprep.subr.mxu0 0.0
  %1284 = vmatpush1.msra.mxu0 0.0
  %1285 = vmatprep.subr.mxu0 0.0
  %1286 = vmatpush1.msra.mxu0 0.0
  %1287 = vmatprep.subr.mxu0 0.0
  %1288 = vmatpush1.msra.mxu0 0.0
  %1289 = vmatprep.subr.mxu0 0.0
  %1290 = vmatpush1.msra.mxu0 0.0
  %1291 = vmatprep.subr.mxu0 0.0
  %1292 = vmatpush1.msra.mxu0 0.0
  %1293 = vmatprep.subr.mxu0 0.0
  %1294 = vmatpush1.msra.mxu0 0.0
  %1295 = vmatprep.subr.mxu0 0.0
  %1296 = vmatpush1.msra.mxu0 0.0
  %1297 = vmatprep.subr.mxu0 0.0
  %1298 = vmatpush1.msra.mxu0 0.0
  %1299 = vmatprep.subr.mxu0 0.0
  %1300 = vmatpush1.msra.mxu0 0.0
  %1301 = vmatprep.subr.mxu0 0.0
  %1302 = vmatpush1.msra.mxu0 0.0
  %1303 = vmatprep.subr.mxu0 0.0
  %1304 = vmatpush1.msra.mxu0 0.0
  %1305 = vmatprep.subr.mxu0 0.0
  %1306 = vmatpush1.msra.mxu0 0.0
  %1307 = vmatprep.subr.mxu0 0.0
  %1308 = vmatpush1.msra.mxu0 0.0
  %1309 = vmatprep.subr.mxu0 0.0
  %1310 = vmatpush1.msra.mxu0 0.0
  %1311 = vmatprep.subr.mxu0 0.0
  %1312 = vmatpush1.msra.mxu0 0.0
  %1313 = vmatprep.subr.mxu0 0.0
  %1314 = vmatpush1.msra.mxu0 0.0
  %1315 = vmatprep.subr.mxu0 0.0
  %1316 = vmatpush1.msra.mxu0 0.0
  %1317 = vmatprep.subr.mxu0 0.0
  %1318 = vmatpush1.msra.mxu0 0.0
  %1319 = vmatprep.subr.mxu0 0.0
  %1320 = vmatpush1.msra.mxu0 0.0
  %1321 = vmatprep.subr.mxu0 0.0
  %1322 = vmatpush1.msra.mxu0 0.0
  %1323 = vmatprep.subr.mxu0 0.0
  %1324 = vmatpush1.msra.mxu0 0.0
  %1325 = vmatprep.subr.mxu0 0.0
  %1326 = vmatpush1.msra.mxu0 0.0
  %1327 = vmatprep.subr.mxu0 0.0
  %1328 = vmatpush1.msra.mxu0 0.0
  %1329 = vmatprep.subr.mxu0 0.0
  %1330 = vmatpush1.msra.mxu0 0.0
  %1331 = vmatprep.subr.mxu0 0.0
  %1332 = vmatpush1.msra.mxu0 0.0
  %1333 = vmatprep.subr.mxu0 0.0
  %1334 = vmatpush1.msra.mxu0 0.0
  %1335 = vmatprep.subr.mxu0 0.0
  %1336 = vmatpush1.msra.mxu0 0.0
  %1337 = vmatprep.subr.mxu0 0.0
  %1338 = vmatpush1.msra.mxu0 0.0
  %1339 = vmatprep.subr.mxu0 0.0
  %1340 = vmatpush1.msra.mxu0 0.0
  %1341 = vmatprep.mubr.f32.mxu0 0.0
  %1342 = vmatmul.mubr.f32.gmra.mrb[0].mxu0 %v1275
  %v1343 = vpop.f32.mrb[0].mxu0
  %v1344 = vadd.f32 %v1271, %v1343
  %v1345 = vpop.f32.mrb[0].mxu0
  %1346 = vdwg.mxu0
  %v1347 = vld [vmem:[%s3 + $0x1c8] sm:$0xff]
  %v1348 = vld [vmem:[%s3 + $0x1d0] sm:$0xff]
  %v1349 = vld [vmem:[%s3 + $0x1d8] sm:$0xff]
  %v1350 = vld [vmem:[%s3 + $0x1e0] sm:$0xff]
  %1351 = vmatprep.subr.mxu0 0.0
  %1352 = vmatpush1.msra.mxu0 %v1347
  %1353 = vmatprep.subr.mxu0 0.0
  %1354 = vmatpush1.msra.mxu0 %v1348
  %1355 = vmatprep.subr.mxu0 0.0
  %1356 = vmatpush1.msra.mxu0 %v1349
  %1357 = vmatprep.subr.mxu0 0.0
  %1358 = vmatpush1.msra.mxu0 %v1350
  %1359 = vmatprep.subr.mxu0 0.0
  %1360 = vmatpush1.msra.mxu0 0.0
  %1361 = vmatprep.subr.mxu0 0.0
  %1362 = vmatpush1.msra.mxu0 0.0
  %1363 = vmatprep.subr.mxu0 0.0
  %1364 = vmatpush1.msra.mxu0 0.0
  %1365 = vmatprep.subr.mxu0 0.0
  %1366 = vmatpush1.msra.mxu0 0.0
  %1367 = vmatprep.subr.mxu0 0.0
  %1368 = vmatpush1.msra.mxu0 0.0
  %1369 = vmatprep.subr.mxu0 0.0
  %1370 = vmatpush1.msra.mxu0 0.0
  %1371 = vmatprep.subr.mxu0 0.0
  %1372 = vmatpush1.msra.mxu0 0.0
  %1373 = vmatprep.subr.mxu0 0.0
  %1374 = vmatpush1.msra.mxu0 0.0
  %1375 = vmatprep.subr.mxu0 0.0
  %1376 = vmatpush1.msra.mxu0 0.0
  %1377 = vmatprep.subr.mxu0 0.0
  %1378 = vmatpush1.msra.mxu0 0.0
  %1379 = vmatprep.subr.mxu0 0.0
  %1380 = vmatpush1.msra.mxu0 0.0
  %1381 = vmatprep.subr.mxu0 0.0
  %1382 = vmatpush1.msra.mxu0 0.0
  %1383 = vmatprep.subr.mxu0 0.0
  %1384 = vmatpush1.msra.mxu0 0.0
  %1385 = vmatprep.subr.mxu0 0.0
  %1386 = vmatpush1.msra.mxu0 0.0
  %1387 = vmatprep.subr.mxu0 0.0
  %1388 = vmatpush1.msra.mxu0 0.0
  %1389 = vmatprep.subr.mxu0 0.0
  %1390 = vmatpush1.msra.mxu0 0.0
  %1391 = vmatprep.subr.mxu0 0.0
  %1392 = vmatpush1.msra.mxu0 0.0
  %1393 = vmatprep.subr.mxu0 0.0
  %1394 = vmatpush1.msra.mxu0 0.0
  %1395 = vmatprep.subr.mxu0 0.0
  %1396 = vmatpush1.msra.mxu0 0.0
  %1397 = vmatprep.subr.mxu0 0.0
  %1398 = vmatpush1.msra.mxu0 0.0
  %1399 = vmatprep.subr.mxu0 0.0
  %1400 = vmatpush1.msra.mxu0 0.0
  %1401 = vmatprep.subr.mxu0 0.0
  %1402 = vmatpush1.msra.mxu0 0.0
  %1403 = vmatprep.subr.mxu0 0.0
  %1404 = vmatpush1.msra.mxu0 0.0
  %1405 = vmatprep.subr.mxu0 0.0
  %1406 = vmatpush1.msra.mxu0 0.0
  %1407 = vmatprep.subr.mxu0 0.0
  %1408 = vmatpush1.msra.mxu0 0.0
  %1409 = vmatprep.subr.mxu0 0.0
  %1410 = vmatpush1.msra.mxu0 0.0
  %1411 = vmatprep.subr.mxu0 0.0
  %1412 = vmatpush1.msra.mxu0 0.0
  %1413 = vmatprep.subr.mxu0 0.0
  %1414 = vmatpush1.msra.mxu0 0.0
  %1415 = vmatprep.mubr.f32.mxu0 0.0
  %1416 = vmatmul.mubr.f32.gmra.mrb[0].mxu0 %v846
  %v1417 = vpop.f32.mrb[0].mxu0
  %v1418 = vadd.f32 0.0, %v1417
  %v1419 = vpop.f32.mrb[0].mxu0
  %1420 = vdwg.mxu0
  %v1421 = vadd.f32 %v1344, %v1418
  %v1422 = vld [vmem:[%s3 + $0x1e8] sm:$0x1]
  %v1423 = vlaneseq
  %v1424 = vshrl.u32 %v1423, 7
  %v1425 = vsub.s32 0, %v1424
  %v1426 = vrot.slane %v1422, %v1425
  %v1427 = vadd.f32 %v1421, %v1426
  %v1428 = vxor.u32 %v1427, 2147483648
  %v1429 = vmul.f32 %v1428, 1.442695
  %v1430 = vpow.pop %v1429
  %v1431 = vadd.f32 %v1430, 1.0
  %v1432 = vrcp.pop %v1431
  %v1433 = vmul.f32 1.0, %v1432
  %v1434 = vtanh.pop %v1427
  %1436 = vrot.lane.b32.xlu0 %v821, 32
  %v1437 = vpop.permute.xlu0 %1436
  %v1439 = vmul.f32 %v1433, %v1437
  %1441 = vrot.lane.b32.xlu0 %v1434, 64
  %v1442 = vpop.permute.xlu0 %1441
  %v1444 = vmul.f32 %v1433, %v1442
  %1446 = vrot.lane.b32.xlu0 %v1444, 32
  %v1447 = vpop.permute.xlu0 %1446
  %v1449 = vadd.f32 %v1439, %v1447
  %v1450 = vtanh.pop %v1449
  %1452 = vrot.lane.b32.xlu0 %v1450, 64
  %v1453 = vpop.permute.xlu0 %1452
  %v1455 = vmul.f32 %v1433, %v1453
  %v1456 = vld [vmem:[%s3 + $0x1f0] sm:$0xff]
  %v1457 = vld [vmem:[%s3 + $0x1f8] sm:$0xff]
  %v1458 = vld [vmem:[%s3 + $0x200] sm:$0xff]
  %v1459 = vld [vmem:[%s3 + $0x208] sm:$0xff]
  %v1460 = vld [vmem:[%s3 + $0x210] sm:$0x1]
  %v1461 = vlaneseq
  %v1462 = vshrl.u32 %v1461, 7
  %v1463 = vsub.s32 0, %v1462
  %v1464 = vrot.slane %v1460, %v1463
  %1466 = vrot.lane.b32.xlu0 %v1455, 32
  %v1467 = vpop.permute.xlu0 %1466
  %v1468 = vsel %vm589, %v1467, 0
  %1470 = vmatprep.subr.mxu0 0.0
  %1471 = vmatpush1.msra.mxu0 %v1456
  %1472 = vmatprep.subr.mxu0 0.0
  %1473 = vmatpush1.msra.mxu0 %v1457
  %1474 = vmatprep.subr.mxu0 0.0
  %1475 = vmatpush1.msra.mxu0 %v1458
  %1476 = vmatprep.subr.mxu0 0.0
  %1477 = vmatpush1.msra.mxu0 %v1459
  %1478 = vmatprep.subr.mxu0 0.0
  %1479 = vmatpush1.msra.mxu0 0.0
  %1480 = vmatprep.subr.mxu0 0.0
  %1481 = vmatpush1.msra.mxu0 0.0
  %1482 = vmatprep.subr.mxu0 0.0
  %1483 = vmatpush1.msra.mxu0 0.0
  %1484 = vmatprep.subr.mxu0 0.0
  %1485 = vmatpush1.msra.mxu0 0.0
  %1486 = vmatprep.subr.mxu0 0.0
  %1487 = vmatpush1.msra.mxu0 0.0
  %1488 = vmatprep.subr.mxu0 0.0
  %1489 = vmatpush1.msra.mxu0 0.0
  %1490 = vmatprep.subr.mxu0 0.0
  %1491 = vmatpush1.msra.mxu0 0.0
  %1492 = vmatprep.subr.mxu0 0.0
  %1493 = vmatpush1.msra.mxu0 0.0
  %1494 = vmatprep.subr.mxu0 0.0
  %1495 = vmatpush1.msra.mxu0 0.0
  %1496 = vmatprep.subr.mxu0 0.0
  %1497 = vmatpush1.msra.mxu0 0.0
  %1498 = vmatprep.subr.mxu0 0.0
  %1499 = vmatpush1.msra.mxu0 0.0
  %1500 = vmatprep.subr.mxu0 0.0
  %1501 = vmatpush1.msra.mxu0 0.0
  %1502 = vmatprep.subr.mxu0 0.0
  %1503 = vmatpush1.msra.mxu0 0.0
  %1504 = vmatprep.subr.mxu0 0.0
  %1505 = vmatpush1.msra.mxu0 0.0
  %1506 = vmatprep.subr.mxu0 0.0
  %1507 = vmatpush1.msra.mxu0 0.0
  %1508 = vmatprep.subr.mxu0 0.0
  %1509 = vmatpush1.msra.mxu0 0.0
  %1510 = vmatprep.subr.mxu0 0.0
  %1511 = vmatpush1.msra.mxu0 0.0
  %1512 = vmatprep.subr.mxu0 0.0
  %1513 = vmatpush1.msra.mxu0 0.0
  %1514 = vmatprep.subr.mxu0 0.0
  %1515 = vmatpush1.msra.mxu0 0.0
  %1516 = vmatprep.subr.mxu0 0.0
  %1517 = vmatpush1.msra.mxu0 0.0
  %1518 = vmatprep.subr.mxu0 0.0
  %1519 = vmatpush1.msra.mxu0 0.0
  %1520 = vmatprep.subr.mxu0 0.0
  %1521 = vmatpush1.msra.mxu0 0.0
  %1522 = vmatprep.subr.mxu0 0.0
  %1523 = vmatpush1.msra.mxu0 0.0
  %1524 = vmatprep.subr.mxu0 0.0
  %1525 = vmatpush1.msra.mxu0 0.0
  %1526 = vmatprep.subr.mxu0 0.0
  %1527 = vmatpush1.msra.mxu0 0.0
  %1528 = vmatprep.subr.mxu0 0.0
  %1529 = vmatpush1.msra.mxu0 0.0
  %1530 = vmatprep.subr.mxu0 0.0
  %1531 = vmatpush1.msra.mxu0 0.0
  %1532 = vmatprep.subr.mxu0 0.0
  %1533 = vmatpush1.msra.mxu0 0.0
  %1534 = vmatprep.mubr.f32.mxu0 0.0
  %1535 = vmatmul.mubr.f32.gmra.mrb[0].mxu0 %v1468
  %v1536 = vpop.f32.mrb[0].mxu0
  %v1537 = vadd.f32 %v1464, %v1536
  %v1538 = vpop.f32.mrb[0].mxu0
  %1539 = vdwg.mxu0
  %vm1540 = vcmask 254976
  %1541 = vst.msk [vmem:[%s5] sm:$0x3] %vm1540, %v1537
  %1542 = vst.msk [vmem:[%s6] sm:$0x3] %vm1030, %v1041
  %v1543 = vld [vmem:[%s4 + $0x610] sm:$0xff]
  %v1544 = vld [vmem:[%s4 + $0x618] sm:$0xff]
  %v1545 = vld [vmem:[%s4 + $0x620] sm:$0xff]
  %v1546 = vld [vmem:[%s4 + $0x628] sm:$0xff]
  %v1547 = vld [vmem:[%s4 + $0x630] sm:$0xff]
  %v1548 = vld [vmem:[%s4 + $0x638] sm:$0xff]
  %v1549 = vld [vmem:[%s4 + $0x640] sm:$0xff]
  %v1550 = vld [vmem:[%s4 + $0x648] sm:$0xff]
  %v1551 = vld [vmem:[%s832] ss:$8 sm:$0x3]
  %v1553 = vlaneseq
  %v1554 = vshrl.u32 %v1553, 7
  %v1555 = vsub.s32 0, %v1554
  %v1556 = vrot.slane %v1551, %v1555
  %v1557 = vlaneseq
  %v1558 = vshrl.u32 %v1557, 7
  %v1559 = vsub.s32 1, %v1558
  %v1560 = vrot.slane %v1551, %v1559
  %1563 = vmatprep.subr.mxu0 %v1544
  %1564 = vmatpush1.msra.mxu0 %v1543
  %1565 = vmatprep.subr.mxu0 %v1546
  %1566 = vmatpush1.msra.mxu0 %v1545
  %1567 = vmatprep.subr.mxu0 %v1548
  %1568 = vmatpush1.msra.mxu0 %v1547
  %1569 = vmatprep.subr.mxu0 %v1550
  %1570 = vmatpush1.msra.mxu0 %v1549
  %1571 = vmatprep.subr.mxu0 0.0
  %1572 = vmatpush1.msra.mxu0 0.0
  %1573 = vmatprep.subr.mxu0 0.0
  %1574 = vmatpush1.msra.mxu0 0.0
  %1575 = vmatprep.subr.mxu0 0.0
  %1576 = vmatpush1.msra.mxu0 0.0
  %1577 = vmatprep.subr.mxu0 0.0
  %1578 = vmatpush1.msra.mxu0 0.0
  %1579 = vmatprep.subr.mxu0 0.0
  %1580 = vmatpush1.msra.mxu0 0.0
  %1581 = vmatprep.subr.mxu0 0.0
  %1582 = vmatpush1.msra.mxu0 0.0
  %1583 = vmatprep.subr.mxu0 0.0
  %1584 = vmatpush1.msra.mxu0 0.0
  %1585 = vmatprep.subr.mxu0 0.0
  %1586 = vmatpush1.msra.mxu0 0.0
  %1587 = vmatprep.subr.mxu0 0.0
  %1588 = vmatpush1.msra.mxu0 0.0
  %1589 = vmatprep.subr.mxu0 0.0
  %1590 = vmatpush1.msra.mxu0 0.0
  %1591 = vmatprep.subr.mxu0 0.0
  %1592 = vmatpush1.msra.mxu0 0.0
  %1593 = vmatprep.subr.mxu0 0.0
  %1594 = vmatpush1.msra.mxu0 0.0
  %1595 = vmatprep.subr.mxu0 0.0
  %1596 = vmatpush1.msra.mxu0 0.0
  %1597 = vmatprep.subr.mxu0 0.0
  %1598 = vmatpush1.msra.mxu0 0.0
  %1599 = vmatprep.subr.mxu0 0.0
  %1600 = vmatpush1.msra.mxu0 0.0
  %1601 = vmatprep.subr.mxu0 0.0
  %1602 = vmatpush1.msra.mxu0 0.0
  %1603 = vmatprep.subr.mxu0 0.0
  %1604 = vmatpush1.msra.mxu0 0.0
  %1605 = vmatprep.subr.mxu0 0.0
  %1606 = vmatpush1.msra.mxu0 0.0
  %1607 = vmatprep.subr.mxu0 0.0
  %1608 = vmatpush1.msra.mxu0 0.0
  %1609 = vmatprep.subr.mxu0 0.0
  %1610 = vmatpush1.msra.mxu0 0.0
  %1611 = vmatprep.subr.mxu0 0.0
  %1612 = vmatpush1.msra.mxu0 0.0
  %1613 = vmatprep.subr.mxu0 0.0
  %1614 = vmatpush1.msra.mxu0 0.0
  %1615 = vmatprep.subr.mxu0 0.0
  %1616 = vmatpush1.msra.mxu0 0.0
  %1617 = vmatprep.subr.mxu0 0.0
  %1618 = vmatpush1.msra.mxu0 0.0
  %1619 = vmatprep.subr.mxu0 0.0
  %1620 = vmatpush1.msra.mxu0 0.0
  %1621 = vmatprep.subr.mxu0 0.0
  %1622 = vmatpush1.msra.mxu0 0.0
  %1623 = vmatprep.subr.mxu0 0.0
  %1624 = vmatpush1.msra.mxu0 0.0
  %1625 = vmatprep.subr.mxu0 0.0
  %1626 = vmatpush1.msra.mxu0 0.0
  %1627 = vmatprep.mubr.f32.mxu0 0.0
  %1628 = vmatmul.mubr.f32.gmra.mrb[0].mxu0 %v1468
  %v1629 = vpop.f32.mrb[0].mxu0
  %v1630 = vadd.f32 %v1556, %v1629
  %v1631 = vpop.f32.mrb[0].mxu0
  %v1632 = vadd.f32 %v1560, %v1631
  %1633 = vdwg.mxu0
  %v1634 = vadd.f32 %v584, %v1630
  %v1635 = vadd.f32 %v586, %v1632
  %v1636 = vtanh.pop %v1634
  %v1637 = vtanh.pop %v1635
  %v1638 = vld [vmem:[%s3 + $0x38] sm:$0xff]
  %v1639 = vld [vmem:[%s3 + $0x40] sm:$0xff]
  %v1640 = vld [vmem:[%s3 + $0x48] sm:$0xff]
  %v1641 = vld [vmem:[%s3 + $0x50] sm:$0xff]
  %v1642 = vld [vmem:[%s3 + $0x58] sm:$0xff]
  %v1643 = vld [vmem:[%s3 + $0x60] sm:$0xff]
  %v1644 = vld [vmem:[%s3 + $0x68] sm:$0xff]
  %v1645 = vld [vmem:[%s3 + $0x70] sm:$0xff]
  %v1646 = vld [vmem:[%s3 + $0x78] sm:$0xff]
  %v1647 = vld [vmem:[%s3 + $0x80] sm:$0xff]
  %v1648 = vld [vmem:[%s3 + $0x88] sm:$0xff]
  %v1649 = vld [vmem:[%s3 + $0x90] sm:$0xff]
  %v1650 = vld [vmem:[%s3 + $0x98] sm:$0xff]
  %v1651 = vld [vmem:[%s3 + $0xa0] sm:$0xff]
  %v1652 = vld [vmem:[%s3 + $0xa8] sm:$0xff]
  %v1653 = vld [vmem:[%s3 + $0xb0] sm:$0xff]
  %v1654 = vld [vmem:[%s3 + $0xb8] sm:$0xff]
  %v1655 = vld [vmem:[%s3 + $0xc0] sm:$0xff]
  %v1656 = vld [vmem:[%s3 + $0xc8] sm:$0xff]
  %v1657 = vld [vmem:[%s3 + $0xd0] sm:$0xff]
  %v1658 = vld [vmem:[%s3 + $0xd8] sm:$0xff]
  %v1659 = vld [vmem:[%s3 + $0xe0] sm:$0xff]
  %v1660 = vld [vmem:[%s3 + $0xe8] sm:$0xff]
  %v1661 = vld [vmem:[%s3 + $0xf0] sm:$0xff]
  %v1662 = vld [vmem:[%s3 + $0xf8] sm:$0xff]
  %v1663 = vld [vmem:[%s3 + $0x100] sm:$0xff]
  %v1664 = vld [vmem:[%s3 + $0x108] sm:$0xff]
  %v1665 = vld [vmem:[%s3 + $0x110] sm:$0xff]
  %v1666 = vld [vmem:[%s3 + $0x118] sm:$0xff]
  %v1667 = vld [vmem:[%s3 + $0x120] sm:$0xff]
  %v1668 = vld [vmem:[%s3 + $0x128] sm:$0xff]
  %v1669 = vld [vmem:[%s3 + $0x130] sm:$0xff]
  %v1670 = vld [vmem:[%s3 + $0x138] sm:$0x1]
  %s1672 = vtos %v1670
  %v1673 = vstv %s1672
  %1675 = vmatprep.subr.mxu0 0.0
  %1676 = vmatpush1.msra.mxu0 %v1638
  %1677 = vmatprep.subr.mxu0 0.0
  %1678 = vmatpush1.msra.mxu0 %v1639
  %1679 = vmatprep.subr.mxu0 0.0
  %1680 = vmatpush1.msra.mxu0 %v1640
  %1681 = vmatprep.subr.mxu0 0.0
  %1682 = vmatpush1.msra.mxu0 %v1641
  %1683 = vmatprep.subr.mxu0 0.0
  %1684 = vmatpush1.msra.mxu0 %v1642
  %1685 = vmatprep.subr.mxu0 0.0
  %1686 = vmatpush1.msra.mxu0 %v1643
  %1687 = vmatprep.subr.mxu0 0.0
  %1688 = vmatpush1.msra.mxu0 %v1644
  %1689 = vmatprep.subr.mxu0 0.0
  %1690 = vmatpush1.msra.mxu0 %v1645
  %1691 = vmatprep.subr.mxu0 0.0
  %1692 = vmatpush1.msra.mxu0 %v1646
  %1693 = vmatprep.subr.mxu0 0.0
  %1694 = vmatpush1.msra.mxu0 %v1647
  %1695 = vmatprep.subr.mxu0 0.0
  %1696 = vmatpush1.msra.mxu0 %v1648
  %1697 = vmatprep.subr.mxu0 0.0
  %1698 = vmatpush1.msra.mxu0 %v1649
  %1699 = vmatprep.subr.mxu0 0.0
  %1700 = vmatpush1.msra.mxu0 %v1650
  %1701 = vmatprep.subr.mxu0 0.0
  %1702 = vmatpush1.msra.mxu0 %v1651
  %1703 = vmatprep.subr.mxu0 0.0
  %1704 = vmatpush1.msra.mxu0 %v1652
  %1705 = vmatprep.subr.mxu0 0.0
  %1706 = vmatpush1.msra.mxu0 %v1653
  %1707 = vmatprep.subr.mxu0 0.0
  %1708 = vmatpush1.msra.mxu0 %v1654
  %1709 = vmatprep.subr.mxu0 0.0
  %1710 = vmatpush1.msra.mxu0 %v1655
  %1711 = vmatprep.subr.mxu0 0.0
  %1712 = vmatpush1.msra.mxu0 %v1656
  %1713 = vmatprep.subr.mxu0 0.0
  %1714 = vmatpush1.msra.mxu0 %v1657
  %1715 = vmatprep.subr.mxu0 0.0
  %1716 = vmatpush1.msra.mxu0 %v1658
  %1717 = vmatprep.subr.mxu0 0.0
  %1718 = vmatpush1.msra.mxu0 %v1659
  %1719 = vmatprep.subr.mxu0 0.0
  %1720 = vmatpush1.msra.mxu0 %v1660
  %1721 = vmatprep.subr.mxu0 0.0
  %1722 = vmatpush1.msra.mxu0 %v1661
  %1723 = vmatprep.subr.mxu0 0.0
  %1724 = vmatpush1.msra.mxu0 %v1662
  %1725 = vmatprep.subr.mxu0 0.0
  %1726 = vmatpush1.msra.mxu0 %v1663
  %1727 = vmatprep.subr.mxu0 0.0
  %1728 = vmatpush1.msra.mxu0 %v1664
  %1729 = vmatprep.subr.mxu0 0.0
  %1730 = vmatpush1.msra.mxu0 %v1665
  %1731 = vmatprep.subr.mxu0 0.0
  %1732 = vmatpush1.msra.mxu0 %v1666
  %1733 = vmatprep.subr.mxu0 0.0
  %1734 = vmatpush1.msra.mxu0 %v1667
  %1735 = vmatprep.subr.mxu0 0.0
  %1736 = vmatpush1.msra.mxu0 %v1668
  %1737 = vmatprep.subr.mxu0 0.0
  %1738 = vmatpush1.msra.mxu0 %v1669
  %1739 = vmatprep.mubr.f32.mxu0 %v1637
  %1740 = vmatmul.mubr.f32.gmra.mrb[0].mxu0 %v1636
  %v1741 = vpop.f32.mrb[0].mxu0
  %v1742 = vadd.f32 %v1673, %v1741
  %v1743 = vpop.f32.mrb[0].mxu0
  %1744 = vdwg.mxu0
  %v1745 = vsel %vm1030, %v1742, -inf
  %1746 = vmax.xlane.f32.xlu0 %v1745
  %v1747 = vpop.xlane.xlu0 %1746
  %v1748 = vsub.f32 %v1742, %v1747
  %v1749 = vmul.f32 %v1748, 1.442695
  %v1750 = vpow.pop %v1749
  %v1751 = vsel %vm1030, %v1750, 0.0
  %1752 = vadd.xlane.f32.xlu0 %v1751
  %v1753 = vpop.xlane.xlu0 %1752
  %v1754 = vrcp.pop %v1753
  %v1755 = vmul.f32 %v1750, %v1754
  %v1757 = vsel %vm1042, %v1755, 0
  %1759 = vmatprep.subr.mxu0 0.0
  %1760 = vmatpush1.msra.mxu0 %v117
  %1761 = vmatprep.subr.mxu0 0.0
  %1762 = vmatpush1.msra.mxu0 %v122
  %1763 = vmatprep.subr.mxu0 0.0
  %1764 = vmatpush1.msra.mxu0 0.0
  %1765 = vmatprep.subr.mxu0 0.0
  %1766 = vmatpush1.msra.mxu0 0.0
  %1767 = vmatprep.subr.mxu0 0.0
  %1768 = vmatpush1.msra.mxu0 0.0
  %1769 = vmatprep.subr.mxu0 0.0
  %1770 = vmatpush1.msra.mxu0 0.0
  %1771 = vmatprep.subr.mxu0 0.0
  %1772 = vmatpush1.msra.mxu0 0.0
  %1773 = vmatprep.subr.mxu0 0.0
  %1774 = vmatpush1.msra.mxu0 0.0
  %1775 = vmatprep.subr.mxu0 0.0
  %1776 = vmatpush1.msra.mxu0 0.0
  %1777 = vmatprep.subr.mxu0 0.0
  %1778 = vmatpush1.msra.mxu0 0.0
  %1779 = vmatprep.subr.mxu0 0.0
  %1780 = vmatpush1.msra.mxu0 0.0
  %1781 = vmatprep.subr.mxu0 0.0
  %1782 = vmatpush1.msra.mxu0 0.0
  %1783 = vmatprep.subr.mxu0 0.0
  %1784 = vmatpush1.msra.mxu0 0.0
  %1785 = vmatprep.subr.mxu0 0.0
  %1786 = vmatpush1.msra.mxu0 0.0
  %1787 = vmatprep.subr.mxu0 0.0
  %1788 = vmatpush1.msra.mxu0 0.0
  %1789 = vmatprep.subr.mxu0 0.0
  %1790 = vmatpush1.msra.mxu0 0.0
  %1791 = vmatprep.subr.mxu0 0.0
  %1792 = vmatpush1.msra.mxu0 0.0
  %1793 = vmatprep.subr.mxu0 0.0
  %1794 = vmatpush1.msra.mxu0 0.0
  %1795 = vmatprep.subr.mxu0 0.0
  %1796 = vmatpush1.msra.mxu0 0.0
  %1797 = vmatprep.subr.mxu0 0.0
  %1798 = vmatpush1.msra.mxu0 0.0
  %1799 = vmatprep.subr.mxu0 0.0
  %1800 = vmatpush1.msra.mxu0 0.0
  %1801 = vmatprep.subr.mxu0 0.0
  %1802 = vmatpush1.msra.mxu0 0.0
  %1803 = vmatprep.subr.mxu0 0.0
  %1804 = vmatpush1.msra.mxu0 0.0
  %1805 = vmatprep.subr.mxu0 0.0
  %1806 = vmatpush1.msra.mxu0 0.0
  %1807 = vmatprep.subr.mxu0 0.0
  %1808 = vmatpush1.msra.mxu0 0.0
  %1809 = vmatprep.subr.mxu0 0.0
  %1810 = vmatpush1.msra.mxu0 0.0
  %1811 = vmatprep.subr.mxu0 0.0
  %1812 = vmatpush1.msra.mxu0 0.0
  %1813 = vmatprep.subr.mxu0 0.0
  %1814 = vmatpush1.msra.mxu0 0.0
  %1815 = vmatprep.subr.mxu0 0.0
  %1816 = vmatpush1.msra.mxu0 0.0
  %1817 = vmatprep.subr.mxu0 0.0
  %1818 = vmatpush1.msra.mxu0 0.0
  %1819 = vmatprep.subr.mxu0 0.0
  %1820 = vmatpush1.msra.mxu0 0.0
  %1821 = vmatprep.subr.mxu0 0.0
  %1822 = vmatpush1.msra.mxu0 0.0
  %1823 = vmatprep.mubr.f32.mxu0 0.0
  %1824 = vmatmul.mubr.f32.gmra.mrb[0].mxu0 %v1757
  %v1825 = vpop.f32.mrb[0].mxu0
  %v1826 = vadd.f32 0.0, %v1825
  %v1827 = vpop.f32.mrb[0].mxu0
  %1828 = vdwg.mxu0
  %v1829 = vrot.slane %v1755, 1
  %v1830 = vsel %vm1042, %v1829, 0
  %1832 = vmatprep.subr.mxu0 0.0
  %1833 = vmatpush1.msra.mxu0 %v127
  %1834 = vmatprep.subr.mxu0 0.0
  %1835 = vmatpush1.msra.mxu0 %v132
  %1836 = vmatprep.subr.mxu0 0.0
  %1837 = vmatpush1.msra.mxu0 0.0
  %1838 = vmatprep.subr.mxu0 0.0
  %1839 = vmatpush1.msra.mxu0 0.0
  %1840 = vmatprep.subr.mxu0 0.0
  %1841 = vmatpush1.msra.mxu0 0.0
  %1842 = vmatprep.subr.mxu0 0.0
  %1843 = vmatpush1.msra.mxu0 0.0
  %1844 = vmatprep.subr.mxu0 0.0
  %1845 = vmatpush1.msra.mxu0 0.0
  %1846 = vmatprep.subr.mxu0 0.0
  %1847 = vmatpush1.msra.mxu0 0.0
  %1848 = vmatprep.subr.mxu0 0.0
  %1849 = vmatpush1.msra.mxu0 0.0
  %1850 = vmatprep.subr.mxu0 0.0
  %1851 = vmatpush1.msra.mxu0 0.0
  %1852 = vmatprep.subr.mxu0 0.0
  %1853 = vmatpush1.msra.mxu0 0.0
  %1854 = vmatprep.subr.mxu0 0.0
  %1855 = vmatpush1.msra.mxu0 0.0
  %1856 = vmatprep.subr.mxu0 0.0
  %1857 = vmatpush1.msra.mxu0 0.0
  %1858 = vmatprep.subr.mxu0 0.0
  %1859 = vmatpush1.msra.mxu0 0.0
  %1860 = vmatprep.subr.mxu0 0.0
  %1861 = vmatpush1.msra.mxu0 0.0
  %1862 = vmatprep.subr.mxu0 0.0
  %1863 = vmatpush1.msra.mxu0 0.0
  %1864 = vmatprep.subr.mxu0 0.0
  %1865 = vmatpush1.msra.mxu0 0.0
  %1866 = vmatprep.subr.mxu0 0.0
  %1867 = vmatpush1.msra.mxu0 0.0
  %1868 = vmatprep.subr.mxu0 0.0
  %1869 = vmatpush1.msra.mxu0 0.0
  %1870 = vmatprep.subr.mxu0 0.0
  %1871 = vmatpush1.msra.mxu0 0.0
  %1872 = vmatprep.subr.mxu0 0.0
  %1873 = vmatpush1.msra.mxu0 0.0
  %1874 = vmatprep.subr.mxu0 0.0
  %1875 = vmatpush1.msra.mxu0 0.0
  %1876 = vmatprep.subr.mxu0 0.0
  %1877 = vmatpush1.msra.mxu0 0.0
  %1878 = vmatprep.subr.mxu0 0.0
  %1879 = vmatpush1.msra.mxu0 0.0
  %1880 = vmatprep.subr.mxu0 0.0
  %1881 = vmatpush1.msra.mxu0 0.0
  %1882 = vmatprep.subr.mxu0 0.0
  %1883 = vmatpush1.msra.mxu0 0.0
  %1884 = vmatprep.subr.mxu0 0.0
  %1885 = vmatpush1.msra.mxu0 0.0
  %1886 = vmatprep.subr.mxu0 0.0
  %1887 = vmatpush1.msra.mxu0 0.0
  %1888 = vmatprep.subr.mxu0 0.0
  %1889 = vmatpush1.msra.mxu0 0.0
  %1890 = vmatprep.subr.mxu0 0.0
  %1891 = vmatpush1.msra.mxu0 0.0
  %1892 = vmatprep.subr.mxu0 0.0
  %1893 = vmatpush1.msra.mxu0 0.0
  %1894 = vmatprep.subr.mxu0 0.0
  %1895 = vmatpush1.msra.mxu0 0.0
  %1896 = vmatprep.mubr.f32.mxu0 0.0
  %1897 = vmatmul.mubr.f32.gmra.mrb[0].mxu0 %v1830
  %v1898 = vpop.f32.mrb[0].mxu0
  %v1899 = vadd.f32 0.0, %v1898
  %v1900 = vpop.f32.mrb[0].mxu0
  %1901 = vdwg.mxu0
  %v1903 = vrot.slane %v1899, 7
  %v1905 = vsel %vm1192, %v1826, %v1903
  %s1906 = scalar_lea.vmem %s2, 2
  %v1907 = vld [vmem:[%s1906] sm:$0x3]
  %v1908 = vld [vmem:[%s3 + $0x198] sm:$0xff]
  %v1909 = vld [vmem:[%s3 + $0x1a0] sm:$0xff]
  %v1910 = vld [vmem:[%s3 + $0x1a8] sm:$0xff]
  %v1911 = vld [vmem:[%s3 + $0x1b0] sm:$0xff]
  %v1912 = vld [vmem:[%s3 + $0x1b8] sm:$0xff]
  %v1913 = vld [vmem:[%s3 + $0x1c0] sm:$0xff]
  %v1915 = vsel %vm589, %v1905, 0
  %1917 = vmatprep.subr.mxu0 0.0
  %1918 = vmatpush1.msra.mxu0 %v1910
  %1919 = vmatprep.subr.mxu0 0.0
  %1920 = vmatpush1.msra.mxu0 %v1911
  %1921 = vmatprep.subr.mxu0 0.0
  %1922 = vmatpush1.msra.mxu0 %v1912
  %1923 = vmatprep.subr.mxu0 0.0
  %1924 = vmatpush1.msra.mxu0 %v1913
  %1925 = vmatprep.subr.mxu0 0.0
  %1926 = vmatpush1.msra.mxu0 0.0
  %1927 = vmatprep.subr.mxu0 0.0
  %1928 = vmatpush1.msra.mxu0 0.0
  %1929 = vmatprep.subr.mxu0 0.0
  %1930 = vmatpush1.msra.mxu0 0.0
  %1931 = vmatprep.subr.mxu0 0.0
  %1932 = vmatpush1.msra.mxu0 0.0
  %1933 = vmatprep.subr.mxu0 0.0
  %1934 = vmatpush1.msra.mxu0 0.0
  %1935 = vmatprep.subr.mxu0 0.0
  %1936 = vmatpush1.msra.mxu0 0.0
  %1937 = vmatprep.subr.mxu0 0.0
  %1938 = vmatpush1.msra.mxu0 0.0
  %1939 = vmatprep.subr.mxu0 0.0
  %1940 = vmatpush1.msra.mxu0 0.0
  %1941 = vmatprep.subr.mxu0 0.0
  %1942 = vmatpush1.msra.mxu0 0.0
  %1943 = vmatprep.subr.mxu0 0.0
  %1944 = vmatpush1.msra.mxu0 0.0
  %1945 = vmatprep.subr.mxu0 0.0
  %1946 = vmatpush1.msra.mxu0 0.0
  %1947 = vmatprep.subr.mxu0 0.0
  %1948 = vmatpush1.msra.mxu0 0.0
  %1949 = vmatprep.subr.mxu0 0.0
  %1950 = vmatpush1.msra.mxu0 0.0
  %1951 = vmatprep.subr.mxu0 0.0
  %1952 = vmatpush1.msra.mxu0 0.0
  %1953 = vmatprep.subr.mxu0 0.0
  %1954 = vmatpush1.msra.mxu0 0.0
  %1955 = vmatprep.subr.mxu0 0.0
  %1956 = vmatpush1.msra.mxu0 0.0
  %1957 = vmatprep.subr.mxu0 0.0
  %1958 = vmatpush1.msra.mxu0 0.0
  %1959 = vmatprep.subr.mxu0 0.0
  %1960 = vmatpush1.msra.mxu0 0.0
  %1961 = vmatprep.subr.mxu0 0.0
  %1962 = vmatpush1.msra.mxu0 0.0
  %1963 = vmatprep.subr.mxu0 0.0
  %1964 = vmatpush1.msra.mxu0 0.0
  %1965 = vmatprep.subr.mxu0 0.0
  %1966 = vmatpush1.msra.mxu0 0.0
  %1967 = vmatprep.subr.mxu0 0.0
  %1968 = vmatpush1.msra.mxu0 0.0
  %1969 = vmatprep.subr.mxu0 0.0
  %1970 = vmatpush1.msra.mxu0 0.0
  %1971 = vmatprep.subr.mxu0 0.0
  %1972 = vmatpush1.msra.mxu0 0.0
  %1973 = vmatprep.subr.mxu0 0.0
  %1974 = vmatpush1.msra.mxu0 0.0
  %1975 = vmatprep.subr.mxu0 0.0
  %1976 = vmatpush1.msra.mxu0 0.0
  %1977 = vmatprep.subr.mxu0 0.0
  %1978 = vmatpush1.msra.mxu0 0.0
  %1979 = vmatprep.subr.mxu0 0.0
  %1980 = vmatpush1.msra.mxu0 0.0
  %1981 = vmatprep.mubr.f32.mxu0 0.0
  %1982 = vmatmul.mubr.f32.gmra.mrb[0].mxu0 %v1915
  %v1983 = vpop.f32.mrb[0].mxu0
  %v1984 = vadd.f32 0.0, %v1983
  %v1985 = vpop.f32.mrb[0].mxu0
  %1986 = vdwg.mxu0
  %v1988 = vsel %vm1042, %v1907, 0
  %1990 = vmatprep.subr.mxu0 0.0
  %1991 = vmatpush1.msra.mxu0 %v1908
  %1992 = vmatprep.subr.mxu0 0.0
  %1993 = vmatpush1.msra.mxu0 %v1909
  %1994 = vmatprep.subr.mxu0 0.0
  %1995 = vmatpush1.msra.mxu0 0.0
  %1996 = vmatprep.subr.mxu0 0.0
  %1997 = vmatpush1.msra.mxu0 0.0
  %1998 = vmatprep.subr.mxu0 0.0
  %1999 = vmatpush1.msra.mxu0 0.0
  %2000 = vmatprep.subr.mxu0 0.0
  %2001 = vmatpush1.msra.mxu0 0.0
  %2002 = vmatprep.subr.mxu0 0.0
  %2003 = vmatpush1.msra.mxu0 0.0
  %2004 = vmatprep.subr.mxu0 0.0
  %2005 = vmatpush1.msra.mxu0 0.0
  %2006 = vmatprep.subr.mxu0 0.0
  %2007 = vmatpush1.msra.mxu0 0.0
  %2008 = vmatprep.subr.mxu0 0.0
  %2009 = vmatpush1.msra.mxu0 0.0
  %2010 = vmatprep.subr.mxu0 0.0
  %2011 = vmatpush1.msra.mxu0 0.0
  %2012 = vmatprep.subr.mxu0 0.0
  %2013 = vmatpush1.msra.mxu0 0.0
  %2014 = vmatprep.subr.mxu0 0.0
  %2015 = vmatpush1.msra.mxu0 0.0
  %2016 = vmatprep.subr.mxu0 0.0
  %2017 = vmatpush1.msra.mxu0 0.0
  %2018 = vmatprep.subr.mxu0 0.0
  %2019 = vmatpush1.msra.mxu0 0.0
  %2020 = vmatprep.subr.mxu0 0.0
  %2021 = vmatpush1.msra.mxu0 0.0
  %2022 = vmatprep.subr.mxu0 0.0
  %2023 = vmatpush1.msra.mxu0 0.0
  %2024 = vmatprep.subr.mxu0 0.0
  %2025 = vmatpush1.msra.mxu0 0.0
  %2026 = vmatprep.subr.mxu0 0.0
  %2027 = vmatpush1.msra.mxu0 0.0
  %2028 = vmatprep.subr.mxu0 0.0
  %2029 = vmatpush1.msra.mxu0 0.0
  %2030 = vmatprep.subr.mxu0 0.0
  %2031 = vmatpush1.msra.mxu0 0.0
  %2032 = vmatprep.subr.mxu0 0.0
  %2033 = vmatpush1.msra.mxu0 0.0
  %2034 = vmatprep.subr.mxu0 0.0
  %2035 = vmatpush1.msra.mxu0 0.0
  %2036 = vmatprep.subr.mxu0 0.0
  %2037 = vmatpush1.msra.mxu0 0.0
  %2038 = vmatprep.subr.mxu0 0.0
  %2039 = vmatpush1.msra.mxu0 0.0
  %2040 = vmatprep.subr.mxu0 0.0
  %2041 = vmatpush1.msra.mxu0 0.0
  %2042 = vmatprep.subr.mxu0 0.0
  %2043 = vmatpush1.msra.mxu0 0.0
  %2044 = vmatprep.subr.mxu0 0.0
  %2045 = vmatpush1.msra.mxu0 0.0
  %2046 = vmatprep.subr.mxu0 0.0
  %2047 = vmatpush1.msra.mxu0 0.0
  %2048 = vmatprep.subr.mxu0 0.0
  %2049 = vmatpush1.msra.mxu0 0.0
  %2050 = vmatprep.subr.mxu0 0.0
  %2051 = vmatpush1.msra.mxu0 0.0
  %2052 = vmatprep.subr.mxu0 0.0
  %2053 = vmatpush1.msra.mxu0 0.0
  %2054 = vmatprep.mubr.f32.mxu0 0.0
  %2055 = vmatmul.mubr.f32.gmra.mrb[0].mxu0 %v1988
  %v2056 = vpop.f32.mrb[0].mxu0
  %v2057 = vadd.f32 %v1984, %v2056
  %v2058 = vpop.f32.mrb[0].mxu0
  %2059 = vdwg.mxu0
  %v2060 = vld [vmem:[%s3 + $0x1c8] sm:$0xff]
  %v2061 = vld [vmem:[%s3 + $0x1d0] sm:$0xff]
  %v2062 = vld [vmem:[%s3 + $0x1d8] sm:$0xff]
  %v2063 = vld [vmem:[%s3 + $0x1e0] sm:$0xff]
  %2064 = vmatprep.subr.mxu0 0.0
  %2065 = vmatpush1.msra.mxu0 %v2060
  %2066 = vmatprep.subr.mxu0 0.0
  %2067 = vmatpush1.msra.mxu0 %v2061
  %2068 = vmatprep.subr.mxu0 0.0
  %2069 = vmatpush1.msra.mxu0 %v2062
  %2070 = vmatprep.subr.mxu0 0.0
  %2071 = vmatpush1.msra.mxu0 %v2063
  %2072 = vmatprep.subr.mxu0 0.0
  %2073 = vmatpush1.msra.mxu0 0.0
  %2074 = vmatprep.subr.mxu0 0.0
  %2075 = vmatpush1.msra.mxu0 0.0
  %2076 = vmatprep.subr.mxu0 0.0
  %2077 = vmatpush1.msra.mxu0 0.0
  %2078 = vmatprep.subr.mxu0 0.0
  %2079 = vmatpush1.msra.mxu0 0.0
  %2080 = vmatprep.subr.mxu0 0.0
  %2081 = vmatpush1.msra.mxu0 0.0
  %2082 = vmatprep.subr.mxu0 0.0
  %2083 = vmatpush1.msra.mxu0 0.0
  %2084 = vmatprep.subr.mxu0 0.0
  %2085 = vmatpush1.msra.mxu0 0.0
  %2086 = vmatprep.subr.mxu0 0.0
  %2087 = vmatpush1.msra.mxu0 0.0
  %2088 = vmatprep.subr.mxu0 0.0
  %2089 = vmatpush1.msra.mxu0 0.0
  %2090 = vmatprep.subr.mxu0 0.0
  %2091 = vmatpush1.msra.mxu0 0.0
  %2092 = vmatprep.subr.mxu0 0.0
  %2093 = vmatpush1.msra.mxu0 0.0
  %2094 = vmatprep.subr.mxu0 0.0
  %2095 = vmatpush1.msra.mxu0 0.0
  %2096 = vmatprep.subr.mxu0 0.0
  %2097 = vmatpush1.msra.mxu0 0.0
  %2098 = vmatprep.subr.mxu0 0.0
  %2099 = vmatpush1.msra.mxu0 0.0
  %2100 = vmatprep.subr.mxu0 0.0
  %2101 = vmatpush1.msra.mxu0 0.0
  %2102 = vmatprep.subr.mxu0 0.0
  %2103 = vmatpush1.msra.mxu0 0.0
  %2104 = vmatprep.subr.mxu0 0.0
  %2105 = vmatpush1.msra.mxu0 0.0
  %2106 = vmatprep.subr.mxu0 0.0
  %2107 = vmatpush1.msra.mxu0 0.0
  %2108 = vmatprep.subr.mxu0 0.0
  %2109 = vmatpush1.msra.mxu0 0.0
  %2110 = vmatprep.subr.mxu0 0.0
  %2111 = vmatpush1.msra.mxu0 0.0
  %2112 = vmatprep.subr.mxu0 0.0
  %2113 = vmatpush1.msra.mxu0 0.0
  %2114 = vmatprep.subr.mxu0 0.0
  %2115 = vmatpush1.msra.mxu0 0.0
  %2116 = vmatprep.subr.mxu0 0.0
  %2117 = vmatpush1.msra.mxu0 0.0
  %2118 = vmatprep.subr.mxu0 0.0
  %2119 = vmatpush1.msra.mxu0 0.0
  %2120 = vmatprep.subr.mxu0 0.0
  %2121 = vmatpush1.msra.mxu0 0.0
  %2122 = vmatprep.subr.mxu0 0.0
  %2123 = vmatpush1.msra.mxu0 0.0
  %2124 = vmatprep.subr.mxu0 0.0
  %2125 = vmatpush1.msra.mxu0 0.0
  %2126 = vmatprep.subr.mxu0 0.0
  %2127 = vmatpush1.msra.mxu0 0.0
  %2128 = vmatprep.mubr.f32.mxu0 0.0
  %2129 = vmatmul.mubr.f32.gmra.mrb[0].mxu0 %v1468
  %v2130 = vpop.f32.mrb[0].mxu0
  %v2131 = vadd.f32 0.0, %v2130
  %v2132 = vpop.f32.mrb[0].mxu0
  %2133 = vdwg.mxu0
  %v2134 = vadd.f32 %v2057, %v2131
  %v2135 = vld [vmem:[%s3 + $0x1e8] sm:$0x1]
  %v2136 = vlaneseq
  %v2137 = vshrl.u32 %v2136, 7
  %v2138 = vsub.s32 0, %v2137
  %v2139 = vrot.slane %v2135, %v2138
  %v2140 = vadd.f32 %v2134, %v2139
  %v2141 = vxor.u32 %v2140, 2147483648
  %v2142 = vmul.f32 %v2141, 1.442695
  %v2143 = vpow.pop %v2142
  %v2144 = vadd.f32 %v2143, 1.0
  %v2145 = vrcp.pop %v2144
  %v2146 = vmul.f32 1.0, %v2145
  %v2147 = vtanh.pop %v2140
  %v2148 = vmul.f32 %v2146, %v1449
  %2150 = vrot.lane.b32.xlu0 %v2147, 64
  %v2151 = vpop.permute.xlu0 %2150
  %v2153 = vmul.f32 %v2146, %v2151
  %2155 = vrot.lane.b32.xlu0 %v2153, 32
  %v2156 = vpop.permute.xlu0 %2155
  %v2158 = vadd.f32 %v2148, %v2156
  %v2159 = vtanh.pop %v2158
  %2161 = vrot.lane.b32.xlu0 %v2159, 64
  %v2162 = vpop.permute.xlu0 %2161
  %v2164 = vmul.f32 %v2146, %v2162
  %v2165 = vld [vmem:[%s3 + $0x1f0] sm:$0xff]
  %v2166 = vld [vmem:[%s3 + $0x1f8] sm:$0xff]
  %v2167 = vld [vmem:[%s3 + $0x200] sm:$0xff]
  %v2168 = vld [vmem:[%s3 + $0x208] sm:$0xff]
  %v2169 = vld [vmem:[%s3 + $0x210] sm:$0x1]
  %v2170 = vlaneseq
  %v2171 = vshrl.u32 %v2170, 7
  %v2172 = vsub.s32 0, %v2171
  %v2173 = vrot.slane %v2169, %v2172
  %2175 = vrot.lane.b32.xlu0 %v2164, 32
  %v2176 = vpop.permute.xlu0 %2175
  %v2177 = vsel %vm589, %v2176, 0
  %2179 = vmatprep.subr.mxu0 0.0
  %2180 = vmatpush1.msra.mxu0 %v2165
  %2181 = vmatprep.subr.mxu0 0.0
  %2182 = vmatpush1.msra.mxu0 %v2166
  %2183 = vmatprep.subr.mxu0 0.0
  %2184 = vmatpush1.msra.mxu0 %v2167
  %2185 = vmatprep.subr.mxu0 0.0
  %2186 = vmatpush1.msra.mxu0 %v2168
  %2187 = vmatprep.subr.mxu0 0.0
  %2188 = vmatpush1.msra.mxu0 0.0
  %2189 = vmatprep.subr.mxu0 0.0
  %2190 = vmatpush1.msra.mxu0 0.0
  %2191 = vmatprep.subr.mxu0 0.0
  %2192 = vmatpush1.msra.mxu0 0.0
  %2193 = vmatprep.subr.mxu0 0.0
  %2194 = vmatpush1.msra.mxu0 0.0
  %2195 = vmatprep.subr.mxu0 0.0
  %2196 = vmatpush1.msra.mxu0 0.0
  %2197 = vmatprep.subr.mxu0 0.0
  %2198 = vmatpush1.msra.mxu0 0.0
  %2199 = vmatprep.subr.mxu0 0.0
  %2200 = vmatpush1.msra.mxu0 0.0
  %2201 = vmatprep.subr.mxu0 0.0
  %2202 = vmatpush1.msra.mxu0 0.0
  %2203 = vmatprep.subr.mxu0 0.0
  %2204 = vmatpush1.msra.mxu0 0.0
  %2205 = vmatprep.subr.mxu0 0.0
  %2206 = vmatpush1.msra.mxu0 0.0
  %2207 = vmatprep.subr.mxu0 0.0
  %2208 = vmatpush1.msra.mxu0 0.0
  %2209 = vmatprep.subr.mxu0 0.0
  %2210 = vmatpush1.msra.mxu0 0.0
  %2211 = vmatprep.subr.mxu0 0.0
  %2212 = vmatpush1.msra.mxu0 0.0
  %2213 = vmatprep.subr.mxu0 0.0
  %2214 = vmatpush1.msra.mxu0 0.0
  %2215 = vmatprep.subr.mxu0 0.0
  %2216 = vmatpush1.msra.mxu0 0.0
  %2217 = vmatprep.subr.mxu0 0.0
  %2218 = vmatpush1.msra.mxu0 0.0
  %2219 = vmatprep.subr.mxu0 0.0
  %2220 = vmatpush1.msra.mxu0 0.0
  %2221 = vmatprep.subr.mxu0 0.0
  %2222 = vmatpush1.msra.mxu0 0.0
  %2223 = vmatprep.subr.mxu0 0.0
  %2224 = vmatpush1.msra.mxu0 0.0
  %2225 = vmatprep.subr.mxu0 0.0
  %2226 = vmatpush1.msra.mxu0 0.0
  %2227 = vmatprep.subr.mxu0 0.0
  %2228 = vmatpush1.msra.mxu0 0.0
  %2229 = vmatprep.subr.mxu0 0.0
  %2230 = vmatpush1.msra.mxu0 0.0
  %2231 = vmatprep.subr.mxu0 0.0
  %2232 = vmatpush1.msra.mxu0 0.0
  %2233 = vmatprep.subr.mxu0 0.0
  %2234 = vmatpush1.msra.mxu0 0.0
  %2235 = vmatprep.subr.mxu0 0.0
  %2236 = vmatpush1.msra.mxu0 0.0
  %2237 = vmatprep.subr.mxu0 0.0
  %2238 = vmatpush1.msra.mxu0 0.0
  %2239 = vmatprep.subr.mxu0 0.0
  %2240 = vmatpush1.msra.mxu0 0.0
  %2241 = vmatprep.subr.mxu0 0.0
  %2242 = vmatpush1.msra.mxu0 0.0
  %2243 = vmatprep.mubr.f32.mxu0 0.0
  %2244 = vmatmul.mubr.f32.gmra.mrb[0].mxu0 %v2177
  %v2245 = vpop.f32.mrb[0].mxu0
  %v2246 = vadd.f32 %v2173, %v2245
  %v2247 = vpop.f32.mrb[0].mxu0
  %2248 = vdwg.mxu0
  %v2251 = vunpack.c.l.s4 1983009808
  %v2252 = vunpack.c.0.s8 %v2251
  %v2253 = vlaneseq
  %v2254 = vshrl.u32 %v2253, 7
  %v2255 = vsub.s32 %v2252, %v2254
  %v2256 = vrot.slane %v2246, %v2255
  %2257 = vrot.lane.b32.xlu0 %v2256, 32
  %v2258 = vpop.permute.xlu0 %2257
  %vm2260 = vcmask 517376
  %2261 = vst.msk [vmem:[%s5] sm:$0x3] %vm2260, %v2258
  %2262 = vrot.lane.b32.xlu0 %v1755, 16
  %v2263 = vpop.permute.xlu0 %2262
  %vm2265 = vcmask 255104
  %2266 = vst.msk [vmem:[%s6] sm:$0x3] %vm2265, %v2263
  %v2267 = vld [vmem:[%s4 + $0x610] sm:$0xff]
  %v2268 = vld [vmem:[%s4 + $0x618] sm:$0xff]
  %v2269 = vld [vmem:[%s4 + $0x620] sm:$0xff]
  %v2270 = vld [vmem:[%s4 + $0x628] sm:$0xff]
  %v2271 = vld [vmem:[%s4 + $0x630] sm:$0xff]
  %v2272 = vld [vmem:[%s4 + $0x638] sm:$0xff]
  %v2273 = vld [vmem:[%s4 + $0x640] sm:$0xff]
  %v2274 = vld [vmem:[%s4 + $0x648] sm:$0xff]
  %v2275 = vld [vmem:[%s832] ss:$8 sm:$0x3]
  %v2277 = vlaneseq
  %v2278 = vshrl.u32 %v2277, 7
  %v2279 = vsub.s32 0, %v2278
  %v2280 = vrot.slane %v2275, %v2279
  %v2281 = vlaneseq
  %v2282 = vshrl.u32 %v2281, 7
  %v2283 = vsub.s32 1, %v2282
  %v2284 = vrot.slane %v2275, %v2283
  %2287 = vmatprep.subr.mxu0 %v2268
  %2288 = vmatpush1.msra.mxu0 %v2267
  %2289 = vmatprep.subr.mxu0 %v2270
  %2290 = vmatpush1.msra.mxu0 %v2269
  %2291 = vmatprep.subr.mxu0 %v2272
  %2292 = vmatpush1.msra.mxu0 %v2271
  %2293 = vmatprep.subr.mxu0 %v2274
  %2294 = vmatpush1.msra.mxu0 %v2273
  %2295 = vmatprep.subr.mxu0 0.0
  %2296 = vmatpush1.msra.mxu0 0.0
  %2297 = vmatprep.subr.mxu0 0.0
  %2298 = vmatpush1.msra.mxu0 0.0
  %2299 = vmatprep.subr.mxu0 0.0
  %2300 = vmatpush1.msra.mxu0 0.0
  %2301 = vmatprep.subr.mxu0 0.0
  %2302 = vmatpush1.msra.mxu0 0.0
  %2303 = vmatprep.subr.mxu0 0.0
  %2304 = vmatpush1.msra.mxu0 0.0
  %2305 = vmatprep.subr.mxu0 0.0
  %2306 = vmatpush1.msra.mxu0 0.0
  %2307 = vmatprep.subr.mxu0 0.0
  %2308 = vmatpush1.msra.mxu0 0.0
  %2309 = vmatprep.subr.mxu0 0.0
  %2310 = vmatpush1.msra.mxu0 0.0
  %2311 = vmatprep.subr.mxu0 0.0
  %2312 = vmatpush1.msra.mxu0 0.0
  %2313 = vmatprep.subr.mxu0 0.0
  %2314 = vmatpush1.msra.mxu0 0.0
  %2315 = vmatprep.subr.mxu0 0.0
  %2316 = vmatpush1.msra.mxu0 0.0
  %2317 = vmatprep.subr.mxu0 0.0
  %2318 = vmatpush1.msra.mxu0 0.0
  %2319 = vmatprep.subr.mxu0 0.0
  %2320 = vmatpush1.msra.mxu0 0.0
  %2321 = vmatprep.subr.mxu0 0.0
  %2322 = vmatpush1.msra.mxu0 0.0
  %2323 = vmatprep.subr.mxu0 0.0
  %2324 = vmatpush1.msra.mxu0 0.0
  %2325 = vmatprep.subr.mxu0 0.0
  %2326 = vmatpush1.msra.mxu0 0.0
  %2327 = vmatprep.subr.mxu0 0.0
  %2328 = vmatpush1.msra.mxu0 0.0
  %2329 = vmatprep.subr.mxu0 0.0
  %2330 = vmatpush1.msra.mxu0 0.0
  %2331 = vmatprep.subr.mxu0 0.0
  %2332 = vmatpush1.msra.mxu0 0.0
  %2333 = vmatprep.subr.mxu0 0.0
  %2334 = vmatpush1.msra.mxu0 0.0
  %2335 = vmatprep.subr.mxu0 0.0
  %2336 = vmatpush1.msra.mxu0 0.0
  %2337 = vmatprep.subr.mxu0 0.0
  %2338 = vmatpush1.msra.mxu0 0.0
  %2339 = vmatprep.subr.mxu0 0.0
  %2340 = vmatpush1.msra.mxu0 0.0
  %2341 = vmatprep.subr.mxu0 0.0
  %2342 = vmatpush1.msra.mxu0 0.0
  %2343 = vmatprep.subr.mxu0 0.0
  %2344 = vmatpush1.msra.mxu0 0.0
  %2345 = vmatprep.subr.mxu0 0.0
  %2346 = vmatpush1.msra.mxu0 0.0
  %2347 = vmatprep.subr.mxu0 0.0
  %2348 = vmatpush1.msra.mxu0 0.0
  %2349 = vmatprep.subr.mxu0 0.0
  %2350 = vmatpush1.msra.mxu0 0.0
  %2351 = vmatprep.mubr.f32.mxu0 0.0
  %2352 = vmatmul.mubr.f32.gmra.mrb[0].mxu0 %v2177
  %v2353 = vpop.f32.mrb[0].mxu0
  %v2354 = vadd.f32 %v2280, %v2353
  %v2355 = vpop.f32.mrb[0].mxu0
  %v2356 = vadd.f32 %v2284, %v2355
  %2357 = vdwg.mxu0
  %v2358 = vadd.f32 %v584, %v2354
  %v2359 = vadd.f32 %v586, %v2356
  %v2360 = vtanh.pop %v2358
  %v2361 = vtanh.pop %v2359
  %v2362 = vld [vmem:[%s3 + $0x38] sm:$0xff]
  %v2363 = vld [vmem:[%s3 + $0x40] sm:$0xff]
  %v2364 = vld [vmem:[%s3 + $0x48] sm:$0xff]
  %v2365 = vld [vmem:[%s3 + $0x50] sm:$0xff]
  %v2366 = vld [vmem:[%s3 + $0x58] sm:$0xff]
  %v2367 = vld [vmem:[%s3 + $0x60] sm:$0xff]
  %v2368 = vld [vmem:[%s3 + $0x68] sm:$0xff]
  %v2369 = vld [vmem:[%s3 + $0x70] sm:$0xff]
  %v2370 = vld [vmem:[%s3 + $0x78] sm:$0xff]
  %v2371 = vld [vmem:[%s3 + $0x80] sm:$0xff]
  %v2372 = vld [vmem:[%s3 + $0x88] sm:$0xff]
  %v2373 = vld [vmem:[%s3 + $0x90] sm:$0xff]
  %v2374 = vld [vmem:[%s3 + $0x98] sm:$0xff]
  %v2375 = vld [vmem:[%s3 + $0xa0] sm:$0xff]
  %v2376 = vld [vmem:[%s3 + $0xa8] sm:$0xff]
  %v2377 = vld [vmem:[%s3 + $0xb0] sm:$0xff]
  %v2378 = vld [vmem:[%s3 + $0xb8] sm:$0xff]
  %v2379 = vld [vmem:[%s3 + $0xc0] sm:$0xff]
  %v2380 = vld [vmem:[%s3 + $0xc8] sm:$0xff]
  %v2381 = vld [vmem:[%s3 + $0xd0] sm:$0xff]
  %v2382 = vld [vmem:[%s3 + $0xd8] sm:$0xff]
  %v2383 = vld [vmem:[%s3 + $0xe0] sm:$0xff]
  %v2384 = vld [vmem:[%s3 + $0xe8] sm:$0xff]
  %v2385 = vld [vmem:[%s3 + $0xf0] sm:$0xff]
  %v2386 = vld [vmem:[%s3 + $0xf8] sm:$0xff]
  %v2387 = vld [vmem:[%s3 + $0x100] sm:$0xff]
  %v2388 = vld [vmem:[%s3 + $0x108] sm:$0xff]
  %v2389 = vld [vmem:[%s3 + $0x110] sm:$0xff]
  %v2390 = vld [vmem:[%s3 + $0x118] sm:$0xff]
  %v2391 = vld [vmem:[%s3 + $0x120] sm:$0xff]
  %v2392 = vld [vmem:[%s3 + $0x128] sm:$0xff]
  %v2393 = vld [vmem:[%s3 + $0x130] sm:$0xff]
  %v2394 = vld [vmem:[%s3 + $0x138] sm:$0x1]
  %s2396 = vtos %v2394
  %v2397 = vstv %s2396
  %2399 = vmatprep.subr.mxu0 0.0
  %2400 = vmatpush1.msra.mxu0 %v2362
  %2401 = vmatprep.subr.mxu0 0.0
  %2402 = vmatpush1.msra.mxu0 %v2363
  %2403 = vmatprep.subr.mxu0 0.0
  %2404 = vmatpush1.msra.mxu0 %v2364
  %2405 = vmatprep.subr.mxu0 0.0
  %2406 = vmatpush1.msra.mxu0 %v2365
  %2407 = vmatprep.subr.mxu0 0.0
  %2408 = vmatpush1.msra.mxu0 %v2366
  %2409 = vmatprep.subr.mxu0 0.0
  %2410 = vmatpush1.msra.mxu0 %v2367
  %2411 = vmatprep.subr.mxu0 0.0
  %2412 = vmatpush1.msra.mxu0 %v2368
  %2413 = vmatprep.subr.mxu0 0.0
  %2414 = vmatpush1.msra.mxu0 %v2369
  %2415 = vmatprep.subr.mxu0 0.0
  %2416 = vmatpush1.msra.mxu0 %v2370
  %2417 = vmatprep.subr.mxu0 0.0
  %2418 = vmatpush1.msra.mxu0 %v2371
  %2419 = vmatprep.subr.mxu0 0.0
  %2420 = vmatpush1.msra.mxu0 %v2372
  %2421 = vmatprep.subr.mxu0 0.0
  %2422 = vmatpush1.msra.mxu0 %v2373
  %2423 = vmatprep.subr.mxu0 0.0
  %2424 = vmatpush1.msra.mxu0 %v2374
  %2425 = vmatprep.subr.mxu0 0.0
  %2426 = vmatpush1.msra.mxu0 %v2375
  %2427 = vmatprep.subr.mxu0 0.0
  %2428 = vmatpush1.msra.mxu0 %v2376
  %2429 = vmatprep.subr.mxu0 0.0
  %2430 = vmatpush1.msra.mxu0 %v2377
  %2431 = vmatprep.subr.mxu0 0.0
  %2432 = vmatpush1.msra.mxu0 %v2378
  %2433 = vmatprep.subr.mxu0 0.0
  %2434 = vmatpush1.msra.mxu0 %v2379
  %2435 = vmatprep.subr.mxu0 0.0
  %2436 = vmatpush1.msra.mxu0 %v2380
  %2437 = vmatprep.subr.mxu0 0.0
  %2438 = vmatpush1.msra.mxu0 %v2381
  %2439 = vmatprep.subr.mxu0 0.0
  %2440 = vmatpush1.msra.mxu0 %v2382
  %2441 = vmatprep.subr.mxu0 0.0
  %2442 = vmatpush1.msra.mxu0 %v2383
  %2443 = vmatprep.subr.mxu0 0.0
  %2444 = vmatpush1.msra.mxu0 %v2384
  %2445 = vmatprep.subr.mxu0 0.0
  %2446 = vmatpush1.msra.mxu0 %v2385
  %2447 = vmatprep.subr.mxu0 0.0
  %2448 = vmatpush1.msra.mxu0 %v2386
  %2449 = vmatprep.subr.mxu0 0.0
  %2450 = vmatpush1.msra.mxu0 %v2387
  %2451 = vmatprep.subr.mxu0 0.0
  %2452 = vmatpush1.msra.mxu0 %v2388
  %2453 = vmatprep.subr.mxu0 0.0
  %2454 = vmatpush1.msra.mxu0 %v2389
  %2455 = vmatprep.subr.mxu0 0.0
  %2456 = vmatpush1.msra.mxu0 %v2390
  %2457 = vmatprep.subr.mxu0 0.0
  %2458 = vmatpush1.msra.mxu0 %v2391
  %2459 = vmatprep.subr.mxu0 0.0
  %2460 = vmatpush1.msra.mxu0 %v2392
  %2461 = vmatprep.subr.mxu0 0.0
  %2462 = vmatpush1.msra.mxu0 %v2393
  %2463 = vmatprep.mubr.f32.mxu0 %v2361
  %2464 = vmatmul.mubr.f32.gmra.mrb[0].mxu0 %v2360
  %v2465 = vpop.f32.mrb[0].mxu0
  %v2466 = vadd.f32 %v2397, %v2465
  %v2467 = vpop.f32.mrb[0].mxu0
  %2468 = vdwg.mxu0
  %v2469 = vsel %vm1030, %v2466, -inf
  %2470 = vmax.xlane.f32.xlu0 %v2469
  %v2471 = vpop.xlane.xlu0 %2470
  %v2472 = vsub.f32 %v2466, %v2471
  %v2473 = vmul.f32 %v2472, 1.442695
  %v2474 = vpow.pop %v2473
  %v2475 = vsel %vm1030, %v2474, 0.0
  %2476 = vadd.xlane.f32.xlu0 %v2475
  %v2477 = vpop.xlane.xlu0 %2476
  %v2478 = vrcp.pop %v2477
  %v2479 = vmul.f32 %v2474, %v2478
  %v2481 = vsel %vm1042, %v2479, 0
  %2483 = vmatprep.subr.mxu0 0.0
  %2484 = vmatpush1.msra.mxu0 %v117
  %2485 = vmatprep.subr.mxu0 0.0
  %2486 = vmatpush1.msra.mxu0 %v122
  %2487 = vmatprep.subr.mxu0 0.0
  %2488 = vmatpush1.msra.mxu0 0.0
  %2489 = vmatprep.subr.mxu0 0.0
  %2490 = vmatpush1.msra.mxu0 0.0
  %2491 = vmatprep.subr.mxu0 0.0
  %2492 = vmatpush1.msra.mxu0 0.0
  %2493 = vmatprep.subr.mxu0 0.0
  %2494 = vmatpush1.msra.mxu0 0.0
  %2495 = vmatprep.subr.mxu0 0.0
  %2496 = vmatpush1.msra.mxu0 0.0
  %2497 = vmatprep.subr.mxu0 0.0
  %2498 = vmatpush1.msra.mxu0 0.0
  %2499 = vmatprep.subr.mxu0 0.0
  %2500 = vmatpush1.msra.mxu0 0.0
  %2501 = vmatprep.subr.mxu0 0.0
  %2502 = vmatpush1.msra.mxu0 0.0
  %2503 = vmatprep.subr.mxu0 0.0
  %2504 = vmatpush1.msra.mxu0 0.0
  %2505 = vmatprep.subr.mxu0 0.0
  %2506 = vmatpush1.msra.mxu0 0.0
  %2507 = vmatprep.subr.mxu0 0.0
  %2508 = vmatpush1.msra.mxu0 0.0
  %2509 = vmatprep.subr.mxu0 0.0
  %2510 = vmatpush1.msra.mxu0 0.0
  %2511 = vmatprep.subr.mxu0 0.0
  %2512 = vmatpush1.msra.mxu0 0.0
  %2513 = vmatprep.subr.mxu0 0.0
  %2514 = vmatpush1.msra.mxu0 0.0
  %2515 = vmatprep.subr.mxu0 0.0
  %2516 = vmatpush1.msra.mxu0 0.0
  %2517 = vmatprep.subr.mxu0 0.0
  %2518 = vmatpush1.msra.mxu0 0.0
  %2519 = vmatprep.subr.mxu0 0.0
  %2520 = vmatpush1.msra.mxu0 0.0
  %2521 = vmatprep.subr.mxu0 0.0
  %2522 = vmatpush1.msra.mxu0 0.0
  %2523 = vmatprep.subr.mxu0 0.0
  %2524 = vmatpush1.msra.mxu0 0.0
  %2525 = vmatprep.subr.mxu0 0.0
  %2526 = vmatpush1.msra.mxu0 0.0
  %2527 = vmatprep.subr.mxu0 0.0
  %2528 = vmatpush1.msra.mxu0 0.0
  %2529 = vmatprep.subr.mxu0 0.0
  %2530 = vmatpush1.msra.mxu0 0.0
  %2531 = vmatprep.subr.mxu0 0.0
  %2532 = vmatpush1.msra.mxu0 0.0
  %2533 = vmatprep.subr.mxu0 0.0
  %2534 = vmatpush1.msra.mxu0 0.0
  %2535 = vmatprep.subr.mxu0 0.0
  %2536 = vmatpush1.msra.mxu0 0.0
  %2537 = vmatprep.subr.mxu0 0.0
  %2538 = vmatpush1.msra.mxu0 0.0
  %2539 = vmatprep.subr.mxu0 0.0
  %2540 = vmatpush1.msra.mxu0 0.0
  %2541 = vmatprep.subr.mxu0 0.0
  %2542 = vmatpush1.msra.mxu0 0.0
  %2543 = vmatprep.subr.mxu0 0.0
  %2544 = vmatpush1.msra.mxu0 0.0
  %2545 = vmatprep.subr.mxu0 0.0
  %2546 = vmatpush1.msra.mxu0 0.0
  %2547 = vmatprep.mubr.f32.mxu0 0.0
  %2548 = vmatmul.mubr.f32.gmra.mrb[0].mxu0 %v2481
  %v2549 = vpop.f32.mrb[0].mxu0
  %v2550 = vadd.f32 0.0, %v2549
  %v2551 = vpop.f32.mrb[0].mxu0
  %2552 = vdwg.mxu0
  %v2553 = vrot.slane %v2479, 1
  %v2554 = vsel %vm1042, %v2553, 0
  %2556 = vmatprep.subr.mxu0 0.0
  %2557 = vmatpush1.msra.mxu0 %v127
  %2558 = vmatprep.subr.mxu0 0.0
  %2559 = vmatpush1.msra.mxu0 %v132
  %2560 = vmatprep.subr.mxu0 0.0
  %2561 = vmatpush1.msra.mxu0 0.0
  %2562 = vmatprep.subr.mxu0 0.0
  %2563 = vmatpush1.msra.mxu0 0.0
  %2564 = vmatprep.subr.mxu0 0.0
  %2565 = vmatpush1.msra.mxu0 0.0
  %2566 = vmatprep.subr.mxu0 0.0
  %2567 = vmatpush1.msra.mxu0 0.0
  %2568 = vmatprep.subr.mxu0 0.0
  %2569 = vmatpush1.msra.mxu0 0.0
  %2570 = vmatprep.subr.mxu0 0.0
  %2571 = vmatpush1.msra.mxu0 0.0
  %2572 = vmatprep.subr.mxu0 0.0
  %2573 = vmatpush1.msra.mxu0 0.0
  %2574 = vmatprep.subr.mxu0 0.0
  %2575 = vmatpush1.msra.mxu0 0.0
  %2576 = vmatprep.subr.mxu0 0.0
  %2577 = vmatpush1.msra.mxu0 0.0
  %2578 = vmatprep.subr.mxu0 0.0
  %2579 = vmatpush1.msra.mxu0 0.0
  %2580 = vmatprep.subr.mxu0 0.0
  %2581 = vmatpush1.msra.mxu0 0.0
  %2582 = vmatprep.subr.mxu0 0.0
  %2583 = vmatpush1.msra.mxu0 0.0
  %2584 = vmatprep.subr.mxu0 0.0
  %2585 = vmatpush1.msra.mxu0 0.0
  %2586 = vmatprep.subr.mxu0 0.0
  %2587 = vmatpush1.msra.mxu0 0.0
  %2588 = vmatprep.subr.mxu0 0.0
  %2589 = vmatpush1.msra.mxu0 0.0
  %2590 = vmatprep.subr.mxu0 0.0
  %2591 = vmatpush1.msra.mxu0 0.0
  %2592 = vmatprep.subr.mxu0 0.0
  %2593 = vmatpush1.msra.mxu0 0.0
  %2594 = vmatprep.subr.mxu0 0.0
  %2595 = vmatpush1.msra.mxu0 0.0
  %2596 = vmatprep.subr.mxu0 0.0
  %2597 = vmatpush1.msra.mxu0 0.0
  %2598 = vmatprep.subr.mxu0 0.0
  %2599 = vmatpush1.msra.mxu0 0.0
  %2600 = vmatprep.subr.mxu0 0.0
  %2601 = vmatpush1.msra.mxu0 0.0
  %2602 = vmatprep.subr.mxu0 0.0
  %2603 = vmatpush1.msra.mxu0 0.0
  %2604 = vmatprep.subr.mxu0 0.0
  %2605 = vmatpush1.msra.mxu0 0.0
  %2606 = vmatprep.subr.mxu0 0.0
  %2607 = vmatpush1.msra.mxu0 0.0
  %2608 = vmatprep.subr.mxu0 0.0
  %2609 = vmatpush1.msra.mxu0 0.0
  %2610 = vmatprep.subr.mxu0 0.0
  %2611 = vmatpush1.msra.mxu0 0.0
  %2612 = vmatprep.subr.mxu0 0.0
  %2613 = vmatpush1.msra.mxu0 0.0
  %2614 = vmatprep.subr.mxu0 0.0
  %2615 = vmatpush1.msra.mxu0 0.0
  %2616 = vmatprep.subr.mxu0 0.0
  %2617 = vmatpush1.msra.mxu0 0.0
  %2618 = vmatprep.subr.mxu0 0.0
  %2619 = vmatpush1.msra.mxu0 0.0
  %2620 = vmatprep.mubr.f32.mxu0 0.0
  %2621 = vmatmul.mubr.f32.gmra.mrb[0].mxu0 %v2554
  %v2622 = vpop.f32.mrb[0].mxu0
  %v2623 = vadd.f32 0.0, %v2622
  %v2624 = vpop.f32.mrb[0].mxu0
  %2625 = vdwg.mxu0
  %v2627 = vrot.slane %v2623, 7
  %v2629 = vsel %vm1192, %v2550, %v2627
  %s2630 = scalar_lea.vmem %s2, 4
  %v2631 = vld [vmem:[%s2630] sm:$0x3]
  %v2632 = vld [vmem:[%s3 + $0x198] sm:$0xff]
  %v2633 = vld [vmem:[%s3 + $0x1a0] sm:$0xff]
  %v2634 = vld [vmem:[%s3 + $0x1a8] sm:$0xff]
  %v2635 = vld [vmem:[%s3 + $0x1b0] sm:$0xff]
  %v2636 = vld [vmem:[%s3 + $0x1b8] sm:$0xff]
  %v2637 = vld [vmem:[%s3 + $0x1c0] sm:$0xff]
  %v2639 = vsel %vm589, %v2629, 0
  %2641 = vmatprep.subr.mxu0 0.0
  %2642 = vmatpush1.msra.mxu0 %v2634
  %2643 = vmatprep.subr.mxu0 0.0
  %2644 = vmatpush1.msra.mxu0 %v2635
  %2645 = vmatprep.subr.mxu0 0.0
  %2646 = vmatpush1.msra.mxu0 %v2636
  %2647 = vmatprep.subr.mxu0 0.0
  %2648 = vmatpush1.msra.mxu0 %v2637
  %2649 = vmatprep.subr.mxu0 0.0
  %2650 = vmatpush1.msra.mxu0 0.0
  %2651 = vmatprep.subr.mxu0 0.0
  %2652 = vmatpush1.msra.mxu0 0.0
  %2653 = vmatprep.subr.mxu0 0.0
  %2654 = vmatpush1.msra.mxu0 0.0
  %2655 = vmatprep.subr.mxu0 0.0
  %2656 = vmatpush1.msra.mxu0 0.0
  %2657 = vmatprep.subr.mxu0 0.0
  %2658 = vmatpush1.msra.mxu0 0.0
  %2659 = vmatprep.subr.mxu0 0.0
  %2660 = vmatpush1.msra.mxu0 0.0
  %2661 = vmatprep.subr.mxu0 0.0
  %2662 = vmatpush1.msra.mxu0 0.0
  %2663 = vmatprep.subr.mxu0 0.0
  %2664 = vmatpush1.msra.mxu0 0.0
  %2665 = vmatprep.subr.mxu0 0.0
  %2666 = vmatpush1.msra.mxu0 0.0
  %2667 = vmatprep.subr.mxu0 0.0
  %2668 = vmatpush1.msra.mxu0 0.0
  %2669 = vmatprep.subr.mxu0 0.0
  %2670 = vmatpush1.msra.mxu0 0.0
  %2671 = vmatprep.subr.mxu0 0.0
  %2672 = vmatpush1.msra.mxu0 0.0
  %2673 = vmatprep.subr.mxu0 0.0
  %2674 = vmatpush1.msra.mxu0 0.0
  %2675 = vmatprep.subr.mxu0 0.0
  %2676 = vmatpush1.msra.mxu0 0.0
  %2677 = vmatprep.subr.mxu0 0.0
  %2678 = vmatpush1.msra.mxu0 0.0
  %2679 = vmatprep.subr.mxu0 0.0
  %2680 = vmatpush1.msra.mxu0 0.0
  %2681 = vmatprep.subr.mxu0 0.0
  %2682 = vmatpush1.msra.mxu0 0.0
  %2683 = vmatprep.subr.mxu0 0.0
  %2684 = vmatpush1.msra.mxu0 0.0
  %2685 = vmatprep.subr.mxu0 0.0
  %2686 = vmatpush1.msra.mxu0 0.0
  %2687 = vmatprep.subr.mxu0 0.0
  %2688 = vmatpush1.msra.mxu0 0.0
  %2689 = vmatprep.subr.mxu0 0.0
  %2690 = vmatpush1.msra.mxu0 0.0
  %2691 = vmatprep.subr.mxu0 0.0
  %2692 = vmatpush1.msra.mxu0 0.0
  %2693 = vmatprep.subr.mxu0 0.0
  %2694 = vmatpush1.msra.mxu0 0.0
  %2695 = vmatprep.subr.mxu0 0.0
  %2696 = vmatpush1.msra.mxu0 0.0
  %2697 = vmatprep.subr.mxu0 0.0
  %2698 = vmatpush1.msra.mxu0 0.0
  %2699 = vmatprep.subr.mxu0 0.0
  %2700 = vmatpush1.msra.mxu0 0.0
  %2701 = vmatprep.subr.mxu0 0.0
  %2702 = vmatpush1.msra.mxu0 0.0
  %2703 = vmatprep.subr.mxu0 0.0
  %2704 = vmatpush1.msra.mxu0 0.0
  %2705 = vmatprep.mubr.f32.mxu0 0.0
  %2706 = vmatmul.mubr.f32.gmra.mrb[0].mxu0 %v2639
  %v2707 = vpop.f32.mrb[0].mxu0
  %v2708 = vadd.f32 0.0, %v2707
  %v2709 = vpop.f32.mrb[0].mxu0
  %2710 = vdwg.mxu0
  %v2712 = vsel %vm1042, %v2631, 0
  %2714 = vmatprep.subr.mxu0 0.0
  %2715 = vmatpush1.msra.mxu0 %v2632
  %2716 = vmatprep.subr.mxu0 0.0
  %2717 = vmatpush1.msra.mxu0 %v2633
  %2718 = vmatprep.subr.mxu0 0.0
  %2719 = vmatpush1.msra.mxu0 0.0
  %2720 = vmatprep.subr.mxu0 0.0
  %2721 = vmatpush1.msra.mxu0 0.0
  %2722 = vmatprep.subr.mxu0 0.0
  %2723 = vmatpush1.msra.mxu0 0.0
  %2724 = vmatprep.subr.mxu0 0.0
  %2725 = vmatpush1.msra.mxu0 0.0
  %2726 = vmatprep.subr.mxu0 0.0
  %2727 = vmatpush1.msra.mxu0 0.0
  %2728 = vmatprep.subr.mxu0 0.0
  %2729 = vmatpush1.msra.mxu0 0.0
  %2730 = vmatprep.subr.mxu0 0.0
  %2731 = vmatpush1.msra.mxu0 0.0
  %2732 = vmatprep.subr.mxu0 0.0
  %2733 = vmatpush1.msra.mxu0 0.0
  %2734 = vmatprep.subr.mxu0 0.0
  %2735 = vmatpush1.msra.mxu0 0.0
  %2736 = vmatprep.subr.mxu0 0.0
  %2737 = vmatpush1.msra.mxu0 0.0
  %2738 = vmatprep.subr.mxu0 0.0
  %2739 = vmatpush1.msra.mxu0 0.0
  %2740 = vmatprep.subr.mxu0 0.0
  %2741 = vmatpush1.msra.mxu0 0.0
  %2742 = vmatprep.subr.mxu0 0.0
  %2743 = vmatpush1.msra.mxu0 0.0
  %2744 = vmatprep.subr.mxu0 0.0
  %2745 = vmatpush1.msra.mxu0 0.0
  %2746 = vmatprep.subr.mxu0 0.0
  %2747 = vmatpush1.msra.mxu0 0.0
  %2748 = vmatprep.subr.mxu0 0.0
  %2749 = vmatpush1.msra.mxu0 0.0
  %2750 = vmatprep.subr.mxu0 0.0
  %2751 = vmatpush1.msra.mxu0 0.0
  %2752 = vmatprep.subr.mxu0 0.0
  %2753 = vmatpush1.msra.mxu0 0.0
  %2754 = vmatprep.subr.mxu0 0.0
  %2755 = vmatpush1.msra.mxu0 0.0
  %2756 = vmatprep.subr.mxu0 0.0
  %2757 = vmatpush1.msra.mxu0 0.0
  %2758 = vmatprep.subr.mxu0 0.0
  %2759 = vmatpush1.msra.mxu0 0.0
  %2760 = vmatprep.subr.mxu0 0.0
  %2761 = vmatpush1.msra.mxu0 0.0
  %2762 = vmatprep.subr.mxu0 0.0
  %2763 = vmatpush1.msra.mxu0 0.0
  %2764 = vmatprep.subr.mxu0 0.0
  %2765 = vmatpush1.msra.mxu0 0.0
  %2766 = vmatprep.subr.mxu0 0.0
  %2767 = vmatpush1.msra.mxu0 0.0
  %2768 = vmatprep.subr.mxu0 0.0
  %2769 = vmatpush1.msra.mxu0 0.0
  %2770 = vmatprep.subr.mxu0 0.0
  %2771 = vmatpush1.msra.mxu0 0.0
  %2772 = vmatprep.subr.mxu0 0.0
  %2773 = vmatpush1.msra.mxu0 0.0
  %2774 = vmatprep.subr.mxu0 0.0
  %2775 = vmatpush1.msra.mxu0 0.0
  %2776 = vmatprep.subr.mxu0 0.0
  %2777 = vmatpush1.msra.mxu0 0.0
  %2778 = vmatprep.mubr.f32.mxu0 0.0
  %2779 = vmatmul.mubr.f32.gmra.mrb[0].mxu0 %v2712
  %v2780 = vpop.f32.mrb[0].mxu0
  %v2781 = vadd.f32 %v2708, %v2780
  %v2782 = vpop.f32.mrb[0].mxu0
  %2783 = vdwg.mxu0
  %v2784 = vld [vmem:[%s3 + $0x1c8] sm:$0xff]
  %v2785 = vld [vmem:[%s3 + $0x1d0] sm:$0xff]
  %v2786 = vld [vmem:[%s3 + $0x1d8] sm:$0xff]
  %v2787 = vld [vmem:[%s3 + $0x1e0] sm:$0xff]
  %2788 = vmatprep.subr.mxu0 0.0
  %2789 = vmatpush1.msra.mxu0 %v2784
  %2790 = vmatprep.subr.mxu0 0.0
  %2791 = vmatpush1.msra.mxu0 %v2785
  %2792 = vmatprep.subr.mxu0 0.0
  %2793 = vmatpush1.msra.mxu0 %v2786
  %2794 = vmatprep.subr.mxu0 0.0
  %2795 = vmatpush1.msra.mxu0 %v2787
  %2796 = vmatprep.subr.mxu0 0.0
  %2797 = vmatpush1.msra.mxu0 0.0
  %2798 = vmatprep.subr.mxu0 0.0
  %2799 = vmatpush1.msra.mxu0 0.0
  %2800 = vmatprep.subr.mxu0 0.0
  %2801 = vmatpush1.msra.mxu0 0.0
  %2802 = vmatprep.subr.mxu0 0.0
  %2803 = vmatpush1.msra.mxu0 0.0
  %2804 = vmatprep.subr.mxu0 0.0
  %2805 = vmatpush1.msra.mxu0 0.0
  %2806 = vmatprep.subr.mxu0 0.0
  %2807 = vmatpush1.msra.mxu0 0.0
  %2808 = vmatprep.subr.mxu0 0.0
  %2809 = vmatpush1.msra.mxu0 0.0
  %2810 = vmatprep.subr.mxu0 0.0
  %2811 = vmatpush1.msra.mxu0 0.0
  %2812 = vmatprep.subr.mxu0 0.0
  %2813 = vmatpush1.msra.mxu0 0.0
  %2814 = vmatprep.subr.mxu0 0.0
  %2815 = vmatpush1.msra.mxu0 0.0
  %2816 = vmatprep.subr.mxu0 0.0
  %2817 = vmatpush1.msra.mxu0 0.0
  %2818 = vmatprep.subr.mxu0 0.0
  %2819 = vmatpush1.msra.mxu0 0.0
  %2820 = vmatprep.subr.mxu0 0.0
  %2821 = vmatpush1.msra.mxu0 0.0
  %2822 = vmatprep.subr.mxu0 0.0
  %2823 = vmatpush1.msra.mxu0 0.0
  %2824 = vmatprep.subr.mxu0 0.0
  %2825 = vmatpush1.msra.mxu0 0.0
  %2826 = vmatprep.subr.mxu0 0.0
  %2827 = vmatpush1.msra.mxu0 0.0
  %2828 = vmatprep.subr.mxu0 0.0
  %2829 = vmatpush1.msra.mxu0 0.0
  %2830 = vmatprep.subr.mxu0 0.0
  %2831 = vmatpush1.msra.mxu0 0.0
  %2832 = vmatprep.subr.mxu0 0.0
  %2833 = vmatpush1.msra.mxu0 0.0
  %2834 = vmatprep.subr.mxu0 0.0
  %2835 = vmatpush1.msra.mxu0 0.0
  %2836 = vmatprep.subr.mxu0 0.0
  %2837 = vmatpush1.msra.mxu0 0.0
  %2838 = vmatprep.subr.mxu0 0.0
  %2839 = vmatpush1.msra.mxu0 0.0
  %2840 = vmatprep.subr.mxu0 0.0
  %2841 = vmatpush1.msra.mxu0 0.0
  %2842 = vmatprep.subr.mxu0 0.0
  %2843 = vmatpush1.msra.mxu0 0.0
  %2844 = vmatprep.subr.mxu0 0.0
  %2845 = vmatpush1.msra.mxu0 0.0
  %2846 = vmatprep.subr.mxu0 0.0
  %2847 = vmatpush1.msra.mxu0 0.0
  %2848 = vmatprep.subr.mxu0 0.0
  %2849 = vmatpush1.msra.mxu0 0.0
  %2850 = vmatprep.subr.mxu0 0.0
  %2851 = vmatpush1.msra.mxu0 0.0
  %2852 = vmatprep.mubr.f32.mxu0 0.0
  %2853 = vmatmul.mubr.f32.gmra.mrb[0].mxu0 %v2177
  %v2854 = vpop.f32.mrb[0].mxu0
  %v2855 = vadd.f32 0.0, %v2854
  %v2856 = vpop.f32.mrb[0].mxu0
  %2857 = vdwg.mxu0
  %v2858 = vadd.f32 %v2781, %v2855
  %v2859 = vld [vmem:[%s3 + $0x1e8] sm:$0x1]
  %v2860 = vlaneseq
  %v2861 = vshrl.u32 %v2860, 7
  %v2862 = vsub.s32 0, %v2861
  %v2863 = vrot.slane %v2859, %v2862
  %v2864 = vadd.f32 %v2858, %v2863
  %v2865 = vxor.u32 %v2864, 2147483648
  %v2866 = vmul.f32 %v2865, 1.442695
  %v2867 = vpow.pop %v2866
  %v2868 = vadd.f32 %v2867, 1.0
  %v2869 = vrcp.pop %v2868
  %v2870 = vmul.f32 1.0, %v2869
  %v2871 = vtanh.pop %v2864
  %v2872 = vmul.f32 %v2870, %v2158
  %2874 = vrot.lane.b32.xlu0 %v2871, 64
  %v2875 = vpop.permute.xlu0 %2874
  %v2877 = vmul.f32 %v2870, %v2875
  %2879 = vrot.lane.b32.xlu0 %v2877, 32
  %v2880 = vpop.permute.xlu0 %2879
  %v2882 = vadd.f32 %v2872, %v2880
  %v2883 = vtanh.pop %v2882
  %2885 = vrot.lane.b32.xlu0 %v2883, 64
  %v2886 = vpop.permute.xlu0 %2885
  %v2888 = vmul.f32 %v2870, %v2886
  %v2889 = vld [vmem:[%s3 + $0x1f0] sm:$0xff]
  %v2890 = vld [vmem:[%s3 + $0x1f8] sm:$0xff]
  %v2891 = vld [vmem:[%s3 + $0x200] sm:$0xff]
  %v2892 = vld [vmem:[%s3 + $0x208] sm:$0xff]
  %v2893 = vld [vmem:[%s3 + $0x210] sm:$0x1]
  %v2894 = vlaneseq
  %v2895 = vshrl.u32 %v2894, 7
  %v2896 = vsub.s32 0, %v2895
  %v2897 = vrot.slane %v2893, %v2896
  %2899 = vrot.lane.b32.xlu0 %v2888, 32
  %v2900 = vpop.permute.xlu0 %2899
  %v2901 = vsel %vm589, %v2900, 0
  %2903 = vmatprep.subr.mxu0 0.0
  %2904 = vmatpush1.msra.mxu0 %v2889
  %2905 = vmatprep.subr.mxu0 0.0
  %2906 = vmatpush1.msra.mxu0 %v2890
  %2907 = vmatprep.subr.mxu0 0.0
  %2908 = vmatpush1.msra.mxu0 %v2891
  %2909 = vmatprep.subr.mxu0 0.0
  %2910 = vmatpush1.msra.mxu0 %v2892
  %2911 = vmatprep.subr.mxu0 0.0
  %2912 = vmatpush1.msra.mxu0 0.0
  %2913 = vmatprep.subr.mxu0 0.0
  %2914 = vmatpush1.msra.mxu0 0.0
  %2915 = vmatprep.subr.mxu0 0.0
  %2916 = vmatpush1.msra.mxu0 0.0
  %2917 = vmatprep.subr.mxu0 0.0
  %2918 = vmatpush1.msra.mxu0 0.0
  %2919 = vmatprep.subr.mxu0 0.0
  %2920 = vmatpush1.msra.mxu0 0.0
  %2921 = vmatprep.subr.mxu0 0.0
  %2922 = vmatpush1.msra.mxu0 0.0
  %2923 = vmatprep.subr.mxu0 0.0
  %2924 = vmatpush1.msra.mxu0 0.0
  %2925 = vmatprep.subr.mxu0 0.0
  %2926 = vmatpush1.msra.mxu0 0.0
  %2927 = vmatprep.subr.mxu0 0.0
  %2928 = vmatpush1.msra.mxu0 0.0
  %2929 = vmatprep.subr.mxu0 0.0
  %2930 = vmatpush1.msra.mxu0 0.0
  %2931 = vmatprep.subr.mxu0 0.0
  %2932 = vmatpush1.msra.mxu0 0.0
  %2933 = vmatprep.subr.mxu0 0.0
  %2934 = vmatpush1.msra.mxu0 0.0
  %2935 = vmatprep.subr.mxu0 0.0
  %2936 = vmatpush1.msra.mxu0 0.0
  %2937 = vmatprep.subr.mxu0 0.0
  %2938 = vmatpush1.msra.mxu0 0.0
  %2939 = vmatprep.subr.mxu0 0.0
  %2940 = vmatpush1.msra.mxu0 0.0
  %2941 = vmatprep.subr.mxu0 0.0
  %2942 = vmatpush1.msra.mxu0 0.0
  %2943 = vmatprep.subr.mxu0 0.0
  %2944 = vmatpush1.msra.mxu0 0.0
  %2945 = vmatprep.subr.mxu0 0.0
  %2946 = vmatpush1.msra.mxu0 0.0
  %2947 = vmatprep.subr.mxu0 0.0
  %2948 = vmatpush1.msra.mxu0 0.0
  %2949 = vmatprep.subr.mxu0 0.0
  %2950 = vmatpush1.msra.mxu0 0.0
  %2951 = vmatprep.subr.mxu0 0.0
  %2952 = vmatpush1.msra.mxu0 0.0
  %2953 = vmatprep.subr.mxu0 0.0
  %2954 = vmatpush1.msra.mxu0 0.0
  %2955 = vmatprep.subr.mxu0 0.0
  %2956 = vmatpush1.msra.mxu0 0.0
  %2957 = vmatprep.subr.mxu0 0.0
  %2958 = vmatpush1.msra.mxu0 0.0
  %2959 = vmatprep.subr.mxu0 0.0
  %2960 = vmatpush1.msra.mxu0 0.0
  %2961 = vmatprep.subr.mxu0 0.0
  %2962 = vmatpush1.msra.mxu0 0.0
  %2963 = vmatprep.subr.mxu0 0.0
  %2964 = vmatpush1.msra.mxu0 0.0
  %2965 = vmatprep.subr.mxu0 0.0
  %2966 = vmatpush1.msra.mxu0 0.0
  %2967 = vmatprep.mubr.f32.mxu0 0.0
  %2968 = vmatmul.mubr.f32.gmra.mrb[0].mxu0 %v2901
  %v2969 = vpop.f32.mrb[0].mxu0
  %v2970 = vadd.f32 %v2897, %v2969
  %v2971 = vpop.f32.mrb[0].mxu0
  %2972 = vdwg.mxu0
  %v2975 = vunpack.c.l.s4 1983009808
  %v2976 = vunpack.c.0.s8 %v2975
  %v2977 = vlaneseq
  %v2978 = vshrl.u32 %v2977, 7
  %v2979 = vsub.s32 %v2976, %v2978
  %v2980 = vrot.slane %v2970, %v2979
  %2981 = vrot.lane.b32.xlu0 %v2980, 64
  %v2982 = vpop.permute.xlu0 %2981
  %vm2984 = vcmask 779776
  %2985 = vst.msk [vmem:[%s5] sm:$0x3] %vm2984, %v2982
  %2986 = vrot.lane.b32.xlu0 %v2479, 32
  %v2987 = vpop.permute.xlu0 %2986
  %vm2989 = vcmask 386304
  %2990 = vst.msk [vmem:[%s6] sm:$0x3] %vm2989, %v2987
  %v2991 = vld [vmem:[%s4 + $0x610] sm:$0xff]
  %v2992 = vld [vmem:[%s4 + $0x618] sm:$0xff]
  %v2993 = vld [vmem:[%s4 + $0x620] sm:$0xff]
  %v2994 = vld [vmem:[%s4 + $0x628] sm:$0xff]
  %v2995 = vld [vmem:[%s4 + $0x630] sm:$0xff]
  %v2996 = vld [vmem:[%s4 + $0x638] sm:$0xff]
  %v2997 = vld [vmem:[%s4 + $0x640] sm:$0xff]
  %v2998 = vld [vmem:[%s4 + $0x648] sm:$0xff]
  %v2999 = vld [vmem:[%s832] ss:$8 sm:$0x3]
  %v3001 = vlaneseq
  %v3002 = vshrl.u32 %v3001, 7
  %v3003 = vsub.s32 0, %v3002
  %v3004 = vrot.slane %v2999, %v3003
  %v3005 = vlaneseq
  %v3006 = vshrl.u32 %v3005, 7
  %v3007 = vsub.s32 1, %v3006
  %v3008 = vrot.slane %v2999, %v3007
  %3011 = vmatprep.subr.mxu0 %v2992
  %3012 = vmatpush1.msra.mxu0 %v2991
  %3013 = vmatprep.subr.mxu0 %v2994
  %3014 = vmatpush1.msra.mxu0 %v2993
  %3015 = vmatprep.subr.mxu0 %v2996
  %3016 = vmatpush1.msra.mxu0 %v2995
  %3017 = vmatprep.subr.mxu0 %v2998
  %3018 = vmatpush1.msra.mxu0 %v2997
  %3019 = vmatprep.subr.mxu0 0.0
  %3020 = vmatpush1.msra.mxu0 0.0
  %3021 = vmatprep.subr.mxu0 0.0
  %3022 = vmatpush1.msra.mxu0 0.0
  %3023 = vmatprep.subr.mxu0 0.0
  %3024 = vmatpush1.msra.mxu0 0.0
  %3025 = vmatprep.subr.mxu0 0.0
  %3026 = vmatpush1.msra.mxu0 0.0
  %3027 = vmatprep.subr.mxu0 0.0
  %3028 = vmatpush1.msra.mxu0 0.0
  %3029 = vmatprep.subr.mxu0 0.0
  %3030 = vmatpush1.msra.mxu0 0.0
  %3031 = vmatprep.subr.mxu0 0.0
  %3032 = vmatpush1.msra.mxu0 0.0
  %3033 = vmatprep.subr.mxu0 0.0
  %3034 = vmatpush1.msra.mxu0 0.0
  %3035 = vmatprep.subr.mxu0 0.0
  %3036 = vmatpush1.msra.mxu0 0.0
  %3037 = vmatprep.subr.mxu0 0.0
  %3038 = vmatpush1.msra.mxu0 0.0
  %3039 = vmatprep.subr.mxu0 0.0
  %3040 = vmatpush1.msra.mxu0 0.0
  %3041 = vmatprep.subr.mxu0 0.0
  %3042 = vmatpush1.msra.mxu0 0.0
  %3043 = vmatprep.subr.mxu0 0.0
  %3044 = vmatpush1.msra.mxu0 0.0
  %3045 = vmatprep.subr.mxu0 0.0
  %3046 = vmatpush1.msra.mxu0 0.0
  %3047 = vmatprep.subr.mxu0 0.0
  %3048 = vmatpush1.msra.mxu0 0.0
  %3049 = vmatprep.subr.mxu0 0.0
  %3050 = vmatpush1.msra.mxu0 0.0
  %3051 = vmatprep.subr.mxu0 0.0
  %3052 = vmatpush1.msra.mxu0 0.0
  %3053 = vmatprep.subr.mxu0 0.0
  %3054 = vmatpush1.msra.mxu0 0.0
  %3055 = vmatprep.subr.mxu0 0.0
  %3056 = vmatpush1.msra.mxu0 0.0
  %3057 = vmatprep.subr.mxu0 0.0
  %3058 = vmatpush1.msra.mxu0 0.0
  %3059 = vmatprep.subr.mxu0 0.0
  %3060 = vmatpush1.msra.mxu0 0.0
  %3061 = vmatprep.subr.mxu0 0.0
  %3062 = vmatpush1.msra.mxu0 0.0
  %3063 = vmatprep.subr.mxu0 0.0
  %3064 = vmatpush1.msra.mxu0 0.0
  %3065 = vmatprep.subr.mxu0 0.0
  %3066 = vmatpush1.msra.mxu0 0.0
  %3067 = vmatprep.subr.mxu0 0.0
  %3068 = vmatpush1.msra.mxu0 0.0
  %3069 = vmatprep.subr.mxu0 0.0
  %3070 = vmatpush1.msra.mxu0 0.0
  %3071 = vmatprep.subr.mxu0 0.0
  %3072 = vmatpush1.msra.mxu0 0.0
  %3073 = vmatprep.subr.mxu0 0.0
  %3074 = vmatpush1.msra.mxu0 0.0
  %3075 = vmatprep.mubr.f32.mxu0 0.0
  %3076 = vmatmul.mubr.f32.gmra.mrb[0].mxu0 %v2901
  %v3077 = vpop.f32.mrb[0].mxu0
  %v3078 = vadd.f32 %v3004, %v3077
  %v3079 = vpop.f32.mrb[0].mxu0
  %v3080 = vadd.f32 %v3008, %v3079
  %3081 = vdwg.mxu0
  %v3082 = vadd.f32 %v584, %v3078
  %v3083 = vadd.f32 %v586, %v3080
  %v3084 = vtanh.pop %v3082
  %v3085 = vtanh.pop %v3083
  %v3086 = vld [vmem:[%s3 + $0x38] sm:$0xff]
  %v3087 = vld [vmem:[%s3 + $0x40] sm:$0xff]
  %v3088 = vld [vmem:[%s3 + $0x48] sm:$0xff]
  %v3089 = vld [vmem:[%s3 + $0x50] sm:$0xff]
  %v3090 = vld [vmem:[%s3 + $0x58] sm:$0xff]
  %v3091 = vld [vmem:[%s3 + $0x60] sm:$0xff]
  %v3092 = vld [vmem:[%s3 + $0x68] sm:$0xff]
  %v3093 = vld [vmem:[%s3 + $0x70] sm:$0xff]
  %v3094 = vld [vmem:[%s3 + $0x78] sm:$0xff]
  %v3095 = vld [vmem:[%s3 + $0x80] sm:$0xff]
  %v3096 = vld [vmem:[%s3 + $0x88] sm:$0xff]
  %v3097 = vld [vmem:[%s3 + $0x90] sm:$0xff]
  %v3098 = vld [vmem:[%s3 + $0x98] sm:$0xff]
  %v3099 = vld [vmem:[%s3 + $0xa0] sm:$0xff]
  %v3100 = vld [vmem:[%s3 + $0xa8] sm:$0xff]
  %v3101 = vld [vmem:[%s3 + $0xb0] sm:$0xff]
  %v3102 = vld [vmem:[%s3 + $0xb8] sm:$0xff]
  %v3103 = vld [vmem:[%s3 + $0xc0] sm:$0xff]
  %v3104 = vld [vmem:[%s3 + $0xc8] sm:$0xff]
  %v3105 = vld [vmem:[%s3 + $0xd0] sm:$0xff]
  %v3106 = vld [vmem:[%s3 + $0xd8] sm:$0xff]
  %v3107 = vld [vmem:[%s3 + $0xe0] sm:$0xff]
  %v3108 = vld [vmem:[%s3 + $0xe8] sm:$0xff]
  %v3109 = vld [vmem:[%s3 + $0xf0] sm:$0xff]
  %v3110 = vld [vmem:[%s3 + $0xf8] sm:$0xff]
  %v3111 = vld [vmem:[%s3 + $0x100] sm:$0xff]
  %v3112 = vld [vmem:[%s3 + $0x108] sm:$0xff]
  %v3113 = vld [vmem:[%s3 + $0x110] sm:$0xff]
  %v3114 = vld [vmem:[%s3 + $0x118] sm:$0xff]
  %v3115 = vld [vmem:[%s3 + $0x120] sm:$0xff]
  %v3116 = vld [vmem:[%s3 + $0x128] sm:$0xff]
  %v3117 = vld [vmem:[%s3 + $0x130] sm:$0xff]
  %v3118 = vld [vmem:[%s3 + $0x138] sm:$0x1]
  %s3120 = vtos %v3118
  %v3121 = vstv %s3120
  %3123 = vmatprep.subr.mxu0 0.0
  %3124 = vmatpush1.msra.mxu0 %v3086
  %3125 = vmatprep.subr.mxu0 0.0
  %3126 = vmatpush1.msra.mxu0 %v3087
  %3127 = vmatprep.subr.mxu0 0.0
  %3128 = vmatpush1.msra.mxu0 %v3088
  %3129 = vmatprep.subr.mxu0 0.0
  %3130 = vmatpush1.msra.mxu0 %v3089
  %3131 = vmatprep.subr.mxu0 0.0
  %3132 = vmatpush1.msra.mxu0 %v3090
  %3133 = vmatprep.subr.mxu0 0.0
  %3134 = vmatpush1.msra.mxu0 %v3091
  %3135 = vmatprep.subr.mxu0 0.0
  %3136 = vmatpush1.msra.mxu0 %v3092
  %3137 = vmatprep.subr.mxu0 0.0
  %3138 = vmatpush1.msra.mxu0 %v3093
  %3139 = vmatprep.subr.mxu0 0.0
  %3140 = vmatpush1.msra.mxu0 %v3094
  %3141 = vmatprep.subr.mxu0 0.0
  %3142 = vmatpush1.msra.mxu0 %v3095
  %3143 = vmatprep.subr.mxu0 0.0
  %3144 = vmatpush1.msra.mxu0 %v3096
  %3145 = vmatprep.subr.mxu0 0.0
  %3146 = vmatpush1.msra.mxu0 %v3097
  %3147 = vmatprep.subr.mxu0 0.0
  %3148 = vmatpush1.msra.mxu0 %v3098
  %3149 = vmatprep.subr.mxu0 0.0
  %3150 = vmatpush1.msra.mxu0 %v3099
  %3151 = vmatprep.subr.mxu0 0.0
  %3152 = vmatpush1.msra.mxu0 %v3100
  %3153 = vmatprep.subr.mxu0 0.0
  %3154 = vmatpush1.msra.mxu0 %v3101
  %3155 = vmatprep.subr.mxu0 0.0
  %3156 = vmatpush1.msra.mxu0 %v3102
  %3157 = vmatprep.subr.mxu0 0.0
  %3158 = vmatpush1.msra.mxu0 %v3103
  %3159 = vmatprep.subr.mxu0 0.0
  %3160 = vmatpush1.msra.mxu0 %v3104
  %3161 = vmatprep.subr.mxu0 0.0
  %3162 = vmatpush1.msra.mxu0 %v3105
  %3163 = vmatprep.subr.mxu0 0.0
  %3164 = vmatpush1.msra.mxu0 %v3106
  %3165 = vmatprep.subr.mxu0 0.0
  %3166 = vmatpush1.msra.mxu0 %v3107
  %3167 = vmatprep.subr.mxu0 0.0
  %3168 = vmatpush1.msra.mxu0 %v3108
  %3169 = vmatprep.subr.mxu0 0.0
  %3170 = vmatpush1.msra.mxu0 %v3109
  %3171 = vmatprep.subr.mxu0 0.0
  %3172 = vmatpush1.msra.mxu0 %v3110
  %3173 = vmatprep.subr.mxu0 0.0
  %3174 = vmatpush1.msra.mxu0 %v3111
  %3175 = vmatprep.subr.mxu0 0.0
  %3176 = vmatpush1.msra.mxu0 %v3112
  %3177 = vmatprep.subr.mxu0 0.0
  %3178 = vmatpush1.msra.mxu0 %v3113
  %3179 = vmatprep.subr.mxu0 0.0
  %3180 = vmatpush1.msra.mxu0 %v3114
  %3181 = vmatprep.subr.mxu0 0.0
  %3182 = vmatpush1.msra.mxu0 %v3115
  %3183 = vmatprep.subr.mxu0 0.0
  %3184 = vmatpush1.msra.mxu0 %v3116
  %3185 = vmatprep.subr.mxu0 0.0
  %3186 = vmatpush1.msra.mxu0 %v3117
  %3187 = vmatprep.mubr.f32.mxu0 %v3085
  %3188 = vmatmul.mubr.f32.gmra.mrb[0].mxu0 %v3084
  %v3189 = vpop.f32.mrb[0].mxu0
  %v3190 = vadd.f32 %v3121, %v3189
  %v3191 = vpop.f32.mrb[0].mxu0
  %3192 = vdwg.mxu0
  %v3193 = vsel %vm1030, %v3190, -inf
  %3194 = vmax.xlane.f32.xlu0 %v3193
  %v3195 = vpop.xlane.xlu0 %3194
  %v3196 = vsub.f32 %v3190, %v3195
  %v3197 = vmul.f32 %v3196, 1.442695
  %v3198 = vpow.pop %v3197
  %v3199 = vsel %vm1030, %v3198, 0.0
  %3200 = vadd.xlane.f32.xlu0 %v3199
  %v3201 = vpop.xlane.xlu0 %3200
  %v3202 = vrcp.pop %v3201
  %v3203 = vmul.f32 %v3198, %v3202
  %v3205 = vsel %vm1042, %v3203, 0
  %3207 = vmatprep.subr.mxu0 0.0
  %3208 = vmatpush1.msra.mxu0 %v117
  %3209 = vmatprep.subr.mxu0 0.0
  %3210 = vmatpush1.msra.mxu0 %v122
  %3211 = vmatprep.subr.mxu0 0.0
  %3212 = vmatpush1.msra.mxu0 0.0
  %3213 = vmatprep.subr.mxu0 0.0
  %3214 = vmatpush1.msra.mxu0 0.0
  %3215 = vmatprep.subr.mxu0 0.0
  %3216 = vmatpush1.msra.mxu0 0.0
  %3217 = vmatprep.subr.mxu0 0.0
  %3218 = vmatpush1.msra.mxu0 0.0
  %3219 = vmatprep.subr.mxu0 0.0
  %3220 = vmatpush1.msra.mxu0 0.0
  %3221 = vmatprep.subr.mxu0 0.0
  %3222 = vmatpush1.msra.mxu0 0.0
  %3223 = vmatprep.subr.mxu0 0.0
  %3224 = vmatpush1.msra.mxu0 0.0
  %3225 = vmatprep.subr.mxu0 0.0
  %3226 = vmatpush1.msra.mxu0 0.0
  %3227 = vmatprep.subr.mxu0 0.0
  %3228 = vmatpush1.msra.mxu0 0.0
  %3229 = vmatprep.subr.mxu0 0.0
  %3230 = vmatpush1.msra.mxu0 0.0
  %3231 = vmatprep.subr.mxu0 0.0
  %3232 = vmatpush1.msra.mxu0 0.0
  %3233 = vmatprep.subr.mxu0 0.0
  %3234 = vmatpush1.msra.mxu0 0.0
  %3235 = vmatprep.subr.mxu0 0.0
  %3236 = vmatpush1.msra.mxu0 0.0
  %3237 = vmatprep.subr.mxu0 0.0
  %3238 = vmatpush1.msra.mxu0 0.0
  %3239 = vmatprep.subr.mxu0 0.0
  %3240 = vmatpush1.msra.mxu0 0.0
  %3241 = vmatprep.subr.mxu0 0.0
  %3242 = vmatpush1.msra.mxu0 0.0
  %3243 = vmatprep.subr.mxu0 0.0
  %3244 = vmatpush1.msra.mxu0 0.0
  %3245 = vmatprep.subr.mxu0 0.0
  %3246 = vmatpush1.msra.mxu0 0.0
  %3247 = vmatprep.subr.mxu0 0.0
  %3248 = vmatpush1.msra.mxu0 0.0
  %3249 = vmatprep.subr.mxu0 0.0
  %3250 = vmatpush1.msra.mxu0 0.0
  %3251 = vmatprep.subr.mxu0 0.0
  %3252 = vmatpush1.msra.mxu0 0.0
  %3253 = vmatprep.subr.mxu0 0.0
  %3254 = vmatpush1.msra.mxu0 0.0
  %3255 = vmatprep.subr.mxu0 0.0
  %3256 = vmatpush1.msra.mxu0 0.0
  %3257 = vmatprep.subr.mxu0 0.0
  %3258 = vmatpush1.msra.mxu0 0.0
  %3259 = vmatprep.subr.mxu0 0.0
  %3260 = vmatpush1.msra.mxu0 0.0
  %3261 = vmatprep.subr.mxu0 0.0
  %3262 = vmatpush1.msra.mxu0 0.0
  %3263 = vmatprep.subr.mxu0 0.0
  %3264 = vmatpush1.msra.mxu0 0.0
  %3265 = vmatprep.subr.mxu0 0.0
  %3266 = vmatpush1.msra.mxu0 0.0
  %3267 = vmatprep.subr.mxu0 0.0
  %3268 = vmatpush1.msra.mxu0 0.0
  %3269 = vmatprep.subr.mxu0 0.0
  %3270 = vmatpush1.msra.mxu0 0.0
  %3271 = vmatprep.mubr.f32.mxu0 0.0
  %3272 = vmatmul.mubr.f32.gmra.mrb[0].mxu0 %v3205
  %v3273 = vpop.f32.mrb[0].mxu0
  %v3274 = vadd.f32 0.0, %v3273
  %v3275 = vpop.f32.mrb[0].mxu0
  %3276 = vdwg.mxu0
  %v3277 = vrot.slane %v3203, 1
  %v3278 = vsel %vm1042, %v3277, 0
  %3280 = vmatprep.subr.mxu0 0.0
  %3281 = vmatpush1.msra.mxu0 %v127
  %3282 = vmatprep.subr.mxu0 0.0
  %3283 = vmatpush1.msra.mxu0 %v132
  %3284 = vmatprep.subr.mxu0 0.0
  %3285 = vmatpush1.msra.mxu0 0.0
  %3286 = vmatprep.subr.mxu0 0.0
  %3287 = vmatpush1.msra.mxu0 0.0
  %3288 = vmatprep.subr.mxu0 0.0
  %3289 = vmatpush1.msra.mxu0 0.0
  %3290 = vmatprep.subr.mxu0 0.0
  %3291 = vmatpush1.msra.mxu0 0.0
  %3292 = vmatprep.subr.mxu0 0.0
  %3293 = vmatpush1.msra.mxu0 0.0
  %3294 = vmatprep.subr.mxu0 0.0
  %3295 = vmatpush1.msra.mxu0 0.0
  %3296 = vmatprep.subr.mxu0 0.0
  %3297 = vmatpush1.msra.mxu0 0.0
  %3298 = vmatprep.subr.mxu0 0.0
  %3299 = vmatpush1.msra.mxu0 0.0
  %3300 = vmatprep.subr.mxu0 0.0
  %3301 = vmatpush1.msra.mxu0 0.0
  %3302 = vmatprep.subr.mxu0 0.0
  %3303 = vmatpush1.msra.mxu0 0.0
  %3304 = vmatprep.subr.mxu0 0.0
  %3305 = vmatpush1.msra.mxu0 0.0
  %3306 = vmatprep.subr.mxu0 0.0
  %3307 = vmatpush1.msra.mxu0 0.0
  %3308 = vmatprep.subr.mxu0 0.0
  %3309 = vmatpush1.msra.mxu0 0.0
  %3310 = vmatprep.subr.mxu0 0.0
  %3311 = vmatpush1.msra.mxu0 0.0
  %3312 = vmatprep.subr.mxu0 0.0
  %3313 = vmatpush1.msra.mxu0 0.0
  %3314 = vmatprep.subr.mxu0 0.0
  %3315 = vmatpush1.msra.mxu0 0.0
  %3316 = vmatprep.subr.mxu0 0.0
  %3317 = vmatpush1.msra.mxu0 0.0
  %3318 = vmatprep.subr.mxu0 0.0
  %3319 = vmatpush1.msra.mxu0 0.0
  %3320 = vmatprep.subr.mxu0 0.0
  %3321 = vmatpush1.msra.mxu0 0.0
  %3322 = vmatprep.subr.mxu0 0.0
  %3323 = vmatpush1.msra.mxu0 0.0
  %3324 = vmatprep.subr.mxu0 0.0
  %3325 = vmatpush1.msra.mxu0 0.0
  %3326 = vmatprep.subr.mxu0 0.0
  %3327 = vmatpush1.msra.mxu0 0.0
  %3328 = vmatprep.subr.mxu0 0.0
  %3329 = vmatpush1.msra.mxu0 0.0
  %3330 = vmatprep.subr.mxu0 0.0
  %3331 = vmatpush1.msra.mxu0 0.0
  %3332 = vmatprep.subr.mxu0 0.0
  %3333 = vmatpush1.msra.mxu0 0.0
  %3334 = vmatprep.subr.mxu0 0.0
  %3335 = vmatpush1.msra.mxu0 0.0
  %3336 = vmatprep.subr.mxu0 0.0
  %3337 = vmatpush1.msra.mxu0 0.0
  %3338 = vmatprep.subr.mxu0 0.0
  %3339 = vmatpush1.msra.mxu0 0.0
  %3340 = vmatprep.subr.mxu0 0.0
  %3341 = vmatpush1.msra.mxu0 0.0
  %3342 = vmatprep.subr.mxu0 0.0
  %3343 = vmatpush1.msra.mxu0 0.0
  %3344 = vmatprep.mubr.f32.mxu0 0.0
  %3345 = vmatmul.mubr.f32.gmra.mrb[0].mxu0 %v3278
  %v3346 = vpop.f32.mrb[0].mxu0
  %v3347 = vadd.f32 0.0, %v3346
  %v3348 = vpop.f32.mrb[0].mxu0
  %3349 = vdwg.mxu0
  %v3351 = vrot.slane %v3347, 7
  %v3353 = vsel %vm1192, %v3274, %v3351
  %s3354 = scalar_lea.vmem %s2, 6
  %v3355 = vld [vmem:[%s3354] sm:$0x3]
  %v3356 = vld [vmem:[%s3 + $0x198] sm:$0xff]
  %v3357 = vld [vmem:[%s3 + $0x1a0] sm:$0xff]
  %v3358 = vld [vmem:[%s3 + $0x1a8] sm:$0xff]
  %v3359 = vld [vmem:[%s3 + $0x1b0] sm:$0xff]
  %v3360 = vld [vmem:[%s3 + $0x1b8] sm:$0xff]
  %v3361 = vld [vmem:[%s3 + $0x1c0] sm:$0xff]
  %v3363 = vsel %vm589, %v3353, 0
  %3365 = vmatprep.subr.mxu0 0.0
  %3366 = vmatpush1.msra.mxu0 %v3358
  %3367 = vmatprep.subr.mxu0 0.0
  %3368 = vmatpush1.msra.mxu0 %v3359
  %3369 = vmatprep.subr.mxu0 0.0
  %3370 = vmatpush1.msra.mxu0 %v3360
  %3371 = vmatprep.subr.mxu0 0.0
  %3372 = vmatpush1.msra.mxu0 %v3361
  %3373 = vmatprep.subr.mxu0 0.0
  %3374 = vmatpush1.msra.mxu0 0.0
  %3375 = vmatprep.subr.mxu0 0.0
  %3376 = vmatpush1.msra.mxu0 0.0
  %3377 = vmatprep.subr.mxu0 0.0
  %3378 = vmatpush1.msra.mxu0 0.0
  %3379 = vmatprep.subr.mxu0 0.0
  %3380 = vmatpush1.msra.mxu0 0.0
  %3381 = vmatprep.subr.mxu0 0.0
  %3382 = vmatpush1.msra.mxu0 0.0
  %3383 = vmatprep.subr.mxu0 0.0
  %3384 = vmatpush1.msra.mxu0 0.0
  %3385 = vmatprep.subr.mxu0 0.0
  %3386 = vmatpush1.msra.mxu0 0.0
  %3387 = vmatprep.subr.mxu0 0.0
  %3388 = vmatpush1.msra.mxu0 0.0
  %3389 = vmatprep.subr.mxu0 0.0
  %3390 = vmatpush1.msra.mxu0 0.0
  %3391 = vmatprep.subr.mxu0 0.0
  %3392 = vmatpush1.msra.mxu0 0.0
  %3393 = vmatprep.subr.mxu0 0.0
  %3394 = vmatpush1.msra.mxu0 0.0
  %3395 = vmatprep.subr.mxu0 0.0
  %3396 = vmatpush1.msra.mxu0 0.0
  %3397 = vmatprep.subr.mxu0 0.0
  %3398 = vmatpush1.msra.mxu0 0.0
  %3399 = vmatprep.subr.mxu0 0.0
  %3400 = vmatpush1.msra.mxu0 0.0
  %3401 = vmatprep.subr.mxu0 0.0
  %3402 = vmatpush1.msra.mxu0 0.0
  %3403 = vmatprep.subr.mxu0 0.0
  %3404 = vmatpush1.msra.mxu0 0.0
  %3405 = vmatprep.subr.mxu0 0.0
  %3406 = vmatpush1.msra.mxu0 0.0
  %3407 = vmatprep.subr.mxu0 0.0
  %3408 = vmatpush1.msra.mxu0 0.0
  %3409 = vmatprep.subr.mxu0 0.0
  %3410 = vmatpush1.msra.mxu0 0.0
  %3411 = vmatprep.subr.mxu0 0.0
  %3412 = vmatpush1.msra.mxu0 0.0
  %3413 = vmatprep.subr.mxu0 0.0
  %3414 = vmatpush1.msra.mxu0 0.0
  %3415 = vmatprep.subr.mxu0 0.0
  %3416 = vmatpush1.msra.mxu0 0.0
  %3417 = vmatprep.subr.mxu0 0.0
  %3418 = vmatpush1.msra.mxu0 0.0
  %3419 = vmatprep.subr.mxu0 0.0
  %3420 = vmatpush1.msra.mxu0 0.0
  %3421 = vmatprep.subr.mxu0 0.0
  %3422 = vmatpush1.msra.mxu0 0.0
  %3423 = vmatprep.subr.mxu0 0.0
  %3424 = vmatpush1.msra.mxu0 0.0
  %3425 = vmatprep.subr.mxu0 0.0
  %3426 = vmatpush1.msra.mxu0 0.0
  %3427 = vmatprep.subr.mxu0 0.0
  %3428 = vmatpush1.msra.mxu0 0.0
  %3429 = vmatprep.mubr.f32.mxu0 0.0
  %3430 = vmatmul.mubr.f32.gmra.mrb[0].mxu0 %v3363
  %v3431 = vpop.f32.mrb[0].mxu0
  %v3432 = vadd.f32 0.0, %v3431
  %v3433 = vpop.f32.mrb[0].mxu0
  %3434 = vdwg.mxu0
  %v3436 = vsel %vm1042, %v3355, 0
  %3438 = vmatprep.subr.mxu0 0.0
  %3439 = vmatpush1.msra.mxu0 %v3356
  %3440 = vmatprep.subr.mxu0 0.0
  %3441 = vmatpush1.msra.mxu0 %v3357
  %3442 = vmatprep.subr.mxu0 0.0
  %3443 = vmatpush1.msra.mxu0 0.0
  %3444 = vmatprep.subr.mxu0 0.0
  %3445 = vmatpush1.msra.mxu0 0.0
  %3446 = vmatprep.subr.mxu0 0.0
  %3447 = vmatpush1.msra.mxu0 0.0
  %3448 = vmatprep.subr.mxu0 0.0
  %3449 = vmatpush1.msra.mxu0 0.0
  %3450 = vmatprep.subr.mxu0 0.0
  %3451 = vmatpush1.msra.mxu0 0.0
  %3452 = vmatprep.subr.mxu0 0.0
  %3453 = vmatpush1.msra.mxu0 0.0
  %3454 = vmatprep.subr.mxu0 0.0
  %3455 = vmatpush1.msra.mxu0 0.0
  %3456 = vmatprep.subr.mxu0 0.0
  %3457 = vmatpush1.msra.mxu0 0.0
  %3458 = vmatprep.subr.mxu0 0.0
  %3459 = vmatpush1.msra.mxu0 0.0
  %3460 = vmatprep.subr.mxu0 0.0
  %3461 = vmatpush1.msra.mxu0 0.0
  %3462 = vmatprep.subr.mxu0 0.0
  %3463 = vmatpush1.msra.mxu0 0.0
  %3464 = vmatprep.subr.mxu0 0.0
  %3465 = vmatpush1.msra.mxu0 0.0
  %3466 = vmatprep.subr.mxu0 0.0
  %3467 = vmatpush1.msra.mxu0 0.0
  %3468 = vmatprep.subr.mxu0 0.0
  %3469 = vmatpush1.msra.mxu0 0.0
  %3470 = vmatprep.subr.mxu0 0.0
  %3471 = vmatpush1.msra.mxu0 0.0
  %3472 = vmatprep.subr.mxu0 0.0
  %3473 = vmatpush1.msra.mxu0 0.0
  %3474 = vmatprep.subr.mxu0 0.0
  %3475 = vmatpush1.msra.mxu0 0.0
  %3476 = vmatprep.subr.mxu0 0.0
  %3477 = vmatpush1.msra.mxu0 0.0
  %3478 = vmatprep.subr.mxu0 0.0
  %3479 = vmatpush1.msra.mxu0 0.0
  %3480 = vmatprep.subr.mxu0 0.0
  %3481 = vmatpush1.msra.mxu0 0.0
  %3482 = vmatprep.subr.mxu0 0.0
  %3483 = vmatpush1.msra.mxu0 0.0
  %3484 = vmatprep.subr.mxu0 0.0
  %3485 = vmatpush1.msra.mxu0 0.0
  %3486 = vmatprep.subr.mxu0 0.0
  %3487 = vmatpush1.msra.mxu0 0.0
  %3488 = vmatprep.subr.mxu0 0.0
  %3489 = vmatpush1.msra.mxu0 0.0
  %3490 = vmatprep.subr.mxu0 0.0
  %3491 = vmatpush1.msra.mxu0 0.0
  %3492 = vmatprep.subr.mxu0 0.0
  %3493 = vmatpush1.msra.mxu0 0.0
  %3494 = vmatprep.subr.mxu0 0.0
  %3495 = vmatpush1.msra.mxu0 0.0
  %3496 = vmatprep.subr.mxu0 0.0
  %3497 = vmatpush1.msra.mxu0 0.0
  %3498 = vmatprep.subr.mxu0 0.0
  %3499 = vmatpush1.msra.mxu0 0.0
  %3500 = vmatprep.subr.mxu0 0.0
  %3501 = vmatpush1.msra.mxu0 0.0
  %3502 = vmatprep.mubr.f32.mxu0 0.0
  %3503 = vmatmul.mubr.f32.gmra.mrb[0].mxu0 %v3436
  %v3504 = vpop.f32.mrb[0].mxu0
  %v3505 = vadd.f32 %v3432, %v3504
  %v3506 = vpop.f32.mrb[0].mxu0
  %3507 = vdwg.mxu0
  %v3508 = vld [vmem:[%s3 + $0x1c8] sm:$0xff]
  %v3509 = vld [vmem:[%s3 + $0x1d0] sm:$0xff]
  %v3510 = vld [vmem:[%s3 + $0x1d8] sm:$0xff]
  %v3511 = vld [vmem:[%s3 + $0x1e0] sm:$0xff]
  %3512 = vmatprep.subr.mxu0 0.0
  %3513 = vmatpush1.msra.mxu0 %v3508
  %3514 = vmatprep.subr.mxu0 0.0
  %3515 = vmatpush1.msra.mxu0 %v3509
  %3516 = vmatprep.subr.mxu0 0.0
  %3517 = vmatpush1.msra.mxu0 %v3510
  %3518 = vmatprep.subr.mxu0 0.0
  %3519 = vmatpush1.msra.mxu0 %v3511
  %3520 = vmatprep.subr.mxu0 0.0
  %3521 = vmatpush1.msra.mxu0 0.0
  %3522 = vmatprep.subr.mxu0 0.0
  %3523 = vmatpush1.msra.mxu0 0.0
  %3524 = vmatprep.subr.mxu0 0.0
  %3525 = vmatpush1.msra.mxu0 0.0
  %3526 = vmatprep.subr.mxu0 0.0
  %3527 = vmatpush1.msra.mxu0 0.0
  %3528 = vmatprep.subr.mxu0 0.0
  %3529 = vmatpush1.msra.mxu0 0.0
  %3530 = vmatprep.subr.mxu0 0.0
  %3531 = vmatpush1.msra.mxu0 0.0
  %3532 = vmatprep.subr.mxu0 0.0
  %3533 = vmatpush1.msra.mxu0 0.0
  %3534 = vmatprep.subr.mxu0 0.0
  %3535 = vmatpush1.msra.mxu0 0.0
  %3536 = vmatprep.subr.mxu0 0.0
  %3537 = vmatpush1.msra.mxu0 0.0
  %3538 = vmatprep.subr.mxu0 0.0
  %3539 = vmatpush1.msra.mxu0 0.0
  %3540 = vmatprep.subr.mxu0 0.0
  %3541 = vmatpush1.msra.mxu0 0.0
  %3542 = vmatprep.subr.mxu0 0.0
  %3543 = vmatpush1.msra.mxu0 0.0
  %3544 = vmatprep.subr.mxu0 0.0
  %3545 = vmatpush1.msra.mxu0 0.0
  %3546 = vmatprep.subr.mxu0 0.0
  %3547 = vmatpush1.msra.mxu0 0.0
  %3548 = vmatprep.subr.mxu0 0.0
  %3549 = vmatpush1.msra.mxu0 0.0
  %3550 = vmatprep.subr.mxu0 0.0
  %3551 = vmatpush1.msra.mxu0 0.0
  %3552 = vmatprep.subr.mxu0 0.0
  %3553 = vmatpush1.msra.mxu0 0.0
  %3554 = vmatprep.subr.mxu0 0.0
  %3555 = vmatpush1.msra.mxu0 0.0
  %3556 = vmatprep.subr.mxu0 0.0
  %3557 = vmatpush1.msra.mxu0 0.0
  %3558 = vmatprep.subr.mxu0 0.0
  %3559 = vmatpush1.msra.mxu0 0.0
  %3560 = vmatprep.subr.mxu0 0.0
  %3561 = vmatpush1.msra.mxu0 0.0
  %3562 = vmatprep.subr.mxu0 0.0
  %3563 = vmatpush1.msra.mxu0 0.0
  %3564 = vmatprep.subr.mxu0 0.0
  %3565 = vmatpush1.msra.mxu0 0.0
  %3566 = vmatprep.subr.mxu0 0.0
  %3567 = vmatpush1.msra.mxu0 0.0
  %3568 = vmatprep.subr.mxu0 0.0
  %3569 = vmatpush1.msra.mxu0 0.0
  %3570 = vmatprep.subr.mxu0 0.0
  %3571 = vmatpush1.msra.mxu0 0.0
  %3572 = vmatprep.subr.mxu0 0.0
  %3573 = vmatpush1.msra.mxu0 0.0
  %3574 = vmatprep.subr.mxu0 0.0
  %3575 = vmatpush1.msra.mxu0 0.0
  %3576 = vmatprep.mubr.f32.mxu0 0.0
  %3577 = vmatmul.mubr.f32.gmra.mrb[0].mxu0 %v2901
  %v3578 = vpop.f32.mrb[0].mxu0
  %v3579 = vadd.f32 0.0, %v3578
  %v3580 = vpop.f32.mrb[0].mxu0
  %3581 = vdwg.mxu0
  %v3582 = vadd.f32 %v3505, %v3579
  %v3583 = vld [vmem:[%s3 + $0x1e8] sm:$0x1]
  %v3584 = vlaneseq
  %v3585 = vshrl.u32 %v3584, 7
  %v3586 = vsub.s32 0, %v3585
  %v3587 = vrot.slane %v3583, %v3586
  %v3588 = vadd.f32 %v3582, %v3587
  %v3589 = vxor.u32 %v3588, 2147483648
  %v3590 = vmul.f32 %v3589, 1.442695
  %v3591 = vpow.pop %v3590
  %v3592 = vadd.f32 %v3591, 1.0
  %v3593 = vrcp.pop %v3592
  %v3594 = vmul.f32 1.0, %v3593
  %v3595 = vtanh.pop %v3588
  %v3596 = vmul.f32 %v3594, %v2882
  %3598 = vrot.lane.b32.xlu0 %v3595, 64
  %v3599 = vpop.permute.xlu0 %3598
  %v3601 = vmul.f32 %v3594, %v3599
  %3603 = vrot.lane.b32.xlu0 %v3601, 32
  %v3604 = vpop.permute.xlu0 %3603
  %v3606 = vadd.f32 %v3596, %v3604
  %v3607 = vtanh.pop %v3606
  %3609 = vrot.lane.b32.xlu0 %v3607, 64
  %v3610 = vpop.permute.xlu0 %3609
  %v3612 = vmul.f32 %v3594, %v3610
  %v3613 = vld [vmem:[%s3 + $0x1f0] sm:$0xff]
  %v3614 = vld [vmem:[%s3 + $0x1f8] sm:$0xff]
  %v3615 = vld [vmem:[%s3 + $0x200] sm:$0xff]
  %v3616 = vld [vmem:[%s3 + $0x208] sm:$0xff]
  %v3617 = vld [vmem:[%s3 + $0x210] sm:$0x1]
  %v3618 = vlaneseq
  %v3619 = vshrl.u32 %v3618, 7
  %v3620 = vsub.s32 0, %v3619
  %v3621 = vrot.slane %v3617, %v3620
  %3623 = vrot.lane.b32.xlu0 %v3612, 32
  %v3624 = vpop.permute.xlu0 %3623
  %v3625 = vsel %vm589, %v3624, 0
  %3627 = vmatprep.subr.mxu0 0.0
  %3628 = vmatpush1.msra.mxu0 %v3613
  %3629 = vmatprep.subr.mxu0 0.0
  %3630 = vmatpush1.msra.mxu0 %v3614
  %3631 = vmatprep.subr.mxu0 0.0
  %3632 = vmatpush1.msra.mxu0 %v3615
  %3633 = vmatprep.subr.mxu0 0.0
  %3634 = vmatpush1.msra.mxu0 %v3616
  %3635 = vmatprep.subr.mxu0 0.0
  %3636 = vmatpush1.msra.mxu0 0.0
  %3637 = vmatprep.subr.mxu0 0.0
  %3638 = vmatpush1.msra.mxu0 0.0
  %3639 = vmatprep.subr.mxu0 0.0
  %3640 = vmatpush1.msra.mxu0 0.0
  %3641 = vmatprep.subr.mxu0 0.0
  %3642 = vmatpush1.msra.mxu0 0.0
  %3643 = vmatprep.subr.mxu0 0.0
  %3644 = vmatpush1.msra.mxu0 0.0
  %3645 = vmatprep.subr.mxu0 0.0
  %3646 = vmatpush1.msra.mxu0 0.0
  %3647 = vmatprep.subr.mxu0 0.0
  %3648 = vmatpush1.msra.mxu0 0.0
  %3649 = vmatprep.subr.mxu0 0.0
  %3650 = vmatpush1.msra.mxu0 0.0
  %3651 = vmatprep.subr.mxu0 0.0
  %3652 = vmatpush1.msra.mxu0 0.0
  %3653 = vmatprep.subr.mxu0 0.0
  %3654 = vmatpush1.msra.mxu0 0.0
  %3655 = vmatprep.subr.mxu0 0.0
  %3656 = vmatpush1.msra.mxu0 0.0
  %3657 = vmatprep.subr.mxu0 0.0
  %3658 = vmatpush1.msra.mxu0 0.0
  %3659 = vmatprep.subr.mxu0 0.0
  %3660 = vmatpush1.msra.mxu0 0.0
  %3661 = vmatprep.subr.mxu0 0.0
  %3662 = vmatpush1.msra.mxu0 0.0
  %3663 = vmatprep.subr.mxu0 0.0
  %3664 = vmatpush1.msra.mxu0 0.0
  %3665 = vmatprep.subr.mxu0 0.0
  %3666 = vmatpush1.msra.mxu0 0.0
  %3667 = vmatprep.subr.mxu0 0.0
  %3668 = vmatpush1.msra.mxu0 0.0
  %3669 = vmatprep.subr.mxu0 0.0
  %3670 = vmatpush1.msra.mxu0 0.0
  %3671 = vmatprep.subr.mxu0 0.0
  %3672 = vmatpush1.msra.mxu0 0.0
  %3673 = vmatprep.subr.mxu0 0.0
  %3674 = vmatpush1.msra.mxu0 0.0
  %3675 = vmatprep.subr.mxu0 0.0
  %3676 = vmatpush1.msra.mxu0 0.0
  %3677 = vmatprep.subr.mxu0 0.0
  %3678 = vmatpush1.msra.mxu0 0.0
  %3679 = vmatprep.subr.mxu0 0.0
  %3680 = vmatpush1.msra.mxu0 0.0
  %3681 = vmatprep.subr.mxu0 0.0
  %3682 = vmatpush1.msra.mxu0 0.0
  %3683 = vmatprep.subr.mxu0 0.0
  %3684 = vmatpush1.msra.mxu0 0.0
  %3685 = vmatprep.subr.mxu0 0.0
  %3686 = vmatpush1.msra.mxu0 0.0
  %3687 = vmatprep.subr.mxu0 0.0
  %3688 = vmatpush1.msra.mxu0 0.0
  %3689 = vmatprep.subr.mxu0 0.0
  %3690 = vmatpush1.msra.mxu0 0.0
  %3691 = vmatprep.mubr.f32.mxu0 0.0
  %3692 = vmatmul.mubr.f32.gmra.mrb[0].mxu0 %v3625
  %v3693 = vpop.f32.mrb[0].mxu0
  %v3694 = vadd.f32 %v3621, %v3693
  %v3695 = vpop.f32.mrb[0].mxu0
  %3696 = vdwg.mxu0
  %v3699 = vunpack.c.l.s4 1983009808
  %v3700 = vunpack.c.0.s8 %v3699
  %v3701 = vlaneseq
  %v3702 = vshrl.u32 %v3701, 7
  %v3703 = vsub.s32 %v3700, %v3702
  %v3704 = vrot.slane %v3694, %v3703
  %3705 = vrot.lane.b32.xlu0 %v3704, 96
  %v3706 = vpop.permute.xlu0 %3705
  %vm3708 = vcmask 1042176
  %3709 = vst.msk [vmem:[%s5] sm:$0x3] %vm3708, %v3706
  %3710 = vrot.lane.b32.xlu0 %v3203, 48
  %v3711 = vpop.permute.xlu0 %3710
  %vm3713 = vcmask 517504
  %3714 = vst.msk [vmem:[%s6] sm:$0x3] %vm3713, %v3711
  %v3715 = vld [vmem:[%s4 + $0x610] sm:$0xff]
  %v3716 = vld [vmem:[%s4 + $0x618] sm:$0xff]
  %v3717 = vld [vmem:[%s4 + $0x620] sm:$0xff]
  %v3718 = vld [vmem:[%s4 + $0x628] sm:$0xff]
  %v3719 = vld [vmem:[%s4 + $0x630] sm:$0xff]
  %v3720 = vld [vmem:[%s4 + $0x638] sm:$0xff]
  %v3721 = vld [vmem:[%s4 + $0x640] sm:$0xff]
  %v3722 = vld [vmem:[%s4 + $0x648] sm:$0xff]
  %v3723 = vld [vmem:[%s832] ss:$8 sm:$0x3]
  %v3725 = vlaneseq
  %v3726 = vshrl.u32 %v3725, 7
  %v3727 = vsub.s32 0, %v3726
  %v3728 = vrot.slane %v3723, %v3727
  %v3729 = vlaneseq
  %v3730 = vshrl.u32 %v3729, 7
  %v3731 = vsub.s32 1, %v3730
  %v3732 = vrot.slane %v3723, %v3731
  %3735 = vmatprep.subr.mxu0 %v3716
  %3736 = vmatpush1.msra.mxu0 %v3715
  %3737 = vmatprep.subr.mxu0 %v3718
  %3738 = vmatpush1.msra.mxu0 %v3717
  %3739 = vmatprep.subr.mxu0 %v3720
  %3740 = vmatpush1.msra.mxu0 %v3719
  %3741 = vmatprep.subr.mxu0 %v3722
  %3742 = vmatpush1.msra.mxu0 %v3721
  %3743 = vmatprep.subr.mxu0 0.0
  %3744 = vmatpush1.msra.mxu0 0.0
  %3745 = vmatprep.subr.mxu0 0.0
  %3746 = vmatpush1.msra.mxu0 0.0
  %3747 = vmatprep.subr.mxu0 0.0
  %3748 = vmatpush1.msra.mxu0 0.0
  %3749 = vmatprep.subr.mxu0 0.0
  %3750 = vmatpush1.msra.mxu0 0.0
  %3751 = vmatprep.subr.mxu0 0.0
  %3752 = vmatpush1.msra.mxu0 0.0
  %3753 = vmatprep.subr.mxu0 0.0
  %3754 = vmatpush1.msra.mxu0 0.0
  %3755 = vmatprep.subr.mxu0 0.0
  %3756 = vmatpush1.msra.mxu0 0.0
  %3757 = vmatprep.subr.mxu0 0.0
  %3758 = vmatpush1.msra.mxu0 0.0
  %3759 = vmatprep.subr.mxu0 0.0
  %3760 = vmatpush1.msra.mxu0 0.0
  %3761 = vmatprep.subr.mxu0 0.0
  %3762 = vmatpush1.msra.mxu0 0.0
  %3763 = vmatprep.subr.mxu0 0.0
  %3764 = vmatpush1.msra.mxu0 0.0
  %3765 = vmatprep.subr.mxu0 0.0
  %3766 = vmatpush1.msra.mxu0 0.0
  %3767 = vmatprep.subr.mxu0 0.0
  %3768 = vmatpush1.msra.mxu0 0.0
  %3769 = vmatprep.subr.mxu0 0.0
  %3770 = vmatpush1.msra.mxu0 0.0
  %3771 = vmatprep.subr.mxu0 0.0
  %3772 = vmatpush1.msra.mxu0 0.0
  %3773 = vmatprep.subr.mxu0 0.0
  %3774 = vmatpush1.msra.mxu0 0.0
  %3775 = vmatprep.subr.mxu0 0.0
  %3776 = vmatpush1.msra.mxu0 0.0
  %3777 = vmatprep.subr.mxu0 0.0
  %3778 = vmatpush1.msra.mxu0 0.0
  %3779 = vmatprep.subr.mxu0 0.0
  %3780 = vmatpush1.msra.mxu0 0.0
  %3781 = vmatprep.subr.mxu0 0.0
  %3782 = vmatpush1.msra.mxu0 0.0
  %3783 = vmatprep.subr.mxu0 0.0
  %3784 = vmatpush1.msra.mxu0 0.0
  %3785 = vmatprep.subr.mxu0 0.0
  %3786 = vmatpush1.msra.mxu0 0.0
  %3787 = vmatprep.subr.mxu0 0.0
  %3788 = vmatpush1.msra.mxu0 0.0
  %3789 = vmatprep.subr.mxu0 0.0
  %3790 = vmatpush1.msra.mxu0 0.0
  %3791 = vmatprep.subr.mxu0 0.0
  %3792 = vmatpush1.msra.mxu0 0.0
  %3793 = vmatprep.subr.mxu0 0.0
  %3794 = vmatpush1.msra.mxu0 0.0
  %3795 = vmatprep.subr.mxu0 0.0
  %3796 = vmatpush1.msra.mxu0 0.0
  %3797 = vmatprep.subr.mxu0 0.0
  %3798 = vmatpush1.msra.mxu0 0.0
  %3799 = vmatprep.mubr.f32.mxu0 0.0
  %3800 = vmatmul.mubr.f32.gmra.mrb[0].mxu0 %v3625
  %v3801 = vpop.f32.mrb[0].mxu0
  %v3802 = vadd.f32 %v3728, %v3801
  %v3803 = vpop.f32.mrb[0].mxu0
  %v3804 = vadd.f32 %v3732, %v3803
  %3805 = vdwg.mxu0
  %v3806 = vadd.f32 %v584, %v3802
  %v3807 = vadd.f32 %v586, %v3804
  %v3808 = vtanh.pop %v3806
  %v3809 = vtanh.pop %v3807
  %v3810 = vld [vmem:[%s3 + $0x38] sm:$0xff]
  %v3811 = vld [vmem:[%s3 + $0x40] sm:$0xff]
  %v3812 = vld [vmem:[%s3 + $0x48] sm:$0xff]
  %v3813 = vld [vmem:[%s3 + $0x50] sm:$0xff]
  %v3814 = vld [vmem:[%s3 + $0x58] sm:$0xff]
  %v3815 = vld [vmem:[%s3 + $0x60] sm:$0xff]
  %v3816 = vld [vmem:[%s3 + $0x68] sm:$0xff]
  %v3817 = vld [vmem:[%s3 + $0x70] sm:$0xff]
  %v3818 = vld [vmem:[%s3 + $0x78] sm:$0xff]
  %v3819 = vld [vmem:[%s3 + $0x80] sm:$0xff]
  %v3820 = vld [vmem:[%s3 + $0x88] sm:$0xff]
  %v3821 = vld [vmem:[%s3 + $0x90] sm:$0xff]
  %v3822 = vld [vmem:[%s3 + $0x98] sm:$0xff]
  %v3823 = vld [vmem:[%s3 + $0xa0] sm:$0xff]
  %v3824 = vld [vmem:[%s3 + $0xa8] sm:$0xff]
  %v3825 = vld [vmem:[%s3 + $0xb0] sm:$0xff]
  %v3826 = vld [vmem:[%s3 + $0xb8] sm:$0xff]
  %v3827 = vld [vmem:[%s3 + $0xc0] sm:$0xff]
  %v3828 = vld [vmem:[%s3 + $0xc8] sm:$0xff]
  %v3829 = vld [vmem:[%s3 + $0xd0] sm:$0xff]
  %v3830 = vld [vmem:[%s3 + $0xd8] sm:$0xff]
  %v3831 = vld [vmem:[%s3 + $0xe0] sm:$0xff]
  %v3832 = vld [vmem:[%s3 + $0xe8] sm:$0xff]
  %v3833 = vld [vmem:[%s3 + $0xf0] sm:$0xff]
  %v3834 = vld [vmem:[%s3 + $0xf8] sm:$0xff]
  %v3835 = vld [vmem:[%s3 + $0x100] sm:$0xff]
  %v3836 = vld [vmem:[%s3 + $0x108] sm:$0xff]
  %v3837 = vld [vmem:[%s3 + $0x110] sm:$0xff]
  %v3838 = vld [vmem:[%s3 + $0x118] sm:$0xff]
  %v3839 = vld [vmem:[%s3 + $0x120] sm:$0xff]
  %v3840 = vld [vmem:[%s3 + $0x128] sm:$0xff]
  %v3841 = vld [vmem:[%s3 + $0x130] sm:$0xff]
  %v3842 = vld [vmem:[%s3 + $0x138] sm:$0x1]
  %s3844 = vtos %v3842
  %v3845 = vstv %s3844
  %3847 = vmatprep.subr.mxu0 0.0
  %3848 = vmatpush1.msra.mxu0 %v3810
  %3849 = vmatprep.subr.mxu0 0.0
  %3850 = vmatpush1.msra.mxu0 %v3811
  %3851 = vmatprep.subr.mxu0 0.0
  %3852 = vmatpush1.msra.mxu0 %v3812
  %3853 = vmatprep.subr.mxu0 0.0
  %3854 = vmatpush1.msra.mxu0 %v3813
  %3855 = vmatprep.subr.mxu0 0.0
  %3856 = vmatpush1.msra.mxu0 %v3814
  %3857 = vmatprep.subr.mxu0 0.0
  %3858 = vmatpush1.msra.mxu0 %v3815
  %3859 = vmatprep.subr.mxu0 0.0
  %3860 = vmatpush1.msra.mxu0 %v3816
  %3861 = vmatprep.subr.mxu0 0.0
  %3862 = vmatpush1.msra.mxu0 %v3817
  %3863 = vmatprep.subr.mxu0 0.0
  %3864 = vmatpush1.msra.mxu0 %v3818
  %3865 = vmatprep.subr.mxu0 0.0
  %3866 = vmatpush1.msra.mxu0 %v3819
  %3867 = vmatprep.subr.mxu0 0.0
  %3868 = vmatpush1.msra.mxu0 %v3820
  %3869 = vmatprep.subr.mxu0 0.0
  %3870 = vmatpush1.msra.mxu0 %v3821
  %3871 = vmatprep.subr.mxu0 0.0
  %3872 = vmatpush1.msra.mxu0 %v3822
  %3873 = vmatprep.subr.mxu0 0.0
  %3874 = vmatpush1.msra.mxu0 %v3823
  %3875 = vmatprep.subr.mxu0 0.0
  %3876 = vmatpush1.msra.mxu0 %v3824
  %3877 = vmatprep.subr.mxu0 0.0
  %3878 = vmatpush1.msra.mxu0 %v3825
  %3879 = vmatprep.subr.mxu0 0.0
  %3880 = vmatpush1.msra.mxu0 %v3826
  %3881 = vmatprep.subr.mxu0 0.0
  %3882 = vmatpush1.msra.mxu0 %v3827
  %3883 = vmatprep.subr.mxu0 0.0
  %3884 = vmatpush1.msra.mxu0 %v3828
  %3885 = vmatprep.subr.mxu0 0.0
  %3886 = vmatpush1.msra.mxu0 %v3829
  %3887 = vmatprep.subr.mxu0 0.0
  %3888 = vmatpush1.msra.mxu0 %v3830
  %3889 = vmatprep.subr.mxu0 0.0
  %3890 = vmatpush1.msra.mxu0 %v3831
  %3891 = vmatprep.subr.mxu0 0.0
  %3892 = vmatpush1.msra.mxu0 %v3832
  %3893 = vmatprep.subr.mxu0 0.0
  %3894 = vmatpush1.msra.mxu0 %v3833
  %3895 = vmatprep.subr.mxu0 0.0
  %3896 = vmatpush1.msra.mxu0 %v3834
  %3897 = vmatprep.subr.mxu0 0.0
  %3898 = vmatpush1.msra.mxu0 %v3835
  %3899 = vmatprep.subr.mxu0 0.0
  %3900 = vmatpush1.msra.mxu0 %v3836
  %3901 = vmatprep.subr.mxu0 0.0
  %3902 = vmatpush1.msra.mxu0 %v3837
  %3903 = vmatprep.subr.mxu0 0.0
  %3904 = vmatpush1.msra.mxu0 %v3838
  %3905 = vmatprep.subr.mxu0 0.0
  %3906 = vmatpush1.msra.mxu0 %v3839
  %3907 = vmatprep.subr.mxu0 0.0
  %3908 = vmatpush1.msra.mxu0 %v3840
  %3909 = vmatprep.subr.mxu0 0.0
  %3910 = vmatpush1.msra.mxu0 %v3841
  %3911 = vmatprep.mubr.f32.mxu0 %v3809
  %3912 = vmatmul.mubr.f32.gmra.mrb[0].mxu0 %v3808
  %v3913 = vpop.f32.mrb[0].mxu0
  %v3914 = vadd.f32 %v3845, %v3913
  %v3915 = vpop.f32.mrb[0].mxu0
  %3916 = vdwg.mxu0
  %v3917 = vsel %vm1030, %v3914, -inf
  %3918 = vmax.xlane.f32.xlu0 %v3917
  %v3919 = vpop.xlane.xlu0 %3918
  %v3920 = vsub.f32 %v3914, %v3919
  %v3921 = vmul.f32 %v3920, 1.442695
  %v3922 = vpow.pop %v3921
  %v3923 = vsel %vm1030, %v3922, 0.0
  %3924 = vadd.xlane.f32.xlu0 %v3923
  %v3925 = vpop.xlane.xlu0 %3924
  %v3926 = vrcp.pop %v3925
  %v3927 = vmul.f32 %v3922, %v3926
  %v3929 = vsel %vm1042, %v3927, 0
  %3931 = vmatprep.subr.mxu0 0.0
  %3932 = vmatpush1.msra.mxu0 %v117
  %3933 = vmatprep.subr.mxu0 0.0
  %3934 = vmatpush1.msra.mxu0 %v122
  %3935 = vmatprep.subr.mxu0 0.0
  %3936 = vmatpush1.msra.mxu0 0.0
  %3937 = vmatprep.subr.mxu0 0.0
  %3938 = vmatpush1.msra.mxu0 0.0
  %3939 = vmatprep.subr.mxu0 0.0
  %3940 = vmatpush1.msra.mxu0 0.0
  %3941 = vmatprep.subr.mxu0 0.0
  %3942 = vmatpush1.msra.mxu0 0.0
  %3943 = vmatprep.subr.mxu0 0.0
  %3944 = vmatpush1.msra.mxu0 0.0
  %3945 = vmatprep.subr.mxu0 0.0
  %3946 = vmatpush1.msra.mxu0 0.0
  %3947 = vmatprep.subr.mxu0 0.0
  %3948 = vmatpush1.msra.mxu0 0.0
  %3949 = vmatprep.subr.mxu0 0.0
  %3950 = vmatpush1.msra.mxu0 0.0
  %3951 = vmatprep.subr.mxu0 0.0
  %3952 = vmatpush1.msra.mxu0 0.0
  %3953 = vmatprep.subr.mxu0 0.0
  %3954 = vmatpush1.msra.mxu0 0.0
  %3955 = vmatprep.subr.mxu0 0.0
  %3956 = vmatpush1.msra.mxu0 0.0
  %3957 = vmatprep.subr.mxu0 0.0
  %3958 = vmatpush1.msra.mxu0 0.0
  %3959 = vmatprep.subr.mxu0 0.0
  %3960 = vmatpush1.msra.mxu0 0.0
  %3961 = vmatprep.subr.mxu0 0.0
  %3962 = vmatpush1.msra.mxu0 0.0
  %3963 = vmatprep.subr.mxu0 0.0
  %3964 = vmatpush1.msra.mxu0 0.0
  %3965 = vmatprep.subr.mxu0 0.0
  %3966 = vmatpush1.msra.mxu0 0.0
  %3967 = vmatprep.subr.mxu0 0.0
  %3968 = vmatpush1.msra.mxu0 0.0
  %3969 = vmatprep.subr.mxu0 0.0
  %3970 = vmatpush1.msra.mxu0 0.0
  %3971 = vmatprep.subr.mxu0 0.0
  %3972 = vmatpush1.msra.mxu0 0.0
  %3973 = vmatprep.subr.mxu0 0.0
  %3974 = vmatpush1.msra.mxu0 0.0
  %3975 = vmatprep.subr.mxu0 0.0
  %3976 = vmatpush1.msra.mxu0 0.0
  %3977 = vmatprep.subr.mxu0 0.0
  %3978 = vmatpush1.msra.mxu0 0.0
  %3979 = vmatprep.subr.mxu0 0.0
  %3980 = vmatpush1.msra.mxu0 0.0
  %3981 = vmatprep.subr.mxu0 0.0
  %3982 = vmatpush1.msra.mxu0 0.0
  %3983 = vmatprep.subr.mxu0 0.0
  %3984 = vmatpush1.msra.mxu0 0.0
  %3985 = vmatprep.subr.mxu0 0.0
  %3986 = vmatpush1.msra.mxu0 0.0
  %3987 = vmatprep.subr.mxu0 0.0
  %3988 = vmatpush1.msra.mxu0 0.0
  %3989 = vmatprep.subr.mxu0 0.0
  %3990 = vmatpush1.msra.mxu0 0.0
  %3991 = vmatprep.subr.mxu0 0.0
  %3992 = vmatpush1.msra.mxu0 0.0
  %3993 = vmatprep.subr.mxu0 0.0
  %3994 = vmatpush1.msra.mxu0 0.0
  %3995 = vmatprep.mubr.f32.mxu0 0.0
  %3996 = vmatmul.mubr.f32.gmra.mrb[0].mxu0 %v3929
  %v3997 = vpop.f32.mrb[0].mxu0
  %v3998 = vadd.f32 0.0, %v3997
  %v3999 = vpop.f32.mrb[0].mxu0
  %4000 = vdwg.mxu0
  %v4001 = vrot.slane %v3927, 1
  %v4002 = vsel %vm1042, %v4001, 0
  %4004 = vmatprep.subr.mxu0 0.0
  %4005 = vmatpush1.msra.mxu0 %v127
  %4006 = vmatprep.subr.mxu0 0.0
  %4007 = vmatpush1.msra.mxu0 %v132
  %4008 = vmatprep.subr.mxu0 0.0
  %4009 = vmatpush1.msra.mxu0 0.0
  %4010 = vmatprep.subr.mxu0 0.0
  %4011 = vmatpush1.msra.mxu0 0.0
  %4012 = vmatprep.subr.mxu0 0.0
  %4013 = vmatpush1.msra.mxu0 0.0
  %4014 = vmatprep.subr.mxu0 0.0
  %4015 = vmatpush1.msra.mxu0 0.0
  %4016 = vmatprep.subr.mxu0 0.0
  %4017 = vmatpush1.msra.mxu0 0.0
  %4018 = vmatprep.subr.mxu0 0.0
  %4019 = vmatpush1.msra.mxu0 0.0
  %4020 = vmatprep.subr.mxu0 0.0
  %4021 = vmatpush1.msra.mxu0 0.0
  %4022 = vmatprep.subr.mxu0 0.0
  %4023 = vmatpush1.msra.mxu0 0.0
  %4024 = vmatprep.subr.mxu0 0.0
  %4025 = vmatpush1.msra.mxu0 0.0
  %4026 = vmatprep.subr.mxu0 0.0
  %4027 = vmatpush1.msra.mxu0 0.0
  %4028 = vmatprep.subr.mxu0 0.0
  %4029 = vmatpush1.msra.mxu0 0.0
  %4030 = vmatprep.subr.mxu0 0.0
  %4031 = vmatpush1.msra.mxu0 0.0
  %4032 = vmatprep.subr.mxu0 0.0
  %4033 = vmatpush1.msra.mxu0 0.0
  %4034 = vmatprep.subr.mxu0 0.0
  %4035 = vmatpush1.msra.mxu0 0.0
  %4036 = vmatprep.subr.mxu0 0.0
  %4037 = vmatpush1.msra.mxu0 0.0
  %4038 = vmatprep.subr.mxu0 0.0
  %4039 = vmatpush1.msra.mxu0 0.0
  %4040 = vmatprep.subr.mxu0 0.0
  %4041 = vmatpush1.msra.mxu0 0.0
  %4042 = vmatprep.subr.mxu0 0.0
  %4043 = vmatpush1.msra.mxu0 0.0
  %4044 = vmatprep.subr.mxu0 0.0
  %4045 = vmatpush1.msra.mxu0 0.0
  %4046 = vmatprep.subr.mxu0 0.0
  %4047 = vmatpush1.msra.mxu0 0.0
  %4048 = vmatprep.subr.mxu0 0.0
  %4049 = vmatpush1.msra.mxu0 0.0
  %4050 = vmatprep.subr.mxu0 0.0
  %4051 = vmatpush1.msra.mxu0 0.0
  %4052 = vmatprep.subr.mxu0 0.0
  %4053 = vmatpush1.msra.mxu0 0.0
  %4054 = vmatprep.subr.mxu0 0.0
  %4055 = vmatpush1.msra.mxu0 0.0
  %4056 = vmatprep.subr.mxu0 0.0
  %4057 = vmatpush1.msra.mxu0 0.0
  %4058 = vmatprep.subr.mxu0 0.0
  %4059 = vmatpush1.msra.mxu0 0.0
  %4060 = vmatprep.subr.mxu0 0.0
  %4061 = vmatpush1.msra.mxu0 0.0
  %4062 = vmatprep.subr.mxu0 0.0
  %4063 = vmatpush1.msra.mxu0 0.0
  %4064 = vmatprep.subr.mxu0 0.0
  %4065 = vmatpush1.msra.mxu0 0.0
  %4066 = vmatprep.subr.mxu0 0.0
  %4067 = vmatpush1.msra.mxu0 0.0
  %4068 = vmatprep.mubr.f32.mxu0 0.0
  %4069 = vmatmul.mubr.f32.gmra.mrb[0].mxu0 %v4002
  %v4070 = vpop.f32.mrb[0].mxu0
  %v4071 = vadd.f32 0.0, %v4070
  %v4072 = vpop.f32.mrb[0].mxu0
  %4073 = vdwg.mxu0
  %v4075 = vrot.slane %v4071, 7
  %v4077 = vsel %vm1192, %v3998, %v4075
  %s4078 = scalar_lea.vmem %s2, 8
  %v4079 = vld [vmem:[%s4078] sm:$0x3]
  %v4080 = vld [vmem:[%s3 + $0x198] sm:$0xff]
  %v4081 = vld [vmem:[%s3 + $0x1a0] sm:$0xff]
  %v4082 = vld [vmem:[%s3 + $0x1a8] sm:$0xff]
  %v4083 = vld [vmem:[%s3 + $0x1b0] sm:$0xff]
  %v4084 = vld [vmem:[%s3 + $0x1b8] sm:$0xff]
  %v4085 = vld [vmem:[%s3 + $0x1c0] sm:$0xff]
  %v4087 = vsel %vm589, %v4077, 0
  %4089 = vmatprep.subr.mxu0 0.0
  %4090 = vmatpush1.msra.mxu0 %v4082
  %4091 = vmatprep.subr.mxu0 0.0
  %4092 = vmatpush1.msra.mxu0 %v4083
  %4093 = vmatprep.subr.mxu0 0.0
  %4094 = vmatpush1.msra.mxu0 %v4084
  %4095 = vmatprep.subr.mxu0 0.0
  %4096 = vmatpush1.msra.mxu0 %v4085
  %4097 = vmatprep.subr.mxu0 0.0
  %4098 = vmatpush1.msra.mxu0 0.0
  %4099 = vmatprep.subr.mxu0 0.0
  %4100 = vmatpush1.msra.mxu0 0.0
  %4101 = vmatprep.subr.mxu0 0.0
  %4102 = vmatpush1.msra.mxu0 0.0
  %4103 = vmatprep.subr.mxu0 0.0
  %4104 = vmatpush1.msra.mxu0 0.0
  %4105 = vmatprep.subr.mxu0 0.0
  %4106 = vmatpush1.msra.mxu0 0.0
  %4107 = vmatprep.subr.mxu0 0.0
  %4108 = vmatpush1.msra.mxu0 0.0
  %4109 = vmatprep.subr.mxu0 0.0
  %4110 = vmatpush1.msra.mxu0 0.0
  %4111 = vmatprep.subr.mxu0 0.0
  %4112 = vmatpush1.msra.mxu0 0.0
  %4113 = vmatprep.subr.mxu0 0.0
  %4114 = vmatpush1.msra.mxu0 0.0
  %4115 = vmatprep.subr.mxu0 0.0
  %4116 = vmatpush1.msra.mxu0 0.0
  %4117 = vmatprep.subr.mxu0 0.0
  %4118 = vmatpush1.msra.mxu0 0.0
  %4119 = vmatprep.subr.mxu0 0.0
  %4120 = vmatpush1.msra.mxu0 0.0
  %4121 = vmatprep.subr.mxu0 0.0
  %4122 = vmatpush1.msra.mxu0 0.0
  %4123 = vmatprep.subr.mxu0 0.0
  %4124 = vmatpush1.msra.mxu0 0.0
  %4125 = vmatprep.subr.mxu0 0.0
  %4126 = vmatpush1.msra.mxu0 0.0
  %4127 = vmatprep.subr.mxu0 0.0
  %4128 = vmatpush1.msra.mxu0 0.0
  %4129 = vmatprep.subr.mxu0 0.0
  %4130 = vmatpush1.msra.mxu0 0.0
  %4131 = vmatprep.subr.mxu0 0.0
  %4132 = vmatpush1.msra.mxu0 0.0
  %4133 = vmatprep.subr.mxu0 0.0
  %4134 = vmatpush1.msra.mxu0 0.0
  %4135 = vmatprep.subr.mxu0 0.0
  %4136 = vmatpush1.msra.mxu0 0.0
  %4137 = vmatprep.subr.mxu0 0.0
  %4138 = vmatpush1.msra.mxu0 0.0
  %4139 = vmatprep.subr.mxu0 0.0
  %4140 = vmatpush1.msra.mxu0 0.0
  %4141 = vmatprep.subr.mxu0 0.0
  %4142 = vmatpush1.msra.mxu0 0.0
  %4143 = vmatprep.subr.mxu0 0.0
  %4144 = vmatpush1.msra.mxu0 0.0
  %4145 = vmatprep.subr.mxu0 0.0
  %4146 = vmatpush1.msra.mxu0 0.0
  %4147 = vmatprep.subr.mxu0 0.0
  %4148 = vmatpush1.msra.mxu0 0.0
  %4149 = vmatprep.subr.mxu0 0.0
  %4150 = vmatpush1.msra.mxu0 0.0
  %4151 = vmatprep.subr.mxu0 0.0
  %4152 = vmatpush1.msra.mxu0 0.0
  %4153 = vmatprep.mubr.f32.mxu0 0.0
  %4154 = vmatmul.mubr.f32.gmra.mrb[0].mxu0 %v4087
  %v4155 = vpop.f32.mrb[0].mxu0
  %v4156 = vadd.f32 0.0, %v4155
  %v4157 = vpop.f32.mrb[0].mxu0
  %4158 = vdwg.mxu0
  %v4160 = vsel %vm1042, %v4079, 0
  %4162 = vmatprep.subr.mxu0 0.0
  %4163 = vmatpush1.msra.mxu0 %v4080
  %4164 = vmatprep.subr.mxu0 0.0
  %4165 = vmatpush1.msra.mxu0 %v4081
  %4166 = vmatprep.subr.mxu0 0.0
  %4167 = vmatpush1.msra.mxu0 0.0
  %4168 = vmatprep.subr.mxu0 0.0
  %4169 = vmatpush1.msra.mxu0 0.0
  %4170 = vmatprep.subr.mxu0 0.0
  %4171 = vmatpush1.msra.mxu0 0.0
  %4172 = vmatprep.subr.mxu0 0.0
  %4173 = vmatpush1.msra.mxu0 0.0
  %4174 = vmatprep.subr.mxu0 0.0
  %4175 = vmatpush1.msra.mxu0 0.0
  %4176 = vmatprep.subr.mxu0 0.0
  %4177 = vmatpush1.msra.mxu0 0.0
  %4178 = vmatprep.subr.mxu0 0.0
  %4179 = vmatpush1.msra.mxu0 0.0
  %4180 = vmatprep.subr.mxu0 0.0
  %4181 = vmatpush1.msra.mxu0 0.0
  %4182 = vmatprep.subr.mxu0 0.0
  %4183 = vmatpush1.msra.mxu0 0.0
  %4184 = vmatprep.subr.mxu0 0.0
  %4185 = vmatpush1.msra.mxu0 0.0
  %4186 = vmatprep.subr.mxu0 0.0
  %4187 = vmatpush1.msra.mxu0 0.0
  %4188 = vmatprep.subr.mxu0 0.0
  %4189 = vmatpush1.msra.mxu0 0.0
  %4190 = vmatprep.subr.mxu0 0.0
  %4191 = vmatpush1.msra.mxu0 0.0
  %4192 = vmatprep.subr.mxu0 0.0
  %4193 = vmatpush1.msra.mxu0 0.0
  %4194 = vmatprep.subr.mxu0 0.0
  %4195 = vmatpush1.msra.mxu0 0.0
  %4196 = vmatprep.subr.mxu0 0.0
  %4197 = vmatpush1.msra.mxu0 0.0
  %4198 = vmatprep.subr.mxu0 0.0
  %4199 = vmatpush1.msra.mxu0 0.0
  %4200 = vmatprep.subr.mxu0 0.0
  %4201 = vmatpush1.msra.mxu0 0.0
  %4202 = vmatprep.subr.mxu0 0.0
  %4203 = vmatpush1.msra.mxu0 0.0
  %4204 = vmatprep.subr.mxu0 0.0
  %4205 = vmatpush1.msra.mxu0 0.0
  %4206 = vmatprep.subr.mxu0 0.0
  %4207 = vmatpush1.msra.mxu0 0.0
  %4208 = vmatprep.subr.mxu0 0.0
  %4209 = vmatpush1.msra.mxu0 0.0
  %4210 = vmatprep.subr.mxu0 0.0
  %4211 = vmatpush1.msra.mxu0 0.0
  %4212 = vmatprep.subr.mxu0 0.0
  %4213 = vmatpush1.msra.mxu0 0.0
  %4214 = vmatprep.subr.mxu0 0.0
  %4215 = vmatpush1.msra.mxu0 0.0
  %4216 = vmatprep.subr.mxu0 0.0
  %4217 = vmatpush1.msra.mxu0 0.0
  %4218 = vmatprep.subr.mxu0 0.0
  %4219 = vmatpush1.msra.mxu0 0.0
  %4220 = vmatprep.subr.mxu0 0.0
  %4221 = vmatpush1.msra.mxu0 0.0
  %4222 = vmatprep.subr.mxu0 0.0
  %4223 = vmatpush1.msra.mxu0 0.0
  %4224 = vmatprep.subr.mxu0 0.0
  %4225 = vmatpush1.msra.mxu0 0.0
  %4226 = vmatprep.mubr.f32.mxu0 0.0
  %4227 = vmatmul.mubr.f32.gmra.mrb[0].mxu0 %v4160
  %v4228 = vpop.f32.mrb[0].mxu0
  %v4229 = vadd.f32 %v4156, %v4228
  %v4230 = vpop.f32.mrb[0].mxu0
  %4231 = vdwg.mxu0
  %v4232 = vld [vmem:[%s3 + $0x1c8] sm:$0xff]
  %v4233 = vld [vmem:[%s3 + $0x1d0] sm:$0xff]
  %v4234 = vld [vmem:[%s3 + $0x1d8] sm:$0xff]
  %v4235 = vld [vmem:[%s3 + $0x1e0] sm:$0xff]
  %4236 = vmatprep.subr.mxu0 0.0
  %4237 = vmatpush1.msra.mxu0 %v4232
  %4238 = vmatprep.subr.mxu0 0.0
  %4239 = vmatpush1.msra.mxu0 %v4233
  %4240 = vmatprep.subr.mxu0 0.0
  %4241 = vmatpush1.msra.mxu0 %v4234
  %4242 = vmatprep.subr.mxu0 0.0
  %4243 = vmatpush1.msra.mxu0 %v4235
  %4244 = vmatprep.subr.mxu0 0.0
  %4245 = vmatpush1.msra.mxu0 0.0
  %4246 = vmatprep.subr.mxu0 0.0
  %4247 = vmatpush1.msra.mxu0 0.0
  %4248 = vmatprep.subr.mxu0 0.0
  %4249 = vmatpush1.msra.mxu0 0.0
  %4250 = vmatprep.subr.mxu0 0.0
  %4251 = vmatpush1.msra.mxu0 0.0
  %4252 = vmatprep.subr.mxu0 0.0
  %4253 = vmatpush1.msra.mxu0 0.0
  %4254 = vmatprep.subr.mxu0 0.0
  %4255 = vmatpush1.msra.mxu0 0.0
  %4256 = vmatprep.subr.mxu0 0.0
  %4257 = vmatpush1.msra.mxu0 0.0
  %4258 = vmatprep.subr.mxu0 0.0
  %4259 = vmatpush1.msra.mxu0 0.0
  %4260 = vmatprep.subr.mxu0 0.0
  %4261 = vmatpush1.msra.mxu0 0.0
  %4262 = vmatprep.subr.mxu0 0.0
  %4263 = vmatpush1.msra.mxu0 0.0
  %4264 = vmatprep.subr.mxu0 0.0
  %4265 = vmatpush1.msra.mxu0 0.0
  %4266 = vmatprep.subr.mxu0 0.0
  %4267 = vmatpush1.msra.mxu0 0.0
  %4268 = vmatprep.subr.mxu0 0.0
  %4269 = vmatpush1.msra.mxu0 0.0
  %4270 = vmatprep.subr.mxu0 0.0
  %4271 = vmatpush1.msra.mxu0 0.0
  %4272 = vmatprep.subr.mxu0 0.0
  %4273 = vmatpush1.msra.mxu0 0.0
  %4274 = vmatprep.subr.mxu0 0.0
  %4275 = vmatpush1.msra.mxu0 0.0
  %4276 = vmatprep.subr.mxu0 0.0
  %4277 = vmatpush1.msra.mxu0 0.0
  %4278 = vmatprep.subr.mxu0 0.0
  %4279 = vmatpush1.msra.mxu0 0.0
  %4280 = vmatprep.subr.mxu0 0.0
  %4281 = vmatpush1.msra.mxu0 0.0
  %4282 = vmatprep.subr.mxu0 0.0
  %4283 = vmatpush1.msra.mxu0 0.0
  %4284 = vmatprep.subr.mxu0 0.0
  %4285 = vmatpush1.msra.mxu0 0.0
  %4286 = vmatprep.subr.mxu0 0.0
  %4287 = vmatpush1.msra.mxu0 0.0
  %4288 = vmatprep.subr.mxu0 0.0
  %4289 = vmatpush1.msra.mxu0 0.0
  %4290 = vmatprep.subr.mxu0 0.0
  %4291 = vmatpush1.msra.mxu0 0.0
  %4292 = vmatprep.subr.mxu0 0.0
  %4293 = vmatpush1.msra.mxu0 0.0
  %4294 = vmatprep.subr.mxu0 0.0
  %4295 = vmatpush1.msra.mxu0 0.0
  %4296 = vmatprep.subr.mxu0 0.0
  %4297 = vmatpush1.msra.mxu0 0.0
  %4298 = vmatprep.subr.mxu0 0.0
  %4299 = vmatpush1.msra.mxu0 0.0
  %4300 = vmatprep.mubr.f32.mxu0 0.0
  %4301 = vmatmul.mubr.f32.gmra.mrb[0].mxu0 %v3625
  %v4302 = vpop.f32.mrb[0].mxu0
  %v4303 = vadd.f32 0.0, %v4302
  %v4304 = vpop.f32.mrb[0].mxu0
  %4305 = vdwg.mxu0
  %v4306 = vadd.f32 %v4229, %v4303
  %v4307 = vld [vmem:[%s3 + $0x1e8] sm:$0x1]
  %v4308 = vlaneseq
  %v4309 = vshrl.u32 %v4308, 7
  %v4310 = vsub.s32 0, %v4309
  %v4311 = vrot.slane %v4307, %v4310
  %v4312 = vadd.f32 %v4306, %v4311
  %v4313 = vxor.u32 %v4312, 2147483648
  %v4314 = vmul.f32 %v4313, 1.442695
  %v4315 = vpow.pop %v4314
  %v4316 = vadd.f32 %v4315, 1.0
  %v4317 = vrcp.pop %v4316
  %v4318 = vmul.f32 1.0, %v4317
  %v4319 = vtanh.pop %v4312
  %v4320 = vmul.f32 %v4318, %v3606
  %4322 = vrot.lane.b32.xlu0 %v4319, 64
  %v4323 = vpop.permute.xlu0 %4322
  %v4325 = vmul.f32 %v4318, %v4323
  %4327 = vrot.lane.b32.xlu0 %v4325, 32
  %v4328 = vpop.permute.xlu0 %4327
  %v4330 = vadd.f32 %v4320, %v4328
  %v4331 = vtanh.pop %v4330
  %4333 = vrot.lane.b32.xlu0 %v4331, 64
  %v4334 = vpop.permute.xlu0 %4333
  %v4336 = vmul.f32 %v4318, %v4334
  %v4337 = vld [vmem:[%s3 + $0x1f0] sm:$0xff]
  %v4338 = vld [vmem:[%s3 + $0x1f8] sm:$0xff]
  %v4339 = vld [vmem:[%s3 + $0x200] sm:$0xff]
  %v4340 = vld [vmem:[%s3 + $0x208] sm:$0xff]
  %v4341 = vld [vmem:[%s3 + $0x210] sm:$0x1]
  %v4342 = vlaneseq
  %v4343 = vshrl.u32 %v4342, 7
  %v4344 = vsub.s32 0, %v4343
  %v4345 = vrot.slane %v4341, %v4344
  %4347 = vrot.lane.b32.xlu0 %v4336, 32
  %v4348 = vpop.permute.xlu0 %4347
  %v4349 = vsel %vm589, %v4348, 0
  %4351 = vmatprep.subr.mxu0 0.0
  %4352 = vmatpush1.msra.mxu0 %v4337
  %4353 = vmatprep.subr.mxu0 0.0
  %4354 = vmatpush1.msra.mxu0 %v4338
  %4355 = vmatprep.subr.mxu0 0.0
  %4356 = vmatpush1.msra.mxu0 %v4339
  %4357 = vmatprep.subr.mxu0 0.0
  %4358 = vmatpush1.msra.mxu0 %v4340
  %4359 = vmatprep.subr.mxu0 0.0
  %4360 = vmatpush1.msra.mxu0 0.0
  %4361 = vmatprep.subr.mxu0 0.0
  %4362 = vmatpush1.msra.mxu0 0.0
  %4363 = vmatprep.subr.mxu0 0.0
  %4364 = vmatpush1.msra.mxu0 0.0
  %4365 = vmatprep.subr.mxu0 0.0
  %4366 = vmatpush1.msra.mxu0 0.0
  %4367 = vmatprep.subr.mxu0 0.0
  %4368 = vmatpush1.msra.mxu0 0.0
  %4369 = vmatprep.subr.mxu0 0.0
  %4370 = vmatpush1.msra.mxu0 0.0
  %4371 = vmatprep.subr.mxu0 0.0
  %4372 = vmatpush1.msra.mxu0 0.0
  %4373 = vmatprep.subr.mxu0 0.0
  %4374 = vmatpush1.msra.mxu0 0.0
  %4375 = vmatprep.subr.mxu0 0.0
  %4376 = vmatpush1.msra.mxu0 0.0
  %4377 = vmatprep.subr.mxu0 0.0
  %4378 = vmatpush1.msra.mxu0 0.0
  %4379 = vmatprep.subr.mxu0 0.0
  %4380 = vmatpush1.msra.mxu0 0.0
  %4381 = vmatprep.subr.mxu0 0.0
  %4382 = vmatpush1.msra.mxu0 0.0
  %4383 = vmatprep.subr.mxu0 0.0
  %4384 = vmatpush1.msra.mxu0 0.0
  %4385 = vmatprep.subr.mxu0 0.0
  %4386 = vmatpush1.msra.mxu0 0.0
  %4387 = vmatprep.subr.mxu0 0.0
  %4388 = vmatpush1.msra.mxu0 0.0
  %4389 = vmatprep.subr.mxu0 0.0
  %4390 = vmatpush1.msra.mxu0 0.0
  %4391 = vmatprep.subr.mxu0 0.0
  %4392 = vmatpush1.msra.mxu0 0.0
  %4393 = vmatprep.subr.mxu0 0.0
  %4394 = vmatpush1.msra.mxu0 0.0
  %4395 = vmatprep.subr.mxu0 0.0
  %4396 = vmatpush1.msra.mxu0 0.0
  %4397 = vmatprep.subr.mxu0 0.0
  %4398 = vmatpush1.msra.mxu0 0.0
  %4399 = vmatprep.subr.mxu0 0.0
  %4400 = vmatpush1.msra.mxu0 0.0
  %4401 = vmatprep.subr.mxu0 0.0
  %4402 = vmatpush1.msra.mxu0 0.0
  %4403 = vmatprep.subr.mxu0 0.0
  %4404 = vmatpush1.msra.mxu0 0.0
  %4405 = vmatprep.subr.mxu0 0.0
  %4406 = vmatpush1.msra.mxu0 0.0
  %4407 = vmatprep.subr.mxu0 0.0
  %4408 = vmatpush1.msra.mxu0 0.0
  %4409 = vmatprep.subr.mxu0 0.0
  %4410 = vmatpush1.msra.mxu0 0.0
  %4411 = vmatprep.subr.mxu0 0.0
  %4412 = vmatpush1.msra.mxu0 0.0
  %4413 = vmatprep.subr.mxu0 0.0
  %4414 = vmatpush1.msra.mxu0 0.0
  %4415 = vmatprep.mubr.f32.mxu0 0.0
  %4416 = vmatmul.mubr.f32.gmra.mrb[0].mxu0 %v4349
  %v4417 = vpop.f32.mrb[0].mxu0
  %v4418 = vadd.f32 %v4345, %v4417
  %v4419 = vpop.f32.mrb[0].mxu0
  %4420 = vdwg.mxu0
  %4421 = vst.msk [vmem:[%s5 + $0x2] sm:$0x3] %vm1540, %v4418
  %4422 = vrot.lane.b32.xlu0 %v3927, 64
  %v4423 = vpop.permute.xlu0 %4422
  %vm4425 = vcmask 648704
  %4426 = vst.msk [vmem:[%s6] sm:$0x3] %vm4425, %v4423
  %v4427 = vld [vmem:[%s4 + $0x610] sm:$0xff]
  %v4428 = vld [vmem:[%s4 + $0x618] sm:$0xff]
  %v4429 = vld [vmem:[%s4 + $0x620] sm:$0xff]
  %v4430 = vld [vmem:[%s4 + $0x628] sm:$0xff]
  %v4431 = vld [vmem:[%s4 + $0x630] sm:$0xff]
  %v4432 = vld [vmem:[%s4 + $0x638] sm:$0xff]
  %v4433 = vld [vmem:[%s4 + $0x640] sm:$0xff]
  %v4434 = vld [vmem:[%s4 + $0x648] sm:$0xff]
  %v4435 = vld [vmem:[%s832] ss:$8 sm:$0x3]
  %v4437 = vlaneseq
  %v4438 = vshrl.u32 %v4437, 7
  %v4439 = vsub.s32 0, %v4438
  %v4440 = vrot.slane %v4435, %v4439
  %v4441 = vlaneseq
  %v4442 = vshrl.u32 %v4441, 7
  %v4443 = vsub.s32 1, %v4442
  %v4444 = vrot.slane %v4435, %v4443
  %4447 = vmatprep.subr.mxu0 %v4428
  %4448 = vmatpush1.msra.mxu0 %v4427
  %4449 = vmatprep.subr.mxu0 %v4430
  %4450 = vmatpush1.msra.mxu0 %v4429
  %4451 = vmatprep.subr.mxu0 %v4432
  %4452 = vmatpush1.msra.mxu0 %v4431
  %4453 = vmatprep.subr.mxu0 %v4434
  %4454 = vmatpush1.msra.mxu0 %v4433
  %4455 = vmatprep.subr.mxu0 0.0
  %4456 = vmatpush1.msra.mxu0 0.0
  %4457 = vmatprep.subr.mxu0 0.0
  %4458 = vmatpush1.msra.mxu0 0.0
  %4459 = vmatprep.subr.mxu0 0.0
  %4460 = vmatpush1.msra.mxu0 0.0
  %4461 = vmatprep.subr.mxu0 0.0
  %4462 = vmatpush1.msra.mxu0 0.0
  %4463 = vmatprep.subr.mxu0 0.0
  %4464 = vmatpush1.msra.mxu0 0.0
  %4465 = vmatprep.subr.mxu0 0.0
  %4466 = vmatpush1.msra.mxu0 0.0
  %4467 = vmatprep.subr.mxu0 0.0
  %4468 = vmatpush1.msra.mxu0 0.0
  %4469 = vmatprep.subr.mxu0 0.0
  %4470 = vmatpush1.msra.mxu0 0.0
  %4471 = vmatprep.subr.mxu0 0.0
  %4472 = vmatpush1.msra.mxu0 0.0
  %4473 = vmatprep.subr.mxu0 0.0
  %4474 = vmatpush1.msra.mxu0 0.0
  %4475 = vmatprep.subr.mxu0 0.0
  %4476 = vmatpush1.msra.mxu0 0.0
  %4477 = vmatprep.subr.mxu0 0.0
  %4478 = vmatpush1.msra.mxu0 0.0
  %4479 = vmatprep.subr.mxu0 0.0
  %4480 = vmatpush1.msra.mxu0 0.0
  %4481 = vmatprep.subr.mxu0 0.0
  %4482 = vmatpush1.msra.mxu0 0.0
  %4483 = vmatprep.subr.mxu0 0.0
  %4484 = vmatpush1.msra.mxu0 0.0
  %4485 = vmatprep.subr.mxu0 0.0
  %4486 = vmatpush1.msra.mxu0 0.0
  %4487 = vmatprep.subr.mxu0 0.0
  %4488 = vmatpush1.msra.mxu0 0.0
  %4489 = vmatprep.subr.mxu0 0.0
  %4490 = vmatpush1.msra.mxu0 0.0
  %4491 = vmatprep.subr.mxu0 0.0
  %4492 = vmatpush1.msra.mxu0 0.0
  %4493 = vmatprep.subr.mxu0 0.0
  %4494 = vmatpush1.msra.mxu0 0.0
  %4495 = vmatprep.subr.mxu0 0.0
  %4496 = vmatpush1.msra.mxu0 0.0
  %4497 = vmatprep.subr.mxu0 0.0
  %4498 = vmatpush1.msra.mxu0 0.0
  %4499 = vmatprep.subr.mxu0 0.0
  %4500 = vmatpush1.msra.mxu0 0.0
  %4501 = vmatprep.subr.mxu0 0.0
  %4502 = vmatpush1.msra.mxu0 0.0
  %4503 = vmatprep.subr.mxu0 0.0
  %4504 = vmatpush1.msra.mxu0 0.0
  %4505 = vmatprep.subr.mxu0 0.0
  %4506 = vmatpush1.msra.mxu0 0.0
  %4507 = vmatprep.subr.mxu0 0.0
  %4508 = vmatpush1.msra.mxu0 0.0
  %4509 = vmatprep.subr.mxu0 0.0
  %4510 = vmatpush1.msra.mxu0 0.0
  %4511 = vmatprep.mubr.f32.mxu0 0.0
  %4512 = vmatmul.mubr.f32.gmra.mrb[0].mxu0 %v4349
  %v4513 = vpop.f32.mrb[0].mxu0
  %v4514 = vadd.f32 %v4440, %v4513
  %v4515 = vpop.f32.mrb[0].mxu0
  %v4516 = vadd.f32 %v4444, %v4515
  %4517 = vdwg.mxu0
  %v4518 = vadd.f32 %v584, %v4514
  %v4519 = vadd.f32 %v586, %v4516
  %v4520 = vtanh.pop %v4518
  %v4521 = vtanh.pop %v4519
  %v4522 = vld [vmem:[%s3 + $0x38] sm:$0xff]
  %v4523 = vld [vmem:[%s3 + $0x40] sm:$0xff]
  %v4524 = vld [vmem:[%s3 + $0x48] sm:$0xff]
  %v4525 = vld [vmem:[%s3 + $0x50] sm:$0xff]
  %v4526 = vld [vmem:[%s3 + $0x58] sm:$0xff]
  %v4527 = vld [vmem:[%s3 + $0x60] sm:$0xff]
  %v4528 = vld [vmem:[%s3 + $0x68] sm:$0xff]
  %v4529 = vld [vmem:[%s3 + $0x70] sm:$0xff]
  %v4530 = vld [vmem:[%s3 + $0x78] sm:$0xff]
  %v4531 = vld [vmem:[%s3 + $0x80] sm:$0xff]
  %v4532 = vld [vmem:[%s3 + $0x88] sm:$0xff]
  %v4533 = vld [vmem:[%s3 + $0x90] sm:$0xff]
  %v4534 = vld [vmem:[%s3 + $0x98] sm:$0xff]
  %v4535 = vld [vmem:[%s3 + $0xa0] sm:$0xff]
  %v4536 = vld [vmem:[%s3 + $0xa8] sm:$0xff]
  %v4537 = vld [vmem:[%s3 + $0xb0] sm:$0xff]
  %v4538 = vld [vmem:[%s3 + $0xb8] sm:$0xff]
  %v4539 = vld [vmem:[%s3 + $0xc0] sm:$0xff]
  %v4540 = vld [vmem:[%s3 + $0xc8] sm:$0xff]
  %v4541 = vld [vmem:[%s3 + $0xd0] sm:$0xff]
  %v4542 = vld [vmem:[%s3 + $0xd8] sm:$0xff]
  %v4543 = vld [vmem:[%s3 + $0xe0] sm:$0xff]
  %v4544 = vld [vmem:[%s3 + $0xe8] sm:$0xff]
  %v4545 = vld [vmem:[%s3 + $0xf0] sm:$0xff]
  %v4546 = vld [vmem:[%s3 + $0xf8] sm:$0xff]
  %v4547 = vld [vmem:[%s3 + $0x100] sm:$0xff]
  %v4548 = vld [vmem:[%s3 + $0x108] sm:$0xff]
  %v4549 = vld [vmem:[%s3 + $0x110] sm:$0xff]
  %v4550 = vld [vmem:[%s3 + $0x118] sm:$0xff]
  %v4551 = vld [vmem:[%s3 + $0x120] sm:$0xff]
  %v4552 = vld [vmem:[%s3 + $0x128] sm:$0xff]
  %v4553 = vld [vmem:[%s3 + $0x130] sm:$0xff]
  %v4554 = vld [vmem:[%s3 + $0x138] sm:$0x1]
  %s4556 = vtos %v4554
  %v4557 = vstv %s4556
  %4559 = vmatprep.subr.mxu0 0.0
  %4560 = vmatpush1.msra.mxu0 %v4522
  %4561 = vmatprep.subr.mxu0 0.0
  %4562 = vmatpush1.msra.mxu0 %v4523
  %4563 = vmatprep.subr.mxu0 0.0
  %4564 = vmatpush1.msra.mxu0 %v4524
  %4565 = vmatprep.subr.mxu0 0.0
  %4566 = vmatpush1.msra.mxu0 %v4525
  %4567 = vmatprep.subr.mxu0 0.0
  %4568 = vmatpush1.msra.mxu0 %v4526
  %4569 = vmatprep.subr.mxu0 0.0
  %4570 = vmatpush1.msra.mxu0 %v4527
  %4571 = vmatprep.subr.mxu0 0.0
  %4572 = vmatpush1.msra.mxu0 %v4528
  %4573 = vmatprep.subr.mxu0 0.0
  %4574 = vmatpush1.msra.mxu0 %v4529
  %4575 = vmatprep.subr.mxu0 0.0
  %4576 = vmatpush1.msra.mxu0 %v4530
  %4577 = vmatprep.subr.mxu0 0.0
  %4578 = vmatpush1.msra.mxu0 %v4531
  %4579 = vmatprep.subr.mxu0 0.0
  %4580 = vmatpush1.msra.mxu0 %v4532
  %4581 = vmatprep.subr.mxu0 0.0
  %4582 = vmatpush1.msra.mxu0 %v4533
  %4583 = vmatprep.subr.mxu0 0.0
  %4584 = vmatpush1.msra.mxu0 %v4534
  %4585 = vmatprep.subr.mxu0 0.0
  %4586 = vmatpush1.msra.mxu0 %v4535
  %4587 = vmatprep.subr.mxu0 0.0
  %4588 = vmatpush1.msra.mxu0 %v4536
  %4589 = vmatprep.subr.mxu0 0.0
  %4590 = vmatpush1.msra.mxu0 %v4537
  %4591 = vmatprep.subr.mxu0 0.0
  %4592 = vmatpush1.msra.mxu0 %v4538
  %4593 = vmatprep.subr.mxu0 0.0
  %4594 = vmatpush1.msra.mxu0 %v4539
  %4595 = vmatprep.subr.mxu0 0.0
  %4596 = vmatpush1.msra.mxu0 %v4540
  %4597 = vmatprep.subr.mxu0 0.0
  %4598 = vmatpush1.msra.mxu0 %v4541
  %4599 = vmatprep.subr.mxu0 0.0
  %4600 = vmatpush1.msra.mxu0 %v4542
  %4601 = vmatprep.subr.mxu0 0.0
  %4602 = vmatpush1.msra.mxu0 %v4543
  %4603 = vmatprep.subr.mxu0 0.0
  %4604 = vmatpush1.msra.mxu0 %v4544
  %4605 = vmatprep.subr.mxu0 0.0
  %4606 = vmatpush1.msra.mxu0 %v4545
  %4607 = vmatprep.subr.mxu0 0.0
  %4608 = vmatpush1.msra.mxu0 %v4546
  %4609 = vmatprep.subr.mxu0 0.0
  %4610 = vmatpush1.msra.mxu0 %v4547
  %4611 = vmatprep.subr.mxu0 0.0
  %4612 = vmatpush1.msra.mxu0 %v4548
  %4613 = vmatprep.subr.mxu0 0.0
  %4614 = vmatpush1.msra.mxu0 %v4549
  %4615 = vmatprep.subr.mxu0 0.0
  %4616 = vmatpush1.msra.mxu0 %v4550
  %4617 = vmatprep.subr.mxu0 0.0
  %4618 = vmatpush1.msra.mxu0 %v4551
  %4619 = vmatprep.subr.mxu0 0.0
  %4620 = vmatpush1.msra.mxu0 %v4552
  %4621 = vmatprep.subr.mxu0 0.0
  %4622 = vmatpush1.msra.mxu0 %v4553
  %4623 = vmatprep.mubr.f32.mxu0 %v4521
  %4624 = vmatmul.mubr.f32.gmra.mrb[0].mxu0 %v4520
  %v4625 = vpop.f32.mrb[0].mxu0
  %v4626 = vadd.f32 %v4557, %v4625
  %v4627 = vpop.f32.mrb[0].mxu0
  %4628 = vdwg.mxu0
  %v4629 = vsel %vm1030, %v4626, -inf
  %4630 = vmax.xlane.f32.xlu0 %v4629
  %v4631 = vpop.xlane.xlu0 %4630
  %v4632 = vsub.f32 %v4626, %v4631
  %v4633 = vmul.f32 %v4632, 1.442695
  %v4634 = vpow.pop %v4633
  %v4635 = vsel %vm1030, %v4634, 0.0
  %4636 = vadd.xlane.f32.xlu0 %v4635
  %v4637 = vpop.xlane.xlu0 %4636
  %v4638 = vrcp.pop %v4637
  %v4639 = vmul.f32 %v4634, %v4638
  %v4641 = vsel %vm1042, %v4639, 0
  %4643 = vmatprep.subr.mxu0 0.0
  %4644 = vmatpush1.msra.mxu0 %v117
  %4645 = vmatprep.subr.mxu0 0.0
  %4646 = vmatpush1.msra.mxu0 %v122
  %4647 = vmatprep.subr.mxu0 0.0
  %4648 = vmatpush1.msra.mxu0 0.0
  %4649 = vmatprep.subr.mxu0 0.0
  %4650 = vmatpush1.msra.mxu0 0.0
  %4651 = vmatprep.subr.mxu0 0.0
  %4652 = vmatpush1.msra.mxu0 0.0
  %4653 = vmatprep.subr.mxu0 0.0
  %4654 = vmatpush1.msra.mxu0 0.0
  %4655 = vmatprep.subr.mxu0 0.0
  %4656 = vmatpush1.msra.mxu0 0.0
  %4657 = vmatprep.subr.mxu0 0.0
  %4658 = vmatpush1.msra.mxu0 0.0
  %4659 = vmatprep.subr.mxu0 0.0
  %4660 = vmatpush1.msra.mxu0 0.0
  %4661 = vmatprep.subr.mxu0 0.0
  %4662 = vmatpush1.msra.mxu0 0.0
  %4663 = vmatprep.subr.mxu0 0.0
  %4664 = vmatpush1.msra.mxu0 0.0
  %4665 = vmatprep.subr.mxu0 0.0
  %4666 = vmatpush1.msra.mxu0 0.0
  %4667 = vmatprep.subr.mxu0 0.0
  %4668 = vmatpush1.msra.mxu0 0.0
  %4669 = vmatprep.subr.mxu0 0.0
  %4670 = vmatpush1.msra.mxu0 0.0
  %4671 = vmatprep.subr.mxu0 0.0
  %4672 = vmatpush1.msra.mxu0 0.0
  %4673 = vmatprep.subr.mxu0 0.0
  %4674 = vmatpush1.msra.mxu0 0.0
  %4675 = vmatprep.subr.mxu0 0.0
  %4676 = vmatpush1.msra.mxu0 0.0
  %4677 = vmatprep.subr.mxu0 0.0
  %4678 = vmatpush1.msra.mxu0 0.0
  %4679 = vmatprep.subr.mxu0 0.0
  %4680 = vmatpush1.msra.mxu0 0.0
  %4681 = vmatprep.subr.mxu0 0.0
  %4682 = vmatpush1.msra.mxu0 0.0
  %4683 = vmatprep.subr.mxu0 0.0
  %4684 = vmatpush1.msra.mxu0 0.0
  %4685 = vmatprep.subr.mxu0 0.0
  %4686 = vmatpush1.msra.mxu0 0.0
  %4687 = vmatprep.subr.mxu0 0.0
  %4688 = vmatpush1.msra.mxu0 0.0
  %4689 = vmatprep.subr.mxu0 0.0
  %4690 = vmatpush1.msra.mxu0 0.0
  %4691 = vmatprep.subr.mxu0 0.0
  %4692 = vmatpush1.msra.mxu0 0.0
  %4693 = vmatprep.subr.mxu0 0.0
  %4694 = vmatpush1.msra.mxu0 0.0
  %4695 = vmatprep.subr.mxu0 0.0
  %4696 = vmatpush1.msra.mxu0 0.0
  %4697 = vmatprep.subr.mxu0 0.0
  %4698 = vmatpush1.msra.mxu0 0.0
  %4699 = vmatprep.subr.mxu0 0.0
  %4700 = vmatpush1.msra.mxu0 0.0
  %4701 = vmatprep.subr.mxu0 0.0
  %4702 = vmatpush1.msra.mxu0 0.0
  %4703 = vmatprep.subr.mxu0 0.0
  %4704 = vmatpush1.msra.mxu0 0.0
  %4705 = vmatprep.subr.mxu0 0.0
  %4706 = vmatpush1.msra.mxu0 0.0
  %4707 = vmatprep.mubr.f32.mxu0 0.0
  %4708 = vmatmul.mubr.f32.gmra.mrb[0].mxu0 %v4641
  %v4709 = vpop.f32.mrb[0].mxu0
  %v4710 = vadd.f32 0.0, %v4709
  %v4711 = vpop.f32.mrb[0].mxu0
  %4712 = vdwg.mxu0
  %v4713 = vrot.slane %v4639, 1
  %v4714 = vsel %vm1042, %v4713, 0
  %4716 = vmatprep.subr.mxu0 0.0
  %4717 = vmatpush1.msra.mxu0 %v127
  %4718 = vmatprep.subr.mxu0 0.0
  %4719 = vmatpush1.msra.mxu0 %v132
  %4720 = vmatprep.subr.mxu0 0.0
  %4721 = vmatpush1.msra.mxu0 0.0
  %4722 = vmatprep.subr.mxu0 0.0
  %4723 = vmatpush1.msra.mxu0 0.0
  %4724 = vmatprep.subr.mxu0 0.0
  %4725 = vmatpush1.msra.mxu0 0.0
  %4726 = vmatprep.subr.mxu0 0.0
  %4727 = vmatpush1.msra.mxu0 0.0
  %4728 = vmatprep.subr.mxu0 0.0
  %4729 = vmatpush1.msra.mxu0 0.0
  %4730 = vmatprep.subr.mxu0 0.0
  %4731 = vmatpush1.msra.mxu0 0.0
  %4732 = vmatprep.subr.mxu0 0.0
  %4733 = vmatpush1.msra.mxu0 0.0
  %4734 = vmatprep.subr.mxu0 0.0
  %4735 = vmatpush1.msra.mxu0 0.0
  %4736 = vmatprep.subr.mxu0 0.0
  %4737 = vmatpush1.msra.mxu0 0.0
  %4738 = vmatprep.subr.mxu0 0.0
  %4739 = vmatpush1.msra.mxu0 0.0
  %4740 = vmatprep.subr.mxu0 0.0
  %4741 = vmatpush1.msra.mxu0 0.0
  %4742 = vmatprep.subr.mxu0 0.0
  %4743 = vmatpush1.msra.mxu0 0.0
  %4744 = vmatprep.subr.mxu0 0.0
  %4745 = vmatpush1.msra.mxu0 0.0
  %4746 = vmatprep.subr.mxu0 0.0
  %4747 = vmatpush1.msra.mxu0 0.0
  %4748 = vmatprep.subr.mxu0 0.0
  %4749 = vmatpush1.msra.mxu0 0.0
  %4750 = vmatprep.subr.mxu0 0.0
  %4751 = vmatpush1.msra.mxu0 0.0
  %4752 = vmatprep.subr.mxu0 0.0
  %4753 = vmatpush1.msra.mxu0 0.0
  %4754 = vmatprep.subr.mxu0 0.0
  %4755 = vmatpush1.msra.mxu0 0.0
  %4756 = vmatprep.subr.mxu0 0.0
  %4757 = vmatpush1.msra.mxu0 0.0
  %4758 = vmatprep.subr.mxu0 0.0
  %4759 = vmatpush1.msra.mxu0 0.0
  %4760 = vmatprep.subr.mxu0 0.0
  %4761 = vmatpush1.msra.mxu0 0.0
  %4762 = vmatprep.subr.mxu0 0.0
  %4763 = vmatpush1.msra.mxu0 0.0
  %4764 = vmatprep.subr.mxu0 0.0
  %4765 = vmatpush1.msra.mxu0 0.0
  %4766 = vmatprep.subr.mxu0 0.0
  %4767 = vmatpush1.msra.mxu0 0.0
  %4768 = vmatprep.subr.mxu0 0.0
  %4769 = vmatpush1.msra.mxu0 0.0
  %4770 = vmatprep.subr.mxu0 0.0
  %4771 = vmatpush1.msra.mxu0 0.0
  %4772 = vmatprep.subr.mxu0 0.0
  %4773 = vmatpush1.msra.mxu0 0.0
  %4774 = vmatprep.subr.mxu0 0.0
  %4775 = vmatpush1.msra.mxu0 0.0
  %4776 = vmatprep.subr.mxu0 0.0
  %4777 = vmatpush1.msra.mxu0 0.0
  %4778 = vmatprep.subr.mxu0 0.0
  %4779 = vmatpush1.msra.mxu0 0.0
  %4780 = vmatprep.mubr.f32.mxu0 0.0
  %4781 = vmatmul.mubr.f32.gmra.mrb[0].mxu0 %v4714
  %v4782 = vpop.f32.mrb[0].mxu0
  %v4783 = vadd.f32 0.0, %v4782
  %v4784 = vpop.f32.mrb[0].mxu0
  %4785 = vdwg.mxu0
  %v4787 = vrot.slane %v4783, 7
  %v4789 = vsel %vm1192, %v4710, %v4787
  %s4790 = scalar_lea.vmem %s2, 10
  %v4791 = vld [vmem:[%s4790] sm:$0x3]
  %v4792 = vld [vmem:[%s3 + $0x198] sm:$0xff]
  %v4793 = vld [vmem:[%s3 + $0x1a0] sm:$0xff]
  %v4794 = vld [vmem:[%s3 + $0x1a8] sm:$0xff]
  %v4795 = vld [vmem:[%s3 + $0x1b0] sm:$0xff]
  %v4796 = vld [vmem:[%s3 + $0x1b8] sm:$0xff]
  %v4797 = vld [vmem:[%s3 + $0x1c0] sm:$0xff]
  %v4799 = vsel %vm589, %v4789, 0
  %4801 = vmatprep.subr.mxu0 0.0
  %4802 = vmatpush1.msra.mxu0 %v4794
  %4803 = vmatprep.subr.mxu0 0.0
  %4804 = vmatpush1.msra.mxu0 %v4795
  %4805 = vmatprep.subr.mxu0 0.0
  %4806 = vmatpush1.msra.mxu0 %v4796
  %4807 = vmatprep.subr.mxu0 0.0
  %4808 = vmatpush1.msra.mxu0 %v4797
  %4809 = vmatprep.subr.mxu0 0.0
  %4810 = vmatpush1.msra.mxu0 0.0
  %4811 = vmatprep.subr.mxu0 0.0
  %4812 = vmatpush1.msra.mxu0 0.0
  %4813 = vmatprep.subr.mxu0 0.0
  %4814 = vmatpush1.msra.mxu0 0.0
  %4815 = vmatprep.subr.mxu0 0.0
  %4816 = vmatpush1.msra.mxu0 0.0
  %4817 = vmatprep.subr.mxu0 0.0
  %4818 = vmatpush1.msra.mxu0 0.0
  %4819 = vmatprep.subr.mxu0 0.0
  %4820 = vmatpush1.msra.mxu0 0.0
  %4821 = vmatprep.subr.mxu0 0.0
  %4822 = vmatpush1.msra.mxu0 0.0
  %4823 = vmatprep.subr.mxu0 0.0
  %4824 = vmatpush1.msra.mxu0 0.0
  %4825 = vmatprep.subr.mxu0 0.0
  %4826 = vmatpush1.msra.mxu0 0.0
  %4827 = vmatprep.subr.mxu0 0.0
  %4828 = vmatpush1.msra.mxu0 0.0
  %4829 = vmatprep.subr.mxu0 0.0
  %4830 = vmatpush1.msra.mxu0 0.0
  %4831 = vmatprep.subr.mxu0 0.0
  %4832 = vmatpush1.msra.mxu0 0.0
  %4833 = vmatprep.subr.mxu0 0.0
  %4834 = vmatpush1.msra.mxu0 0.0
  %4835 = vmatprep.subr.mxu0 0.0
  %4836 = vmatpush1.msra.mxu0 0.0
  %4837 = vmatprep.subr.mxu0 0.0
  %4838 = vmatpush1.msra.mxu0 0.0
  %4839 = vmatprep.subr.mxu0 0.0
  %4840 = vmatpush1.msra.mxu0 0.0
  %4841 = vmatprep.subr.mxu0 0.0
  %4842 = vmatpush1.msra.mxu0 0.0
  %4843 = vmatprep.subr.mxu0 0.0
  %4844 = vmatpush1.msra.mxu0 0.0
  %4845 = vmatprep.subr.mxu0 0.0
  %4846 = vmatpush1.msra.mxu0 0.0
  %4847 = vmatprep.subr.mxu0 0.0
  %4848 = vmatpush1.msra.mxu0 0.0
  %4849 = vmatprep.subr.mxu0 0.0
  %4850 = vmatpush1.msra.mxu0 0.0
  %4851 = vmatprep.subr.mxu0 0.0
  %4852 = vmatpush1.msra.mxu0 0.0
  %4853 = vmatprep.subr.mxu0 0.0
  %4854 = vmatpush1.msra.mxu0 0.0
  %4855 = vmatprep.subr.mxu0 0.0
  %4856 = vmatpush1.msra.mxu0 0.0
  %4857 = vmatprep.subr.mxu0 0.0
  %4858 = vmatpush1.msra.mxu0 0.0
  %4859 = vmatprep.subr.mxu0 0.0
  %4860 = vmatpush1.msra.mxu0 0.0
  %4861 = vmatprep.subr.mxu0 0.0
  %4862 = vmatpush1.msra.mxu0 0.0
  %4863 = vmatprep.subr.mxu0 0.0
  %4864 = vmatpush1.msra.mxu0 0.0
  %4865 = vmatprep.mubr.f32.mxu0 0.0
  %4866 = vmatmul.mubr.f32.gmra.mrb[0].mxu0 %v4799
  %v4867 = vpop.f32.mrb[0].mxu0
  %v4868 = vadd.f32 0.0, %v4867
  %v4869 = vpop.f32.mrb[0].mxu0
  %4870 = vdwg.mxu0
  %v4872 = vsel %vm1042, %v4791, 0
  %4874 = vmatprep.subr.mxu0 0.0
  %4875 = vmatpush1.msra.mxu0 %v4792
  %4876 = vmatprep.subr.mxu0 0.0
  %4877 = vmatpush1.msra.mxu0 %v4793
  %4878 = vmatprep.subr.mxu0 0.0
  %4879 = vmatpush1.msra.mxu0 0.0
  %4880 = vmatprep.subr.mxu0 0.0
  %4881 = vmatpush1.msra.mxu0 0.0
  %4882 = vmatprep.subr.mxu0 0.0
  %4883 = vmatpush1.msra.mxu0 0.0
  %4884 = vmatprep.subr.mxu0 0.0
  %4885 = vmatpush1.msra.mxu0 0.0
  %4886 = vmatprep.subr.mxu0 0.0
  %4887 = vmatpush1.msra.mxu0 0.0
  %4888 = vmatprep.subr.mxu0 0.0
  %4889 = vmatpush1.msra.mxu0 0.0
  %4890 = vmatprep.subr.mxu0 0.0
  %4891 = vmatpush1.msra.mxu0 0.0
  %4892 = vmatprep.subr.mxu0 0.0
  %4893 = vmatpush1.msra.mxu0 0.0
  %4894 = vmatprep.subr.mxu0 0.0
  %4895 = vmatpush1.msra.mxu0 0.0
  %4896 = vmatprep.subr.mxu0 0.0
  %4897 = vmatpush1.msra.mxu0 0.0
  %4898 = vmatprep.subr.mxu0 0.0
  %4899 = vmatpush1.msra.mxu0 0.0
  %4900 = vmatprep.subr.mxu0 0.0
  %4901 = vmatpush1.msra.mxu0 0.0
  %4902 = vmatprep.subr.mxu0 0.0
  %4903 = vmatpush1.msra.mxu0 0.0
  %4904 = vmatprep.subr.mxu0 0.0
  %4905 = vmatpush1.msra.mxu0 0.0
  %4906 = vmatprep.subr.mxu0 0.0
  %4907 = vmatpush1.msra.mxu0 0.0
  %4908 = vmatprep.subr.mxu0 0.0
  %4909 = vmatpush1.msra.mxu0 0.0
  %4910 = vmatprep.subr.mxu0 0.0
  %4911 = vmatpush1.msra.mxu0 0.0
  %4912 = vmatprep.subr.mxu0 0.0
  %4913 = vmatpush1.msra.mxu0 0.0
  %4914 = vmatprep.subr.mxu0 0.0
  %4915 = vmatpush1.msra.mxu0 0.0
  %4916 = vmatprep.subr.mxu0 0.0
  %4917 = vmatpush1.msra.mxu0 0.0
  %4918 = vmatprep.subr.mxu0 0.0
  %4919 = vmatpush1.msra.mxu0 0.0
  %4920 = vmatprep.subr.mxu0 0.0
  %4921 = vmatpush1.msra.mxu0 0.0
  %4922 = vmatprep.subr.mxu0 0.0
  %4923 = vmatpush1.msra.mxu0 0.0
  %4924 = vmatprep.subr.mxu0 0.0
  %4925 = vmatpush1.msra.mxu0 0.0
  %4926 = vmatprep.subr.mxu0 0.0
  %4927 = vmatpush1.msra.mxu0 0.0
  %4928 = vmatprep.subr.mxu0 0.0
  %4929 = vmatpush1.msra.mxu0 0.0
  %4930 = vmatprep.subr.mxu0 0.0
  %4931 = vmatpush1.msra.mxu0 0.0
  %4932 = vmatprep.subr.mxu0 0.0
  %4933 = vmatpush1.msra.mxu0 0.0
  %4934 = vmatprep.subr.mxu0 0.0
  %4935 = vmatpush1.msra.mxu0 0.0
  %4936 = vmatprep.subr.mxu0 0.0
  %4937 = vmatpush1.msra.mxu0 0.0
  %4938 = vmatprep.mubr.f32.mxu0 0.0
  %4939 = vmatmul.mubr.f32.gmra.mrb[0].mxu0 %v4872
  %v4940 = vpop.f32.mrb[0].mxu0
  %v4941 = vadd.f32 %v4868, %v4940
  %v4942 = vpop.f32.mrb[0].mxu0
  %4943 = vdwg.mxu0
  %v4944 = vld [vmem:[%s3 + $0x1c8] sm:$0xff]
  %v4945 = vld [vmem:[%s3 + $0x1d0] sm:$0xff]
  %v4946 = vld [vmem:[%s3 + $0x1d8] sm:$0xff]
  %v4947 = vld [vmem:[%s3 + $0x1e0] sm:$0xff]
  %4948 = vmatprep.subr.mxu0 0.0
  %4949 = vmatpush1.msra.mxu0 %v4944
  %4950 = vmatprep.subr.mxu0 0.0
  %4951 = vmatpush1.msra.mxu0 %v4945
  %4952 = vmatprep.subr.mxu0 0.0
  %4953 = vmatpush1.msra.mxu0 %v4946
  %4954 = vmatprep.subr.mxu0 0.0
  %4955 = vmatpush1.msra.mxu0 %v4947
  %4956 = vmatprep.subr.mxu0 0.0
  %4957 = vmatpush1.msra.mxu0 0.0
  %4958 = vmatprep.subr.mxu0 0.0
  %4959 = vmatpush1.msra.mxu0 0.0
  %4960 = vmatprep.subr.mxu0 0.0
  %4961 = vmatpush1.msra.mxu0 0.0
  %4962 = vmatprep.subr.mxu0 0.0
  %4963 = vmatpush1.msra.mxu0 0.0
  %4964 = vmatprep.subr.mxu0 0.0
  %4965 = vmatpush1.msra.mxu0 0.0
  %4966 = vmatprep.subr.mxu0 0.0
  %4967 = vmatpush1.msra.mxu0 0.0
  %4968 = vmatprep.subr.mxu0 0.0
  %4969 = vmatpush1.msra.mxu0 0.0
  %4970 = vmatprep.subr.mxu0 0.0
  %4971 = vmatpush1.msra.mxu0 0.0
  %4972 = vmatprep.subr.mxu0 0.0
  %4973 = vmatpush1.msra.mxu0 0.0
  %4974 = vmatprep.subr.mxu0 0.0
  %4975 = vmatpush1.msra.mxu0 0.0
  %4976 = vmatprep.subr.mxu0 0.0
  %4977 = vmatpush1.msra.mxu0 0.0
  %4978 = vmatprep.subr.mxu0 0.0
  %4979 = vmatpush1.msra.mxu0 0.0
  %4980 = vmatprep.subr.mxu0 0.0
  %4981 = vmatpush1.msra.mxu0 0.0
  %4982 = vmatprep.subr.mxu0 0.0
  %4983 = vmatpush1.msra.mxu0 0.0
  %4984 = vmatprep.subr.mxu0 0.0
  %4985 = vmatpush1.msra.mxu0 0.0
  %4986 = vmatprep.subr.mxu0 0.0
  %4987 = vmatpush1.msra.mxu0 0.0
  %4988 = vmatprep.subr.mxu0 0.0
  %4989 = vmatpush1.msra.mxu0 0.0
  %4990 = vmatprep.subr.mxu0 0.0
  %4991 = vmatpush1.msra.mxu0 0.0
  %4992 = vmatprep.subr.mxu0 0.0
  %4993 = vmatpush1.msra.mxu0 0.0
  %4994 = vmatprep.subr.mxu0 0.0
  %4995 = vmatpush1.msra.mxu0 0.0
  %4996 = vmatprep.subr.mxu0 0.0
  %4997 = vmatpush1.msra.mxu0 0.0
  %4998 = vmatprep.subr.mxu0 0.0
  %4999 = vmatpush1.msra.mxu0 0.0
  %5000 = vmatprep.subr.mxu0 0.0
  %5001 = vmatpush1.msra.mxu0 0.0
  %5002 = vmatprep.subr.mxu0 0.0
  %5003 = vmatpush1.msra.mxu0 0.0
  %5004 = vmatprep.subr.mxu0 0.0
  %5005 = vmatpush1.msra.mxu0 0.0
  %5006 = vmatprep.subr.mxu0 0.0
  %5007 = vmatpush1.msra.mxu0 0.0
  %5008 = vmatprep.subr.mxu0 0.0
  %5009 = vmatpush1.msra.mxu0 0.0
  %5010 = vmatprep.subr.mxu0 0.0
  %5011 = vmatpush1.msra.mxu0 0.0
  %5012 = vmatprep.mubr.f32.mxu0 0.0
  %5013 = vmatmul.mubr.f32.gmra.mrb[0].mxu0 %v4349
  %v5014 = vpop.f32.mrb[0].mxu0
  %v5015 = vadd.f32 0.0, %v5014
  %v5016 = vpop.f32.mrb[0].mxu0
  %5017 = vdwg.mxu0
  %v5018 = vadd.f32 %v4941, %v5015
  %v5019 = vld [vmem:[%s3 + $0x1e8] sm:$0x1]
  %v5020 = vlaneseq
  %v5021 = vshrl.u32 %v5020, 7
  %v5022 = vsub.s32 0, %v5021
  %v5023 = vrot.slane %v5019, %v5022
  %v5024 = vadd.f32 %v5018, %v5023
  %v5025 = vxor.u32 %v5024, 2147483648
  %v5026 = vmul.f32 %v5025, 1.442695
  %v5027 = vpow.pop %v5026
  %v5028 = vadd.f32 %v5027, 1.0
  %v5029 = vrcp.pop %v5028
  %v5030 = vmul.f32 1.0, %v5029
  %v5031 = vtanh.pop %v5024
  %v5032 = vmul.f32 %v5030, %v4330
  %5034 = vrot.lane.b32.xlu0 %v5031, 64
  %v5035 = vpop.permute.xlu0 %5034
  %v5037 = vmul.f32 %v5030, %v5035
  %5039 = vrot.lane.b32.xlu0 %v5037, 32
  %v5040 = vpop.permute.xlu0 %5039
  %v5042 = vadd.f32 %v5032, %v5040
  %v5043 = vtanh.pop %v5042
  %5045 = vrot.lane.b32.xlu0 %v5043, 64
  %v5046 = vpop.permute.xlu0 %5045
  %v5048 = vmul.f32 %v5030, %v5046
  %v5049 = vld [vmem:[%s3 + $0x1f0] sm:$0xff]
  %v5050 = vld [vmem:[%s3 + $0x1f8] sm:$0xff]
  %v5051 = vld [vmem:[%s3 + $0x200] sm:$0xff]
  %v5052 = vld [vmem:[%s3 + $0x208] sm:$0xff]
  %v5053 = vld [vmem:[%s3 + $0x210] sm:$0x1]
  %v5054 = vlaneseq
  %v5055 = vshrl.u32 %v5054, 7
  %v5056 = vsub.s32 0, %v5055
  %v5057 = vrot.slane %v5053, %v5056
  %5059 = vrot.lane.b32.xlu0 %v5048, 32
  %v5060 = vpop.permute.xlu0 %5059
  %v5061 = vsel %vm589, %v5060, 0
  %5063 = vmatprep.subr.mxu0 0.0
  %5064 = vmatpush1.msra.mxu0 %v5049
  %5065 = vmatprep.subr.mxu0 0.0
  %5066 = vmatpush1.msra.mxu0 %v5050
  %5067 = vmatprep.subr.mxu0 0.0
  %5068 = vmatpush1.msra.mxu0 %v5051
  %5069 = vmatprep.subr.mxu0 0.0
  %5070 = vmatpush1.msra.mxu0 %v5052
  %5071 = vmatprep.subr.mxu0 0.0
  %5072 = vmatpush1.msra.mxu0 0.0
  %5073 = vmatprep.subr.mxu0 0.0
  %5074 = vmatpush1.msra.mxu0 0.0
  %5075 = vmatprep.subr.mxu0 0.0
  %5076 = vmatpush1.msra.mxu0 0.0
  %5077 = vmatprep.subr.mxu0 0.0
  %5078 = vmatpush1.msra.mxu0 0.0
  %5079 = vmatprep.subr.mxu0 0.0
  %5080 = vmatpush1.msra.mxu0 0.0
  %5081 = vmatprep.subr.mxu0 0.0
  %5082 = vmatpush1.msra.mxu0 0.0
  %5083 = vmatprep.subr.mxu0 0.0
  %5084 = vmatpush1.msra.mxu0 0.0
  %5085 = vmatprep.subr.mxu0 0.0
  %5086 = vmatpush1.msra.mxu0 0.0
  %5087 = vmatprep.subr.mxu0 0.0
  %5088 = vmatpush1.msra.mxu0 0.0
  %5089 = vmatprep.subr.mxu0 0.0
  %5090 = vmatpush1.msra.mxu0 0.0
  %5091 = vmatprep.subr.mxu0 0.0
  %5092 = vmatpush1.msra.mxu0 0.0
  %5093 = vmatprep.subr.mxu0 0.0
  %5094 = vmatpush1.msra.mxu0 0.0
  %5095 = vmatprep.subr.mxu0 0.0
  %5096 = vmatpush1.msra.mxu0 0.0
  %5097 = vmatprep.subr.mxu0 0.0
  %5098 = vmatpush1.msra.mxu0 0.0
  %5099 = vmatprep.subr.mxu0 0.0
  %5100 = vmatpush1.msra.mxu0 0.0
  %5101 = vmatprep.subr.mxu0 0.0
  %5102 = vmatpush1.msra.mxu0 0.0
  %5103 = vmatprep.subr.mxu0 0.0
  %5104 = vmatpush1.msra.mxu0 0.0
  %5105 = vmatprep.subr.mxu0 0.0
  %5106 = vmatpush1.msra.mxu0 0.0
  %5107 = vmatprep.subr.mxu0 0.0
  %5108 = vmatpush1.msra.mxu0 0.0
  %5109 = vmatprep.subr.mxu0 0.0
  %5110 = vmatpush1.msra.mxu0 0.0
  %5111 = vmatprep.subr.mxu0 0.0
  %5112 = vmatpush1.msra.mxu0 0.0
  %5113 = vmatprep.subr.mxu0 0.0
  %5114 = vmatpush1.msra.mxu0 0.0
  %5115 = vmatprep.subr.mxu0 0.0
  %5116 = vmatpush1.msra.mxu0 0.0
  %5117 = vmatprep.subr.mxu0 0.0
  %5118 = vmatpush1.msra.mxu0 0.0
  %5119 = vmatprep.subr.mxu0 0.0
  %5120 = vmatpush1.msra.mxu0 0.0
  %5121 = vmatprep.subr.mxu0 0.0
  %5122 = vmatpush1.msra.mxu0 0.0
  %5123 = vmatprep.subr.mxu0 0.0
  %5124 = vmatpush1.msra.mxu0 0.0
  %5125 = vmatprep.subr.mxu0 0.0
  %5126 = vmatpush1.msra.mxu0 0.0
  %5127 = vmatprep.mubr.f32.mxu0 0.0
  %5128 = vmatmul.mubr.f32.gmra.mrb[0].mxu0 %v5061
  %v5129 = vpop.f32.mrb[0].mxu0
  %v5130 = vadd.f32 %v5057, %v5129
  %v5131 = vpop.f32.mrb[0].mxu0
  %5132 = vdwg.mxu0
  %v5135 = vunpack.c.l.s4 1983009808
  %v5136 = vunpack.c.0.s8 %v5135
  %v5137 = vlaneseq
  %v5138 = vshrl.u32 %v5137, 7
  %v5139 = vsub.s32 %v5136, %v5138
  %v5140 = vrot.slane %v5130, %v5139
  %5141 = vrot.lane.b32.xlu0 %v5140, 32
  %v5142 = vpop.permute.xlu0 %5141
  %5144 = vst.msk [vmem:[%s5 + $0x2] sm:$0x3] %vm2260, %v5142
  %5145 = vrot.lane.b32.xlu0 %v4639, 80
  %v5146 = vpop.permute.xlu0 %5145
  %vm5148 = vcmask 779904
  %5149 = vst.msk [vmem:[%s6] sm:$0x3] %vm5148, %v5146
  %v5150 = vld [vmem:[%s4 + $0x610] sm:$0xff]
  %v5151 = vld [vmem:[%s4 + $0x618] sm:$0xff]
  %v5152 = vld [vmem:[%s4 + $0x620] sm:$0xff]
  %v5153 = vld [vmem:[%s4 + $0x628] sm:$0xff]
  %v5154 = vld [vmem:[%s4 + $0x630] sm:$0xff]
  %v5155 = vld [vmem:[%s4 + $0x638] sm:$0xff]
  %v5156 = vld [vmem:[%s4 + $0x640] sm:$0xff]
  %v5157 = vld [vmem:[%s4 + $0x648] sm:$0xff]
  %v5158 = vld [vmem:[%s832] ss:$8 sm:$0x3]
  %v5160 = vlaneseq
  %v5161 = vshrl.u32 %v5160, 7
  %v5162 = vsub.s32 0, %v5161
  %v5163 = vrot.slane %v5158, %v5162
  %v5164 = vlaneseq
  %v5165 = vshrl.u32 %v5164, 7
  %v5166 = vsub.s32 1, %v5165
  %v5167 = vrot.slane %v5158, %v5166
  %5170 = vmatprep.subr.mxu0 %v5151
  %5171 = vmatpush1.msra.mxu0 %v5150
  %5172 = vmatprep.subr.mxu0 %v5153
  %5173 = vmatpush1.msra.mxu0 %v5152
  %5174 = vmatprep.subr.mxu0 %v5155
  %5175 = vmatpush1.msra.mxu0 %v5154
  %5176 = vmatprep.subr.mxu0 %v5157
  %5177 = vmatpush1.msra.mxu0 %v5156
  %5178 = vmatprep.subr.mxu0 0.0
  %5179 = vmatpush1.msra.mxu0 0.0
  %5180 = vmatprep.subr.mxu0 0.0
  %5181 = vmatpush1.msra.mxu0 0.0
  %5182 = vmatprep.subr.mxu0 0.0
  %5183 = vmatpush1.msra.mxu0 0.0
  %5184 = vmatprep.subr.mxu0 0.0
  %5185 = vmatpush1.msra.mxu0 0.0
  %5186 = vmatprep.subr.mxu0 0.0
  %5187 = vmatpush1.msra.mxu0 0.0
  %5188 = vmatprep.subr.mxu0 0.0
  %5189 = vmatpush1.msra.mxu0 0.0
  %5190 = vmatprep.subr.mxu0 0.0
  %5191 = vmatpush1.msra.mxu0 0.0
  %5192 = vmatprep.subr.mxu0 0.0
  %5193 = vmatpush1.msra.mxu0 0.0
  %5194 = vmatprep.subr.mxu0 0.0
  %5195 = vmatpush1.msra.mxu0 0.0
  %5196 = vmatprep.subr.mxu0 0.0
  %5197 = vmatpush1.msra.mxu0 0.0
  %5198 = vmatprep.subr.mxu0 0.0
  %5199 = vmatpush1.msra.mxu0 0.0
  %5200 = vmatprep.subr.mxu0 0.0
  %5201 = vmatpush1.msra.mxu0 0.0
  %5202 = vmatprep.subr.mxu0 0.0
  %5203 = vmatpush1.msra.mxu0 0.0
  %5204 = vmatprep.subr.mxu0 0.0
  %5205 = vmatpush1.msra.mxu0 0.0
  %5206 = vmatprep.subr.mxu0 0.0
  %5207 = vmatpush1.msra.mxu0 0.0
  %5208 = vmatprep.subr.mxu0 0.0
  %5209 = vmatpush1.msra.mxu0 0.0
  %5210 = vmatprep.subr.mxu0 0.0
  %5211 = vmatpush1.msra.mxu0 0.0
  %5212 = vmatprep.subr.mxu0 0.0
  %5213 = vmatpush1.msra.mxu0 0.0
  %5214 = vmatprep.subr.mxu0 0.0
  %5215 = vmatpush1.msra.mxu0 0.0
  %5216 = vmatprep.subr.mxu0 0.0
  %5217 = vmatpush1.msra.mxu0 0.0
  %5218 = vmatprep.subr.mxu0 0.0
  %5219 = vmatpush1.msra.mxu0 0.0
  %5220 = vmatprep.subr.mxu0 0.0
  %5221 = vmatpush1.msra.mxu0 0.0
  %5222 = vmatprep.subr.mxu0 0.0
  %5223 = vmatpush1.msra.mxu0 0.0
  %5224 = vmatprep.subr.mxu0 0.0
  %5225 = vmatpush1.msra.mxu0 0.0
  %5226 = vmatprep.subr.mxu0 0.0
  %5227 = vmatpush1.msra.mxu0 0.0
  %5228 = vmatprep.subr.mxu0 0.0
  %5229 = vmatpush1.msra.mxu0 0.0
  %5230 = vmatprep.subr.mxu0 0.0
  %5231 = vmatpush1.msra.mxu0 0.0
  %5232 = vmatprep.subr.mxu0 0.0
  %5233 = vmatpush1.msra.mxu0 0.0
  %5234 = vmatprep.mubr.f32.mxu0 0.0
  %5235 = vmatmul.mubr.f32.gmra.mrb[0].mxu0 %v5061
  %v5236 = vpop.f32.mrb[0].mxu0
  %v5237 = vadd.f32 %v5163, %v5236
  %v5238 = vpop.f32.mrb[0].mxu0
  %v5239 = vadd.f32 %v5167, %v5238
  %5240 = vdwg.mxu0
  %v5241 = vadd.f32 %v584, %v5237
  %v5242 = vadd.f32 %v586, %v5239
  %v5243 = vtanh.pop %v5241
  %v5244 = vtanh.pop %v5242
  %v5245 = vld [vmem:[%s3 + $0x38] sm:$0xff]
  %v5246 = vld [vmem:[%s3 + $0x40] sm:$0xff]
  %v5247 = vld [vmem:[%s3 + $0x48] sm:$0xff]
  %v5248 = vld [vmem:[%s3 + $0x50] sm:$0xff]
  %v5249 = vld [vmem:[%s3 + $0x58] sm:$0xff]
  %v5250 = vld [vmem:[%s3 + $0x60] sm:$0xff]
  %v5251 = vld [vmem:[%s3 + $0x68] sm:$0xff]
  %v5252 = vld [vmem:[%s3 + $0x70] sm:$0xff]
  %v5253 = vld [vmem:[%s3 + $0x78] sm:$0xff]
  %v5254 = vld [vmem:[%s3 + $0x80] sm:$0xff]
  %v5255 = vld [vmem:[%s3 + $0x88] sm:$0xff]
  %v5256 = vld [vmem:[%s3 + $0x90] sm:$0xff]
  %v5257 = vld [vmem:[%s3 + $0x98] sm:$0xff]
  %v5258 = vld [vmem:[%s3 + $0xa0] sm:$0xff]
  %v5259 = vld [vmem:[%s3 + $0xa8] sm:$0xff]
  %v5260 = vld [vmem:[%s3 + $0xb0] sm:$0xff]
  %v5261 = vld [vmem:[%s3 + $0xb8] sm:$0xff]
  %v5262 = vld [vmem:[%s3 + $0xc0] sm:$0xff]
  %v5263 = vld [vmem:[%s3 + $0xc8] sm:$0xff]
  %v5264 = vld [vmem:[%s3 + $0xd0] sm:$0xff]
  %v5265 = vld [vmem:[%s3 + $0xd8] sm:$0xff]
  %v5266 = vld [vmem:[%s3 + $0xe0] sm:$0xff]
  %v5267 = vld [vmem:[%s3 + $0xe8] sm:$0xff]
  %v5268 = vld [vmem:[%s3 + $0xf0] sm:$0xff]
  %v5269 = vld [vmem:[%s3 + $0xf8] sm:$0xff]
  %v5270 = vld [vmem:[%s3 + $0x100] sm:$0xff]
  %v5271 = vld [vmem:[%s3 + $0x108] sm:$0xff]
  %v5272 = vld [vmem:[%s3 + $0x110] sm:$0xff]
  %v5273 = vld [vmem:[%s3 + $0x118] sm:$0xff]
  %v5274 = vld [vmem:[%s3 + $0x120] sm:$0xff]
  %v5275 = vld [vmem:[%s3 + $0x128] sm:$0xff]
  %v5276 = vld [vmem:[%s3 + $0x130] sm:$0xff]
  %v5277 = vld [vmem:[%s3 + $0x138] sm:$0x1]
  %s5279 = vtos %v5277
  %v5280 = vstv %s5279
  %5282 = vmatprep.subr.mxu0 0.0
  %5283 = vmatpush1.msra.mxu0 %v5245
  %5284 = vmatprep.subr.mxu0 0.0
  %5285 = vmatpush1.msra.mxu0 %v5246
  %5286 = vmatprep.subr.mxu0 0.0
  %5287 = vmatpush1.msra.mxu0 %v5247
  %5288 = vmatprep.subr.mxu0 0.0
  %5289 = vmatpush1.msra.mxu0 %v5248
  %5290 = vmatprep.subr.mxu0 0.0
  %5291 = vmatpush1.msra.mxu0 %v5249
  %5292 = vmatprep.subr.mxu0 0.0
  %5293 = vmatpush1.msra.mxu0 %v5250
  %5294 = vmatprep.subr.mxu0 0.0
  %5295 = vmatpush1.msra.mxu0 %v5251
  %5296 = vmatprep.subr.mxu0 0.0
  %5297 = vmatpush1.msra.mxu0 %v5252
  %5298 = vmatprep.subr.mxu0 0.0
  %5299 = vmatpush1.msra.mxu0 %v5253
  %5300 = vmatprep.subr.mxu0 0.0
  %5301 = vmatpush1.msra.mxu0 %v5254
  %5302 = vmatprep.subr.mxu0 0.0
  %5303 = vmatpush1.msra.mxu0 %v5255
  %5304 = vmatprep.subr.mxu0 0.0
  %5305 = vmatpush1.msra.mxu0 %v5256
  %5306 = vmatprep.subr.mxu0 0.0
  %5307 = vmatpush1.msra.mxu0 %v5257
  %5308 = vmatprep.subr.mxu0 0.0
  %5309 = vmatpush1.msra.mxu0 %v5258
  %5310 = vmatprep.subr.mxu0 0.0
  %5311 = vmatpush1.msra.mxu0 %v5259
  %5312 = vmatprep.subr.mxu0 0.0
  %5313 = vmatpush1.msra.mxu0 %v5260
  %5314 = vmatprep.subr.mxu0 0.0
  %5315 = vmatpush1.msra.mxu0 %v5261
  %5316 = vmatprep.subr.mxu0 0.0
  %5317 = vmatpush1.msra.mxu0 %v5262
  %5318 = vmatprep.subr.mxu0 0.0
  %5319 = vmatpush1.msra.mxu0 %v5263
  %5320 = vmatprep.subr.mxu0 0.0
  %5321 = vmatpush1.msra.mxu0 %v5264
  %5322 = vmatprep.subr.mxu0 0.0
  %5323 = vmatpush1.msra.mxu0 %v5265
  %5324 = vmatprep.subr.mxu0 0.0
  %5325 = vmatpush1.msra.mxu0 %v5266
  %5326 = vmatprep.subr.mxu0 0.0
  %5327 = vmatpush1.msra.mxu0 %v5267
  %5328 = vmatprep.subr.mxu0 0.0
  %5329 = vmatpush1.msra.mxu0 %v5268
  %5330 = vmatprep.subr.mxu0 0.0
  %5331 = vmatpush1.msra.mxu0 %v5269
  %5332 = vmatprep.subr.mxu0 0.0
  %5333 = vmatpush1.msra.mxu0 %v5270
  %5334 = vmatprep.subr.mxu0 0.0
  %5335 = vmatpush1.msra.mxu0 %v5271
  %5336 = vmatprep.subr.mxu0 0.0
  %5337 = vmatpush1.msra.mxu0 %v5272
  %5338 = vmatprep.subr.mxu0 0.0
  %5339 = vmatpush1.msra.mxu0 %v5273
  %5340 = vmatprep.subr.mxu0 0.0
  %5341 = vmatpush1.msra.mxu0 %v5274
  %5342 = vmatprep.subr.mxu0 0.0
  %5343 = vmatpush1.msra.mxu0 %v5275
  %5344 = vmatprep.subr.mxu0 0.0
  %5345 = vmatpush1.msra.mxu0 %v5276
  %5346 = vmatprep.mubr.f32.mxu0 %v5244
  %5347 = vmatmul.mubr.f32.gmra.mrb[0].mxu0 %v5243
  %v5348 = vpop.f32.mrb[0].mxu0
  %v5349 = vadd.f32 %v5280, %v5348
  %v5350 = vpop.f32.mrb[0].mxu0
  %5351 = vdwg.mxu0
  %v5352 = vsel %vm1030, %v5349, -inf
  %5353 = vmax.xlane.f32.xlu0 %v5352
  %v5354 = vpop.xlane.xlu0 %5353
  %v5355 = vsub.f32 %v5349, %v5354
  %v5356 = vmul.f32 %v5355, 1.442695
  %v5357 = vpow.pop %v5356
  %v5358 = vsel %vm1030, %v5357, 0.0
  %5359 = vadd.xlane.f32.xlu0 %v5358
  %v5360 = vpop.xlane.xlu0 %5359
  %v5361 = vrcp.pop %v5360
  %v5362 = vmul.f32 %v5357, %v5361
  %v5364 = vsel %vm1042, %v5362, 0
  %5366 = vmatprep.subr.mxu0 0.0
  %5367 = vmatpush1.msra.mxu0 %v117
  %5368 = vmatprep.subr.mxu0 0.0
  %5369 = vmatpush1.msra.mxu0 %v122
  %5370 = vmatprep.subr.mxu0 0.0
  %5371 = vmatpush1.msra.mxu0 0.0
  %5372 = vmatprep.subr.mxu0 0.0
  %5373 = vmatpush1.msra.mxu0 0.0
  %5374 = vmatprep.subr.mxu0 0.0
  %5375 = vmatpush1.msra.mxu0 0.0
  %5376 = vmatprep.subr.mxu0 0.0
  %5377 = vmatpush1.msra.mxu0 0.0
  %5378 = vmatprep.subr.mxu0 0.0
  %5379 = vmatpush1.msra.mxu0 0.0
  %5380 = vmatprep.subr.mxu0 0.0
  %5381 = vmatpush1.msra.mxu0 0.0
  %5382 = vmatprep.subr.mxu0 0.0
  %5383 = vmatpush1.msra.mxu0 0.0
  %5384 = vmatprep.subr.mxu0 0.0
  %5385 = vmatpush1.msra.mxu0 0.0
  %5386 = vmatprep.subr.mxu0 0.0
  %5387 = vmatpush1.msra.mxu0 0.0
  %5388 = vmatprep.subr.mxu0 0.0
  %5389 = vmatpush1.msra.mxu0 0.0
  %5390 = vmatprep.subr.mxu0 0.0
  %5391 = vmatpush1.msra.mxu0 0.0
  %5392 = vmatprep.subr.mxu0 0.0
  %5393 = vmatpush1.msra.mxu0 0.0
  %5394 = vmatprep.subr.mxu0 0.0
  %5395 = vmatpush1.msra.mxu0 0.0
  %5396 = vmatprep.subr.mxu0 0.0
  %5397 = vmatpush1.msra.mxu0 0.0
  %5398 = vmatprep.subr.mxu0 0.0
  %5399 = vmatpush1.msra.mxu0 0.0
  %5400 = vmatprep.subr.mxu0 0.0
  %5401 = vmatpush1.msra.mxu0 0.0
  %5402 = vmatprep.subr.mxu0 0.0
  %5403 = vmatpush1.msra.mxu0 0.0
  %5404 = vmatprep.subr.mxu0 0.0
  %5405 = vmatpush1.msra.mxu0 0.0
  %5406 = vmatprep.subr.mxu0 0.0
  %5407 = vmatpush1.msra.mxu0 0.0
  %5408 = vmatprep.subr.mxu0 0.0
  %5409 = vmatpush1.msra.mxu0 0.0
  %5410 = vmatprep.subr.mxu0 0.0
  %5411 = vmatpush1.msra.mxu0 0.0
  %5412 = vmatprep.subr.mxu0 0.0
  %5413 = vmatpush1.msra.mxu0 0.0
  %5414 = vmatprep.subr.mxu0 0.0
  %5415 = vmatpush1.msra.mxu0 0.0
  %5416 = vmatprep.subr.mxu0 0.0
  %5417 = vmatpush1.msra.mxu0 0.0
  %5418 = vmatprep.subr.mxu0 0.0
  %5419 = vmatpush1.msra.mxu0 0.0
  %5420 = vmatprep.subr.mxu0 0.0
  %5421 = vmatpush1.msra.mxu0 0.0
  %5422 = vmatprep.subr.mxu0 0.0
  %5423 = vmatpush1.msra.mxu0 0.0
  %5424 = vmatprep.subr.mxu0 0.0
  %5425 = vmatpush1.msra.mxu0 0.0
  %5426 = vmatprep.subr.mxu0 0.0
  %5427 = vmatpush1.msra.mxu0 0.0
  %5428 = vmatprep.subr.mxu0 0.0
  %5429 = vmatpush1.msra.mxu0 0.0
  %5430 = vmatprep.mubr.f32.mxu0 0.0
  %5431 = vmatmul.mubr.f32.gmra.mrb[0].mxu0 %v5364
  %v5432 = vpop.f32.mrb[0].mxu0
  %v5433 = vadd.f32 0.0, %v5432
  %v5434 = vpop.f32.mrb[0].mxu0
  %5435 = vdwg.mxu0
  %v5436 = vrot.slane %v5362, 1
  %v5437 = vsel %vm1042, %v5436, 0
  %5439 = vmatprep.subr.mxu0 0.0
  %5440 = vmatpush1.msra.mxu0 %v127
  %5441 = vmatprep.subr.mxu0 0.0
  %5442 = vmatpush1.msra.mxu0 %v132
  %5443 = vmatprep.subr.mxu0 0.0
  %5444 = vmatpush1.msra.mxu0 0.0
  %5445 = vmatprep.subr.mxu0 0.0
  %5446 = vmatpush1.msra.mxu0 0.0
  %5447 = vmatprep.subr.mxu0 0.0
  %5448 = vmatpush1.msra.mxu0 0.0
  %5449 = vmatprep.subr.mxu0 0.0
  %5450 = vmatpush1.msra.mxu0 0.0
  %5451 = vmatprep.subr.mxu0 0.0
  %5452 = vmatpush1.msra.mxu0 0.0
  %5453 = vmatprep.subr.mxu0 0.0
  %5454 = vmatpush1.msra.mxu0 0.0
  %5455 = vmatprep.subr.mxu0 0.0
  %5456 = vmatpush1.msra.mxu0 0.0
  %5457 = vmatprep.subr.mxu0 0.0
  %5458 = vmatpush1.msra.mxu0 0.0
  %5459 = vmatprep.subr.mxu0 0.0
  %5460 = vmatpush1.msra.mxu0 0.0
  %5461 = vmatprep.subr.mxu0 0.0
  %5462 = vmatpush1.msra.mxu0 0.0
  %5463 = vmatprep.subr.mxu0 0.0
  %5464 = vmatpush1.msra.mxu0 0.0
  %5465 = vmatprep.subr.mxu0 0.0
  %5466 = vmatpush1.msra.mxu0 0.0
  %5467 = vmatprep.subr.mxu0 0.0
  %5468 = vmatpush1.msra.mxu0 0.0
  %5469 = vmatprep.subr.mxu0 0.0
  %5470 = vmatpush1.msra.mxu0 0.0
  %5471 = vmatprep.subr.mxu0 0.0
  %5472 = vmatpush1.msra.mxu0 0.0
  %5473 = vmatprep.subr.mxu0 0.0
  %5474 = vmatpush1.msra.mxu0 0.0
  %5475 = vmatprep.subr.mxu0 0.0
  %5476 = vmatpush1.msra.mxu0 0.0
  %5477 = vmatprep.subr.mxu0 0.0
  %5478 = vmatpush1.msra.mxu0 0.0
  %5479 = vmatprep.subr.mxu0 0.0
  %5480 = vmatpush1.msra.mxu0 0.0
  %5481 = vmatprep.subr.mxu0 0.0
  %5482 = vmatpush1.msra.mxu0 0.0
  %5483 = vmatprep.subr.mxu0 0.0
  %5484 = vmatpush1.msra.mxu0 0.0
  %5485 = vmatprep.subr.mxu0 0.0
  %5486 = vmatpush1.msra.mxu0 0.0
  %5487 = vmatprep.subr.mxu0 0.0
  %5488 = vmatpush1.msra.mxu0 0.0
  %5489 = vmatprep.subr.mxu0 0.0
  %5490 = vmatpush1.msra.mxu0 0.0
  %5491 = vmatprep.subr.mxu0 0.0
  %5492 = vmatpush1.msra.mxu0 0.0
  %5493 = vmatprep.subr.mxu0 0.0
  %5494 = vmatpush1.msra.mxu0 0.0
  %5495 = vmatprep.subr.mxu0 0.0
  %5496 = vmatpush1.msra.mxu0 0.0
  %5497 = vmatprep.subr.mxu0 0.0
  %5498 = vmatpush1.msra.mxu0 0.0
  %5499 = vmatprep.subr.mxu0 0.0
  %5500 = vmatpush1.msra.mxu0 0.0
  %5501 = vmatprep.subr.mxu0 0.0
  %5502 = vmatpush1.msra.mxu0 0.0
  %5503 = vmatprep.mubr.f32.mxu0 0.0
  %5504 = vmatmul.mubr.f32.gmra.mrb[0].mxu0 %v5437
  %v5505 = vpop.f32.mrb[0].mxu0
  %v5506 = vadd.f32 0.0, %v5505
  %v5507 = vpop.f32.mrb[0].mxu0
  %5508 = vdwg.mxu0
  %v5510 = vrot.slane %v5506, 7
  %v5512 = vsel %vm1192, %v5433, %v5510
  %s5513 = scalar_lea.vmem %s2, 12
  %v5514 = vld [vmem:[%s5513] sm:$0x3]
  %v5515 = vld [vmem:[%s3 + $0x198] sm:$0xff]
  %v5516 = vld [vmem:[%s3 + $0x1a0] sm:$0xff]
  %v5517 = vld [vmem:[%s3 + $0x1a8] sm:$0xff]
  %v5518 = vld [vmem:[%s3 + $0x1b0] sm:$0xff]
  %v5519 = vld [vmem:[%s3 + $0x1b8] sm:$0xff]
  %v5520 = vld [vmem:[%s3 + $0x1c0] sm:$0xff]
  %v5522 = vsel %vm589, %v5512, 0
  %5524 = vmatprep.subr.mxu0 0.0
  %5525 = vmatpush1.msra.mxu0 %v5517
  %5526 = vmatprep.subr.mxu0 0.0
  %5527 = vmatpush1.msra.mxu0 %v5518
  %5528 = vmatprep.subr.mxu0 0.0
  %5529 = vmatpush1.msra.mxu0 %v5519
  %5530 = vmatprep.subr.mxu0 0.0
  %5531 = vmatpush1.msra.mxu0 %v5520
  %5532 = vmatprep.subr.mxu0 0.0
  %5533 = vmatpush1.msra.mxu0 0.0
  %5534 = vmatprep.subr.mxu0 0.0
  %5535 = vmatpush1.msra.mxu0 0.0
  %5536 = vmatprep.subr.mxu0 0.0
  %5537 = vmatpush1.msra.mxu0 0.0
  %5538 = vmatprep.subr.mxu0 0.0
  %5539 = vmatpush1.msra.mxu0 0.0
  %5540 = vmatprep.subr.mxu0 0.0
  %5541 = vmatpush1.msra.mxu0 0.0
  %5542 = vmatprep.subr.mxu0 0.0
  %5543 = vmatpush1.msra.mxu0 0.0
  %5544 = vmatprep.subr.mxu0 0.0
  %5545 = vmatpush1.msra.mxu0 0.0
  %5546 = vmatprep.subr.mxu0 0.0
  %5547 = vmatpush1.msra.mxu0 0.0
  %5548 = vmatprep.subr.mxu0 0.0
  %5549 = vmatpush1.msra.mxu0 0.0
  %5550 = vmatprep.subr.mxu0 0.0
  %5551 = vmatpush1.msra.mxu0 0.0
  %5552 = vmatprep.subr.mxu0 0.0
  %5553 = vmatpush1.msra.mxu0 0.0
  %5554 = vmatprep.subr.mxu0 0.0
  %5555 = vmatpush1.msra.mxu0 0.0
  %5556 = vmatprep.subr.mxu0 0.0
  %5557 = vmatpush1.msra.mxu0 0.0
  %5558 = vmatprep.subr.mxu0 0.0
  %5559 = vmatpush1.msra.mxu0 0.0
  %5560 = vmatprep.subr.mxu0 0.0
  %5561 = vmatpush1.msra.mxu0 0.0
  %5562 = vmatprep.subr.mxu0 0.0
  %5563 = vmatpush1.msra.mxu0 0.0
  %5564 = vmatprep.subr.mxu0 0.0
  %5565 = vmatpush1.msra.mxu0 0.0
  %5566 = vmatprep.subr.mxu0 0.0
  %5567 = vmatpush1.msra.mxu0 0.0
  %5568 = vmatprep.subr.mxu0 0.0
  %5569 = vmatpush1.msra.mxu0 0.0
  %5570 = vmatprep.subr.mxu0 0.0
  %5571 = vmatpush1.msra.mxu0 0.0
  %5572 = vmatprep.subr.mxu0 0.0
  %5573 = vmatpush1.msra.mxu0 0.0
  %5574 = vmatprep.subr.mxu0 0.0
  %5575 = vmatpush1.msra.mxu0 0.0
  %5576 = vmatprep.subr.mxu0 0.0
  %5577 = vmatpush1.msra.mxu0 0.0
  %5578 = vmatprep.subr.mxu0 0.0
  %5579 = vmatpush1.msra.mxu0 0.0
  %5580 = vmatprep.subr.mxu0 0.0
  %5581 = vmatpush1.msra.mxu0 0.0
  %5582 = vmatprep.subr.mxu0 0.0
  %5583 = vmatpush1.msra.mxu0 0.0
  %5584 = vmatprep.subr.mxu0 0.0
  %5585 = vmatpush1.msra.mxu0 0.0
  %5586 = vmatprep.subr.mxu0 0.0
  %5587 = vmatpush1.msra.mxu0 0.0
  %5588 = vmatprep.mubr.f32.mxu0 0.0
  %5589 = vmatmul.mubr.f32.gmra.mrb[0].mxu0 %v5522
  %v5590 = vpop.f32.mrb[0].mxu0
  %v5591 = vadd.f32 0.0, %v5590
  %v5592 = vpop.f32.mrb[0].mxu0
  %5593 = vdwg.mxu0
  %v5595 = vsel %vm1042, %v5514, 0
  %5597 = vmatprep.subr.mxu0 0.0
  %5598 = vmatpush1.msra.mxu0 %v5515
  %5599 = vmatprep.subr.mxu0 0.0
  %5600 = vmatpush1.msra.mxu0 %v5516
  %5601 = vmatprep.subr.mxu0 0.0
  %5602 = vmatpush1.msra.mxu0 0.0
  %5603 = vmatprep.subr.mxu0 0.0
  %5604 = vmatpush1.msra.mxu0 0.0
  %5605 = vmatprep.subr.mxu0 0.0
  %5606 = vmatpush1.msra.mxu0 0.0
  %5607 = vmatprep.subr.mxu0 0.0
  %5608 = vmatpush1.msra.mxu0 0.0
  %5609 = vmatprep.subr.mxu0 0.0
  %5610 = vmatpush1.msra.mxu0 0.0
  %5611 = vmatprep.subr.mxu0 0.0
  %5612 = vmatpush1.msra.mxu0 0.0
  %5613 = vmatprep.subr.mxu0 0.0
  %5614 = vmatpush1.msra.mxu0 0.0
  %5615 = vmatprep.subr.mxu0 0.0
  %5616 = vmatpush1.msra.mxu0 0.0
  %5617 = vmatprep.subr.mxu0 0.0
  %5618 = vmatpush1.msra.mxu0 0.0
  %5619 = vmatprep.subr.mxu0 0.0
  %5620 = vmatpush1.msra.mxu0 0.0
  %5621 = vmatprep.subr.mxu0 0.0
  %5622 = vmatpush1.msra.mxu0 0.0
  %5623 = vmatprep.subr.mxu0 0.0
  %5624 = vmatpush1.msra.mxu0 0.0
  %5625 = vmatprep.subr.mxu0 0.0
  %5626 = vmatpush1.msra.mxu0 0.0
  %5627 = vmatprep.subr.mxu0 0.0
  %5628 = vmatpush1.msra.mxu0 0.0
  %5629 = vmatprep.subr.mxu0 0.0
  %5630 = vmatpush1.msra.mxu0 0.0
  %5631 = vmatprep.subr.mxu0 0.0
  %5632 = vmatpush1.msra.mxu0 0.0
  %5633 = vmatprep.subr.mxu0 0.0
  %5634 = vmatpush1.msra.mxu0 0.0
  %5635 = vmatprep.subr.mxu0 0.0
  %5636 = vmatpush1.msra.mxu0 0.0
  %5637 = vmatprep.subr.mxu0 0.0
  %5638 = vmatpush1.msra.mxu0 0.0
  %5639 = vmatprep.subr.mxu0 0.0
  %5640 = vmatpush1.msra.mxu0 0.0
  %5641 = vmatprep.subr.mxu0 0.0
  %5642 = vmatpush1.msra.mxu0 0.0
  %5643 = vmatprep.subr.mxu0 0.0
  %5644 = vmatpush1.msra.mxu0 0.0
  %5645 = vmatprep.subr.mxu0 0.0
  %5646 = vmatpush1.msra.mxu0 0.0
  %5647 = vmatprep.subr.mxu0 0.0
  %5648 = vmatpush1.msra.mxu0 0.0
  %5649 = vmatprep.subr.mxu0 0.0
  %5650 = vmatpush1.msra.mxu0 0.0
  %5651 = vmatprep.subr.mxu0 0.0
  %5652 = vmatpush1.msra.mxu0 0.0
  %5653 = vmatprep.subr.mxu0 0.0
  %5654 = vmatpush1.msra.mxu0 0.0
  %5655 = vmatprep.subr.mxu0 0.0
  %5656 = vmatpush1.msra.mxu0 0.0
  %5657 = vmatprep.subr.mxu0 0.0
  %5658 = vmatpush1.msra.mxu0 0.0
  %5659 = vmatprep.subr.mxu0 0.0
  %5660 = vmatpush1.msra.mxu0 0.0
  %5661 = vmatprep.mubr.f32.mxu0 0.0
  %5662 = vmatmul.mubr.f32.gmra.mrb[0].mxu0 %v5595
  %v5663 = vpop.f32.mrb[0].mxu0
  %v5664 = vadd.f32 %v5591, %v5663
  %v5665 = vpop.f32.mrb[0].mxu0
  %5666 = vdwg.mxu0
  %v5667 = vld [vmem:[%s3 + $0x1c8] sm:$0xff]
  %v5668 = vld [vmem:[%s3 + $0x1d0] sm:$0xff]
  %v5669 = vld [vmem:[%s3 + $0x1d8] sm:$0xff]
  %v5670 = vld [vmem:[%s3 + $0x1e0] sm:$0xff]
  %5671 = vmatprep.subr.mxu0 0.0
  %5672 = vmatpush1.msra.mxu0 %v5667
  %5673 = vmatprep.subr.mxu0 0.0
  %5674 = vmatpush1.msra.mxu0 %v5668
  %5675 = vmatprep.subr.mxu0 0.0
  %5676 = vmatpush1.msra.mxu0 %v5669
  %5677 = vmatprep.subr.mxu0 0.0
  %5678 = vmatpush1.msra.mxu0 %v5670
  %5679 = vmatprep.subr.mxu0 0.0
  %5680 = vmatpush1.msra.mxu0 0.0
  %5681 = vmatprep.subr.mxu0 0.0
  %5682 = vmatpush1.msra.mxu0 0.0
  %5683 = vmatprep.subr.mxu0 0.0
  %5684 = vmatpush1.msra.mxu0 0.0
  %5685 = vmatprep.subr.mxu0 0.0
  %5686 = vmatpush1.msra.mxu0 0.0
  %5687 = vmatprep.subr.mxu0 0.0
  %5688 = vmatpush1.msra.mxu0 0.0
  %5689 = vmatprep.subr.mxu0 0.0
  %5690 = vmatpush1.msra.mxu0 0.0
  %5691 = vmatprep.subr.mxu0 0.0
  %5692 = vmatpush1.msra.mxu0 0.0
  %5693 = vmatprep.subr.mxu0 0.0
  %5694 = vmatpush1.msra.mxu0 0.0
  %5695 = vmatprep.subr.mxu0 0.0
  %5696 = vmatpush1.msra.mxu0 0.0
  %5697 = vmatprep.subr.mxu0 0.0
  %5698 = vmatpush1.msra.mxu0 0.0
  %5699 = vmatprep.subr.mxu0 0.0
  %5700 = vmatpush1.msra.mxu0 0.0
  %5701 = vmatprep.subr.mxu0 0.0
  %5702 = vmatpush1.msra.mxu0 0.0
  %5703 = vmatprep.subr.mxu0 0.0
  %5704 = vmatpush1.msra.mxu0 0.0
  %5705 = vmatprep.subr.mxu0 0.0
  %5706 = vmatpush1.msra.mxu0 0.0
  %5707 = vmatprep.subr.mxu0 0.0
  %5708 = vmatpush1.msra.mxu0 0.0
  %5709 = vmatprep.subr.mxu0 0.0
  %5710 = vmatpush1.msra.mxu0 0.0
  %5711 = vmatprep.subr.mxu0 0.0
  %5712 = vmatpush1.msra.mxu0 0.0
  %5713 = vmatprep.subr.mxu0 0.0
  %5714 = vmatpush1.msra.mxu0 0.0
  %5715 = vmatprep.subr.mxu0 0.0
  %5716 = vmatpush1.msra.mxu0 0.0
  %5717 = vmatprep.subr.mxu0 0.0
  %5718 = vmatpush1.msra.mxu0 0.0
  %5719 = vmatprep.subr.mxu0 0.0
  %5720 = vmatpush1.msra.mxu0 0.0
  %5721 = vmatprep.subr.mxu0 0.0
  %5722 = vmatpush1.msra.mxu0 0.0
  %5723 = vmatprep.subr.mxu0 0.0
  %5724 = vmatpush1.msra.mxu0 0.0
  %5725 = vmatprep.subr.mxu0 0.0
  %5726 = vmatpush1.msra.mxu0 0.0
  %5727 = vmatprep.subr.mxu0 0.0
  %5728 = vmatpush1.msra.mxu0 0.0
  %5729 = vmatprep.subr.mxu0 0.0
  %5730 = vmatpush1.msra.mxu0 0.0
  %5731 = vmatprep.subr.mxu0 0.0
  %5732 = vmatpush1.msra.mxu0 0.0
  %5733 = vmatprep.subr.mxu0 0.0
  %5734 = vmatpush1.msra.mxu0 0.0
  %5735 = vmatprep.mubr.f32.mxu0 0.0
  %5736 = vmatmul.mubr.f32.gmra.mrb[0].mxu0 %v5061
  %v5737 = vpop.f32.mrb[0].mxu0
  %v5738 = vadd.f32 0.0, %v5737
  %v5739 = vpop.f32.mrb[0].mxu0
  %5740 = vdwg.mxu0
  %v5741 = vadd.f32 %v5664, %v5738
  %v5742 = vld [vmem:[%s3 + $0x1e8] sm:$0x1]
  %v5743 = vlaneseq
  %v5744 = vshrl.u32 %v5743, 7
  %v5745 = vsub.s32 0, %v5744
  %v5746 = vrot.slane %v5742, %v5745
  %v5747 = vadd.f32 %v5741, %v5746
  %v5748 = vxor.u32 %v5747, 2147483648
  %v5749 = vmul.f32 %v5748, 1.442695
  %v5750 = vpow.pop %v5749
  %v5751 = vadd.f32 %v5750, 1.0
  %v5752 = vrcp.pop %v5751
  %v5753 = vmul.f32 1.0, %v5752
  %v5754 = vtanh.pop %v5747
  %v5755 = vmul.f32 %v5753, %v5042
  %5757 = vrot.lane.b32.xlu0 %v5754, 64
  %v5758 = vpop.permute.xlu0 %5757
  %v5760 = vmul.f32 %v5753, %v5758
  %5762 = vrot.lane.b32.xlu0 %v5760, 32
  %v5763 = vpop.permute.xlu0 %5762
  %v5765 = vadd.f32 %v5755, %v5763
  %v5766 = vtanh.pop %v5765
  %5768 = vrot.lane.b32.xlu0 %v5766, 64
  %v5769 = vpop.permute.xlu0 %5768
  %v5771 = vmul.f32 %v5753, %v5769
  %v5772 = vld [vmem:[%s3 + $0x1f0] sm:$0xff]
  %v5773 = vld [vmem:[%s3 + $0x1f8] sm:$0xff]
  %v5774 = vld [vmem:[%s3 + $0x200] sm:$0xff]
  %v5775 = vld [vmem:[%s3 + $0x208] sm:$0xff]
  %v5776 = vld [vmem:[%s3 + $0x210] sm:$0x1]
  %v5777 = vlaneseq
  %v5778 = vshrl.u32 %v5777, 7
  %v5779 = vsub.s32 0, %v5778
  %v5780 = vrot.slane %v5776, %v5779
  %5782 = vrot.lane.b32.xlu0 %v5771, 32
  %v5783 = vpop.permute.xlu0 %5782
  %v5784 = vsel %vm589, %v5783, 0
  %5786 = vmatprep.subr.mxu0 0.0
  %5787 = vmatpush1.msra.mxu0 %v5772
  %5788 = vmatprep.subr.mxu0 0.0
  %5789 = vmatpush1.msra.mxu0 %v5773
  %5790 = vmatprep.subr.mxu0 0.0
  %5791 = vmatpush1.msra.mxu0 %v5774
  %5792 = vmatprep.subr.mxu0 0.0
  %5793 = vmatpush1.msra.mxu0 %v5775
  %5794 = vmatprep.subr.mxu0 0.0
  %5795 = vmatpush1.msra.mxu0 0.0
  %5796 = vmatprep.subr.mxu0 0.0
  %5797 = vmatpush1.msra.mxu0 0.0
  %5798 = vmatprep.subr.mxu0 0.0
  %5799 = vmatpush1.msra.mxu0 0.0
  %5800 = vmatprep.subr.mxu0 0.0
  %5801 = vmatpush1.msra.mxu0 0.0
  %5802 = vmatprep.subr.mxu0 0.0
  %5803 = vmatpush1.msra.mxu0 0.0
  %5804 = vmatprep.subr.mxu0 0.0
  %5805 = vmatpush1.msra.mxu0 0.0
  %5806 = vmatprep.subr.mxu0 0.0
  %5807 = vmatpush1.msra.mxu0 0.0
  %5808 = vmatprep.subr.mxu0 0.0
  %5809 = vmatpush1.msra.mxu0 0.0
  %5810 = vmatprep.subr.mxu0 0.0
  %5811 = vmatpush1.msra.mxu0 0.0
  %5812 = vmatprep.subr.mxu0 0.0
  %5813 = vmatpush1.msra.mxu0 0.0
  %5814 = vmatprep.subr.mxu0 0.0
  %5815 = vmatpush1.msra.mxu0 0.0
  %5816 = vmatprep.subr.mxu0 0.0
  %5817 = vmatpush1.msra.mxu0 0.0
  %5818 = vmatprep.subr.mxu0 0.0
  %5819 = vmatpush1.msra.mxu0 0.0
  %5820 = vmatprep.subr.mxu0 0.0
  %5821 = vmatpush1.msra.mxu0 0.0
  %5822 = vmatprep.subr.mxu0 0.0
  %5823 = vmatpush1.msra.mxu0 0.0
  %5824 = vmatprep.subr.mxu0 0.0
  %5825 = vmatpush1.msra.mxu0 0.0
  %5826 = vmatprep.subr.mxu0 0.0
  %5827 = vmatpush1.msra.mxu0 0.0
  %5828 = vmatprep.subr.mxu0 0.0
  %5829 = vmatpush1.msra.mxu0 0.0
  %5830 = vmatprep.subr.mxu0 0.0
  %5831 = vmatpush1.msra.mxu0 0.0
  %5832 = vmatprep.subr.mxu0 0.0
  %5833 = vmatpush1.msra.mxu0 0.0
  %5834 = vmatprep.subr.mxu0 0.0
  %5835 = vmatpush1.msra.mxu0 0.0
  %5836 = vmatprep.subr.mxu0 0.0
  %5837 = vmatpush1.msra.mxu0 0.0
  %5838 = vmatprep.subr.mxu0 0.0
  %5839 = vmatpush1.msra.mxu0 0.0
  %5840 = vmatprep.subr.mxu0 0.0
  %5841 = vmatpush1.msra.mxu0 0.0
  %5842 = vmatprep.subr.mxu0 0.0
  %5843 = vmatpush1.msra.mxu0 0.0
  %5844 = vmatprep.subr.mxu0 0.0
  %5845 = vmatpush1.msra.mxu0 0.0
  %5846 = vmatprep.subr.mxu0 0.0
  %5847 = vmatpush1.msra.mxu0 0.0
  %5848 = vmatprep.subr.mxu0 0.0
  %5849 = vmatpush1.msra.mxu0 0.0
  %5850 = vmatprep.mubr.f32.mxu0 0.0
  %5851 = vmatmul.mubr.f32.gmra.mrb[0].mxu0 %v5784
  %v5852 = vpop.f32.mrb[0].mxu0
  %v5853 = vadd.f32 %v5780, %v5852
  %v5854 = vpop.f32.mrb[0].mxu0
  %5855 = vdwg.mxu0
  %v5858 = vunpack.c.l.s4 1983009808
  %v5859 = vunpack.c.0.s8 %v5858
  %v5860 = vlaneseq
  %v5861 = vshrl.u32 %v5860, 7
  %v5862 = vsub.s32 %v5859, %v5861
  %v5863 = vrot.slane %v5853, %v5862
  %5864 = vrot.lane.b32.xlu0 %v5863, 64
  %v5865 = vpop.permute.xlu0 %5864
  %5867 = vst.msk [vmem:[%s5 + $0x2] sm:$0x3] %vm2984, %v5865
  %5868 = vrot.lane.b32.xlu0 %v5362, 96
  %v5869 = vpop.permute.xlu0 %5868
  %vm5871 = vcmask 911104
  %5872 = vst.msk [vmem:[%s6] sm:$0x3] %vm5871, %v5869
  %v5873 = vld [vmem:[%s4 + $0x610] sm:$0xff]
  %v5874 = vld [vmem:[%s4 + $0x618] sm:$0xff]
  %v5875 = vld [vmem:[%s4 + $0x620] sm:$0xff]
  %v5876 = vld [vmem:[%s4 + $0x628] sm:$0xff]
  %v5877 = vld [vmem:[%s4 + $0x630] sm:$0xff]
  %v5878 = vld [vmem:[%s4 + $0x638] sm:$0xff]
  %v5879 = vld [vmem:[%s4 + $0x640] sm:$0xff]
  %v5880 = vld [vmem:[%s4 + $0x648] sm:$0xff]
  %v5881 = vld [vmem:[%s832] ss:$8 sm:$0x3]
  %v5883 = vlaneseq
  %v5884 = vshrl.u32 %v5883, 7
  %v5885 = vsub.s32 0, %v5884
  %v5886 = vrot.slane %v5881, %v5885
  %v5887 = vlaneseq
  %v5888 = vshrl.u32 %v5887, 7
  %v5889 = vsub.s32 1, %v5888
  %v5890 = vrot.slane %v5881, %v5889
  %5893 = vmatprep.subr.mxu0 %v5874
  %5894 = vmatpush1.msra.mxu0 %v5873
  %5895 = vmatprep.subr.mxu0 %v5876
  %5896 = vmatpush1.msra.mxu0 %v5875
  %5897 = vmatprep.subr.mxu0 %v5878
  %5898 = vmatpush1.msra.mxu0 %v5877
  %5899 = vmatprep.subr.mxu0 %v5880
  %5900 = vmatpush1.msra.mxu0 %v5879
  %5901 = vmatprep.subr.mxu0 0.0
  %5902 = vmatpush1.msra.mxu0 0.0
  %5903 = vmatprep.subr.mxu0 0.0
  %5904 = vmatpush1.msra.mxu0 0.0
  %5905 = vmatprep.subr.mxu0 0.0
  %5906 = vmatpush1.msra.mxu0 0.0
  %5907 = vmatprep.subr.mxu0 0.0
  %5908 = vmatpush1.msra.mxu0 0.0
  %5909 = vmatprep.subr.mxu0 0.0
  %5910 = vmatpush1.msra.mxu0 0.0
  %5911 = vmatprep.subr.mxu0 0.0
  %5912 = vmatpush1.msra.mxu0 0.0
  %5913 = vmatprep.subr.mxu0 0.0
  %5914 = vmatpush1.msra.mxu0 0.0
  %5915 = vmatprep.subr.mxu0 0.0
  %5916 = vmatpush1.msra.mxu0 0.0
  %5917 = vmatprep.subr.mxu0 0.0
  %5918 = vmatpush1.msra.mxu0 0.0
  %5919 = vmatprep.subr.mxu0 0.0
  %5920 = vmatpush1.msra.mxu0 0.0
  %5921 = vmatprep.subr.mxu0 0.0
  %5922 = vmatpush1.msra.mxu0 0.0
  %5923 = vmatprep.subr.mxu0 0.0
  %5924 = vmatpush1.msra.mxu0 0.0
  %5925 = vmatprep.subr.mxu0 0.0
  %5926 = vmatpush1.msra.mxu0 0.0
  %5927 = vmatprep.subr.mxu0 0.0
  %5928 = vmatpush1.msra.mxu0 0.0
  %5929 = vmatprep.subr.mxu0 0.0
  %5930 = vmatpush1.msra.mxu0 0.0
  %5931 = vmatprep.subr.mxu0 0.0
  %5932 = vmatpush1.msra.mxu0 0.0
  %5933 = vmatprep.subr.mxu0 0.0
  %5934 = vmatpush1.msra.mxu0 0.0
  %5935 = vmatprep.subr.mxu0 0.0
  %5936 = vmatpush1.msra.mxu0 0.0
  %5937 = vmatprep.subr.mxu0 0.0
  %5938 = vmatpush1.msra.mxu0 0.0
  %5939 = vmatprep.subr.mxu0 0.0
  %5940 = vmatpush1.msra.mxu0 0.0
  %5941 = vmatprep.subr.mxu0 0.0
  %5942 = vmatpush1.msra.mxu0 0.0
  %5943 = vmatprep.subr.mxu0 0.0
  %5944 = vmatpush1.msra.mxu0 0.0
  %5945 = vmatprep.subr.mxu0 0.0
  %5946 = vmatpush1.msra.mxu0 0.0
  %5947 = vmatprep.subr.mxu0 0.0
  %5948 = vmatpush1.msra.mxu0 0.0
  %5949 = vmatprep.subr.mxu0 0.0
  %5950 = vmatpush1.msra.mxu0 0.0
  %5951 = vmatprep.subr.mxu0 0.0
  %5952 = vmatpush1.msra.mxu0 0.0
  %5953 = vmatprep.subr.mxu0 0.0
  %5954 = vmatpush1.msra.mxu0 0.0
  %5955 = vmatprep.subr.mxu0 0.0
  %5956 = vmatpush1.msra.mxu0 0.0
  %5957 = vmatprep.mubr.f32.mxu0 0.0
  %5958 = vmatmul.mubr.f32.gmra.mrb[0].mxu0 %v5784
  %v5959 = vpop.f32.mrb[0].mxu0
  %v5960 = vadd.f32 %v5886, %v5959
  %v5961 = vpop.f32.mrb[0].mxu0
  %v5962 = vadd.f32 %v5890, %v5961
  %5963 = vdwg.mxu0
  %v5964 = vadd.f32 %v584, %v5960
  %v5965 = vadd.f32 %v586, %v5962
  %v5966 = vtanh.pop %v5964
  %v5967 = vtanh.pop %v5965
  %v5968 = vld [vmem:[%s3 + $0x38] sm:$0xff]
  %v5969 = vld [vmem:[%s3 + $0x40] sm:$0xff]
  %v5970 = vld [vmem:[%s3 + $0x48] sm:$0xff]
  %v5971 = vld [vmem:[%s3 + $0x50] sm:$0xff]
  %v5972 = vld [vmem:[%s3 + $0x58] sm:$0xff]
  %v5973 = vld [vmem:[%s3 + $0x60] sm:$0xff]
  %v5974 = vld [vmem:[%s3 + $0x68] sm:$0xff]
  %v5975 = vld [vmem:[%s3 + $0x70] sm:$0xff]
  %v5976 = vld [vmem:[%s3 + $0x78] sm:$0xff]
  %v5977 = vld [vmem:[%s3 + $0x80] sm:$0xff]
  %v5978 = vld [vmem:[%s3 + $0x88] sm:$0xff]
  %v5979 = vld [vmem:[%s3 + $0x90] sm:$0xff]
  %v5980 = vld [vmem:[%s3 + $0x98] sm:$0xff]
  %v5981 = vld [vmem:[%s3 + $0xa0] sm:$0xff]
  %v5982 = vld [vmem:[%s3 + $0xa8] sm:$0xff]
  %v5983 = vld [vmem:[%s3 + $0xb0] sm:$0xff]
  %v5984 = vld [vmem:[%s3 + $0xb8] sm:$0xff]
  %v5985 = vld [vmem:[%s3 + $0xc0] sm:$0xff]
  %v5986 = vld [vmem:[%s3 + $0xc8] sm:$0xff]
  %v5987 = vld [vmem:[%s3 + $0xd0] sm:$0xff]
  %v5988 = vld [vmem:[%s3 + $0xd8] sm:$0xff]
  %v5989 = vld [vmem:[%s3 + $0xe0] sm:$0xff]
  %v5990 = vld [vmem:[%s3 + $0xe8] sm:$0xff]
  %v5991 = vld [vmem:[%s3 + $0xf0] sm:$0xff]
  %v5992 = vld [vmem:[%s3 + $0xf8] sm:$0xff]
  %v5993 = vld [vmem:[%s3 + $0x100] sm:$0xff]
  %v5994 = vld [vmem:[%s3 + $0x108] sm:$0xff]
  %v5995 = vld [vmem:[%s3 + $0x110] sm:$0xff]
  %v5996 = vld [vmem:[%s3 + $0x118] sm:$0xff]
  %v5997 = vld [vmem:[%s3 + $0x120] sm:$0xff]
  %v5998 = vld [vmem:[%s3 + $0x128] sm:$0xff]
  %v5999 = vld [vmem:[%s3 + $0x130] sm:$0xff]
  %v6000 = vld [vmem:[%s3 + $0x138] sm:$0x1]
  %s6002 = vtos %v6000
  %v6003 = vstv %s6002
  %6005 = vmatprep.subr.mxu0 0.0
  %6006 = vmatpush1.msra.mxu0 %v5968
  %6007 = vmatprep.subr.mxu0 0.0
  %6008 = vmatpush1.msra.mxu0 %v5969
  %6009 = vmatprep.subr.mxu0 0.0
  %6010 = vmatpush1.msra.mxu0 %v5970
  %6011 = vmatprep.subr.mxu0 0.0
  %6012 = vmatpush1.msra.mxu0 %v5971
  %6013 = vmatprep.subr.mxu0 0.0
  %6014 = vmatpush1.msra.mxu0 %v5972
  %6015 = vmatprep.subr.mxu0 0.0
  %6016 = vmatpush1.msra.mxu0 %v5973
  %6017 = vmatprep.subr.mxu0 0.0
  %6018 = vmatpush1.msra.mxu0 %v5974
  %6019 = vmatprep.subr.mxu0 0.0
  %6020 = vmatpush1.msra.mxu0 %v5975
  %6021 = vmatprep.subr.mxu0 0.0
  %6022 = vmatpush1.msra.mxu0 %v5976
  %6023 = vmatprep.subr.mxu0 0.0
  %6024 = vmatpush1.msra.mxu0 %v5977
  %6025 = vmatprep.subr.mxu0 0.0
  %6026 = vmatpush1.msra.mxu0 %v5978
  %6027 = vmatprep.subr.mxu0 0.0
  %6028 = vmatpush1.msra.mxu0 %v5979
  %6029 = vmatprep.subr.mxu0 0.0
  %6030 = vmatpush1.msra.mxu0 %v5980
  %6031 = vmatprep.subr.mxu0 0.0
  %6032 = vmatpush1.msra.mxu0 %v5981
  %6033 = vmatprep.subr.mxu0 0.0
  %6034 = vmatpush1.msra.mxu0 %v5982
  %6035 = vmatprep.subr.mxu0 0.0
  %6036 = vmatpush1.msra.mxu0 %v5983
  %6037 = vmatprep.subr.mxu0 0.0
  %6038 = vmatpush1.msra.mxu0 %v5984
  %6039 = vmatprep.subr.mxu0 0.0
  %6040 = vmatpush1.msra.mxu0 %v5985
  %6041 = vmatprep.subr.mxu0 0.0
  %6042 = vmatpush1.msra.mxu0 %v5986
  %6043 = vmatprep.subr.mxu0 0.0
  %6044 = vmatpush1.msra.mxu0 %v5987
  %6045 = vmatprep.subr.mxu0 0.0
  %6046 = vmatpush1.msra.mxu0 %v5988
  %6047 = vmatprep.subr.mxu0 0.0
  %6048 = vmatpush1.msra.mxu0 %v5989
  %6049 = vmatprep.subr.mxu0 0.0
  %6050 = vmatpush1.msra.mxu0 %v5990
  %6051 = vmatprep.subr.mxu0 0.0
  %6052 = vmatpush1.msra.mxu0 %v5991
  %6053 = vmatprep.subr.mxu0 0.0
  %6054 = vmatpush1.msra.mxu0 %v5992
  %6055 = vmatprep.subr.mxu0 0.0
  %6056 = vmatpush1.msra.mxu0 %v5993
  %6057 = vmatprep.subr.mxu0 0.0
  %6058 = vmatpush1.msra.mxu0 %v5994
  %6059 = vmatprep.subr.mxu0 0.0
  %6060 = vmatpush1.msra.mxu0 %v5995
  %6061 = vmatprep.subr.mxu0 0.0
  %6062 = vmatpush1.msra.mxu0 %v5996
  %6063 = vmatprep.subr.mxu0 0.0
  %6064 = vmatpush1.msra.mxu0 %v5997
  %6065 = vmatprep.subr.mxu0 0.0
  %6066 = vmatpush1.msra.mxu0 %v5998
  %6067 = vmatprep.subr.mxu0 0.0
  %6068 = vmatpush1.msra.mxu0 %v5999
  %6069 = vmatprep.mubr.f32.mxu0 %v5967
  %6070 = vmatmul.mubr.f32.gmra.mrb[0].mxu0 %v5966
  %v6071 = vpop.f32.mrb[0].mxu0
  %v6072 = vadd.f32 %v6003, %v6071
  %v6073 = vpop.f32.mrb[0].mxu0
  %6074 = vdwg.mxu0
  %v6075 = vsel %vm1030, %v6072, -inf
  %6076 = vmax.xlane.f32.xlu0 %v6075
  %v6077 = vpop.xlane.xlu0 %6076
  %v6078 = vsub.f32 %v6072, %v6077
  %v6079 = vmul.f32 %v6078, 1.442695
  %v6080 = vpow.pop %v6079
  %v6081 = vsel %vm1030, %v6080, 0.0
  %6082 = vadd.xlane.f32.xlu0 %v6081
  %v6083 = vpop.xlane.xlu0 %6082
  %v6084 = vrcp.pop %v6083
  %v6085 = vmul.f32 %v6080, %v6084
  %v6087 = vsel %vm1042, %v6085, 0
  %6089 = vmatprep.subr.mxu0 0.0
  %6090 = vmatpush1.msra.mxu0 %v117
  %6091 = vmatprep.subr.mxu0 0.0
  %6092 = vmatpush1.msra.mxu0 %v122
  %6093 = vmatprep.subr.mxu0 0.0
  %6094 = vmatpush1.msra.mxu0 0.0
  %6095 = vmatprep.subr.mxu0 0.0
  %6096 = vmatpush1.msra.mxu0 0.0
  %6097 = vmatprep.subr.mxu0 0.0
  %6098 = vmatpush1.msra.mxu0 0.0
  %6099 = vmatprep.subr.mxu0 0.0
  %6100 = vmatpush1.msra.mxu0 0.0
  %6101 = vmatprep.subr.mxu0 0.0
  %6102 = vmatpush1.msra.mxu0 0.0
  %6103 = vmatprep.subr.mxu0 0.0
  %6104 = vmatpush1.msra.mxu0 0.0
  %6105 = vmatprep.subr.mxu0 0.0
  %6106 = vmatpush1.msra.mxu0 0.0
  %6107 = vmatprep.subr.mxu0 0.0
  %6108 = vmatpush1.msra.mxu0 0.0
  %6109 = vmatprep.subr.mxu0 0.0
  %6110 = vmatpush1.msra.mxu0 0.0
  %6111 = vmatprep.subr.mxu0 0.0
  %6112 = vmatpush1.msra.mxu0 0.0
  %6113 = vmatprep.subr.mxu0 0.0
  %6114 = vmatpush1.msra.mxu0 0.0
  %6115 = vmatprep.subr.mxu0 0.0
  %6116 = vmatpush1.msra.mxu0 0.0
  %6117 = vmatprep.subr.mxu0 0.0
  %6118 = vmatpush1.msra.mxu0 0.0
  %6119 = vmatprep.subr.mxu0 0.0
  %6120 = vmatpush1.msra.mxu0 0.0
  %6121 = vmatprep.subr.mxu0 0.0
  %6122 = vmatpush1.msra.mxu0 0.0
  %6123 = vmatprep.subr.mxu0 0.0
  %6124 = vmatpush1.msra.mxu0 0.0
  %6125 = vmatprep.subr.mxu0 0.0
  %6126 = vmatpush1.msra.mxu0 0.0
  %6127 = vmatprep.subr.mxu0 0.0
  %6128 = vmatpush1.msra.mxu0 0.0
  %6129 = vmatprep.subr.mxu0 0.0
  %6130 = vmatpush1.msra.mxu0 0.0
  %6131 = vmatprep.subr.mxu0 0.0
  %6132 = vmatpush1.msra.mxu0 0.0
  %6133 = vmatprep.subr.mxu0 0.0
  %6134 = vmatpush1.msra.mxu0 0.0
  %6135 = vmatprep.subr.mxu0 0.0
  %6136 = vmatpush1.msra.mxu0 0.0
  %6137 = vmatprep.subr.mxu0 0.0
  %6138 = vmatpush1.msra.mxu0 0.0
  %6139 = vmatprep.subr.mxu0 0.0
  %6140 = vmatpush1.msra.mxu0 0.0
  %6141 = vmatprep.subr.mxu0 0.0
  %6142 = vmatpush1.msra.mxu0 0.0
  %6143 = vmatprep.subr.mxu0 0.0
  %6144 = vmatpush1.msra.mxu0 0.0
  %6145 = vmatprep.subr.mxu0 0.0
  %6146 = vmatpush1.msra.mxu0 0.0
  %6147 = vmatprep.subr.mxu0 0.0
  %6148 = vmatpush1.msra.mxu0 0.0
  %6149 = vmatprep.subr.mxu0 0.0
  %6150 = vmatpush1.msra.mxu0 0.0
  %6151 = vmatprep.subr.mxu0 0.0
  %6152 = vmatpush1.msra.mxu0 0.0
  %6153 = vmatprep.mubr.f32.mxu0 0.0
  %6154 = vmatmul.mubr.f32.gmra.mrb[0].mxu0 %v6087
  %v6155 = vpop.f32.mrb[0].mxu0
  %v6156 = vadd.f32 0.0, %v6155
  %v6157 = vpop.f32.mrb[0].mxu0
  %6158 = vdwg.mxu0
  %v6159 = vrot.slane %v6085, 1
  %v6160 = vsel %vm1042, %v6159, 0
  %6162 = vmatprep.subr.mxu0 0.0
  %6163 = vmatpush1.msra.mxu0 %v127
  %6164 = vmatprep.subr.mxu0 0.0
  %6165 = vmatpush1.msra.mxu0 %v132
  %6166 = vmatprep.subr.mxu0 0.0
  %6167 = vmatpush1.msra.mxu0 0.0
  %6168 = vmatprep.subr.mxu0 0.0
  %6169 = vmatpush1.msra.mxu0 0.0
  %6170 = vmatprep.subr.mxu0 0.0
  %6171 = vmatpush1.msra.mxu0 0.0
  %6172 = vmatprep.subr.mxu0 0.0
  %6173 = vmatpush1.msra.mxu0 0.0
  %6174 = vmatprep.subr.mxu0 0.0
  %6175 = vmatpush1.msra.mxu0 0.0
  %6176 = vmatprep.subr.mxu0 0.0
  %6177 = vmatpush1.msra.mxu0 0.0
  %6178 = vmatprep.subr.mxu0 0.0
  %6179 = vmatpush1.msra.mxu0 0.0
  %6180 = vmatprep.subr.mxu0 0.0
  %6181 = vmatpush1.msra.mxu0 0.0
  %6182 = vmatprep.subr.mxu0 0.0
  %6183 = vmatpush1.msra.mxu0 0.0
  %6184 = vmatprep.subr.mxu0 0.0
  %6185 = vmatpush1.msra.mxu0 0.0
  %6186 = vmatprep.subr.mxu0 0.0
  %6187 = vmatpush1.msra.mxu0 0.0
  %6188 = vmatprep.subr.mxu0 0.0
  %6189 = vmatpush1.msra.mxu0 0.0
  %6190 = vmatprep.subr.mxu0 0.0
  %6191 = vmatpush1.msra.mxu0 0.0
  %6192 = vmatprep.subr.mxu0 0.0
  %6193 = vmatpush1.msra.mxu0 0.0
  %6194 = vmatprep.subr.mxu0 0.0
  %6195 = vmatpush1.msra.mxu0 0.0
  %6196 = vmatprep.subr.mxu0 0.0
  %6197 = vmatpush1.msra.mxu0 0.0
  %6198 = vmatprep.subr.mxu0 0.0
  %6199 = vmatpush1.msra.mxu0 0.0
  %6200 = vmatprep.subr.mxu0 0.0
  %6201 = vmatpush1.msra.mxu0 0.0
  %6202 = vmatprep.subr.mxu0 0.0
  %6203 = vmatpush1.msra.mxu0 0.0
  %6204 = vmatprep.subr.mxu0 0.0
  %6205 = vmatpush1.msra.mxu0 0.0
  %6206 = vmatprep.subr.mxu0 0.0
  %6207 = vmatpush1.msra.mxu0 0.0
  %6208 = vmatprep.subr.mxu0 0.0
  %6209 = vmatpush1.msra.mxu0 0.0
  %6210 = vmatprep.subr.mxu0 0.0
  %6211 = vmatpush1.msra.mxu0 0.0
  %6212 = vmatprep.subr.mxu0 0.0
  %6213 = vmatpush1.msra.mxu0 0.0
  %6214 = vmatprep.subr.mxu0 0.0
  %6215 = vmatpush1.msra.mxu0 0.0
  %6216 = vmatprep.subr.mxu0 0.0
  %6217 = vmatpush1.msra.mxu0 0.0
  %6218 = vmatprep.subr.mxu0 0.0
  %6219 = vmatpush1.msra.mxu0 0.0
  %6220 = vmatprep.subr.mxu0 0.0
  %6221 = vmatpush1.msra.mxu0 0.0
  %6222 = vmatprep.subr.mxu0 0.0
  %6223 = vmatpush1.msra.mxu0 0.0
  %6224 = vmatprep.subr.mxu0 0.0
  %6225 = vmatpush1.msra.mxu0 0.0
  %6226 = vmatprep.mubr.f32.mxu0 0.0
  %6227 = vmatmul.mubr.f32.gmra.mrb[0].mxu0 %v6160
  %v6228 = vpop.f32.mrb[0].mxu0
  %v6229 = vadd.f32 0.0, %v6228
  %v6230 = vpop.f32.mrb[0].mxu0
  %6231 = vdwg.mxu0
  %v6233 = vrot.slane %v6229, 7
  %v6235 = vsel %vm1192, %v6156, %v6233
  %s6236 = scalar_lea.vmem %s2, 14
  %v6237 = vld [vmem:[%s6236] sm:$0x3]
  %v6238 = vld [vmem:[%s3 + $0x198] sm:$0xff]
  %v6239 = vld [vmem:[%s3 + $0x1a0] sm:$0xff]
  %v6240 = vld [vmem:[%s3 + $0x1a8] sm:$0xff]
  %v6241 = vld [vmem:[%s3 + $0x1b0] sm:$0xff]
  %v6242 = vld [vmem:[%s3 + $0x1b8] sm:$0xff]
  %v6243 = vld [vmem:[%s3 + $0x1c0] sm:$0xff]
  %v6245 = vsel %vm589, %v6235, 0
  %6247 = vmatprep.subr.mxu0 0.0
  %6248 = vmatpush1.msra.mxu0 %v6240
  %6249 = vmatprep.subr.mxu0 0.0
  %6250 = vmatpush1.msra.mxu0 %v6241
  %6251 = vmatprep.subr.mxu0 0.0
  %6252 = vmatpush1.msra.mxu0 %v6242
  %6253 = vmatprep.subr.mxu0 0.0
  %6254 = vmatpush1.msra.mxu0 %v6243
  %6255 = vmatprep.subr.mxu0 0.0
  %6256 = vmatpush1.msra.mxu0 0.0
  %6257 = vmatprep.subr.mxu0 0.0
  %6258 = vmatpush1.msra.mxu0 0.0
  %6259 = vmatprep.subr.mxu0 0.0
  %6260 = vmatpush1.msra.mxu0 0.0
  %6261 = vmatprep.subr.mxu0 0.0
  %6262 = vmatpush1.msra.mxu0 0.0
  %6263 = vmatprep.subr.mxu0 0.0
  %6264 = vmatpush1.msra.mxu0 0.0
  %6265 = vmatprep.subr.mxu0 0.0
  %6266 = vmatpush1.msra.mxu0 0.0
  %6267 = vmatprep.subr.mxu0 0.0
  %6268 = vmatpush1.msra.mxu0 0.0
  %6269 = vmatprep.subr.mxu0 0.0
  %6270 = vmatpush1.msra.mxu0 0.0
  %6271 = vmatprep.subr.mxu0 0.0
  %6272 = vmatpush1.msra.mxu0 0.0
  %6273 = vmatprep.subr.mxu0 0.0
  %6274 = vmatpush1.msra.mxu0 0.0
  %6275 = vmatprep.subr.mxu0 0.0
  %6276 = vmatpush1.msra.mxu0 0.0
  %6277 = vmatprep.subr.mxu0 0.0
  %6278 = vmatpush1.msra.mxu0 0.0
  %6279 = vmatprep.subr.mxu0 0.0
  %6280 = vmatpush1.msra.mxu0 0.0
  %6281 = vmatprep.subr.mxu0 0.0
  %6282 = vmatpush1.msra.mxu0 0.0
  %6283 = vmatprep.subr.mxu0 0.0
  %6284 = vmatpush1.msra.mxu0 0.0
  %6285 = vmatprep.subr.mxu0 0.0
  %6286 = vmatpush1.msra.mxu0 0.0
  %6287 = vmatprep.subr.mxu0 0.0
  %6288 = vmatpush1.msra.mxu0 0.0
  %6289 = vmatprep.subr.mxu0 0.0
  %6290 = vmatpush1.msra.mxu0 0.0
  %6291 = vmatprep.subr.mxu0 0.0
  %6292 = vmatpush1.msra.mxu0 0.0
  %6293 = vmatprep.subr.mxu0 0.0
  %6294 = vmatpush1.msra.mxu0 0.0
  %6295 = vmatprep.subr.mxu0 0.0
  %6296 = vmatpush1.msra.mxu0 0.0
  %6297 = vmatprep.subr.mxu0 0.0
  %6298 = vmatpush1.msra.mxu0 0.0
  %6299 = vmatprep.subr.mxu0 0.0
  %6300 = vmatpush1.msra.mxu0 0.0
  %6301 = vmatprep.subr.mxu0 0.0
  %6302 = vmatpush1.msra.mxu0 0.0
  %6303 = vmatprep.subr.mxu0 0.0
  %6304 = vmatpush1.msra.mxu0 0.0
  %6305 = vmatprep.subr.mxu0 0.0
  %6306 = vmatpush1.msra.mxu0 0.0
  %6307 = vmatprep.subr.mxu0 0.0
  %6308 = vmatpush1.msra.mxu0 0.0
  %6309 = vmatprep.subr.mxu0 0.0
  %6310 = vmatpush1.msra.mxu0 0.0
  %6311 = vmatprep.mubr.f32.mxu0 0.0
  %6312 = vmatmul.mubr.f32.gmra.mrb[0].mxu0 %v6245
  %v6313 = vpop.f32.mrb[0].mxu0
  %v6314 = vadd.f32 0.0, %v6313
  %v6315 = vpop.f32.mrb[0].mxu0
  %6316 = vdwg.mxu0
  %v6318 = vsel %vm1042, %v6237, 0
  %6320 = vmatprep.subr.mxu0 0.0
  %6321 = vmatpush1.msra.mxu0 %v6238
  %6322 = vmatprep.subr.mxu0 0.0
  %6323 = vmatpush1.msra.mxu0 %v6239
  %6324 = vmatprep.subr.mxu0 0.0
  %6325 = vmatpush1.msra.mxu0 0.0
  %6326 = vmatprep.subr.mxu0 0.0
  %6327 = vmatpush1.msra.mxu0 0.0
  %6328 = vmatprep.subr.mxu0 0.0
  %6329 = vmatpush1.msra.mxu0 0.0
  %6330 = vmatprep.subr.mxu0 0.0
  %6331 = vmatpush1.msra.mxu0 0.0
  %6332 = vmatprep.subr.mxu0 0.0
  %6333 = vmatpush1.msra.mxu0 0.0
  %6334 = vmatprep.subr.mxu0 0.0
  %6335 = vmatpush1.msra.mxu0 0.0
  %6336 = vmatprep.subr.mxu0 0.0
  %6337 = vmatpush1.msra.mxu0 0.0
  %6338 = vmatprep.subr.mxu0 0.0
  %6339 = vmatpush1.msra.mxu0 0.0
  %6340 = vmatprep.subr.mxu0 0.0
  %6341 = vmatpush1.msra.mxu0 0.0
  %6342 = vmatprep.subr.mxu0 0.0
  %6343 = vmatpush1.msra.mxu0 0.0
  %6344 = vmatprep.subr.mxu0 0.0
  %6345 = vmatpush1.msra.mxu0 0.0
  %6346 = vmatprep.subr.mxu0 0.0
  %6347 = vmatpush1.msra.mxu0 0.0
  %6348 = vmatprep.subr.mxu0 0.0
  %6349 = vmatpush1.msra.mxu0 0.0
  %6350 = vmatprep.subr.mxu0 0.0
  %6351 = vmatpush1.msra.mxu0 0.0
  %6352 = vmatprep.subr.mxu0 0.0
  %6353 = vmatpush1.msra.mxu0 0.0
  %6354 = vmatprep.subr.mxu0 0.0
  %6355 = vmatpush1.msra.mxu0 0.0
  %6356 = vmatprep.subr.mxu0 0.0
  %6357 = vmatpush1.msra.mxu0 0.0
  %6358 = vmatprep.subr.mxu0 0.0
  %6359 = vmatpush1.msra.mxu0 0.0
  %6360 = vmatprep.subr.mxu0 0.0
  %6361 = vmatpush1.msra.mxu0 0.0
  %6362 = vmatprep.subr.mxu0 0.0
  %6363 = vmatpush1.msra.mxu0 0.0
  %6364 = vmatprep.subr.mxu0 0.0
  %6365 = vmatpush1.msra.mxu0 0.0
  %6366 = vmatprep.subr.mxu0 0.0
  %6367 = vmatpush1.msra.mxu0 0.0
  %6368 = vmatprep.subr.mxu0 0.0
  %6369 = vmatpush1.msra.mxu0 0.0
  %6370 = vmatprep.subr.mxu0 0.0
  %6371 = vmatpush1.msra.mxu0 0.0
  %6372 = vmatprep.subr.mxu0 0.0
  %6373 = vmatpush1.msra.mxu0 0.0
  %6374 = vmatprep.subr.mxu0 0.0
  %6375 = vmatpush1.msra.mxu0 0.0
  %6376 = vmatprep.subr.mxu0 0.0
  %6377 = vmatpush1.msra.mxu0 0.0
  %6378 = vmatprep.subr.mxu0 0.0
  %6379 = vmatpush1.msra.mxu0 0.0
  %6380 = vmatprep.subr.mxu0 0.0
  %6381 = vmatpush1.msra.mxu0 0.0
  %6382 = vmatprep.subr.mxu0 0.0
  %6383 = vmatpush1.msra.mxu0 0.0
  %6384 = vmatprep.mubr.f32.mxu0 0.0
  %6385 = vmatmul.mubr.f32.gmra.mrb[0].mxu0 %v6318
  %v6386 = vpop.f32.mrb[0].mxu0
  %v6387 = vadd.f32 %v6314, %v6386
  %v6388 = vpop.f32.mrb[0].mxu0
  %6389 = vdwg.mxu0
  %v6390 = vld [vmem:[%s3 + $0x1c8] sm:$0xff]
  %v6391 = vld [vmem:[%s3 + $0x1d0] sm:$0xff]
  %v6392 = vld [vmem:[%s3 + $0x1d8] sm:$0xff]
  %v6393 = vld [vmem:[%s3 + $0x1e0] sm:$0xff]
  %6394 = vmatprep.subr.mxu0 0.0
  %6395 = vmatpush1.msra.mxu0 %v6390
  %6396 = vmatprep.subr.mxu0 0.0
  %6397 = vmatpush1.msra.mxu0 %v6391
  %6398 = vmatprep.subr.mxu0 0.0
  %6399 = vmatpush1.msra.mxu0 %v6392
  %6400 = vmatprep.subr.mxu0 0.0
  %6401 = vmatpush1.msra.mxu0 %v6393
  %6402 = vmatprep.subr.mxu0 0.0
  %6403 = vmatpush1.msra.mxu0 0.0
  %6404 = vmatprep.subr.mxu0 0.0
  %6405 = vmatpush1.msra.mxu0 0.0
  %6406 = vmatprep.subr.mxu0 0.0
  %6407 = vmatpush1.msra.mxu0 0.0
  %6408 = vmatprep.subr.mxu0 0.0
  %6409 = vmatpush1.msra.mxu0 0.0
  %6410 = vmatprep.subr.mxu0 0.0
  %6411 = vmatpush1.msra.mxu0 0.0
  %6412 = vmatprep.subr.mxu0 0.0
  %6413 = vmatpush1.msra.mxu0 0.0
  %6414 = vmatprep.subr.mxu0 0.0
  %6415 = vmatpush1.msra.mxu0 0.0
  %6416 = vmatprep.subr.mxu0 0.0
  %6417 = vmatpush1.msra.mxu0 0.0
  %6418 = vmatprep.subr.mxu0 0.0
  %6419 = vmatpush1.msra.mxu0 0.0
  %6420 = vmatprep.subr.mxu0 0.0
  %6421 = vmatpush1.msra.mxu0 0.0
  %6422 = vmatprep.subr.mxu0 0.0
  %6423 = vmatpush1.msra.mxu0 0.0
  %6424 = vmatprep.subr.mxu0 0.0
  %6425 = vmatpush1.msra.mxu0 0.0
  %6426 = vmatprep.subr.mxu0 0.0
  %6427 = vmatpush1.msra.mxu0 0.0
  %6428 = vmatprep.subr.mxu0 0.0
  %6429 = vmatpush1.msra.mxu0 0.0
  %6430 = vmatprep.subr.mxu0 0.0
  %6431 = vmatpush1.msra.mxu0 0.0
  %6432 = vmatprep.subr.mxu0 0.0
  %6433 = vmatpush1.msra.mxu0 0.0
  %6434 = vmatprep.subr.mxu0 0.0
  %6435 = vmatpush1.msra.mxu0 0.0
  %6436 = vmatprep.subr.mxu0 0.0
  %6437 = vmatpush1.msra.mxu0 0.0
  %6438 = vmatprep.subr.mxu0 0.0
  %6439 = vmatpush1.msra.mxu0 0.0
  %6440 = vmatprep.subr.mxu0 0.0
  %6441 = vmatpush1.msra.mxu0 0.0
  %6442 = vmatprep.subr.mxu0 0.0
  %6443 = vmatpush1.msra.mxu0 0.0
  %6444 = vmatprep.subr.mxu0 0.0
  %6445 = vmatpush1.msra.mxu0 0.0
  %6446 = vmatprep.subr.mxu0 0.0
  %6447 = vmatpush1.msra.mxu0 0.0
  %6448 = vmatprep.subr.mxu0 0.0
  %6449 = vmatpush1.msra.mxu0 0.0
  %6450 = vmatprep.subr.mxu0 0.0
  %6451 = vmatpush1.msra.mxu0 0.0
  %6452 = vmatprep.subr.mxu0 0.0
  %6453 = vmatpush1.msra.mxu0 0.0
  %6454 = vmatprep.subr.mxu0 0.0
  %6455 = vmatpush1.msra.mxu0 0.0
  %6456 = vmatprep.subr.mxu0 0.0
  %6457 = vmatpush1.msra.mxu0 0.0
  %6458 = vmatprep.mubr.f32.mxu0 0.0
  %6459 = vmatmul.mubr.f32.gmra.mrb[0].mxu0 %v5784
  %v6460 = vpop.f32.mrb[0].mxu0
  %v6461 = vadd.f32 0.0, %v6460
  %v6462 = vpop.f32.mrb[0].mxu0
  %6463 = vdwg.mxu0
  %v6464 = vadd.f32 %v6387, %v6461
  %v6465 = vld [vmem:[%s3 + $0x1e8] sm:$0x1]
  %v6466 = vlaneseq
  %v6467 = vshrl.u32 %v6466, 7
  %v6468 = vsub.s32 0, %v6467
  %v6469 = vrot.slane %v6465, %v6468
  %v6470 = vadd.f32 %v6464, %v6469
  %v6471 = vxor.u32 %v6470, 2147483648
  %v6472 = vmul.f32 %v6471, 1.442695
  %v6473 = vpow.pop %v6472
  %v6474 = vadd.f32 %v6473, 1.0
  %v6475 = vrcp.pop %v6474
  %v6476 = vmul.f32 1.0, %v6475
  %v6477 = vtanh.pop %v6470
  %v6478 = vmul.f32 %v6476, %v5765
  %6480 = vrot.lane.b32.xlu0 %v6477, 64
  %v6481 = vpop.permute.xlu0 %6480
  %v6483 = vmul.f32 %v6476, %v6481
  %6485 = vrot.lane.b32.xlu0 %v6483, 32
  %v6486 = vpop.permute.xlu0 %6485
  %v6488 = vadd.f32 %v6478, %v6486
  %v6489 = vtanh.pop %v6488
  %6491 = vrot.lane.b32.xlu0 %v6489, 64
  %v6492 = vpop.permute.xlu0 %6491
  %v6494 = vmul.f32 %v6476, %v6492
  %v6495 = vld [vmem:[%s3 + $0x1f0] sm:$0xff]
  %v6496 = vld [vmem:[%s3 + $0x1f8] sm:$0xff]
  %v6497 = vld [vmem:[%s3 + $0x200] sm:$0xff]
  %v6498 = vld [vmem:[%s3 + $0x208] sm:$0xff]
  %v6499 = vld [vmem:[%s3 + $0x210] sm:$0x1]
  %v6500 = vlaneseq
  %v6501 = vshrl.u32 %v6500, 7
  %v6502 = vsub.s32 0, %v6501
  %v6503 = vrot.slane %v6499, %v6502
  %6505 = vrot.lane.b32.xlu0 %v6494, 32
  %v6506 = vpop.permute.xlu0 %6505
  %v6507 = vsel %vm589, %v6506, 0
  %6509 = vmatprep.subr.mxu0 0.0
  %6510 = vmatpush1.msra.mxu0 %v6495
  %6511 = vmatprep.subr.mxu0 0.0
  %6512 = vmatpush1.msra.mxu0 %v6496
  %6513 = vmatprep.subr.mxu0 0.0
  %6514 = vmatpush1.msra.mxu0 %v6497
  %6515 = vmatprep.subr.mxu0 0.0
  %6516 = vmatpush1.msra.mxu0 %v6498
  %6517 = vmatprep.subr.mxu0 0.0
  %6518 = vmatpush1.msra.mxu0 0.0
  %6519 = vmatprep.subr.mxu0 0.0
  %6520 = vmatpush1.msra.mxu0 0.0
  %6521 = vmatprep.subr.mxu0 0.0
  %6522 = vmatpush1.msra.mxu0 0.0
  %6523 = vmatprep.subr.mxu0 0.0
  %6524 = vmatpush1.msra.mxu0 0.0
  %6525 = vmatprep.subr.mxu0 0.0
  %6526 = vmatpush1.msra.mxu0 0.0
  %6527 = vmatprep.subr.mxu0 0.0
  %6528 = vmatpush1.msra.mxu0 0.0
  %6529 = vmatprep.subr.mxu0 0.0
  %6530 = vmatpush1.msra.mxu0 0.0
  %6531 = vmatprep.subr.mxu0 0.0
  %6532 = vmatpush1.msra.mxu0 0.0
  %6533 = vmatprep.subr.mxu0 0.0
  %6534 = vmatpush1.msra.mxu0 0.0
  %6535 = vmatprep.subr.mxu0 0.0
  %6536 = vmatpush1.msra.mxu0 0.0
  %6537 = vmatprep.subr.mxu0 0.0
  %6538 = vmatpush1.msra.mxu0 0.0
  %6539 = vmatprep.subr.mxu0 0.0
  %6540 = vmatpush1.msra.mxu0 0.0
  %6541 = vmatprep.subr.mxu0 0.0
  %6542 = vmatpush1.msra.mxu0 0.0
  %6543 = vmatprep.subr.mxu0 0.0
  %6544 = vmatpush1.msra.mxu0 0.0
  %6545 = vmatprep.subr.mxu0 0.0
  %6546 = vmatpush1.msra.mxu0 0.0
  %6547 = vmatprep.subr.mxu0 0.0
  %6548 = vmatpush1.msra.mxu0 0.0
  %6549 = vmatprep.subr.mxu0 0.0
  %6550 = vmatpush1.msra.mxu0 0.0
  %6551 = vmatprep.subr.mxu0 0.0
  %6552 = vmatpush1.msra.mxu0 0.0
  %6553 = vmatprep.subr.mxu0 0.0
  %6554 = vmatpush1.msra.mxu0 0.0
  %6555 = vmatprep.subr.mxu0 0.0
  %6556 = vmatpush1.msra.mxu0 0.0
  %6557 = vmatprep.subr.mxu0 0.0
  %6558 = vmatpush1.msra.mxu0 0.0
  %6559 = vmatprep.subr.mxu0 0.0
  %6560 = vmatpush1.msra.mxu0 0.0
  %6561 = vmatprep.subr.mxu0 0.0
  %6562 = vmatpush1.msra.mxu0 0.0
  %6563 = vmatprep.subr.mxu0 0.0
  %6564 = vmatpush1.msra.mxu0 0.0
  %6565 = vmatprep.subr.mxu0 0.0
  %6566 = vmatpush1.msra.mxu0 0.0
  %6567 = vmatprep.subr.mxu0 0.0
  %6568 = vmatpush1.msra.mxu0 0.0
  %6569 = vmatprep.subr.mxu0 0.0
  %6570 = vmatpush1.msra.mxu0 0.0
  %6571 = vmatprep.subr.mxu0 0.0
  %6572 = vmatpush1.msra.mxu0 0.0
  %6573 = vmatprep.mubr.f32.mxu0 0.0
  %6574 = vmatmul.mubr.f32.gmra.mrb[0].mxu0 %v6507
  %v6575 = vpop.f32.mrb[0].mxu0
  %v6576 = vadd.f32 %v6503, %v6575
  %v6577 = vpop.f32.mrb[0].mxu0
  %6578 = vdwg.mxu0
  %v6581 = vunpack.c.l.s4 1983009808
  %v6582 = vunpack.c.0.s8 %v6581
  %v6583 = vlaneseq
  %v6584 = vshrl.u32 %v6583, 7
  %v6585 = vsub.s32 %v6582, %v6584
  %v6586 = vrot.slane %v6576, %v6585
  %6587 = vrot.lane.b32.xlu0 %v6586, 96
  %v6588 = vpop.permute.xlu0 %6587
  %6590 = vst.msk [vmem:[%s5 + $0x2] sm:$0x3] %vm3708, %v6588
  %6591 = vrot.lane.b32.xlu0 %v6085, 112
  %v6592 = vpop.permute.xlu0 %6591
  %vm6594 = vcmask 1042304
  %6595 = vst.msk [vmem:[%s6] sm:$0x3] %vm6594, %v6592
  // Predicated region
  $region22: #{encoder_decoder_forward.1} parent=0 // pred_check
    _
  $region23: #{encoder_decoder_forward.1} parent=0 // pred_check_branch
    %6597 = sbr.rel (0) target = $region25
  $region24: #{encoder_decoder_forward.1} parent=0 // pred_region
    _
  $region25: #{encoder_decoder_forward.1} parent=0 // pred_fallthru
    _
  // Predicated region
  $region26: #{encoder_decoder_forward.1} parent=0 // pred_check
    _
  $region27: #{encoder_decoder_forward.1} parent=0 // pred_check_branch
    %6599 = sbr.rel (0) target = $region29
  $region28: #{encoder_decoder_forward.1} parent=0 // pred_region
    _
  $region29: #{encoder_decoder_forward.1} parent=0 // pred_fallthru
    _
  // Predicated region
  $region30: #{encoder_decoder_forward.1} parent=0 // pred_check
    _
  $region31: #{encoder_decoder_forward.1} parent=0 // pred_check_branch
    %6601 = sbr.rel (0) target = $region33
  $region32: #{encoder_decoder_forward.1} parent=0 // pred_region
    _
  $region33: #{encoder_decoder_forward.1} parent=0 // pred_fallthru
    _
  // Predicated region
  $region34: #{encoder_decoder_forward.1} parent=0 // pred_check
    _
  $region35: #{encoder_decoder_forward.1} parent=0 // pred_check_branch
    %6603 = sbr.rel (0) target = $region37
  $region36: #{encoder_decoder_forward.1} parent=0 // pred_region
    _
  $region37: #{encoder_decoder_forward.1} parent=0 // pred_fallthru
    _

</llo_original>
